<compile_context>
chip_gen: v7x
topology: tpu7x:2x2x1
jax: 0.10.0
libtpu: 0.0.40
codegen_flags: <defaults>
</compile_context>

<pallas_src>
import jax
import jax.numpy as jnp
from jax import lax
from jax.experimental import pallas as pl
from jax.experimental.pallas import tpu as pltpu


# ---------------------------------------------------------------------------
# Fused kernel: one grid step == one bidirectional LSTM layer.
# ---------------------------------------------------------------------------
def _make_kernel(T, B, H, O):
    G = 4 * H

    def kernel(x_ref, wih_ref, whhf_ref, whhb_ref, b_ref, fcw_ref, fcb_ref,
               out_ref, xproj_ref, seq_ref):
        layer = pl.program_id(0)

        # Layer 0 consumes the (zero-padded) input sequence; later layers consume
        # the previous layer's (T*B, 2H) output already sitting in seq_ref.
        @pl.when(layer == 0)
        def _():
            seq_ref[...] = x_ref[...]

        # Input projection for BOTH directions in one K=2H GEMM:
        #   cols [0:4H]  -> forward gate pre-activations
        #   cols [4H:8H] -> backward gate pre-activations
        xproj_ref[...] = (
            jnp.dot(seq_ref[...], wih_ref[...], preferred_element_type=jnp.float32)
            + b_ref[...])

        whh_f = whhf_ref[...]            # (H, 4H), resident for the whole time loop
        whh_b = whhb_ref[...]

        def cell(gates, c):
            # Gate order is [i, f, o, g]; i/f/o pre-activations were pre-scaled by
            # 0.5 in the wrapper so sigmoid(x) == 0.5 * tanh(0.5 * x) + 0.5.
            t = jnp.tanh(gates)                        # single EUP pass over (B, 4H)
            s = 0.5 * t[:, 0:3 * H] + 0.5              # [i, f, o] sigmoids
            i_g = s[:, 0:H]
            f_g = s[:, H:2 * H]
            o_g = s[:, 2 * H:3 * H]
            g_g = t[:, 3 * H:4 * H]
            c_new = f_g * c + i_g * g_g
            h_new = o_g * jnp.tanh(c_new)
            return h_new, c_new

        def step(t, carry):
            h_f, c_f, h_b, c_b = carry
            fwd_base = t * B              # static: the loop is fully unrolled
            bwd_base = (T - 1 - t) * B    # reversal via index math, no copies
            gates_f = (xproj_ref[pl.ds(fwd_base, B), 0:G]
                       + jnp.dot(h_f, whh_f, preferred_element_type=jnp.float32))
            gates_b = (xproj_ref[pl.ds(bwd_base, B), G:2 * G]
                       + jnp.dot(h_b, whh_b, preferred_element_type=jnp.float32))
            h_f, c_f = cell(gates_f, c_f)
            h_b, c_b = cell(gates_b, c_b)
            seq_ref[pl.ds(fwd_base, B), 0:H] = h_f
            seq_ref[pl.ds(bwd_base, B), H:2 * H] = h_b
            return h_f, c_f, h_b, c_b

        zeros = jnp.zeros((B, H), jnp.float32)
        lax.fori_loop(0, T, step, (zeros, zeros, zeros, zeros), unroll=True)

        # Last layer: out[:, -1, :] == [fwd hidden at T-1 | bwd hidden at T-1],
        # already adjacent in seq_ref -> single K=2H dot for the FC head.
        @pl.when(layer == pl.num_programs(0) - 1)
        def _():
            last = seq_ref[pl.ds((T - 1) * B, B), :]                  # (B, 2H)
            out = (jnp.dot(last, fcw_ref[...], preferred_element_type=jnp.float32)
                   + fcb_ref[...])
            out_ref[...] = out.astype(out_ref.dtype)

    return kernel


# ---------------------------------------------------------------------------
# Parameter packing: PyTorch layout -> kernel layout
#   - gate rows reordered [i,f,g,o] -> [i,f,o,g]
#   - i/f/o rows pre-scaled by 0.5 (tanh-based sigmoid)
#   - transposed, fwd|bwd fused along the gate axis, stacked over layers
# ---------------------------------------------------------------------------
def _pack_direction(wih, whh, bih, bhh, H):
    def reorder(a):  # rows [i, f, g, o] -> [i, f, o, g]
        return jnp.concatenate([a[0:2 * H], a[3 * H:4 * H], a[2 * H:3 * H]], axis=0)

    scale = jnp.concatenate(
        [jnp.full((3 * H,), 0.5, jnp.float32), jnp.ones((H,), jnp.float32)])
    wih_r = reorder(wih) * scale[:, None]
    whh_r = reorder(whh) * scale[:, None]
    b_r = reorder(bih + bhh) * scale
    return wih_r.T, whh_r.T, b_r[None, :]       # (in,4H), (H,4H), (1,4H)


def _pack_params(params, H):
    wih_all, whhf_all, whhb_all, b_all = [], [], [], []
    for fwd, bwd in params["lstm"]:
        wih_f, whh_f, b_f = _pack_direction(*fwd, H)
        wih_b, whh_b, b_b = _pack_direction(*bwd, H)
        wih = jnp.concatenate([wih_f, wih_b], axis=1)            # (in_dim, 8H)
        if wih.shape[0] < 2 * H:                                  # layer 0: pad Din -> 2H
            wih = jnp.pad(wih, ((0, 2 * H - wih.shape[0]), (0, 0)))
        wih_all.append(wih)
        whhf_all.append(whh_f)
        whhb_all.append(whh_b)
        b_all.append(jnp.concatenate([b_f, b_b], axis=1))         # (1, 8H)
    fc_w_t = params["fc_w"].T                                     # (2H, O)
    fc_b = params["fc_b"][None, :]                                # (1, O)
    return (jnp.stack(wih_all), jnp.stack(whhf_all), jnp.stack(whhb_all),
            jnp.stack(b_all), fc_w_t, fc_b)


# ---------------------------------------------------------------------------
# Public wrapper: x is (B, T, input_size), batch_first like the PyTorch module.
# ---------------------------------------------------------------------------
def stock_lstm_forward(x_btd, params):
    B, T, Din = x_btd.shape
    H = params["lstm"][0][0][1].shape[1]          # whh: (4H, H)
    O = params["fc_w"].shape[0]
    L = len(params["lstm"])

    wih_all, whhf_all, whhb_all, b_all, fc_w_t, fc_b = _pack_params(params, H)

    # Time-major, flattened; features zero-padded to the common layer width 2H.
    x_flat = jnp.transpose(x_btd, (1, 0, 2)).reshape(T * B, Din).astype(jnp.float32)
    x_pad = jnp.pad(x_flat, ((0, 0), (0, 2 * H - Din)))

    kernel = _make_kernel(T, B, H, O)

    return pl.pallas_call(
        kernel,
        out_shape=jax.ShapeDtypeStruct((B, O), jnp.float32),
        grid_spec=pltpu.PrefetchScalarGridSpec(
            num_scalar_prefetch=0,
            grid=(L,),
            in_specs=[
                pl.BlockSpec((T * B, 2 * H), lambda l: (0, 0)),           # x (padded)
                pl.BlockSpec((None, 2 * H, 8 * H), lambda l: (l, 0, 0)),  # W_ih (fused)
                pl.BlockSpec((None, H, 4 * H), lambda l: (l, 0, 0)),      # W_hh fwd
                pl.BlockSpec((None, H, 4 * H), lambda l: (l, 0, 0)),      # W_hh bwd
                pl.BlockSpec((None, 1, 8 * H), lambda l: (l, 0, 0)),      # bias (fused)
                pl.BlockSpec((2 * H, O), lambda l: (0, 0)),               # fc_w
                pl.BlockSpec((1, O), lambda l: (0, 0)),                   # fc_b
            ],
            out_specs=pl.BlockSpec((B, O), lambda l: (0, 0)),
            scratch_shapes=[
                pltpu.VMEM((T * B, 8 * H), jnp.float32),   # fused fwd|bwd gate pre-acts
                pltpu.VMEM((T * B, 2 * H), jnp.float32),   # layer output [fwd | bwd]
            ],
        ),
        compiler_params=pltpu.CompilerParams(
            dimension_semantics=("arbitrary",),     # layers are sequential
            vmem_limit_bytes=32 * 1024 * 1024,      # explicit budget (fits v5e..v7x)
        ),
    )(x_pad, wih_all, whhf_all, whhb_all, b_all, fc_w_t, fc_b)


# ---------------------------------------------------------------------------
# Deterministic PyTorch-style parameter init (raw layout; packing happens in wrapper).
# ---------------------------------------------------------------------------
def init_params(key, input_size, hidden_size, output_size, num_layers):
    H = hidden_size
    k = 1.0 / float(H) ** 0.5
    lstm = []
    for layer in range(num_layers):
        in_dim = input_size if layer == 0 else 2 * H
        dirs = []
        for _ in range(2):  # forward, backward
            key, k1, k2, k3, k4 = jax.random.split(key, 5)
            wih = jax.random.uniform(k1, (4 * H, in_dim), jnp.float32, -k, k)
            whh = jax.random.uniform(k2, (4 * H, H), jnp.float32, -k, k)
            bih = jax.random.uniform(k3, (4 * H,), jnp.float32, -k, k)
            bhh = jax.random.uniform(k4, (4 * H,), jnp.float32, -k, k)
            dirs.append((wih, whh, bih, bhh))
        lstm.append(tuple(dirs))
    kf = 1.0 / float(2 * H) ** 0.5
    key, k1, k2 = jax.random.split(key, 3)
    fc_w = jax.random.uniform(k1, (output_size, 2 * H), jnp.float32, -kf, kf)
    fc_b = jax.random.uniform(k2, (output_size,), jnp.float32, -kf, kf)
    return {"lstm": lstm, "fc_w": fc_w, "fc_b": fc_b}


# ---------------------------------------------------------------------------
# Pure-JAX reference (trick-free PyTorch semantics) for numeric verification.
# ---------------------------------------------------------------------------
def _ref_layer_dir(x_tbd, wih, whh, bih, bhh):
    T, B, _ = x_tbd.shape
    H = whh.shape[1]
    h = jnp.zeros((B, H), jnp.float32)
    c = jnp.zeros((B, H), jnp.float32)
    outs = []
    for t in range(T):
        gates = x_tbd[t] @ wih.T + h @ whh.T + bih + bhh
        i = jax.nn.sigmoid(gates[:, 0 * H:1 * H])
        f = jax.nn.sigmoid(gates[:, 1 * H:2 * H])
        g = jnp.tanh(gates[:, 2 * H:3 * H])
        o = jax.nn.sigmoid(gates[:, 3 * H:4 * H])
        c = f * c + i * g
        h = o * jnp.tanh(c)
        outs.append(h)
    return jnp.stack(outs)


def stock_lstm_ref(x_btd, params):
    layer_in = jnp.transpose(x_btd, (1, 0, 2))
    for fwd, bwd in params["lstm"]:
        out_f = _ref_layer_dir(layer_in, *fwd)
        out_b = _ref_layer_dir(layer_in[::-1], *bwd)[::-1]
        layer_in = jnp.concatenate([out_f, out_b], axis=-1)
    last = layer_in[-1]                      # dropout(p=0.3) is identity in eval
    return last @ params["fc_w"].T + params["fc_b"][None, :]


if __name__ == "__main__":
    INPUT_SIZE, HIDDEN, OUTPUT, NUM_LAYERS = 5, 128, 1, 3
    BATCH, SEQ = 8, 16

    key = jax.random.PRNGKey(0)
    kx, kp = jax.random.split(key)
    x = jax.random.normal(kx, (BATCH, SEQ, INPUT_SIZE), jnp.float32)
    params = init_params(kp, INPUT_SIZE, HIDDEN, OUTPUT, NUM_LAYERS)

    y = jax.block_until_ready(stock_lstm_forward(x, params))
    y_ref = jax.block_until_ready(stock_lstm_ref(x, params))

    assert y.shape == (BATCH, OUTPUT), y.shape
    # tolerance covers MXU f32 (bf16-decomposed) vs XLA matmul differences
    assert jnp.allclose(y, y_ref, atol=2e-3, rtol=2e-3), (y, y_ref)
    print("KERNEL_OK")
</pallas_src>

<mosaic_0001>
module attributes {stable_mosaic.version = 11 : i64} {
  func.func @kernel(%arg0: i32, %arg1: memref<128x256xf32, #tpu.memory_space<vmem>>, %arg2: memref<1x256x1024xf32, #tpu.memory_space<vmem>>, %arg3: memref<1x128x512xf32, #tpu.memory_space<vmem>>, %arg4: memref<1x128x512xf32, #tpu.memory_space<vmem>>, %arg5: memref<1x1x1024xf32, #tpu.memory_space<vmem>>, %arg6: memref<256x1xf32, #tpu.memory_space<vmem>>, %arg7: memref<1x1xf32, #tpu.memory_space<vmem>>, %arg8: memref<8x1xf32, #tpu.memory_space<vmem>>, %arg9: memref<128x1024xf32, #tpu.memory_space<vmem>>, %arg10: memref<128x256xf32, #tpu.memory_space<vmem>>) attributes {dimension_semantics = [#tpu.dimension_semantics<arbitrary>], iteration_bounds = array<i64: 3>, scalar_prefetch = 0 : i64, scratch_operands = 2 : i64, tpu.core_type = #tpu.core_type<tc>, window_params = [{pipeline_mode = #tpu.pipeline_mode<synchronous>, transform_indices = @transform_0, window_bounds = array<i64: 128, 256>}, {transform_indices = @transform_1, window_bounds = array<i64: 1, 256, 1024>}, {transform_indices = @transform_2, window_bounds = array<i64: 1, 128, 512>}, {transform_indices = @transform_3, window_bounds = array<i64: 1, 128, 512>}, {transform_indices = @transform_4, window_bounds = array<i64: 1, 1, 1024>}, {pipeline_mode = #tpu.pipeline_mode<synchronous>, transform_indices = @transform_5, window_bounds = array<i64: 256, 1>}, {pipeline_mode = #tpu.pipeline_mode<synchronous>, transform_indices = @transform_6, window_bounds = array<i64: 1, 1>}, {pipeline_mode = #tpu.pipeline_mode<synchronous>, transform_indices = @transform_7, window_bounds = array<i64: 8, 1>}]} {
    %c0_i32 = arith.constant 0 : i32
    %0 = arith.cmpi eq, %arg0, %c0_i32 : i32
    %1 = arith.extui %0 : i1 to i32
    %c0_i32_0 = arith.constant 0 : i32
    %2 = arith.cmpi ne, %1, %c0_i32_0 : i32
    scf.if %2 {
      %c0_226 = arith.constant 0 : index
      %c0_227 = arith.constant 0 : index
      %740 = vector.load %arg1[%c0_226, %c0_227] : memref<128x256xf32, #tpu.memory_space<vmem>>, vector<128x256xf32>
      %c0_228 = arith.constant 0 : index
      %c0_229 = arith.constant 0 : index
      %741 = vector.load %arg10[%c0_228, %c0_229] : memref<128x256xf32, #tpu.memory_space<vmem>>, vector<128x256xf32>
      tpu.vector_store %arg10[%c0_228, %c0_229], %740 {strides = array<i32>} : memref<128x256xf32, #tpu.memory_space<vmem>>, vector<128x256xf32>,
    } else {
    }
    %c0 = arith.constant 0 : index
    %c0_1 = arith.constant 0 : index
    %3 = vector.load %arg10[%c0, %c0_1] : memref<128x256xf32, #tpu.memory_space<vmem>>, vector<128x256xf32>
    %c0_2 = arith.constant 0 : index
    %c0_3 = arith.constant 0 : index
    %c0_4 = arith.constant 0 : index
    %4 = vector.load %arg2[%c0_2, %c0_3, %c0_4] : memref<1x256x1024xf32, #tpu.memory_space<vmem>>, vector<1x256x1024xf32>
    %5 = vector.shape_cast %4 : vector<1x256x1024xf32> to vector<256x1024xf32>
    %cst = arith.constant dense<0.000000e+00> : vector<128x1024xf32>
    %6 = tpu.matmul %3, %5, %cst {dimension_numbers = #tpu.dot_dimension_numbers<[1], [0], [0], [1], [0, 0, 1, 1], [], []>} : vector<128x256xf32>, vector<256x1024xf32>, vector<128x1024xf32> -> vector<128x1024xf32>
    %c0_5 = arith.constant 0 : index
    %c0_6 = arith.constant 0 : index
    %c0_7 = arith.constant 0 : index
    %7 = vector.load %arg5[%c0_5, %c0_6, %c0_7] : memref<1x1x1024xf32, #tpu.memory_space<vmem>>, vector<1x1x1024xf32>
    %8 = vector.shape_cast %7 : vector<1x1x1024xf32> to vector<1x1024xf32>
    %9 = vector.broadcast %8 : vector<1x1024xf32> to vector<128x1024xf32>
    %10 = arith.addf %6, %9 : vector<128x1024xf32>
    %c0_8 = arith.constant 0 : index
    %c0_9 = arith.constant 0 : index
    %11 = vector.load %arg9[%c0_8, %c0_9] : memref<128x1024xf32, #tpu.memory_space<vmem>>, vector<128x1024xf32>
    tpu.vector_store %arg9[%c0_8, %c0_9], %10 {strides = array<i32>} : memref<128x1024xf32, #tpu.memory_space<vmem>>, vector<128x1024xf32>,
    %c0_10 = arith.constant 0 : index
    %c0_11 = arith.constant 0 : index
    %c0_12 = arith.constant 0 : index
    %12 = vector.load %arg3[%c0_10, %c0_11, %c0_12] : memref<1x128x512xf32, #tpu.memory_space<vmem>>, vector<1x128x512xf32>
    %13 = vector.shape_cast %12 : vector<1x128x512xf32> to vector<128x512xf32>
    %c0_13 = arith.constant 0 : index
    %c0_14 = arith.constant 0 : index
    %c0_15 = arith.constant 0 : index
    %14 = vector.load %arg4[%c0_13, %c0_14, %c0_15] : memref<1x128x512xf32, #tpu.memory_space<vmem>>, vector<1x128x512xf32>
    %15 = vector.shape_cast %14 : vector<1x128x512xf32> to vector<128x512xf32>
    %cst_16 = arith.constant 0.000000e+00 : f32
    %16 = vector.broadcast %cst_16 : f32 to vector<8x128xf32>
    %c0_i32_17 = arith.constant 0 : i32
    %c8_i32 = arith.constant 8 : i32
    %17 = arith.muli %c0_i32_17, %c8_i32 : i32
    %c15_i32 = arith.constant 15 : i32
    %18 = arith.subi %c15_i32, %c0_i32_17 : i32
    %c8_i32_18 = arith.constant 8 : i32
    %19 = arith.muli %18, %c8_i32_18 : i32
    %20 = arith.index_cast %17 : i32 to index
    %c0_19 = arith.constant 0 : index
    %21 = vector.load %arg9[%20, %c0_19] : memref<128x1024xf32, #tpu.memory_space<vmem>>, vector<8x512xf32>
    %cst_20 = arith.constant dense<0.000000e+00> : vector<8x512xf32>
    %22 = tpu.matmul %16, %13, %cst_20 {dimension_numbers = #tpu.dot_dimension_numbers<[1], [0], [0], [1], [0, 0, 1, 1], [], []>} : vector<8x128xf32>, vector<128x512xf32>, vector<8x512xf32> -> vector<8x512xf32>
    %23 = arith.addf %21, %22 : vector<8x512xf32>
    %24 = arith.index_cast %19 : i32 to index
    %c512 = arith.constant 512 : index
    %25 = vector.load %arg9[%24, %c512] : memref<128x1024xf32, #tpu.memory_space<vmem>>, vector<8x512xf32>
    %cst_21 = arith.constant dense<0.000000e+00> : vector<8x512xf32>
    %26 = tpu.matmul %16, %15, %cst_21 {dimension_numbers = #tpu.dot_dimension_numbers<[1], [0], [0], [1], [0, 0, 1, 1], [], []>} : vector<8x128xf32>, vector<128x512xf32>, vector<8x512xf32> -> vector<8x512xf32>
    %27 = arith.addf %25, %26 : vector<8x512xf32>
    %28 = math.tanh %23 : vector<8x512xf32>
    %29 = vector.extract_strided_slice %28 {offsets = [0, 0], sizes = [8, 384], strides = [1, 1]} : vector<8x512xf32> to vector<8x384xf32>
    %cst_22 = arith.constant 5.000000e-01 : f32
    %30 = vector.broadcast %cst_22 : f32 to vector<8x384xf32>
    %31 = arith.mulf %30, %29 : vector<8x384xf32>
    %cst_23 = arith.constant 5.000000e-01 : f32
    %32 = vector.broadcast %cst_23 : f32 to vector<8x384xf32>
    %33 = arith.addf %31, %32 : vector<8x384xf32>
    %34 = vector.extract_strided_slice %33 {offsets = [0, 0], sizes = [8, 128], strides = [1, 1]} : vector<8x384xf32> to vector<8x128xf32>
    %35 = vector.extract_strided_slice %33 {offsets = [0, 128], sizes = [8, 128], strides = [1, 1]} : vector<8x384xf32> to vector<8x128xf32>
    %36 = vector.extract_strided_slice %33 {offsets = [0, 256], sizes = [8, 128], strides = [1, 1]} : vector<8x384xf32> to vector<8x128xf32>
    %37 = vector.extract_strided_slice %28 {offsets = [0, 384], sizes = [8, 128], strides = [1, 1]} : vector<8x512xf32> to vector<8x128xf32>
    %38 = arith.mulf %35, %16 : vector<8x128xf32>
    %39 = arith.mulf %34, %37 : vector<8x128xf32>
    %40 = arith.addf %38, %39 : vector<8x128xf32>
    %41 = math.tanh %40 : vector<8x128xf32>
    %42 = arith.mulf %36, %41 : vector<8x128xf32>
    %43 = math.tanh %27 : vector<8x512xf32>
    %44 = vector.extract_strided_slice %43 {offsets = [0, 0], sizes = [8, 384], strides = [1, 1]} : vector<8x512xf32> to vector<8x384xf32>
    %cst_24 = arith.constant 5.000000e-01 : f32
    %45 = vector.broadcast %cst_24 : f32 to vector<8x384xf32>
    %46 = arith.mulf %45, %44 : vector<8x384xf32>
    %cst_25 = arith.constant 5.000000e-01 : f32
    %47 = vector.broadcast %cst_25 : f32 to vector<8x384xf32>
    %48 = arith.addf %46, %47 : vector<8x384xf32>
    %49 = vector.extract_strided_slice %48 {offsets = [0, 0], sizes = [8, 128], strides = [1, 1]} : vector<8x384xf32> to vector<8x128xf32>
    %50 = vector.extract_strided_slice %48 {offsets = [0, 128], sizes = [8, 128], strides = [1, 1]} : vector<8x384xf32> to vector<8x128xf32>
    %51 = vector.extract_strided_slice %48 {offsets = [0, 256], sizes = [8, 128], strides = [1, 1]} : vector<8x384xf32> to vector<8x128xf32>
    %52 = vector.extract_strided_slice %43 {offsets = [0, 384], sizes = [8, 128], strides = [1, 1]} : vector<8x512xf32> to vector<8x128xf32>
    %53 = arith.mulf %50, %16 : vector<8x128xf32>
    %54 = arith.mulf %49, %52 : vector<8x128xf32>
    %55 = arith.addf %53, %54 : vector<8x128xf32>
    %56 = math.tanh %55 : vector<8x128xf32>
    %57 = arith.mulf %51, %56 : vector<8x128xf32>
    %58 = arith.index_cast %17 : i32 to index
    %c0_26 = arith.constant 0 : index
    %59 = vector.load %arg10[%58, %c0_26] : memref<128x256xf32, #tpu.memory_space<vmem>>, vector<8x128xf32>
    tpu.vector_store %arg10[%58, %c0_26], %42 {strides = array<i32>} : memref<128x256xf32, #tpu.memory_space<vmem>>, vector<8x128xf32>,
    %60 = arith.index_cast %19 : i32 to index
    %c128 = arith.constant 128 : index
    %61 = vector.load %arg10[%60, %c128] : memref<128x256xf32, #tpu.memory_space<vmem>>, vector<8x128xf32>
    tpu.vector_store %arg10[%60, %c128], %57 {strides = array<i32>} : memref<128x256xf32, #tpu.memory_space<vmem>>, vector<8x128xf32>,
    %c1_i32 = arith.constant 1 : i32
    %c8_i32_27 = arith.constant 8 : i32
    %62 = arith.muli %c1_i32, %c8_i32_27 : i32
    %c15_i32_28 = arith.constant 15 : i32
    %63 = arith.subi %c15_i32_28, %c1_i32 : i32
    %c8_i32_29 = arith.constant 8 : i32
    %64 = arith.muli %63, %c8_i32_29 : i32
    %65 = arith.index_cast %62 : i32 to index
    %c0_30 = arith.constant 0 : index
    %66 = vector.load %arg9[%65, %c0_30] : memref<128x1024xf32, #tpu.memory_space<vmem>>, vector<8x512xf32>
    %cst_31 = arith.constant dense<0.000000e+00> : vector<8x512xf32>
    %67 = tpu.matmul %42, %13, %cst_31 {dimension_numbers = #tpu.dot_dimension_numbers<[1], [0], [0], [1], [0, 0, 1, 1], [], []>} : vector<8x128xf32>, vector<128x512xf32>, vector<8x512xf32> -> vector<8x512xf32>
    %68 = arith.addf %66, %67 : vector<8x512xf32>
    %69 = arith.index_cast %64 : i32 to index
    %c512_32 = arith.constant 512 : index
    %70 = vector.load %arg9[%69, %c512_32] : memref<128x1024xf32, #tpu.memory_space<vmem>>, vector<8x512xf32>
    %cst_33 = arith.constant dense<0.000000e+00> : vector<8x512xf32>
    %71 = tpu.matmul %57, %15, %cst_33 {dimension_numbers = #tpu.dot_dimension_numbers<[1], [0], [0], [1], [0, 0, 1, 1], [], []>} : vector<8x128xf32>, vector<128x512xf32>, vector<8x512xf32> -> vector<8x512xf32>
    %72 = arith.addf %70, %71 : vector<8x512xf32>
    %73 = math.tanh %68 : vector<8x512xf32>
    %74 = vector.extract_strided_slice %73 {offsets = [0, 0], sizes = [8, 384], strides = [1, 1]} : vector<8x512xf32> to vector<8x384xf32>
    %cst_34 = arith.constant 5.000000e-01 : f32
    %75 = vector.broadcast %cst_34 : f32 to vector<8x384xf32>
    %76 = arith.mulf %75, %74 : vector<8x384xf32>
    %cst_35 = arith.constant 5.000000e-01 : f32
    %77 = vector.broadcast %cst_35 : f32 to vector<8x384xf32>
    %78 = arith.addf %76, %77 : vector<8x384xf32>
    %79 = vector.extract_strided_slice %78 {offsets = [0, 0], sizes = [8, 128], strides = [1, 1]} : vector<8x384xf32> to vector<8x128xf32>
    %80 = vector.extract_strided_slice %78 {offsets = [0, 128], sizes = [8, 128], strides = [1, 1]} : vector<8x384xf32> to vector<8x128xf32>
    %81 = vector.extract_strided_slice %78 {offsets = [0, 256], sizes = [8, 128], strides = [1, 1]} : vector<8x384xf32> to vector<8x128xf32>
    %82 = vector.extract_strided_slice %73 {offsets = [0, 384], sizes = [8, 128], strides = [1, 1]} : vector<8x512xf32> to vector<8x128xf32>
    %83 = arith.mulf %80, %40 : vector<8x128xf32>
    %84 = arith.mulf %79, %82 : vector<8x128xf32>
    %85 = arith.addf %83, %84 : vector<8x128xf32>
    %86 = math.tanh %85 : vector<8x128xf32>
    %87 = arith.mulf %81, %86 : vector<8x128xf32>
    %88 = math.tanh %72 : vector<8x512xf32>
    %89 = vector.extract_strided_slice %88 {offsets = [0, 0], sizes = [8, 384], strides = [1, 1]} : vector<8x512xf32> to vector<8x384xf32>
    %cst_36 = arith.constant 5.000000e-01 : f32
    %90 = vector.broadcast %cst_36 : f32 to vector<8x384xf32>
    %91 = arith.mulf %90, %89 : vector<8x384xf32>
    %cst_37 = arith.constant 5.000000e-01 : f32
    %92 = vector.broadcast %cst_37 : f32 to vector<8x384xf32>
    %93 = arith.addf %91, %92 : vector<8x384xf32>
    %94 = vector.extract_strided_slice %93 {offsets = [0, 0], sizes = [8, 128], strides = [1, 1]} : vector<8x384xf32> to vector<8x128xf32>
    %95 = vector.extract_strided_slice %93 {offsets = [0, 128], sizes = [8, 128], strides = [1, 1]} : vector<8x384xf32> to vector<8x128xf32>
    %96 = vector.extract_strided_slice %93 {offsets = [0, 256], sizes = [8, 128], strides = [1, 1]} : vector<8x384xf32> to vector<8x128xf32>
    %97 = vector.extract_strided_slice %88 {offsets = [0, 384], sizes = [8, 128], strides = [1, 1]} : vector<8x512xf32> to vector<8x128xf32>
    %98 = arith.mulf %95, %55 : vector<8x128xf32>
    %99 = arith.mulf %94, %97 : vector<8x128xf32>
    %100 = arith.addf %98, %99 : vector<8x128xf32>
    %101 = math.tanh %100 : vector<8x128xf32>
    %102 = arith.mulf %96, %101 : vector<8x128xf32>
    %103 = arith.index_cast %62 : i32 to index
    %c0_38 = arith.constant 0 : index
    %104 = vector.load %arg10[%103, %c0_38] : memref<128x256xf32, #tpu.memory_space<vmem>>, vector<8x128xf32>
    tpu.vector_store %arg10[%103, %c0_38], %87 {strides = array<i32>} : memref<128x256xf32, #tpu.memory_space<vmem>>, vector<8x128xf32>,
    %105 = arith.index_cast %64 : i32 to index
    %c128_39 = arith.constant 128 : index
    %106 = vector.load %arg10[%105, %c128_39] : memref<128x256xf32, #tpu.memory_space<vmem>>, vector<8x128xf32>
    tpu.vector_store %arg10[%105, %c128_39], %102 {strides = array<i32>} : memref<128x256xf32, #tpu.memory_space<vmem>>, vector<8x128xf32>,
    %c2_i32 = arith.constant 2 : i32
    %c8_i32_40 = arith.constant 8 : i32
    %107 = arith.muli %c2_i32, %c8_i32_40 : i32
    %c15_i32_41 = arith.constant 15 : i32
    %108 = arith.subi %c15_i32_41, %c2_i32 : i32
    %c8_i32_42 = arith.constant 8 : i32
    %109 = arith.muli %108, %c8_i32_42 : i32
    %110 = arith.index_cast %107 : i32 to index
    %c0_43 = arith.constant 0 : index
    %111 = vector.load %arg9[%110, %c0_43] : memref<128x1024xf32, #tpu.memory_space<vmem>>, vector<8x512xf32>
    %cst_44 = arith.constant dense<0.000000e+00> : vector<8x512xf32>
    %112 = tpu.matmul %87, %13, %cst_44 {dimension_numbers = #tpu.dot_dimension_numbers<[1], [0], [0], [1], [0, 0, 1, 1], [], []>} : vector<8x128xf32>, vector<128x512xf32>, vector<8x512xf32> -> vector<8x512xf32>
    %113 = arith.addf %111, %112 : vector<8x512xf32>
    %114 = arith.index_cast %109 : i32 to index
    %c512_45 = arith.constant 512 : index
    %115 = vector.load %arg9[%114, %c512_45] : memref<128x1024xf32, #tpu.memory_space<vmem>>, vector<8x512xf32>
    %cst_46 = arith.constant dense<0.000000e+00> : vector<8x512xf32>
    %116 = tpu.matmul %102, %15, %cst_46 {dimension_numbers = #tpu.dot_dimension_numbers<[1], [0], [0], [1], [0, 0, 1, 1], [], []>} : vector<8x128xf32>, vector<128x512xf32>, vector<8x512xf32> -> vector<8x512xf32>
    %117 = arith.addf %115, %116 : vector<8x512xf32>
    %118 = math.tanh %113 : vector<8x512xf32>
    %119 = vector.extract_strided_slice %118 {offsets = [0, 0], sizes = [8, 384], strides = [1, 1]} : vector<8x512xf32> to vector<8x384xf32>
    %cst_47 = arith.constant 5.000000e-01 : f32
    %120 = vector.broadcast %cst_47 : f32 to vector<8x384xf32>
    %121 = arith.mulf %120, %119 : vector<8x384xf32>
    %cst_48 = arith.constant 5.000000e-01 : f32
    %122 = vector.broadcast %cst_48 : f32 to vector<8x384xf32>
    %123 = arith.addf %121, %122 : vector<8x384xf32>
    %124 = vector.extract_strided_slice %123 {offsets = [0, 0], sizes = [8, 128], strides = [1, 1]} : vector<8x384xf32> to vector<8x128xf32>
    %125 = vector.extract_strided_slice %123 {offsets = [0, 128], sizes = [8, 128], strides = [1, 1]} : vector<8x384xf32> to vector<8x128xf32>
    %126 = vector.extract_strided_slice %123 {offsets = [0, 256], sizes = [8, 128], strides = [1, 1]} : vector<8x384xf32> to vector<8x128xf32>
    %127 = vector.extract_strided_slice %118 {offsets = [0, 384], sizes = [8, 128], strides = [1, 1]} : vector<8x512xf32> to vector<8x128xf32>
    %128 = arith.mulf %125, %85 : vector<8x128xf32>
    %129 = arith.mulf %124, %127 : vector<8x128xf32>
    %130 = arith.addf %128, %129 : vector<8x128xf32>
    %131 = math.tanh %130 : vector<8x128xf32>
    %132 = arith.mulf %126, %131 : vector<8x128xf32>
    %133 = math.tanh %117 : vector<8x512xf32>
    %134 = vector.extract_strided_slice %133 {offsets = [0, 0], sizes = [8, 384], strides = [1, 1]} : vector<8x512xf32> to vector<8x384xf32>
    %cst_49 = arith.constant 5.000000e-01 : f32
    %135 = vector.broadcast %cst_49 : f32 to vector<8x384xf32>
    %136 = arith.mulf %135, %134 : vector<8x384xf32>
    %cst_50 = arith.constant 5.000000e-01 : f32
    %137 = vector.broadcast %cst_50 : f32 to vector<8x384xf32>
    %138 = arith.addf %136, %137 : vector<8x384xf32>
    %139 = vector.extract_strided_slice %138 {offsets = [0, 0], sizes = [8, 128], strides = [1, 1]} : vector<8x384xf32> to vector<8x128xf32>
    %140 = vector.extract_strided_slice %138 {offsets = [0, 128], sizes = [8, 128], strides = [1, 1]} : vector<8x384xf32> to vector<8x128xf32>
    %141 = vector.extract_strided_slice %138 {offsets = [0, 256], sizes = [8, 128], strides = [1, 1]} : vector<8x384xf32> to vector<8x128xf32>
    %142 = vector.extract_strided_slice %133 {offsets = [0, 384], sizes = [8, 128], strides = [1, 1]} : vector<8x512xf32> to vector<8x128xf32>
    %143 = arith.mulf %140, %100 : vector<8x128xf32>
    %144 = arith.mulf %139, %142 : vector<8x128xf32>
    %145 = arith.addf %143, %144 : vector<8x128xf32>
    %146 = math.tanh %145 : vector<8x128xf32>
    %147 = arith.mulf %141, %146 : vector<8x128xf32>
    %148 = arith.index_cast %107 : i32 to index
    %c0_51 = arith.constant 0 : index
    %149 = vector.load %arg10[%148, %c0_51] : memref<128x256xf32, #tpu.memory_space<vmem>>, vector<8x128xf32>
    tpu.vector_store %arg10[%148, %c0_51], %132 {strides = array<i32>} : memref<128x256xf32, #tpu.memory_space<vmem>>, vector<8x128xf32>,
    %150 = arith.index_cast %109 : i32 to index
    %c128_52 = arith.constant 128 : index
    %151 = vector.load %arg10[%150, %c128_52] : memref<128x256xf32, #tpu.memory_space<vmem>>, vector<8x128xf32>
    tpu.vector_store %arg10[%150, %c128_52], %147 {strides = array<i32>} : memref<128x256xf32, #tpu.memory_space<vmem>>, vector<8x128xf32>,
    %c3_i32 = arith.constant 3 : i32
    %c8_i32_53 = arith.constant 8 : i32
    %152 = arith.muli %c3_i32, %c8_i32_53 : i32
    %c15_i32_54 = arith.constant 15 : i32
    %153 = arith.subi %c15_i32_54, %c3_i32 : i32
    %c8_i32_55 = arith.constant 8 : i32
    %154 = arith.muli %153, %c8_i32_55 : i32
    %155 = arith.index_cast %152 : i32 to index
    %c0_56 = arith.constant 0 : index
    %156 = vector.load %arg9[%155, %c0_56] : memref<128x1024xf32, #tpu.memory_space<vmem>>, vector<8x512xf32>
    %cst_57 = arith.constant dense<0.000000e+00> : vector<8x512xf32>
    %157 = tpu.matmul %132, %13, %cst_57 {dimension_numbers = #tpu.dot_dimension_numbers<[1], [0], [0], [1], [0, 0, 1, 1], [], []>} : vector<8x128xf32>, vector<128x512xf32>, vector<8x512xf32> -> vector<8x512xf32>
    %158 = arith.addf %156, %157 : vector<8x512xf32>
    %159 = arith.index_cast %154 : i32 to index
    %c512_58 = arith.constant 512 : index
    %160 = vector.load %arg9[%159, %c512_58] : memref<128x1024xf32, #tpu.memory_space<vmem>>, vector<8x512xf32>
    %cst_59 = arith.constant dense<0.000000e+00> : vector<8x512xf32>
    %161 = tpu.matmul %147, %15, %cst_59 {dimension_numbers = #tpu.dot_dimension_numbers<[1], [0], [0], [1], [0, 0, 1, 1], [], []>} : vector<8x128xf32>, vector<128x512xf32>, vector<8x512xf32> -> vector<8x512xf32>
    %162 = arith.addf %160, %161 : vector<8x512xf32>
    %163 = math.tanh %158 : vector<8x512xf32>
    %164 = vector.extract_strided_slice %163 {offsets = [0, 0], sizes = [8, 384], strides = [1, 1]} : vector<8x512xf32> to vector<8x384xf32>
    %cst_60 = arith.constant 5.000000e-01 : f32
    %165 = vector.broadcast %cst_60 : f32 to vector<8x384xf32>
    %166 = arith.mulf %165, %164 : vector<8x384xf32>
    %cst_61 = arith.constant 5.000000e-01 : f32
    %167 = vector.broadcast %cst_61 : f32 to vector<8x384xf32>
    %168 = arith.addf %166, %167 : vector<8x384xf32>
    %169 = vector.extract_strided_slice %168 {offsets = [0, 0], sizes = [8, 128], strides = [1, 1]} : vector<8x384xf32> to vector<8x128xf32>
    %170 = vector.extract_strided_slice %168 {offsets = [0, 128], sizes = [8, 128], strides = [1, 1]} : vector<8x384xf32> to vector<8x128xf32>
    %171 = vector.extract_strided_slice %168 {offsets = [0, 256], sizes = [8, 128], strides = [1, 1]} : vector<8x384xf32> to vector<8x128xf32>
    %172 = vector.extract_strided_slice %163 {offsets = [0, 384], sizes = [8, 128], strides = [1, 1]} : vector<8x512xf32> to vector<8x128xf32>
    %173 = arith.mulf %170, %130 : vector<8x128xf32>
    %174 = arith.mulf %169, %172 : vector<8x128xf32>
    %175 = arith.addf %173, %174 : vector<8x128xf32>
    %176 = math.tanh %175 : vector<8x128xf32>
    %177 = arith.mulf %171, %176 : vector<8x128xf32>
    %178 = math.tanh %162 : vector<8x512xf32>
    %179 = vector.extract_strided_slice %178 {offsets = [0, 0], sizes = [8, 384], strides = [1, 1]} : vector<8x512xf32> to vector<8x384xf32>
    %cst_62 = arith.constant 5.000000e-01 : f32
    %180 = vector.broadcast %cst_62 : f32 to vector<8x384xf32>
    %181 = arith.mulf %180, %179 : vector<8x384xf32>
    %cst_63 = arith.constant 5.000000e-01 : f32
    %182 = vector.broadcast %cst_63 : f32 to vector<8x384xf32>
    %183 = arith.addf %181, %182 : vector<8x384xf32>
    %184 = vector.extract_strided_slice %183 {offsets = [0, 0], sizes = [8, 128], strides = [1, 1]} : vector<8x384xf32> to vector<8x128xf32>
    %185 = vector.extract_strided_slice %183 {offsets = [0, 128], sizes = [8, 128], strides = [1, 1]} : vector<8x384xf32> to vector<8x128xf32>
    %186 = vector.extract_strided_slice %183 {offsets = [0, 256], sizes = [8, 128], strides = [1, 1]} : vector<8x384xf32> to vector<8x128xf32>
    %187 = vector.extract_strided_slice %178 {offsets = [0, 384], sizes = [8, 128], strides = [1, 1]} : vector<8x512xf32> to vector<8x128xf32>
    %188 = arith.mulf %185, %145 : vector<8x128xf32>
    %189 = arith.mulf %184, %187 : vector<8x128xf32>
    %190 = arith.addf %188, %189 : vector<8x128xf32>
    %191 = math.tanh %190 : vector<8x128xf32>
    %192 = arith.mulf %186, %191 : vector<8x128xf32>
    %193 = arith.index_cast %152 : i32 to index
    %c0_64 = arith.constant 0 : index
    %194 = vector.load %arg10[%193, %c0_64] : memref<128x256xf32, #tpu.memory_space<vmem>>, vector<8x128xf32>
    tpu.vector_store %arg10[%193, %c0_64], %177 {strides = array<i32>} : memref<128x256xf32, #tpu.memory_space<vmem>>, vector<8x128xf32>,
    %195 = arith.index_cast %154 : i32 to index
    %c128_65 = arith.constant 128 : index
    %196 = vector.load %arg10[%195, %c128_65] : memref<128x256xf32, #tpu.memory_space<vmem>>, vector<8x128xf32>
    tpu.vector_store %arg10[%195, %c128_65], %192 {strides = array<i32>} : memref<128x256xf32, #tpu.memory_space<vmem>>, vector<8x128xf32>,
    %c4_i32 = arith.constant 4 : i32
    %c8_i32_66 = arith.constant 8 : i32
    %197 = arith.muli %c4_i32, %c8_i32_66 : i32
    %c15_i32_67 = arith.constant 15 : i32
    %198 = arith.subi %c15_i32_67, %c4_i32 : i32
    %c8_i32_68 = arith.constant 8 : i32
    %199 = arith.muli %198, %c8_i32_68 : i32
    %200 = arith.index_cast %197 : i32 to index
    %c0_69 = arith.constant 0 : index
    %201 = vector.load %arg9[%200, %c0_69] : memref<128x1024xf32, #tpu.memory_space<vmem>>, vector<8x512xf32>
    %cst_70 = arith.constant dense<0.000000e+00> : vector<8x512xf32>
    %202 = tpu.matmul %177, %13, %cst_70 {dimension_numbers = #tpu.dot_dimension_numbers<[1], [0], [0], [1], [0, 0, 1, 1], [], []>} : vector<8x128xf32>, vector<128x512xf32>, vector<8x512xf32> -> vector<8x512xf32>
    %203 = arith.addf %201, %202 : vector<8x512xf32>
    %204 = arith.index_cast %199 : i32 to index
    %c512_71 = arith.constant 512 : index
    %205 = vector.load %arg9[%204, %c512_71] : memref<128x1024xf32, #tpu.memory_space<vmem>>, vector<8x512xf32>
    %cst_72 = arith.constant dense<0.000000e+00> : vector<8x512xf32>
    %206 = tpu.matmul %192, %15, %cst_72 {dimension_numbers = #tpu.dot_dimension_numbers<[1], [0], [0], [1], [0, 0, 1, 1], [], []>} : vector<8x128xf32>, vector<128x512xf32>, vector<8x512xf32> -> vector<8x512xf32>
    %207 = arith.addf %205, %206 : vector<8x512xf32>
    %208 = math.tanh %203 : vector<8x512xf32>
    %209 = vector.extract_strided_slice %208 {offsets = [0, 0], sizes = [8, 384], strides = [1, 1]} : vector<8x512xf32> to vector<8x384xf32>
    %cst_73 = arith.constant 5.000000e-01 : f32
    %210 = vector.broadcast %cst_73 : f32 to vector<8x384xf32>
    %211 = arith.mulf %210, %209 : vector<8x384xf32>
    %cst_74 = arith.constant 5.000000e-01 : f32
    %212 = vector.broadcast %cst_74 : f32 to vector<8x384xf32>
    %213 = arith.addf %211, %212 : vector<8x384xf32>
    %214 = vector.extract_strided_slice %213 {offsets = [0, 0], sizes = [8, 128], strides = [1, 1]} : vector<8x384xf32> to vector<8x128xf32>
    %215 = vector.extract_strided_slice %213 {offsets = [0, 128], sizes = [8, 128], strides = [1, 1]} : vector<8x384xf32> to vector<8x128xf32>
    %216 = vector.extract_strided_slice %213 {offsets = [0, 256], sizes = [8, 128], strides = [1, 1]} : vector<8x384xf32> to vector<8x128xf32>
    %217 = vector.extract_strided_slice %208 {offsets = [0, 384], sizes = [8, 128], strides = [1, 1]} : vector<8x512xf32> to vector<8x128xf32>
    %218 = arith.mulf %215, %175 : vector<8x128xf32>
    %219 = arith.mulf %214, %217 : vector<8x128xf32>
    %220 = arith.addf %218, %219 : vector<8x128xf32>
    %221 = math.tanh %220 : vector<8x128xf32>
    %222 = arith.mulf %216, %221 : vector<8x128xf32>
    %223 = math.tanh %207 : vector<8x512xf32>
    %224 = vector.extract_strided_slice %223 {offsets = [0, 0], sizes = [8, 384], strides = [1, 1]} : vector<8x512xf32> to vector<8x384xf32>
    %cst_75 = arith.constant 5.000000e-01 : f32
    %225 = vector.broadcast %cst_75 : f32 to vector<8x384xf32>
    %226 = arith.mulf %225, %224 : vector<8x384xf32>
    %cst_76 = arith.constant 5.000000e-01 : f32
    %227 = vector.broadcast %cst_76 : f32 to vector<8x384xf32>
    %228 = arith.addf %226, %227 : vector<8x384xf32>
    %229 = vector.extract_strided_slice %228 {offsets = [0, 0], sizes = [8, 128], strides = [1, 1]} : vector<8x384xf32> to vector<8x128xf32>
    %230 = vector.extract_strided_slice %228 {offsets = [0, 128], sizes = [8, 128], strides = [1, 1]} : vector<8x384xf32> to vector<8x128xf32>
    %231 = vector.extract_strided_slice %228 {offsets = [0, 256], sizes = [8, 128], strides = [1, 1]} : vector<8x384xf32> to vector<8x128xf32>
    %232 = vector.extract_strided_slice %223 {offsets = [0, 384], sizes = [8, 128], strides = [1, 1]} : vector<8x512xf32> to vector<8x128xf32>
    %233 = arith.mulf %230, %190 : vector<8x128xf32>
    %234 = arith.mulf %229, %232 : vector<8x128xf32>
    %235 = arith.addf %233, %234 : vector<8x128xf32>
    %236 = math.tanh %235 : vector<8x128xf32>
    %237 = arith.mulf %231, %236 : vector<8x128xf32>
    %238 = arith.index_cast %197 : i32 to index
    %c0_77 = arith.constant 0 : index
    %239 = vector.load %arg10[%238, %c0_77] : memref<128x256xf32, #tpu.memory_space<vmem>>, vector<8x128xf32>
    tpu.vector_store %arg10[%238, %c0_77], %222 {strides = array<i32>} : memref<128x256xf32, #tpu.memory_space<vmem>>, vector<8x128xf32>,
    %240 = arith.index_cast %199 : i32 to index
    %c128_78 = arith.constant 128 : index
    %241 = vector.load %arg10[%240, %c128_78] : memref<128x256xf32, #tpu.memory_space<vmem>>, vector<8x128xf32>
    tpu.vector_store %arg10[%240, %c128_78], %237 {strides = array<i32>} : memref<128x256xf32, #tpu.memory_space<vmem>>, vector<8x128xf32>,
    %c5_i32 = arith.constant 5 : i32
    %c8_i32_79 = arith.constant 8 : i32
    %242 = arith.muli %c5_i32, %c8_i32_79 : i32
    %c15_i32_80 = arith.constant 15 : i32
    %243 = arith.subi %c15_i32_80, %c5_i32 : i32
    %c8_i32_81 = arith.constant 8 : i32
    %244 = arith.muli %243, %c8_i32_81 : i32
    %245 = arith.index_cast %242 : i32 to index
    %c0_82 = arith.constant 0 : index
    %246 = vector.load %arg9[%245, %c0_82] : memref<128x1024xf32, #tpu.memory_space<vmem>>, vector<8x512xf32>
    %cst_83 = arith.constant dense<0.000000e+00> : vector<8x512xf32>
    %247 = tpu.matmul %222, %13, %cst_83 {dimension_numbers = #tpu.dot_dimension_numbers<[1], [0], [0], [1], [0, 0, 1, 1], [], []>} : vector<8x128xf32>, vector<128x512xf32>, vector<8x512xf32> -> vector<8x512xf32>
    %248 = arith.addf %246, %247 : vector<8x512xf32>
    %249 = arith.index_cast %244 : i32 to index
    %c512_84 = arith.constant 512 : index
    %250 = vector.load %arg9[%249, %c512_84] : memref<128x1024xf32, #tpu.memory_space<vmem>>, vector<8x512xf32>
    %cst_85 = arith.constant dense<0.000000e+00> : vector<8x512xf32>
    %251 = tpu.matmul %237, %15, %cst_85 {dimension_numbers = #tpu.dot_dimension_numbers<[1], [0], [0], [1], [0, 0, 1, 1], [], []>} : vector<8x128xf32>, vector<128x512xf32>, vector<8x512xf32> -> vector<8x512xf32>
    %252 = arith.addf %250, %251 : vector<8x512xf32>
    %253 = math.tanh %248 : vector<8x512xf32>
    %254 = vector.extract_strided_slice %253 {offsets = [0, 0], sizes = [8, 384], strides = [1, 1]} : vector<8x512xf32> to vector<8x384xf32>
    %cst_86 = arith.constant 5.000000e-01 : f32
    %255 = vector.broadcast %cst_86 : f32 to vector<8x384xf32>
    %256 = arith.mulf %255, %254 : vector<8x384xf32>
    %cst_87 = arith.constant 5.000000e-01 : f32
    %257 = vector.broadcast %cst_87 : f32 to vector<8x384xf32>
    %258 = arith.addf %256, %257 : vector<8x384xf32>
    %259 = vector.extract_strided_slice %258 {offsets = [0, 0], sizes = [8, 128], strides = [1, 1]} : vector<8x384xf32> to vector<8x128xf32>
    %260 = vector.extract_strided_slice %258 {offsets = [0, 128], sizes = [8, 128], strides = [1, 1]} : vector<8x384xf32> to vector<8x128xf32>
    %261 = vector.extract_strided_slice %258 {offsets = [0, 256], sizes = [8, 128], strides = [1, 1]} : vector<8x384xf32> to vector<8x128xf32>
    %262 = vector.extract_strided_slice %253 {offsets = [0, 384], sizes = [8, 128], strides = [1, 1]} : vector<8x512xf32> to vector<8x128xf32>
    %263 = arith.mulf %260, %220 : vector<8x128xf32>
    %264 = arith.mulf %259, %262 : vector<8x128xf32>
    %265 = arith.addf %263, %264 : vector<8x128xf32>
    %266 = math.tanh %265 : vector<8x128xf32>
    %267 = arith.mulf %261, %266 : vector<8x128xf32>
    %268 = math.tanh %252 : vector<8x512xf32>
    %269 = vector.extract_strided_slice %268 {offsets = [0, 0], sizes = [8, 384], strides = [1, 1]} : vector<8x512xf32> to vector<8x384xf32>
    %cst_88 = arith.constant 5.000000e-01 : f32
    %270 = vector.broadcast %cst_88 : f32 to vector<8x384xf32>
    %271 = arith.mulf %270, %269 : vector<8x384xf32>
    %cst_89 = arith.constant 5.000000e-01 : f32
    %272 = vector.broadcast %cst_89 : f32 to vector<8x384xf32>
    %273 = arith.addf %271, %272 : vector<8x384xf32>
    %274 = vector.extract_strided_slice %273 {offsets = [0, 0], sizes = [8, 128], strides = [1, 1]} : vector<8x384xf32> to vector<8x128xf32>
    %275 = vector.extract_strided_slice %273 {offsets = [0, 128], sizes = [8, 128], strides = [1, 1]} : vector<8x384xf32> to vector<8x128xf32>
    %276 = vector.extract_strided_slice %273 {offsets = [0, 256], sizes = [8, 128], strides = [1, 1]} : vector<8x384xf32> to vector<8x128xf32>
    %277 = vector.extract_strided_slice %268 {offsets = [0, 384], sizes = [8, 128], strides = [1, 1]} : vector<8x512xf32> to vector<8x128xf32>
    %278 = arith.mulf %275, %235 : vector<8x128xf32>
    %279 = arith.mulf %274, %277 : vector<8x128xf32>
    %280 = arith.addf %278, %279 : vector<8x128xf32>
    %281 = math.tanh %280 : vector<8x128xf32>
    %282 = arith.mulf %276, %281 : vector<8x128xf32>
    %283 = arith.index_cast %242 : i32 to index
    %c0_90 = arith.constant 0 : index
    %284 = vector.load %arg10[%283, %c0_90] : memref<128x256xf32, #tpu.memory_space<vmem>>, vector<8x128xf32>
    tpu.vector_store %arg10[%283, %c0_90], %267 {strides = array<i32>} : memref<128x256xf32, #tpu.memory_space<vmem>>, vector<8x128xf32>,
    %285 = arith.index_cast %244 : i32 to index
    %c128_91 = arith.constant 128 : index
    %286 = vector.load %arg10[%285, %c128_91] : memref<128x256xf32, #tpu.memory_space<vmem>>, vector<8x128xf32>
    tpu.vector_store %arg10[%285, %c128_91], %282 {strides = array<i32>} : memref<128x256xf32, #tpu.memory_space<vmem>>, vector<8x128xf32>,
    %c6_i32 = arith.constant 6 : i32
    %c8_i32_92 = arith.constant 8 : i32
    %287 = arith.muli %c6_i32, %c8_i32_92 : i32
    %c15_i32_93 = arith.constant 15 : i32
    %288 = arith.subi %c15_i32_93, %c6_i32 : i32
    %c8_i32_94 = arith.constant 8 : i32
    %289 = arith.muli %288, %c8_i32_94 : i32
    %290 = arith.index_cast %287 : i32 to index
    %c0_95 = arith.constant 0 : index
    %291 = vector.load %arg9[%290, %c0_95] : memref<128x1024xf32, #tpu.memory_space<vmem>>, vector<8x512xf32>
    %cst_96 = arith.constant dense<0.000000e+00> : vector<8x512xf32>
    %292 = tpu.matmul %267, %13, %cst_96 {dimension_numbers = #tpu.dot_dimension_numbers<[1], [0], [0], [1], [0, 0, 1, 1], [], []>} : vector<8x128xf32>, vector<128x512xf32>, vector<8x512xf32> -> vector<8x512xf32>
    %293 = arith.addf %291, %292 : vector<8x512xf32>
    %294 = arith.index_cast %289 : i32 to index
    %c512_97 = arith.constant 512 : index
    %295 = vector.load %arg9[%294, %c512_97] : memref<128x1024xf32, #tpu.memory_space<vmem>>, vector<8x512xf32>
    %cst_98 = arith.constant dense<0.000000e+00> : vector<8x512xf32>
    %296 = tpu.matmul %282, %15, %cst_98 {dimension_numbers = #tpu.dot_dimension_numbers<[1], [0], [0], [1], [0, 0, 1, 1], [], []>} : vector<8x128xf32>, vector<128x512xf32>, vector<8x512xf32> -> vector<8x512xf32>
    %297 = arith.addf %295, %296 : vector<8x512xf32>
    %298 = math.tanh %293 : vector<8x512xf32>
    %299 = vector.extract_strided_slice %298 {offsets = [0, 0], sizes = [8, 384], strides = [1, 1]} : vector<8x512xf32> to vector<8x384xf32>
    %cst_99 = arith.constant 5.000000e-01 : f32
    %300 = vector.broadcast %cst_99 : f32 to vector<8x384xf32>
    %301 = arith.mulf %300, %299 : vector<8x384xf32>
    %cst_100 = arith.constant 5.000000e-01 : f32
    %302 = vector.broadcast %cst_100 : f32 to vector<8x384xf32>
    %303 = arith.addf %301, %302 : vector<8x384xf32>
    %304 = vector.extract_strided_slice %303 {offsets = [0, 0], sizes = [8, 128], strides = [1, 1]} : vector<8x384xf32> to vector<8x128xf32>
    %305 = vector.extract_strided_slice %303 {offsets = [0, 128], sizes = [8, 128], strides = [1, 1]} : vector<8x384xf32> to vector<8x128xf32>
    %306 = vector.extract_strided_slice %303 {offsets = [0, 256], sizes = [8, 128], strides = [1, 1]} : vector<8x384xf32> to vector<8x128xf32>
    %307 = vector.extract_strided_slice %298 {offsets = [0, 384], sizes = [8, 128], strides = [1, 1]} : vector<8x512xf32> to vector<8x128xf32>
    %308 = arith.mulf %305, %265 : vector<8x128xf32>
    %309 = arith.mulf %304, %307 : vector<8x128xf32>
    %310 = arith.addf %308, %309 : vector<8x128xf32>
    %311 = math.tanh %310 : vector<8x128xf32>
    %312 = arith.mulf %306, %311 : vector<8x128xf32>
    %313 = math.tanh %297 : vector<8x512xf32>
    %314 = vector.extract_strided_slice %313 {offsets = [0, 0], sizes = [8, 384], strides = [1, 1]} : vector<8x512xf32> to vector<8x384xf32>
    %cst_101 = arith.constant 5.000000e-01 : f32
    %315 = vector.broadcast %cst_101 : f32 to vector<8x384xf32>
    %316 = arith.mulf %315, %314 : vector<8x384xf32>
    %cst_102 = arith.constant 5.000000e-01 : f32
    %317 = vector.broadcast %cst_102 : f32 to vector<8x384xf32>
    %318 = arith.addf %316, %317 : vector<8x384xf32>
    %319 = vector.extract_strided_slice %318 {offsets = [0, 0], sizes = [8, 128], strides = [1, 1]} : vector<8x384xf32> to vector<8x128xf32>
    %320 = vector.extract_strided_slice %318 {offsets = [0, 128], sizes = [8, 128], strides = [1, 1]} : vector<8x384xf32> to vector<8x128xf32>
    %321 = vector.extract_strided_slice %318 {offsets = [0, 256], sizes = [8, 128], strides = [1, 1]} : vector<8x384xf32> to vector<8x128xf32>
    %322 = vector.extract_strided_slice %313 {offsets = [0, 384], sizes = [8, 128], strides = [1, 1]} : vector<8x512xf32> to vector<8x128xf32>
    %323 = arith.mulf %320, %280 : vector<8x128xf32>
    %324 = arith.mulf %319, %322 : vector<8x128xf32>
    %325 = arith.addf %323, %324 : vector<8x128xf32>
    %326 = math.tanh %325 : vector<8x128xf32>
    %327 = arith.mulf %321, %326 : vector<8x128xf32>
    %328 = arith.index_cast %287 : i32 to index
    %c0_103 = arith.constant 0 : index
    %329 = vector.load %arg10[%328, %c0_103] : memref<128x256xf32, #tpu.memory_space<vmem>>, vector<8x128xf32>
    tpu.vector_store %arg10[%328, %c0_103], %312 {strides = array<i32>} : memref<128x256xf32, #tpu.memory_space<vmem>>, vector<8x128xf32>,
    %330 = arith.index_cast %289 : i32 to index
    %c128_104 = arith.constant 128 : index
    %331 = vector.load %arg10[%330, %c128_104] : memref<128x256xf32, #tpu.memory_space<vmem>>, vector<8x128xf32>
    tpu.vector_store %arg10[%330, %c128_104], %327 {strides = array<i32>} : memref<128x256xf32, #tpu.memory_space<vmem>>, vector<8x128xf32>,
    %c7_i32 = arith.constant 7 : i32
    %c8_i32_105 = arith.constant 8 : i32
    %332 = arith.muli %c7_i32, %c8_i32_105 : i32
    %c15_i32_106 = arith.constant 15 : i32
    %333 = arith.subi %c15_i32_106, %c7_i32 : i32
    %c8_i32_107 = arith.constant 8 : i32
    %334 = arith.muli %333, %c8_i32_107 : i32
    %335 = arith.index_cast %332 : i32 to index
    %c0_108 = arith.constant 0 : index
    %336 = vector.load %arg9[%335, %c0_108] : memref<128x1024xf32, #tpu.memory_space<vmem>>, vector<8x512xf32>
    %cst_109 = arith.constant dense<0.000000e+00> : vector<8x512xf32>
    %337 = tpu.matmul %312, %13, %cst_109 {dimension_numbers = #tpu.dot_dimension_numbers<[1], [0], [0], [1], [0, 0, 1, 1], [], []>} : vector<8x128xf32>, vector<128x512xf32>, vector<8x512xf32> -> vector<8x512xf32>
    %338 = arith.addf %336, %337 : vector<8x512xf32>
    %339 = arith.index_cast %334 : i32 to index
    %c512_110 = arith.constant 512 : index
    %340 = vector.load %arg9[%339, %c512_110] : memref<128x1024xf32, #tpu.memory_space<vmem>>, vector<8x512xf32>
    %cst_111 = arith.constant dense<0.000000e+00> : vector<8x512xf32>
    %341 = tpu.matmul %327, %15, %cst_111 {dimension_numbers = #tpu.dot_dimension_numbers<[1], [0], [0], [1], [0, 0, 1, 1], [], []>} : vector<8x128xf32>, vector<128x512xf32>, vector<8x512xf32> -> vector<8x512xf32>
    %342 = arith.addf %340, %341 : vector<8x512xf32>
    %343 = math.tanh %338 : vector<8x512xf32>
    %344 = vector.extract_strided_slice %343 {offsets = [0, 0], sizes = [8, 384], strides = [1, 1]} : vector<8x512xf32> to vector<8x384xf32>
    %cst_112 = arith.constant 5.000000e-01 : f32
    %345 = vector.broadcast %cst_112 : f32 to vector<8x384xf32>
    %346 = arith.mulf %345, %344 : vector<8x384xf32>
    %cst_113 = arith.constant 5.000000e-01 : f32
    %347 = vector.broadcast %cst_113 : f32 to vector<8x384xf32>
    %348 = arith.addf %346, %347 : vector<8x384xf32>
    %349 = vector.extract_strided_slice %348 {offsets = [0, 0], sizes = [8, 128], strides = [1, 1]} : vector<8x384xf32> to vector<8x128xf32>
    %350 = vector.extract_strided_slice %348 {offsets = [0, 128], sizes = [8, 128], strides = [1, 1]} : vector<8x384xf32> to vector<8x128xf32>
    %351 = vector.extract_strided_slice %348 {offsets = [0, 256], sizes = [8, 128], strides = [1, 1]} : vector<8x384xf32> to vector<8x128xf32>
    %352 = vector.extract_strided_slice %343 {offsets = [0, 384], sizes = [8, 128], strides = [1, 1]} : vector<8x512xf32> to vector<8x128xf32>
    %353 = arith.mulf %350, %310 : vector<8x128xf32>
    %354 = arith.mulf %349, %352 : vector<8x128xf32>
    %355 = arith.addf %353, %354 : vector<8x128xf32>
    %356 = math.tanh %355 : vector<8x128xf32>
    %357 = arith.mulf %351, %356 : vector<8x128xf32>
    %358 = math.tanh %342 : vector<8x512xf32>
    %359 = vector.extract_strided_slice %358 {offsets = [0, 0], sizes = [8, 384], strides = [1, 1]} : vector<8x512xf32> to vector<8x384xf32>
    %cst_114 = arith.constant 5.000000e-01 : f32
    %360 = vector.broadcast %cst_114 : f32 to vector<8x384xf32>
    %361 = arith.mulf %360, %359 : vector<8x384xf32>
    %cst_115 = arith.constant 5.000000e-01 : f32
    %362 = vector.broadcast %cst_115 : f32 to vector<8x384xf32>
    %363 = arith.addf %361, %362 : vector<8x384xf32>
    %364 = vector.extract_strided_slice %363 {offsets = [0, 0], sizes = [8, 128], strides = [1, 1]} : vector<8x384xf32> to vector<8x128xf32>
    %365 = vector.extract_strided_slice %363 {offsets = [0, 128], sizes = [8, 128], strides = [1, 1]} : vector<8x384xf32> to vector<8x128xf32>
    %366 = vector.extract_strided_slice %363 {offsets = [0, 256], sizes = [8, 128], strides = [1, 1]} : vector<8x384xf32> to vector<8x128xf32>
    %367 = vector.extract_strided_slice %358 {offsets = [0, 384], sizes = [8, 128], strides = [1, 1]} : vector<8x512xf32> to vector<8x128xf32>
    %368 = arith.mulf %365, %325 : vector<8x128xf32>
    %369 = arith.mulf %364, %367 : vector<8x128xf32>
    %370 = arith.addf %368, %369 : vector<8x128xf32>
    %371 = math.tanh %370 : vector<8x128xf32>
    %372 = arith.mulf %366, %371 : vector<8x128xf32>
    %373 = arith.index_cast %332 : i32 to index
    %c0_116 = arith.constant 0 : index
    %374 = vector.load %arg10[%373, %c0_116] : memref<128x256xf32, #tpu.memory_space<vmem>>, vector<8x128xf32>
    tpu.vector_store %arg10[%373, %c0_116], %357 {strides = array<i32>} : memref<128x256xf32, #tpu.memory_space<vmem>>, vector<8x128xf32>,
    %375 = arith.index_cast %334 : i32 to index
    %c128_117 = arith.constant 128 : index
    %376 = vector.load %arg10[%375, %c128_117] : memref<128x256xf32, #tpu.memory_space<vmem>>, vector<8x128xf32>
    tpu.vector_store %arg10[%375, %c128_117], %372 {strides = array<i32>} : memref<128x256xf32, #tpu.memory_space<vmem>>, vector<8x128xf32>,
    %c8_i32_118 = arith.constant 8 : i32
    %c8_i32_119 = arith.constant 8 : i32
    %377 = arith.muli %c8_i32_118, %c8_i32_119 : i32
    %c15_i32_120 = arith.constant 15 : i32
    %378 = arith.subi %c15_i32_120, %c8_i32_118 : i32
    %c8_i32_121 = arith.constant 8 : i32
    %379 = arith.muli %378, %c8_i32_121 : i32
    %380 = arith.index_cast %377 : i32 to index
    %c0_122 = arith.constant 0 : index
    %381 = vector.load %arg9[%380, %c0_122] : memref<128x1024xf32, #tpu.memory_space<vmem>>, vector<8x512xf32>
    %cst_123 = arith.constant dense<0.000000e+00> : vector<8x512xf32>
    %382 = tpu.matmul %357, %13, %cst_123 {dimension_numbers = #tpu.dot_dimension_numbers<[1], [0], [0], [1], [0, 0, 1, 1], [], []>} : vector<8x128xf32>, vector<128x512xf32>, vector<8x512xf32> -> vector<8x512xf32>
    %383 = arith.addf %381, %382 : vector<8x512xf32>
    %384 = arith.index_cast %379 : i32 to index
    %c512_124 = arith.constant 512 : index
    %385 = vector.load %arg9[%384, %c512_124] : memref<128x1024xf32, #tpu.memory_space<vmem>>, vector<8x512xf32>
    %cst_125 = arith.constant dense<0.000000e+00> : vector<8x512xf32>
    %386 = tpu.matmul %372, %15, %cst_125 {dimension_numbers = #tpu.dot_dimension_numbers<[1], [0], [0], [1], [0, 0, 1, 1], [], []>} : vector<8x128xf32>, vector<128x512xf32>, vector<8x512xf32> -> vector<8x512xf32>
    %387 = arith.addf %385, %386 : vector<8x512xf32>
    %388 = math.tanh %383 : vector<8x512xf32>
    %389 = vector.extract_strided_slice %388 {offsets = [0, 0], sizes = [8, 384], strides = [1, 1]} : vector<8x512xf32> to vector<8x384xf32>
    %cst_126 = arith.constant 5.000000e-01 : f32
    %390 = vector.broadcast %cst_126 : f32 to vector<8x384xf32>
    %391 = arith.mulf %390, %389 : vector<8x384xf32>
    %cst_127 = arith.constant 5.000000e-01 : f32
    %392 = vector.broadcast %cst_127 : f32 to vector<8x384xf32>
    %393 = arith.addf %391, %392 : vector<8x384xf32>
    %394 = vector.extract_strided_slice %393 {offsets = [0, 0], sizes = [8, 128], strides = [1, 1]} : vector<8x384xf32> to vector<8x128xf32>
    %395 = vector.extract_strided_slice %393 {offsets = [0, 128], sizes = [8, 128], strides = [1, 1]} : vector<8x384xf32> to vector<8x128xf32>
    %396 = vector.extract_strided_slice %393 {offsets = [0, 256], sizes = [8, 128], strides = [1, 1]} : vector<8x384xf32> to vector<8x128xf32>
    %397 = vector.extract_strided_slice %388 {offsets = [0, 384], sizes = [8, 128], strides = [1, 1]} : vector<8x512xf32> to vector<8x128xf32>
    %398 = arith.mulf %395, %355 : vector<8x128xf32>
    %399 = arith.mulf %394, %397 : vector<8x128xf32>
    %400 = arith.addf %398, %399 : vector<8x128xf32>
    %401 = math.tanh %400 : vector<8x128xf32>
    %402 = arith.mulf %396, %401 : vector<8x128xf32>
    %403 = math.tanh %387 : vector<8x512xf32>
    %404 = vector.extract_strided_slice %403 {offsets = [0, 0], sizes = [8, 384], strides = [1, 1]} : vector<8x512xf32> to vector<8x384xf32>
    %cst_128 = arith.constant 5.000000e-01 : f32
    %405 = vector.broadcast %cst_128 : f32 to vector<8x384xf32>
    %406 = arith.mulf %405, %404 : vector<8x384xf32>
    %cst_129 = arith.constant 5.000000e-01 : f32
    %407 = vector.broadcast %cst_129 : f32 to vector<8x384xf32>
    %408 = arith.addf %406, %407 : vector<8x384xf32>
    %409 = vector.extract_strided_slice %408 {offsets = [0, 0], sizes = [8, 128], strides = [1, 1]} : vector<8x384xf32> to vector<8x128xf32>
    %410 = vector.extract_strided_slice %408 {offsets = [0, 128], sizes = [8, 128], strides = [1, 1]} : vector<8x384xf32> to vector<8x128xf32>
    %411 = vector.extract_strided_slice %408 {offsets = [0, 256], sizes = [8, 128], strides = [1, 1]} : vector<8x384xf32> to vector<8x128xf32>
    %412 = vector.extract_strided_slice %403 {offsets = [0, 384], sizes = [8, 128], strides = [1, 1]} : vector<8x512xf32> to vector<8x128xf32>
    %413 = arith.mulf %410, %370 : vector<8x128xf32>
    %414 = arith.mulf %409, %412 : vector<8x128xf32>
    %415 = arith.addf %413, %414 : vector<8x128xf32>
    %416 = math.tanh %415 : vector<8x128xf32>
    %417 = arith.mulf %411, %416 : vector<8x128xf32>
    %418 = arith.index_cast %377 : i32 to index
    %c0_130 = arith.constant 0 : index
    %419 = vector.load %arg10[%418, %c0_130] : memref<128x256xf32, #tpu.memory_space<vmem>>, vector<8x128xf32>
    tpu.vector_store %arg10[%418, %c0_130], %402 {strides = array<i32>} : memref<128x256xf32, #tpu.memory_space<vmem>>, vector<8x128xf32>,
    %420 = arith.index_cast %379 : i32 to index
    %c128_131 = arith.constant 128 : index
    %421 = vector.load %arg10[%420, %c128_131] : memref<128x256xf32, #tpu.memory_space<vmem>>, vector<8x128xf32>
    tpu.vector_store %arg10[%420, %c128_131], %417 {strides = array<i32>} : memref<128x256xf32, #tpu.memory_space<vmem>>, vector<8x128xf32>,
    %c9_i32 = arith.constant 9 : i32
    %c8_i32_132 = arith.constant 8 : i32
    %422 = arith.muli %c9_i32, %c8_i32_132 : i32
    %c15_i32_133 = arith.constant 15 : i32
    %423 = arith.subi %c15_i32_133, %c9_i32 : i32
    %c8_i32_134 = arith.constant 8 : i32
    %424 = arith.muli %423, %c8_i32_134 : i32
    %425 = arith.index_cast %422 : i32 to index
    %c0_135 = arith.constant 0 : index
    %426 = vector.load %arg9[%425, %c0_135] : memref<128x1024xf32, #tpu.memory_space<vmem>>, vector<8x512xf32>
    %cst_136 = arith.constant dense<0.000000e+00> : vector<8x512xf32>
    %427 = tpu.matmul %402, %13, %cst_136 {dimension_numbers = #tpu.dot_dimension_numbers<[1], [0], [0], [1], [0, 0, 1, 1], [], []>} : vector<8x128xf32>, vector<128x512xf32>, vector<8x512xf32> -> vector<8x512xf32>
    %428 = arith.addf %426, %427 : vector<8x512xf32>
    %429 = arith.index_cast %424 : i32 to index
    %c512_137 = arith.constant 512 : index
    %430 = vector.load %arg9[%429, %c512_137] : memref<128x1024xf32, #tpu.memory_space<vmem>>, vector<8x512xf32>
    %cst_138 = arith.constant dense<0.000000e+00> : vector<8x512xf32>
    %431 = tpu.matmul %417, %15, %cst_138 {dimension_numbers = #tpu.dot_dimension_numbers<[1], [0], [0], [1], [0, 0, 1, 1], [], []>} : vector<8x128xf32>, vector<128x512xf32>, vector<8x512xf32> -> vector<8x512xf32>
    %432 = arith.addf %430, %431 : vector<8x512xf32>
    %433 = math.tanh %428 : vector<8x512xf32>
    %434 = vector.extract_strided_slice %433 {offsets = [0, 0], sizes = [8, 384], strides = [1, 1]} : vector<8x512xf32> to vector<8x384xf32>
    %cst_139 = arith.constant 5.000000e-01 : f32
    %435 = vector.broadcast %cst_139 : f32 to vector<8x384xf32>
    %436 = arith.mulf %435, %434 : vector<8x384xf32>
    %cst_140 = arith.constant 5.000000e-01 : f32
    %437 = vector.broadcast %cst_140 : f32 to vector<8x384xf32>
    %438 = arith.addf %436, %437 : vector<8x384xf32>
    %439 = vector.extract_strided_slice %438 {offsets = [0, 0], sizes = [8, 128], strides = [1, 1]} : vector<8x384xf32> to vector<8x128xf32>
    %440 = vector.extract_strided_slice %438 {offsets = [0, 128], sizes = [8, 128], strides = [1, 1]} : vector<8x384xf32> to vector<8x128xf32>
    %441 = vector.extract_strided_slice %438 {offsets = [0, 256], sizes = [8, 128], strides = [1, 1]} : vector<8x384xf32> to vector<8x128xf32>
    %442 = vector.extract_strided_slice %433 {offsets = [0, 384], sizes = [8, 128], strides = [1, 1]} : vector<8x512xf32> to vector<8x128xf32>
    %443 = arith.mulf %440, %400 : vector<8x128xf32>
    %444 = arith.mulf %439, %442 : vector<8x128xf32>
    %445 = arith.addf %443, %444 : vector<8x128xf32>
    %446 = math.tanh %445 : vector<8x128xf32>
    %447 = arith.mulf %441, %446 : vector<8x128xf32>
    %448 = math.tanh %432 : vector<8x512xf32>
    %449 = vector.extract_strided_slice %448 {offsets = [0, 0], sizes = [8, 384], strides = [1, 1]} : vector<8x512xf32> to vector<8x384xf32>
    %cst_141 = arith.constant 5.000000e-01 : f32
    %450 = vector.broadcast %cst_141 : f32 to vector<8x384xf32>
    %451 = arith.mulf %450, %449 : vector<8x384xf32>
    %cst_142 = arith.constant 5.000000e-01 : f32
    %452 = vector.broadcast %cst_142 : f32 to vector<8x384xf32>
    %453 = arith.addf %451, %452 : vector<8x384xf32>
    %454 = vector.extract_strided_slice %453 {offsets = [0, 0], sizes = [8, 128], strides = [1, 1]} : vector<8x384xf32> to vector<8x128xf32>
    %455 = vector.extract_strided_slice %453 {offsets = [0, 128], sizes = [8, 128], strides = [1, 1]} : vector<8x384xf32> to vector<8x128xf32>
    %456 = vector.extract_strided_slice %453 {offsets = [0, 256], sizes = [8, 128], strides = [1, 1]} : vector<8x384xf32> to vector<8x128xf32>
    %457 = vector.extract_strided_slice %448 {offsets = [0, 384], sizes = [8, 128], strides = [1, 1]} : vector<8x512xf32> to vector<8x128xf32>
    %458 = arith.mulf %455, %415 : vector<8x128xf32>
    %459 = arith.mulf %454, %457 : vector<8x128xf32>
    %460 = arith.addf %458, %459 : vector<8x128xf32>
    %461 = math.tanh %460 : vector<8x128xf32>
    %462 = arith.mulf %456, %461 : vector<8x128xf32>
    %463 = arith.index_cast %422 : i32 to index
    %c0_143 = arith.constant 0 : index
    %464 = vector.load %arg10[%463, %c0_143] : memref<128x256xf32, #tpu.memory_space<vmem>>, vector<8x128xf32>
    tpu.vector_store %arg10[%463, %c0_143], %447 {strides = array<i32>} : memref<128x256xf32, #tpu.memory_space<vmem>>, vector<8x128xf32>,
    %465 = arith.index_cast %424 : i32 to index
    %c128_144 = arith.constant 128 : index
    %466 = vector.load %arg10[%465, %c128_144] : memref<128x256xf32, #tpu.memory_space<vmem>>, vector<8x128xf32>
    tpu.vector_store %arg10[%465, %c128_144], %462 {strides = array<i32>} : memref<128x256xf32, #tpu.memory_space<vmem>>, vector<8x128xf32>,
    %c10_i32 = arith.constant 10 : i32
    %c8_i32_145 = arith.constant 8 : i32
    %467 = arith.muli %c10_i32, %c8_i32_145 : i32
    %c15_i32_146 = arith.constant 15 : i32
    %468 = arith.subi %c15_i32_146, %c10_i32 : i32
    %c8_i32_147 = arith.constant 8 : i32
    %469 = arith.muli %468, %c8_i32_147 : i32
    %470 = arith.index_cast %467 : i32 to index
    %c0_148 = arith.constant 0 : index
    %471 = vector.load %arg9[%470, %c0_148] : memref<128x1024xf32, #tpu.memory_space<vmem>>, vector<8x512xf32>
    %cst_149 = arith.constant dense<0.000000e+00> : vector<8x512xf32>
    %472 = tpu.matmul %447, %13, %cst_149 {dimension_numbers = #tpu.dot_dimension_numbers<[1], [0], [0], [1], [0, 0, 1, 1], [], []>} : vector<8x128xf32>, vector<128x512xf32>, vector<8x512xf32> -> vector<8x512xf32>
    %473 = arith.addf %471, %472 : vector<8x512xf32>
    %474 = arith.index_cast %469 : i32 to index
    %c512_150 = arith.constant 512 : index
    %475 = vector.load %arg9[%474, %c512_150] : memref<128x1024xf32, #tpu.memory_space<vmem>>, vector<8x512xf32>
    %cst_151 = arith.constant dense<0.000000e+00> : vector<8x512xf32>
    %476 = tpu.matmul %462, %15, %cst_151 {dimension_numbers = #tpu.dot_dimension_numbers<[1], [0], [0], [1], [0, 0, 1, 1], [], []>} : vector<8x128xf32>, vector<128x512xf32>, vector<8x512xf32> -> vector<8x512xf32>
    %477 = arith.addf %475, %476 : vector<8x512xf32>
    %478 = math.tanh %473 : vector<8x512xf32>
    %479 = vector.extract_strided_slice %478 {offsets = [0, 0], sizes = [8, 384], strides = [1, 1]} : vector<8x512xf32> to vector<8x384xf32>
    %cst_152 = arith.constant 5.000000e-01 : f32
    %480 = vector.broadcast %cst_152 : f32 to vector<8x384xf32>
    %481 = arith.mulf %480, %479 : vector<8x384xf32>
    %cst_153 = arith.constant 5.000000e-01 : f32
    %482 = vector.broadcast %cst_153 : f32 to vector<8x384xf32>
    %483 = arith.addf %481, %482 : vector<8x384xf32>
    %484 = vector.extract_strided_slice %483 {offsets = [0, 0], sizes = [8, 128], strides = [1, 1]} : vector<8x384xf32> to vector<8x128xf32>
    %485 = vector.extract_strided_slice %483 {offsets = [0, 128], sizes = [8, 128], strides = [1, 1]} : vector<8x384xf32> to vector<8x128xf32>
    %486 = vector.extract_strided_slice %483 {offsets = [0, 256], sizes = [8, 128], strides = [1, 1]} : vector<8x384xf32> to vector<8x128xf32>
    %487 = vector.extract_strided_slice %478 {offsets = [0, 384], sizes = [8, 128], strides = [1, 1]} : vector<8x512xf32> to vector<8x128xf32>
    %488 = arith.mulf %485, %445 : vector<8x128xf32>
    %489 = arith.mulf %484, %487 : vector<8x128xf32>
    %490 = arith.addf %488, %489 : vector<8x128xf32>
    %491 = math.tanh %490 : vector<8x128xf32>
    %492 = arith.mulf %486, %491 : vector<8x128xf32>
    %493 = math.tanh %477 : vector<8x512xf32>
    %494 = vector.extract_strided_slice %493 {offsets = [0, 0], sizes = [8, 384], strides = [1, 1]} : vector<8x512xf32> to vector<8x384xf32>
    %cst_154 = arith.constant 5.000000e-01 : f32
    %495 = vector.broadcast %cst_154 : f32 to vector<8x384xf32>
    %496 = arith.mulf %495, %494 : vector<8x384xf32>
    %cst_155 = arith.constant 5.000000e-01 : f32
    %497 = vector.broadcast %cst_155 : f32 to vector<8x384xf32>
    %498 = arith.addf %496, %497 : vector<8x384xf32>
    %499 = vector.extract_strided_slice %498 {offsets = [0, 0], sizes = [8, 128], strides = [1, 1]} : vector<8x384xf32> to vector<8x128xf32>
    %500 = vector.extract_strided_slice %498 {offsets = [0, 128], sizes = [8, 128], strides = [1, 1]} : vector<8x384xf32> to vector<8x128xf32>
    %501 = vector.extract_strided_slice %498 {offsets = [0, 256], sizes = [8, 128], strides = [1, 1]} : vector<8x384xf32> to vector<8x128xf32>
    %502 = vector.extract_strided_slice %493 {offsets = [0, 384], sizes = [8, 128], strides = [1, 1]} : vector<8x512xf32> to vector<8x128xf32>
    %503 = arith.mulf %500, %460 : vector<8x128xf32>
    %504 = arith.mulf %499, %502 : vector<8x128xf32>
    %505 = arith.addf %503, %504 : vector<8x128xf32>
    %506 = math.tanh %505 : vector<8x128xf32>
    %507 = arith.mulf %501, %506 : vector<8x128xf32>
    %508 = arith.index_cast %467 : i32 to index
    %c0_156 = arith.constant 0 : index
    %509 = vector.load %arg10[%508, %c0_156] : memref<128x256xf32, #tpu.memory_space<vmem>>, vector<8x128xf32>
    tpu.vector_store %arg10[%508, %c0_156], %492 {strides = array<i32>} : memref<128x256xf32, #tpu.memory_space<vmem>>, vector<8x128xf32>,
    %510 = arith.index_cast %469 : i32 to index
    %c128_157 = arith.constant 128 : index
    %511 = vector.load %arg10[%510, %c128_157] : memref<128x256xf32, #tpu.memory_space<vmem>>, vector<8x128xf32>
    tpu.vector_store %arg10[%510, %c128_157], %507 {strides = array<i32>} : memref<128x256xf32, #tpu.memory_space<vmem>>, vector<8x128xf32>,
    %c11_i32 = arith.constant 11 : i32
    %c8_i32_158 = arith.constant 8 : i32
    %512 = arith.muli %c11_i32, %c8_i32_158 : i32
    %c15_i32_159 = arith.constant 15 : i32
    %513 = arith.subi %c15_i32_159, %c11_i32 : i32
    %c8_i32_160 = arith.constant 8 : i32
    %514 = arith.muli %513, %c8_i32_160 : i32
    %515 = arith.index_cast %512 : i32 to index
    %c0_161 = arith.constant 0 : index
    %516 = vector.load %arg9[%515, %c0_161] : memref<128x1024xf32, #tpu.memory_space<vmem>>, vector<8x512xf32>
    %cst_162 = arith.constant dense<0.000000e+00> : vector<8x512xf32>
    %517 = tpu.matmul %492, %13, %cst_162 {dimension_numbers = #tpu.dot_dimension_numbers<[1], [0], [0], [1], [0, 0, 1, 1], [], []>} : vector<8x128xf32>, vector<128x512xf32>, vector<8x512xf32> -> vector<8x512xf32>
    %518 = arith.addf %516, %517 : vector<8x512xf32>
    %519 = arith.index_cast %514 : i32 to index
    %c512_163 = arith.constant 512 : index
    %520 = vector.load %arg9[%519, %c512_163] : memref<128x1024xf32, #tpu.memory_space<vmem>>, vector<8x512xf32>
    %cst_164 = arith.constant dense<0.000000e+00> : vector<8x512xf32>
    %521 = tpu.matmul %507, %15, %cst_164 {dimension_numbers = #tpu.dot_dimension_numbers<[1], [0], [0], [1], [0, 0, 1, 1], [], []>} : vector<8x128xf32>, vector<128x512xf32>, vector<8x512xf32> -> vector<8x512xf32>
    %522 = arith.addf %520, %521 : vector<8x512xf32>
    %523 = math.tanh %518 : vector<8x512xf32>
    %524 = vector.extract_strided_slice %523 {offsets = [0, 0], sizes = [8, 384], strides = [1, 1]} : vector<8x512xf32> to vector<8x384xf32>
    %cst_165 = arith.constant 5.000000e-01 : f32
    %525 = vector.broadcast %cst_165 : f32 to vector<8x384xf32>
    %526 = arith.mulf %525, %524 : vector<8x384xf32>
    %cst_166 = arith.constant 5.000000e-01 : f32
    %527 = vector.broadcast %cst_166 : f32 to vector<8x384xf32>
    %528 = arith.addf %526, %527 : vector<8x384xf32>
    %529 = vector.extract_strided_slice %528 {offsets = [0, 0], sizes = [8, 128], strides = [1, 1]} : vector<8x384xf32> to vector<8x128xf32>
    %530 = vector.extract_strided_slice %528 {offsets = [0, 128], sizes = [8, 128], strides = [1, 1]} : vector<8x384xf32> to vector<8x128xf32>
    %531 = vector.extract_strided_slice %528 {offsets = [0, 256], sizes = [8, 128], strides = [1, 1]} : vector<8x384xf32> to vector<8x128xf32>
    %532 = vector.extract_strided_slice %523 {offsets = [0, 384], sizes = [8, 128], strides = [1, 1]} : vector<8x512xf32> to vector<8x128xf32>
    %533 = arith.mulf %530, %490 : vector<8x128xf32>
    %534 = arith.mulf %529, %532 : vector<8x128xf32>
    %535 = arith.addf %533, %534 : vector<8x128xf32>
    %536 = math.tanh %535 : vector<8x128xf32>
    %537 = arith.mulf %531, %536 : vector<8x128xf32>
    %538 = math.tanh %522 : vector<8x512xf32>
    %539 = vector.extract_strided_slice %538 {offsets = [0, 0], sizes = [8, 384], strides = [1, 1]} : vector<8x512xf32> to vector<8x384xf32>
    %cst_167 = arith.constant 5.000000e-01 : f32
    %540 = vector.broadcast %cst_167 : f32 to vector<8x384xf32>
    %541 = arith.mulf %540, %539 : vector<8x384xf32>
    %cst_168 = arith.constant 5.000000e-01 : f32
    %542 = vector.broadcast %cst_168 : f32 to vector<8x384xf32>
    %543 = arith.addf %541, %542 : vector<8x384xf32>
    %544 = vector.extract_strided_slice %543 {offsets = [0, 0], sizes = [8, 128], strides = [1, 1]} : vector<8x384xf32> to vector<8x128xf32>
    %545 = vector.extract_strided_slice %543 {offsets = [0, 128], sizes = [8, 128], strides = [1, 1]} : vector<8x384xf32> to vector<8x128xf32>
    %546 = vector.extract_strided_slice %543 {offsets = [0, 256], sizes = [8, 128], strides = [1, 1]} : vector<8x384xf32> to vector<8x128xf32>
    %547 = vector.extract_strided_slice %538 {offsets = [0, 384], sizes = [8, 128], strides = [1, 1]} : vector<8x512xf32> to vector<8x128xf32>
    %548 = arith.mulf %545, %505 : vector<8x128xf32>
    %549 = arith.mulf %544, %547 : vector<8x128xf32>
    %550 = arith.addf %548, %549 : vector<8x128xf32>
    %551 = math.tanh %550 : vector<8x128xf32>
    %552 = arith.mulf %546, %551 : vector<8x128xf32>
    %553 = arith.index_cast %512 : i32 to index
    %c0_169 = arith.constant 0 : index
    %554 = vector.load %arg10[%553, %c0_169] : memref<128x256xf32, #tpu.memory_space<vmem>>, vector<8x128xf32>
    tpu.vector_store %arg10[%553, %c0_169], %537 {strides = array<i32>} : memref<128x256xf32, #tpu.memory_space<vmem>>, vector<8x128xf32>,
    %555 = arith.index_cast %514 : i32 to index
    %c128_170 = arith.constant 128 : index
    %556 = vector.load %arg10[%555, %c128_170] : memref<128x256xf32, #tpu.memory_space<vmem>>, vector<8x128xf32>
    tpu.vector_store %arg10[%555, %c128_170], %552 {strides = array<i32>} : memref<128x256xf32, #tpu.memory_space<vmem>>, vector<8x128xf32>,
    %c12_i32 = arith.constant 12 : i32
    %c8_i32_171 = arith.constant 8 : i32
    %557 = arith.muli %c12_i32, %c8_i32_171 : i32
    %c15_i32_172 = arith.constant 15 : i32
    %558 = arith.subi %c15_i32_172, %c12_i32 : i32
    %c8_i32_173 = arith.constant 8 : i32
    %559 = arith.muli %558, %c8_i32_173 : i32
    %560 = arith.index_cast %557 : i32 to index
    %c0_174 = arith.constant 0 : index
    %561 = vector.load %arg9[%560, %c0_174] : memref<128x1024xf32, #tpu.memory_space<vmem>>, vector<8x512xf32>
    %cst_175 = arith.constant dense<0.000000e+00> : vector<8x512xf32>
    %562 = tpu.matmul %537, %13, %cst_175 {dimension_numbers = #tpu.dot_dimension_numbers<[1], [0], [0], [1], [0, 0, 1, 1], [], []>} : vector<8x128xf32>, vector<128x512xf32>, vector<8x512xf32> -> vector<8x512xf32>
    %563 = arith.addf %561, %562 : vector<8x512xf32>
    %564 = arith.index_cast %559 : i32 to index
    %c512_176 = arith.constant 512 : index
    %565 = vector.load %arg9[%564, %c512_176] : memref<128x1024xf32, #tpu.memory_space<vmem>>, vector<8x512xf32>
    %cst_177 = arith.constant dense<0.000000e+00> : vector<8x512xf32>
    %566 = tpu.matmul %552, %15, %cst_177 {dimension_numbers = #tpu.dot_dimension_numbers<[1], [0], [0], [1], [0, 0, 1, 1], [], []>} : vector<8x128xf32>, vector<128x512xf32>, vector<8x512xf32> -> vector<8x512xf32>
    %567 = arith.addf %565, %566 : vector<8x512xf32>
    %568 = math.tanh %563 : vector<8x512xf32>
    %569 = vector.extract_strided_slice %568 {offsets = [0, 0], sizes = [8, 384], strides = [1, 1]} : vector<8x512xf32> to vector<8x384xf32>
    %cst_178 = arith.constant 5.000000e-01 : f32
    %570 = vector.broadcast %cst_178 : f32 to vector<8x384xf32>
    %571 = arith.mulf %570, %569 : vector<8x384xf32>
    %cst_179 = arith.constant 5.000000e-01 : f32
    %572 = vector.broadcast %cst_179 : f32 to vector<8x384xf32>
    %573 = arith.addf %571, %572 : vector<8x384xf32>
    %574 = vector.extract_strided_slice %573 {offsets = [0, 0], sizes = [8, 128], strides = [1, 1]} : vector<8x384xf32> to vector<8x128xf32>
    %575 = vector.extract_strided_slice %573 {offsets = [0, 128], sizes = [8, 128], strides = [1, 1]} : vector<8x384xf32> to vector<8x128xf32>
    %576 = vector.extract_strided_slice %573 {offsets = [0, 256], sizes = [8, 128], strides = [1, 1]} : vector<8x384xf32> to vector<8x128xf32>
    %577 = vector.extract_strided_slice %568 {offsets = [0, 384], sizes = [8, 128], strides = [1, 1]} : vector<8x512xf32> to vector<8x128xf32>
    %578 = arith.mulf %575, %535 : vector<8x128xf32>
    %579 = arith.mulf %574, %577 : vector<8x128xf32>
    %580 = arith.addf %578, %579 : vector<8x128xf32>
    %581 = math.tanh %580 : vector<8x128xf32>
    %582 = arith.mulf %576, %581 : vector<8x128xf32>
    %583 = math.tanh %567 : vector<8x512xf32>
    %584 = vector.extract_strided_slice %583 {offsets = [0, 0], sizes = [8, 384], strides = [1, 1]} : vector<8x512xf32> to vector<8x384xf32>
    %cst_180 = arith.constant 5.000000e-01 : f32
    %585 = vector.broadcast %cst_180 : f32 to vector<8x384xf32>
    %586 = arith.mulf %585, %584 : vector<8x384xf32>
    %cst_181 = arith.constant 5.000000e-01 : f32
    %587 = vector.broadcast %cst_181 : f32 to vector<8x384xf32>
    %588 = arith.addf %586, %587 : vector<8x384xf32>
    %589 = vector.extract_strided_slice %588 {offsets = [0, 0], sizes = [8, 128], strides = [1, 1]} : vector<8x384xf32> to vector<8x128xf32>
    %590 = vector.extract_strided_slice %588 {offsets = [0, 128], sizes = [8, 128], strides = [1, 1]} : vector<8x384xf32> to vector<8x128xf32>
    %591 = vector.extract_strided_slice %588 {offsets = [0, 256], sizes = [8, 128], strides = [1, 1]} : vector<8x384xf32> to vector<8x128xf32>
    %592 = vector.extract_strided_slice %583 {offsets = [0, 384], sizes = [8, 128], strides = [1, 1]} : vector<8x512xf32> to vector<8x128xf32>
    %593 = arith.mulf %590, %550 : vector<8x128xf32>
    %594 = arith.mulf %589, %592 : vector<8x128xf32>
    %595 = arith.addf %593, %594 : vector<8x128xf32>
    %596 = math.tanh %595 : vector<8x128xf32>
    %597 = arith.mulf %591, %596 : vector<8x128xf32>
    %598 = arith.index_cast %557 : i32 to index
    %c0_182 = arith.constant 0 : index
    %599 = vector.load %arg10[%598, %c0_182] : memref<128x256xf32, #tpu.memory_space<vmem>>, vector<8x128xf32>
    tpu.vector_store %arg10[%598, %c0_182], %582 {strides = array<i32>} : memref<128x256xf32, #tpu.memory_space<vmem>>, vector<8x128xf32>,
    %600 = arith.index_cast %559 : i32 to index
    %c128_183 = arith.constant 128 : index
    %601 = vector.load %arg10[%600, %c128_183] : memref<128x256xf32, #tpu.memory_space<vmem>>, vector<8x128xf32>
    tpu.vector_store %arg10[%600, %c128_183], %597 {strides = array<i32>} : memref<128x256xf32, #tpu.memory_space<vmem>>, vector<8x128xf32>,
    %c13_i32 = arith.constant 13 : i32
    %c8_i32_184 = arith.constant 8 : i32
    %602 = arith.muli %c13_i32, %c8_i32_184 : i32
    %c15_i32_185 = arith.constant 15 : i32
    %603 = arith.subi %c15_i32_185, %c13_i32 : i32
    %c8_i32_186 = arith.constant 8 : i32
    %604 = arith.muli %603, %c8_i32_186 : i32
    %605 = arith.index_cast %602 : i32 to index
    %c0_187 = arith.constant 0 : index
    %606 = vector.load %arg9[%605, %c0_187] : memref<128x1024xf32, #tpu.memory_space<vmem>>, vector<8x512xf32>
    %cst_188 = arith.constant dense<0.000000e+00> : vector<8x512xf32>
    %607 = tpu.matmul %582, %13, %cst_188 {dimension_numbers = #tpu.dot_dimension_numbers<[1], [0], [0], [1], [0, 0, 1, 1], [], []>} : vector<8x128xf32>, vector<128x512xf32>, vector<8x512xf32> -> vector<8x512xf32>
    %608 = arith.addf %606, %607 : vector<8x512xf32>
    %609 = arith.index_cast %604 : i32 to index
    %c512_189 = arith.constant 512 : index
    %610 = vector.load %arg9[%609, %c512_189] : memref<128x1024xf32, #tpu.memory_space<vmem>>, vector<8x512xf32>
    %cst_190 = arith.constant dense<0.000000e+00> : vector<8x512xf32>
    %611 = tpu.matmul %597, %15, %cst_190 {dimension_numbers = #tpu.dot_dimension_numbers<[1], [0], [0], [1], [0, 0, 1, 1], [], []>} : vector<8x128xf32>, vector<128x512xf32>, vector<8x512xf32> -> vector<8x512xf32>
    %612 = arith.addf %610, %611 : vector<8x512xf32>
    %613 = math.tanh %608 : vector<8x512xf32>
    %614 = vector.extract_strided_slice %613 {offsets = [0, 0], sizes = [8, 384], strides = [1, 1]} : vector<8x512xf32> to vector<8x384xf32>
    %cst_191 = arith.constant 5.000000e-01 : f32
    %615 = vector.broadcast %cst_191 : f32 to vector<8x384xf32>
    %616 = arith.mulf %615, %614 : vector<8x384xf32>
    %cst_192 = arith.constant 5.000000e-01 : f32
    %617 = vector.broadcast %cst_192 : f32 to vector<8x384xf32>
    %618 = arith.addf %616, %617 : vector<8x384xf32>
    %619 = vector.extract_strided_slice %618 {offsets = [0, 0], sizes = [8, 128], strides = [1, 1]} : vector<8x384xf32> to vector<8x128xf32>
    %620 = vector.extract_strided_slice %618 {offsets = [0, 128], sizes = [8, 128], strides = [1, 1]} : vector<8x384xf32> to vector<8x128xf32>
    %621 = vector.extract_strided_slice %618 {offsets = [0, 256], sizes = [8, 128], strides = [1, 1]} : vector<8x384xf32> to vector<8x128xf32>
    %622 = vector.extract_strided_slice %613 {offsets = [0, 384], sizes = [8, 128], strides = [1, 1]} : vector<8x512xf32> to vector<8x128xf32>
    %623 = arith.mulf %620, %580 : vector<8x128xf32>
    %624 = arith.mulf %619, %622 : vector<8x128xf32>
    %625 = arith.addf %623, %624 : vector<8x128xf32>
    %626 = math.tanh %625 : vector<8x128xf32>
    %627 = arith.mulf %621, %626 : vector<8x128xf32>
    %628 = math.tanh %612 : vector<8x512xf32>
    %629 = vector.extract_strided_slice %628 {offsets = [0, 0], sizes = [8, 384], strides = [1, 1]} : vector<8x512xf32> to vector<8x384xf32>
    %cst_193 = arith.constant 5.000000e-01 : f32
    %630 = vector.broadcast %cst_193 : f32 to vector<8x384xf32>
    %631 = arith.mulf %630, %629 : vector<8x384xf32>
    %cst_194 = arith.constant 5.000000e-01 : f32
    %632 = vector.broadcast %cst_194 : f32 to vector<8x384xf32>
    %633 = arith.addf %631, %632 : vector<8x384xf32>
    %634 = vector.extract_strided_slice %633 {offsets = [0, 0], sizes = [8, 128], strides = [1, 1]} : vector<8x384xf32> to vector<8x128xf32>
    %635 = vector.extract_strided_slice %633 {offsets = [0, 128], sizes = [8, 128], strides = [1, 1]} : vector<8x384xf32> to vector<8x128xf32>
    %636 = vector.extract_strided_slice %633 {offsets = [0, 256], sizes = [8, 128], strides = [1, 1]} : vector<8x384xf32> to vector<8x128xf32>
    %637 = vector.extract_strided_slice %628 {offsets = [0, 384], sizes = [8, 128], strides = [1, 1]} : vector<8x512xf32> to vector<8x128xf32>
    %638 = arith.mulf %635, %595 : vector<8x128xf32>
    %639 = arith.mulf %634, %637 : vector<8x128xf32>
    %640 = arith.addf %638, %639 : vector<8x128xf32>
    %641 = math.tanh %640 : vector<8x128xf32>
    %642 = arith.mulf %636, %641 : vector<8x128xf32>
    %643 = arith.index_cast %602 : i32 to index
    %c0_195 = arith.constant 0 : index
    %644 = vector.load %arg10[%643, %c0_195] : memref<128x256xf32, #tpu.memory_space<vmem>>, vector<8x128xf32>
    tpu.vector_store %arg10[%643, %c0_195], %627 {strides = array<i32>} : memref<128x256xf32, #tpu.memory_space<vmem>>, vector<8x128xf32>,
    %645 = arith.index_cast %604 : i32 to index
    %c128_196 = arith.constant 128 : index
    %646 = vector.load %arg10[%645, %c128_196] : memref<128x256xf32, #tpu.memory_space<vmem>>, vector<8x128xf32>
    tpu.vector_store %arg10[%645, %c128_196], %642 {strides = array<i32>} : memref<128x256xf32, #tpu.memory_space<vmem>>, vector<8x128xf32>,
    %c14_i32 = arith.constant 14 : i32
    %c8_i32_197 = arith.constant 8 : i32
    %647 = arith.muli %c14_i32, %c8_i32_197 : i32
    %c15_i32_198 = arith.constant 15 : i32
    %648 = arith.subi %c15_i32_198, %c14_i32 : i32
    %c8_i32_199 = arith.constant 8 : i32
    %649 = arith.muli %648, %c8_i32_199 : i32
    %650 = arith.index_cast %647 : i32 to index
    %c0_200 = arith.constant 0 : index
    %651 = vector.load %arg9[%650, %c0_200] : memref<128x1024xf32, #tpu.memory_space<vmem>>, vector<8x512xf32>
    %cst_201 = arith.constant dense<0.000000e+00> : vector<8x512xf32>
    %652 = tpu.matmul %627, %13, %cst_201 {dimension_numbers = #tpu.dot_dimension_numbers<[1], [0], [0], [1], [0, 0, 1, 1], [], []>} : vector<8x128xf32>, vector<128x512xf32>, vector<8x512xf32> -> vector<8x512xf32>
    %653 = arith.addf %651, %652 : vector<8x512xf32>
    %654 = arith.index_cast %649 : i32 to index
    %c512_202 = arith.constant 512 : index
    %655 = vector.load %arg9[%654, %c512_202] : memref<128x1024xf32, #tpu.memory_space<vmem>>, vector<8x512xf32>
    %cst_203 = arith.constant dense<0.000000e+00> : vector<8x512xf32>
    %656 = tpu.matmul %642, %15, %cst_203 {dimension_numbers = #tpu.dot_dimension_numbers<[1], [0], [0], [1], [0, 0, 1, 1], [], []>} : vector<8x128xf32>, vector<128x512xf32>, vector<8x512xf32> -> vector<8x512xf32>
    %657 = arith.addf %655, %656 : vector<8x512xf32>
    %658 = math.tanh %653 : vector<8x512xf32>
    %659 = vector.extract_strided_slice %658 {offsets = [0, 0], sizes = [8, 384], strides = [1, 1]} : vector<8x512xf32> to vector<8x384xf32>
    %cst_204 = arith.constant 5.000000e-01 : f32
    %660 = vector.broadcast %cst_204 : f32 to vector<8x384xf32>
    %661 = arith.mulf %660, %659 : vector<8x384xf32>
    %cst_205 = arith.constant 5.000000e-01 : f32
    %662 = vector.broadcast %cst_205 : f32 to vector<8x384xf32>
    %663 = arith.addf %661, %662 : vector<8x384xf32>
    %664 = vector.extract_strided_slice %663 {offsets = [0, 0], sizes = [8, 128], strides = [1, 1]} : vector<8x384xf32> to vector<8x128xf32>
    %665 = vector.extract_strided_slice %663 {offsets = [0, 128], sizes = [8, 128], strides = [1, 1]} : vector<8x384xf32> to vector<8x128xf32>
    %666 = vector.extract_strided_slice %663 {offsets = [0, 256], sizes = [8, 128], strides = [1, 1]} : vector<8x384xf32> to vector<8x128xf32>
    %667 = vector.extract_strided_slice %658 {offsets = [0, 384], sizes = [8, 128], strides = [1, 1]} : vector<8x512xf32> to vector<8x128xf32>
    %668 = arith.mulf %665, %625 : vector<8x128xf32>
    %669 = arith.mulf %664, %667 : vector<8x128xf32>
    %670 = arith.addf %668, %669 : vector<8x128xf32>
    %671 = math.tanh %670 : vector<8x128xf32>
    %672 = arith.mulf %666, %671 : vector<8x128xf32>
    %673 = math.tanh %657 : vector<8x512xf32>
    %674 = vector.extract_strided_slice %673 {offsets = [0, 0], sizes = [8, 384], strides = [1, 1]} : vector<8x512xf32> to vector<8x384xf32>
    %cst_206 = arith.constant 5.000000e-01 : f32
    %675 = vector.broadcast %cst_206 : f32 to vector<8x384xf32>
    %676 = arith.mulf %675, %674 : vector<8x384xf32>
    %cst_207 = arith.constant 5.000000e-01 : f32
    %677 = vector.broadcast %cst_207 : f32 to vector<8x384xf32>
    %678 = arith.addf %676, %677 : vector<8x384xf32>
    %679 = vector.extract_strided_slice %678 {offsets = [0, 0], sizes = [8, 128], strides = [1, 1]} : vector<8x384xf32> to vector<8x128xf32>
    %680 = vector.extract_strided_slice %678 {offsets = [0, 128], sizes = [8, 128], strides = [1, 1]} : vector<8x384xf32> to vector<8x128xf32>
    %681 = vector.extract_strided_slice %678 {offsets = [0, 256], sizes = [8, 128], strides = [1, 1]} : vector<8x384xf32> to vector<8x128xf32>
    %682 = vector.extract_strided_slice %673 {offsets = [0, 384], sizes = [8, 128], strides = [1, 1]} : vector<8x512xf32> to vector<8x128xf32>
    %683 = arith.mulf %680, %640 : vector<8x128xf32>
    %684 = arith.mulf %679, %682 : vector<8x128xf32>
    %685 = arith.addf %683, %684 : vector<8x128xf32>
    %686 = math.tanh %685 : vector<8x128xf32>
    %687 = arith.mulf %681, %686 : vector<8x128xf32>
    %688 = arith.index_cast %647 : i32 to index
    %c0_208 = arith.constant 0 : index
    %689 = vector.load %arg10[%688, %c0_208] : memref<128x256xf32, #tpu.memory_space<vmem>>, vector<8x128xf32>
    tpu.vector_store %arg10[%688, %c0_208], %672 {strides = array<i32>} : memref<128x256xf32, #tpu.memory_space<vmem>>, vector<8x128xf32>,
    %690 = arith.index_cast %649 : i32 to index
    %c128_209 = arith.constant 128 : index
    %691 = vector.load %arg10[%690, %c128_209] : memref<128x256xf32, #tpu.memory_space<vmem>>, vector<8x128xf32>
    tpu.vector_store %arg10[%690, %c128_209], %687 {strides = array<i32>} : memref<128x256xf32, #tpu.memory_space<vmem>>, vector<8x128xf32>,
    %c15_i32_210 = arith.constant 15 : i32
    %c8_i32_211 = arith.constant 8 : i32
    %692 = arith.muli %c15_i32_210, %c8_i32_211 : i32
    %c15_i32_212 = arith.constant 15 : i32
    %693 = arith.subi %c15_i32_212, %c15_i32_210 : i32
    %c8_i32_213 = arith.constant 8 : i32
    %694 = arith.muli %693, %c8_i32_213 : i32
    %695 = arith.index_cast %692 : i32 to index
    %c0_214 = arith.constant 0 : index
    %696 = vector.load %arg9[%695, %c0_214] : memref<128x1024xf32, #tpu.memory_space<vmem>>, vector<8x512xf32>
    %cst_215 = arith.constant dense<0.000000e+00> : vector<8x512xf32>
    %697 = tpu.matmul %672, %13, %cst_215 {dimension_numbers = #tpu.dot_dimension_numbers<[1], [0], [0], [1], [0, 0, 1, 1], [], []>} : vector<8x128xf32>, vector<128x512xf32>, vector<8x512xf32> -> vector<8x512xf32>
    %698 = arith.addf %696, %697 : vector<8x512xf32>
    %699 = arith.index_cast %694 : i32 to index
    %c512_216 = arith.constant 512 : index
    %700 = vector.load %arg9[%699, %c512_216] : memref<128x1024xf32, #tpu.memory_space<vmem>>, vector<8x512xf32>
    %cst_217 = arith.constant dense<0.000000e+00> : vector<8x512xf32>
    %701 = tpu.matmul %687, %15, %cst_217 {dimension_numbers = #tpu.dot_dimension_numbers<[1], [0], [0], [1], [0, 0, 1, 1], [], []>} : vector<8x128xf32>, vector<128x512xf32>, vector<8x512xf32> -> vector<8x512xf32>
    %702 = arith.addf %700, %701 : vector<8x512xf32>
    %703 = math.tanh %698 : vector<8x512xf32>
    %704 = vector.extract_strided_slice %703 {offsets = [0, 0], sizes = [8, 384], strides = [1, 1]} : vector<8x512xf32> to vector<8x384xf32>
    %cst_218 = arith.constant 5.000000e-01 : f32
    %705 = vector.broadcast %cst_218 : f32 to vector<8x384xf32>
    %706 = arith.mulf %705, %704 : vector<8x384xf32>
    %cst_219 = arith.constant 5.000000e-01 : f32
    %707 = vector.broadcast %cst_219 : f32 to vector<8x384xf32>
    %708 = arith.addf %706, %707 : vector<8x384xf32>
    %709 = vector.extract_strided_slice %708 {offsets = [0, 0], sizes = [8, 128], strides = [1, 1]} : vector<8x384xf32> to vector<8x128xf32>
    %710 = vector.extract_strided_slice %708 {offsets = [0, 128], sizes = [8, 128], strides = [1, 1]} : vector<8x384xf32> to vector<8x128xf32>
    %711 = vector.extract_strided_slice %708 {offsets = [0, 256], sizes = [8, 128], strides = [1, 1]} : vector<8x384xf32> to vector<8x128xf32>
    %712 = vector.extract_strided_slice %703 {offsets = [0, 384], sizes = [8, 128], strides = [1, 1]} : vector<8x512xf32> to vector<8x128xf32>
    %713 = arith.mulf %710, %670 : vector<8x128xf32>
    %714 = arith.mulf %709, %712 : vector<8x128xf32>
    %715 = arith.addf %713, %714 : vector<8x128xf32>
    %716 = math.tanh %715 : vector<8x128xf32>
    %717 = arith.mulf %711, %716 : vector<8x128xf32>
    %718 = math.tanh %702 : vector<8x512xf32>
    %719 = vector.extract_strided_slice %718 {offsets = [0, 0], sizes = [8, 384], strides = [1, 1]} : vector<8x512xf32> to vector<8x384xf32>
    %cst_220 = arith.constant 5.000000e-01 : f32
    %720 = vector.broadcast %cst_220 : f32 to vector<8x384xf32>
    %721 = arith.mulf %720, %719 : vector<8x384xf32>
    %cst_221 = arith.constant 5.000000e-01 : f32
    %722 = vector.broadcast %cst_221 : f32 to vector<8x384xf32>
    %723 = arith.addf %721, %722 : vector<8x384xf32>
    %724 = vector.extract_strided_slice %723 {offsets = [0, 0], sizes = [8, 128], strides = [1, 1]} : vector<8x384xf32> to vector<8x128xf32>
    %725 = vector.extract_strided_slice %723 {offsets = [0, 128], sizes = [8, 128], strides = [1, 1]} : vector<8x384xf32> to vector<8x128xf32>
    %726 = vector.extract_strided_slice %723 {offsets = [0, 256], sizes = [8, 128], strides = [1, 1]} : vector<8x384xf32> to vector<8x128xf32>
    %727 = vector.extract_strided_slice %718 {offsets = [0, 384], sizes = [8, 128], strides = [1, 1]} : vector<8x512xf32> to vector<8x128xf32>
    %728 = arith.mulf %725, %685 : vector<8x128xf32>
    %729 = arith.mulf %724, %727 : vector<8x128xf32>
    %730 = arith.addf %728, %729 : vector<8x128xf32>
    %731 = math.tanh %730 : vector<8x128xf32>
    %732 = arith.mulf %726, %731 : vector<8x128xf32>
    %733 = arith.index_cast %692 : i32 to index
    %c0_222 = arith.constant 0 : index
    %734 = vector.load %arg10[%733, %c0_222] : memref<128x256xf32, #tpu.memory_space<vmem>>, vector<8x128xf32>
    tpu.vector_store %arg10[%733, %c0_222], %717 {strides = array<i32>} : memref<128x256xf32, #tpu.memory_space<vmem>>, vector<8x128xf32>,
    %735 = arith.index_cast %694 : i32 to index
    %c128_223 = arith.constant 128 : index
    %736 = vector.load %arg10[%735, %c128_223] : memref<128x256xf32, #tpu.memory_space<vmem>>, vector<8x128xf32>
    tpu.vector_store %arg10[%735, %c128_223], %732 {strides = array<i32>} : memref<128x256xf32, #tpu.memory_space<vmem>>, vector<8x128xf32>,
    %c16_i32 = arith.constant 16 : i32
    %c2_i32_224 = arith.constant 2 : i32
    %737 = arith.cmpi eq, %arg0, %c2_i32_224 : i32
    %738 = arith.extui %737 : i1 to i32
    %c0_i32_225 = arith.constant 0 : i32
    %739 = arith.cmpi ne, %738, %c0_i32_225 : i32
    scf.if %739 {
      %c120 = arith.constant 120 : index
      %c0_226 = arith.constant 0 : index
      %740 = vector.load %arg10[%c120, %c0_226] : memref<128x256xf32, #tpu.memory_space<vmem>>, vector<8x256xf32>
      %c0_227 = arith.constant 0 : index
      %c0_228 = arith.constant 0 : index
      %741 = vector.load %arg6[%c0_227, %c0_228] : memref<256x1xf32, #tpu.memory_space<vmem>>, vector<256x1xf32>
      %cst_229 = arith.constant dense<0.000000e+00> : vector<8x1xf32>
      %742 = tpu.matmul %740, %741, %cst_229 {dimension_numbers = #tpu.dot_dimension_numbers<[1], [0], [0], [1], [0, 0, 1, 1], [], []>} : vector<8x256xf32>, vector<256x1xf32>, vector<8x1xf32> -> vector<8x1xf32>
      %c0_230 = arith.constant 0 : index
      %c0_231 = arith.constant 0 : index
      %743 = vector.load %arg7[%c0_230, %c0_231] : memref<1x1xf32, #tpu.memory_space<vmem>>, vector<1x1xf32>
      %744 = vector.broadcast %743 : vector<1x1xf32> to vector<8x1xf32>
      %745 = arith.addf %742, %744 : vector<8x1xf32>
      %c0_232 = arith.constant 0 : index
      %c0_233 = arith.constant 0 : index
      %746 = vector.load %arg8[%c0_232, %c0_233] : memref<8x1xf32, #tpu.memory_space<vmem>>, vector<8x1xf32>
      tpu.vector_store %arg8[%c0_232, %c0_233], %745 {strides = array<i32>} : memref<8x1xf32, #tpu.memory_space<vmem>>, vector<8x1xf32>,
    } else {
    }
    return
  }
  func.func @transform_0(%arg0: i32) -> (i32, i32) {
    %c0_i32 = arith.constant 0 : i32
    %c0_i32_0 = arith.constant 0 : i32
    %c0_i32_1 = arith.constant 0 : i32
    return %c0_i32, %c0_i32_0 : i32, i32
  }
  func.func @transform_1(%arg0: i32) -> (i32, i32, i32) {
    %c0_i32 = arith.constant 0 : i32
    %c0_i32_0 = arith.constant 0 : i32
    %c0_i32_1 = arith.constant 0 : i32
    return %arg0, %c0_i32, %c0_i32_0 : i32, i32, i32
  }
  func.func @transform_2(%arg0: i32) -> (i32, i32, i32) {
    %c0_i32 = arith.constant 0 : i32
    %c0_i32_0 = arith.constant 0 : i32
    %c0_i32_1 = arith.constant 0 : i32
    return %arg0, %c0_i32, %c0_i32_0 : i32, i32, i32
  }
  func.func @transform_3(%arg0: i32) -> (i32, i32, i32) {
    %c0_i32 = arith.constant 0 : i32
    %c0_i32_0 = arith.constant 0 : i32
    %c0_i32_1 = arith.constant 0 : i32
    return %arg0, %c0_i32, %c0_i32_0 : i32, i32, i32
  }
  func.func @transform_4(%arg0: i32) -> (i32, i32, i32) {
    %c0_i32 = arith.constant 0 : i32
    %c0_i32_0 = arith.constant 0 : i32
    %c0_i32_1 = arith.constant 0 : i32
    return %arg0, %c0_i32, %c0_i32_0 : i32, i32, i32
  }
  func.func @transform_5(%arg0: i32) -> (i32, i32) {
    %c0_i32 = arith.constant 0 : i32
    %c0_i32_0 = arith.constant 0 : i32
    %c0_i32_1 = arith.constant 0 : i32
    return %c0_i32, %c0_i32_0 : i32, i32
  }
  func.func @transform_6(%arg0: i32) -> (i32, i32) {
    %c0_i32 = arith.constant 0 : i32
    %c0_i32_0 = arith.constant 0 : i32
    %c0_i32_1 = arith.constant 0 : i32
    return %c0_i32, %c0_i32_0 : i32, i32
  }
  func.func @transform_7(%arg0: i32) -> (i32, i32) {
    %c0_i32 = arith.constant 0 : i32
    %c0_i32_0 = arith.constant 0 : i32
    %c0_i32_1 = arith.constant 0 : i32
    return %c0_i32, %c0_i32_0 : i32, i32
  }
}

</mosaic_0001>

<llo_original>
// kernel: tpu_custom_call.1
$region0: #{tpu_custom_call.1}
  #allocation0 [shape = 'u32[]', space=smem, size = 0x4, offset = 0x4, fixed_abs, tag = 'smem constant byte address 0x4 - core index']
  #allocation1 [shape = 'u32[144,128]{1,0:T(1,128)}', space=vmem, size = 0x12000, scoped, tag = 'internal scratch']
  #allocation2 [shape = 'f32[128,1024]{1,0:T(8,128)}', space=vmem, size = 0x80000, scoped, tag = 'scratch operand']
  #allocation3 [shape = 'f32[128,256]{1,0:T(8,128)}', space=vmem, size = 0x20000, scoped, tag = 'scratch operand']
  #allocation4 [shape = 'f32[1,1]{1,0:T(1,128)S(1)}', space=vmem, size = 0x200, scoped, tag = 'scoped memory for tpu_custom_call.1']
  %s0 = inlined_call_operand.hbm [shape: f32[128,256], index: 0, kind: input, shape index: {}]
  %s1 = inlined_call_operand.hbm [shape: f32[3,256,1024], index: 1, kind: input, shape index: {}]
  %s2 = inlined_call_operand.hbm [shape: f32[3,128,512], index: 2, kind: input, shape index: {}]
  %s3 = inlined_call_operand.hbm [shape: f32[3,128,512], index: 3, kind: input, shape index: {}]
  %s4 = inlined_call_operand.hbm [shape: f32[3,1,1024], index: 4, kind: input, shape index: {}]
  %s5 = inlined_call_operand.vmem [shape: f32[256,1], index: 5, kind: input, shape index: {}]
  %s6 = inlined_call_operand.<no memory space> [shape: f32[1,1], index: 6, kind: input, shape index: {}]
  %s7 = inlined_call_operand.vmem [shape: f32[8,1], index: 7, kind: output, shape index: {}]
  %s8 = sld [smem:[#allocation0]]
  $region89: #{tpu_custom_call.1} parent=0
    _
  %s10 = ssub.s32 1, %s8
  %s11 = scalar_select 0, %s10, %s8
  %v12 = vstv %s6
  %13 = vst [vmem:[#allocation4] sm:$0x1] %v12
  $region1: #{tpu_custom_call.1} parent=0
    #allocation5 [shape = 'u8[131072]{0}', space=vmem, size = 0x20000, scoped, tag = 'input window, operand 0, single buffered']
    #allocation6 [shape = 's32[2]{0}', space=sflag, size = 0x8, scoped, tag = 'scoped memory for tpu_custom_call.1']
    #allocation7 [shape = 'u8[2097152]{0}', space=vmem, size = 0x200000, scoped, tag = 'input window, operand 1']
    #allocation8 [shape = 's32[2]{0}', space=sflag, size = 0x8, scoped, tag = 'scoped memory for tpu_custom_call.1']
    #allocation9 [shape = 'u8[524288]{0}', space=vmem, size = 0x80000, scoped, tag = 'input window, operand 2']
    #allocation10 [shape = 'u8[524288]{0}', space=vmem, size = 0x80000, scoped, tag = 'input window, operand 3']
    #allocation11 [shape = 's32[2]{0}', space=sflag, size = 0x8, scoped, tag = 'scoped memory for tpu_custom_call.1']
    #allocation12 [shape = 'u8[8192]{0}', space=vmem, size = 0x2000, scoped, tag = 'input window, operand 4']
    %14 = vsyncpa [#allocation6], 0
    %15 = vsyncpa [#allocation8], 0
    %s16 = scalar_lea.sflag [#allocation8], 1
    %17 = vsyncpa %s16, 0
    %18 = vsyncpa [#allocation11], 0
    %s19 = scalar_lea.sflag [#allocation11], 1
    %20 = vsyncpa %s19, 0
    loop: start=0, step=1, limit=5
    $region2: #{tpu_custom_call.1} parent=1 // loop_pre_header
      _
    $region3: #{tpu_custom_call.1} parent=1 // loop_header
      %s22 = sphi 0, %s26
      %p23 = scmp.ge.s32.totalorder %s22, 5
      %s30 = sphi 0, %s30
      %s32 = sphi 0, %s30
      %s33 = sphi 0, %s32
      %s47 = sphi 0, %s33
      %s53 = sphi 0, %s55
      %s56 = sphi 0, %s53
      %s57 = sphi 0, %s56
      %s73 = sphi 0, %s57
      %s79 = sphi 0, %s81
      %s82 = sphi 0, %s79
      %s83 = sphi 0, %s82
      %s99 = sphi 0, %s83
      %s105 = sphi 0, %s107
      %s108 = sphi 0, %s105
      %s109 = sphi 0, %s108
      %s125 = sphi 0, %s109
      %s131 = sphi 0, %s133
      %s134 = sphi 0, %s131
      %s135 = sphi 0, %s134
      %s151 = sphi 0, %s135
      %s155 = sphi 0, %s155
      %s157 = sphi 0, %s155
      %s158 = sphi 0, %s157
      %s172 = sphi 0, %s158
      %s176 = sphi 0, %s176
      %s178 = sphi 0, %s176
      %s179 = sphi 0, %s178
      %s193 = sphi 0, %s179
      %s197 = sphi 0, %s197
      %s199 = sphi 0, %s197
      %s200 = sphi 0, %s199
      %s214 = sphi 0, %s200
    $region4: #{tpu_custom_call.1} parent=1 // loop_header_branch
      %25 = sbr.rel (%p23) target = $region8
    $region5: #{tpu_custom_call.1} parent=1 // loop_body
      %s27 = ssub.s32 %s22, 1
      %s28 = ssub.s32 %s22, 2
      %s29 = sadd.s32 %s22, 1
      %s31 = sadd.s32 %s30, 1
      %p34 = scmp.eq.s32.totalorder %s22, 2
      %p35 = scmp.ne.s32.totalorder %s30, %s32
      %p36 = scmp.eq.s32.totalorder %s22, 0
      %p37 = por %p35, %p36
      %p38 = scmp.ne.s32.totalorder %s30, %s32
      %p39 = scmp.eq.s32.totalorder %s27, 2
      %p40 = por %p38, %p39
      %p41 = scmp.ne.s32.totalorder %s32, %s33
      %p42 = scmp.eq.s32.totalorder %s27, 0
      %p43 = por %p41, %p42
      %p44 = scmp.ne.s32.totalorder %s32, %s33
      %p45 = scmp.eq.s32.totalorder %s28, 2
      %p46 = por %p44, %p45
      %p48 = scmp.ne.s32.totalorder %s33, %s47
      %p49 = scmp.eq.s32.totalorder %s28, 0
      %p50 = por %p48, %p49
      %s51 = ssub.s32 %s22, %s29
      %p52 = scmp.eq.s32.totalorder %s51, 0
      %s54 = sadd.s32 %s53, 1
      %s55 = scalar_select %p52, %s53, %s54
      %p58 = pneg %p52
      %p59 = scmp.eq.s32.totalorder %s22, 2
      %p60 = por %p58, %p59
      %p61 = scmp.ne.s32.totalorder %s53, %s56
      %p62 = scmp.eq.s32.totalorder %s22, 0
      %p63 = por %p61, %p62
      %p64 = scmp.ne.s32.totalorder %s53, %s56
      %p65 = scmp.eq.s32.totalorder %s27, 2
      %p66 = por %p64, %p65
      %p67 = scmp.ne.s32.totalorder %s56, %s57
      %p68 = scmp.eq.s32.totalorder %s27, 0
      %p69 = por %p67, %p68
      %p70 = scmp.ne.s32.totalorder %s56, %s57
      %p71 = scmp.eq.s32.totalorder %s28, 2
      %p72 = por %p70, %p71
      %p74 = scmp.ne.s32.totalorder %s57, %s73
      %p75 = scmp.eq.s32.totalorder %s28, 0
      %p76 = por %p74, %p75
      %s77 = ssub.s32 %s22, %s29
      %p78 = scmp.eq.s32.totalorder %s77, 0
      %s80 = sadd.s32 %s79, 1
      %s81 = scalar_select %p78, %s79, %s80
      %p84 = pneg %p78
      %p85 = scmp.eq.s32.totalorder %s22, 2
      %p86 = por %p84, %p85
      %p87 = scmp.ne.s32.totalorder %s79, %s82
      %p88 = scmp.eq.s32.totalorder %s22, 0
      %p89 = por %p87, %p88
      %p90 = scmp.ne.s32.totalorder %s79, %s82
      %p91 = scmp.eq.s32.totalorder %s27, 2
      %p92 = por %p90, %p91
      %p93 = scmp.ne.s32.totalorder %s82, %s83
      %p94 = scmp.eq.s32.totalorder %s27, 0
      %p95 = por %p93, %p94
      %p96 = scmp.ne.s32.totalorder %s82, %s83
      %p97 = scmp.eq.s32.totalorder %s28, 2
      %p98 = por %p96, %p97
      %p100 = scmp.ne.s32.totalorder %s83, %s99
      %p101 = scmp.eq.s32.totalorder %s28, 0
      %p102 = por %p100, %p101
      %s103 = ssub.s32 %s22, %s29
      %p104 = scmp.eq.s32.totalorder %s103, 0
      %s106 = sadd.s32 %s105, 1
      %s107 = scalar_select %p104, %s105, %s106
      %p110 = pneg %p104
      %p111 = scmp.eq.s32.totalorder %s22, 2
      %p112 = por %p110, %p111
      %p113 = scmp.ne.s32.totalorder %s105, %s108
      %p114 = scmp.eq.s32.totalorder %s22, 0
      %p115 = por %p113, %p114
      %p116 = scmp.ne.s32.totalorder %s105, %s108
      %p117 = scmp.eq.s32.totalorder %s27, 2
      %p118 = por %p116, %p117
      %p119 = scmp.ne.s32.totalorder %s108, %s109
      %p120 = scmp.eq.s32.totalorder %s27, 0
      %p121 = por %p119, %p120
      %p122 = scmp.ne.s32.totalorder %s108, %s109
      %p123 = scmp.eq.s32.totalorder %s28, 2
      %p124 = por %p122, %p123
      %p126 = scmp.ne.s32.totalorder %s109, %s125
      %p127 = scmp.eq.s32.totalorder %s28, 0
      %p128 = por %p126, %p127
      %s129 = ssub.s32 %s22, %s29
      %p130 = scmp.eq.s32.totalorder %s129, 0
      %s132 = sadd.s32 %s131, 1
      %s133 = scalar_select %p130, %s131, %s132
      %p136 = pneg %p130
      %p137 = scmp.eq.s32.totalorder %s22, 2
      %p138 = por %p136, %p137
      %p139 = scmp.ne.s32.totalorder %s131, %s134
      %p140 = scmp.eq.s32.totalorder %s22, 0
      %p141 = por %p139, %p140
      %p142 = scmp.ne.s32.totalorder %s131, %s134
      %p143 = scmp.eq.s32.totalorder %s27, 2
      %p144 = por %p142, %p143
      %p145 = scmp.ne.s32.totalorder %s134, %s135
      %p146 = scmp.eq.s32.totalorder %s27, 0
      %p147 = por %p145, %p146
      %p148 = scmp.ne.s32.totalorder %s134, %s135
      %p149 = scmp.eq.s32.totalorder %s28, 2
      %p150 = por %p148, %p149
      %p152 = scmp.ne.s32.totalorder %s135, %s151
      %p153 = scmp.eq.s32.totalorder %s28, 0
      %p154 = por %p152, %p153
      %s156 = sadd.s32 %s155, 1
      %p159 = scmp.eq.s32.totalorder %s22, 2
      %p160 = scmp.ne.s32.totalorder %s155, %s157
      %p161 = scmp.eq.s32.totalorder %s22, 0
      %p162 = por %p160, %p161
      %p163 = scmp.ne.s32.totalorder %s155, %s157
      %p164 = scmp.eq.s32.totalorder %s27, 2
      %p165 = por %p163, %p164
      %p166 = scmp.ne.s32.totalorder %s157, %s158
      %p167 = scmp.eq.s32.totalorder %s27, 0
      %p168 = por %p166, %p167
      %p169 = scmp.ne.s32.totalorder %s157, %s158
      %p170 = scmp.eq.s32.totalorder %s28, 2
      %p171 = por %p169, %p170
      %p173 = scmp.ne.s32.totalorder %s158, %s172
      %p174 = scmp.eq.s32.totalorder %s28, 0
      %p175 = por %p173, %p174
      %s177 = sadd.s32 %s176, 1
      %p180 = scmp.eq.s32.totalorder %s22, 2
      %p181 = scmp.ne.s32.totalorder %s176, %s178
      %p182 = scmp.eq.s32.totalorder %s22, 0
      %p183 = por %p181, %p182
      %p184 = scmp.ne.s32.totalorder %s176, %s178
      %p185 = scmp.eq.s32.totalorder %s27, 2
      %p186 = por %p184, %p185
      %p187 = scmp.ne.s32.totalorder %s178, %s179
      %p188 = scmp.eq.s32.totalorder %s27, 0
      %p189 = por %p187, %p188
      %p190 = scmp.ne.s32.totalorder %s178, %s179
      %p191 = scmp.eq.s32.totalorder %s28, 2
      %p192 = por %p190, %p191
      %p194 = scmp.ne.s32.totalorder %s179, %s193
      %p195 = scmp.eq.s32.totalorder %s28, 0
      %p196 = por %p194, %p195
      %s198 = sadd.s32 %s197, 1
      %p201 = scmp.eq.s32.totalorder %s22, 2
      %p202 = scmp.ne.s32.totalorder %s197, %s199
      %p203 = scmp.eq.s32.totalorder %s22, 0
      %p204 = por %p202, %p203
      %p205 = scmp.ne.s32.totalorder %s197, %s199
      %p206 = scmp.eq.s32.totalorder %s27, 2
      %p207 = por %p205, %p206
      %p208 = scmp.ne.s32.totalorder %s199, %s200
      %p209 = scmp.eq.s32.totalorder %s27, 0
      %p210 = por %p208, %p209
      %p211 = scmp.ne.s32.totalorder %s199, %s200
      %p212 = scmp.eq.s32.totalorder %s28, 2
      %p213 = por %p211, %p212
      %p215 = scmp.ne.s32.totalorder %s200, %s214
      %p216 = scmp.eq.s32.totalorder %s28, 0
      %p217 = por %p215, %p216
      %p218 = scmp.le.s32.totalorder 1, %s22
      %p219 = scmp.lt.s32.totalorder %s22, 4
      %p220 = pnand %p218, %p219
      %p221 = pneg %p220
      // Predicated region
      $region9: #{tpu_custom_call.1} parent=5 // pred_check
        _
      $region10: #{tpu_custom_call.1} parent=5 // pred_check_branch
        %223 = sbr.rel (%p220) target = $region12
      $region11: #{tpu_custom_call.1} parent=5 // pred_region
        %s224 = ssub.s32 %s22, 1
        // Predicated region
        $region13: #{tpu_custom_call.1} parent=11 // pred_check
          %p225 = pneg %p43
        $region14: #{tpu_custom_call.1} parent=11 // pred_check_branch
          %227 = sbr.rel (%p225) target = $region16
        $region15: #{tpu_custom_call.1} parent=11 // pred_region
          %s229 = ssub.s32 4096, 4096
          %230 = vsyncadd [#allocation6], %s229
          %s231 = sshll.u32 [#allocation5], 4
          %s232 = int_to_ptr.vmem [resolvable:$true] %s231
          %237 = dma.hbm_to_vmem [thread:$0]  %s0, 4096, %s232, [#allocation6], 256, 256, 16
        $region16: #{tpu_custom_call.1} parent=11 // pred_fallthru
          _
        // Predicated region
        $region17: #{tpu_custom_call.1} parent=11 // pred_check
          %p238 = pneg %p168
        $region18: #{tpu_custom_call.1} parent=11 // pred_check_branch
          %240 = sbr.rel (%p238) target = $region20
        $region19: #{tpu_custom_call.1} parent=11 // pred_region
          _
        $region20: #{tpu_custom_call.1} parent=11 // pred_fallthru
          _
        // Predicated region
        $region21: #{tpu_custom_call.1} parent=11 // pred_check
          %p241 = pneg %p189
        $region22: #{tpu_custom_call.1} parent=11 // pred_check_branch
          %243 = sbr.rel (%p241) target = $region24
        $region23: #{tpu_custom_call.1} parent=11 // pred_region
          _
        $region24: #{tpu_custom_call.1} parent=11 // pred_fallthru
          _
      $region12: #{tpu_custom_call.1} parent=5 // pred_fallthru
        _
      %p244 = scmp.lt.s32.totalorder %s22, 3
      // Predicated region
      $region25: #{tpu_custom_call.1} parent=5 // pred_check
        %p245 = pneg %p244
      $region26: #{tpu_custom_call.1} parent=5 // pred_check_branch
        %247 = sbr.rel (%p245) target = $region28
      $region27: #{tpu_custom_call.1} parent=5 // pred_region
        // Predicated region
        $region29: #{tpu_custom_call.1} parent=27 // pred_check
          %p248 = pneg %p63
        $region30: #{tpu_custom_call.1} parent=27 // pred_check_branch
          %250 = sbr.rel (%p248) target = $region32
        $region31: #{tpu_custom_call.1} parent=27 // pred_region
          %s251 = sand.u32 %s22, 1
          %s252 = scalar_lea.sflag [#allocation8], %s251
          %s253 = sand.u32 %s53, 1
          %s254 = smul.addr %s253, 2048
          %s255 = scalar_lea.vmem [#allocation7], %s254
          %s257 = ssub.s32 32768, 32768
          %258 = vsyncadd %s252, %s257
          %s259 = smul.addr %s22, 256
          %s260 = smul.addr %s259, 128
          %s261 = scalar_lea.hbm %s1, %s260
          %s262 = sshll.u32 %s255, 4
          %s263 = int_to_ptr.vmem [resolvable:$true] %s262
          %268 = dma.hbm_to_vmem [thread:$0]  %s261, 32768, %s263, %s252, 1024, 1024, 64
        $region32: #{tpu_custom_call.1} parent=27 // pred_fallthru
          _
        // Predicated region
        $region33: #{tpu_custom_call.1} parent=27 // pred_check
          %p269 = pneg %p89
        $region34: #{tpu_custom_call.1} parent=27 // pred_check_branch
          %271 = sbr.rel (%p269) target = $region36
        $region35: #{tpu_custom_call.1} parent=27 // pred_region
          %s272 = sand.u32 %s22, 1
          %s273 = scalar_lea.sflag [#allocation8], %s272
          %s274 = sand.u32 %s79, 1
          %s275 = smul.addr %s274, 512
          %s276 = scalar_lea.vmem [#allocation9], %s275
          %s278 = ssub.s32 8192, 8192
          %279 = vsyncadd %s273, %s278
          %s280 = smul.addr %s22, 64
          %s281 = smul.addr %s280, 128
          %s282 = scalar_lea.hbm %s2, %s281
          %s283 = sshll.u32 %s276, 4
          %s284 = int_to_ptr.vmem [resolvable:$true] %s283
          %289 = dma.hbm_to_vmem [thread:$0]  %s282, 8192, %s284, %s273, 512, 512, 32
        $region36: #{tpu_custom_call.1} parent=27 // pred_fallthru
          _
        // Predicated region
        $region37: #{tpu_custom_call.1} parent=27 // pred_check
          %p290 = pneg %p115
        $region38: #{tpu_custom_call.1} parent=27 // pred_check_branch
          %292 = sbr.rel (%p290) target = $region40
        $region39: #{tpu_custom_call.1} parent=27 // pred_region
          %s293 = sand.u32 %s22, 1
          %s294 = scalar_lea.sflag [#allocation11], %s293
          %s295 = sand.u32 %s105, 1
          %s296 = smul.addr %s295, 512
          %s297 = scalar_lea.vmem [#allocation10], %s296
          %s299 = ssub.s32 8192, 8192
          %300 = vsyncadd %s294, %s299
          %s301 = smul.addr %s22, 64
          %s302 = smul.addr %s301, 128
          %s303 = scalar_lea.hbm %s3, %s302
          %s304 = sshll.u32 %s297, 4
          %s305 = int_to_ptr.vmem [resolvable:$true] %s304
          %310 = dma.hbm_to_vmem [thread:$0]  %s303, 8192, %s305, %s294, 512, 512, 32
        $region40: #{tpu_custom_call.1} parent=27 // pred_fallthru
          _
        // Predicated region
        $region41: #{tpu_custom_call.1} parent=27 // pred_check
          %p311 = pneg %p141
        $region42: #{tpu_custom_call.1} parent=27 // pred_check_branch
          %313 = sbr.rel (%p311) target = $region44
        $region43: #{tpu_custom_call.1} parent=27 // pred_region
          %s314 = sand.u32 %s22, 1
          %s315 = scalar_lea.sflag [#allocation11], %s314
          %s316 = sand.u32 %s131, 1
          %s317 = smul.addr %s316, 8
          %s318 = scalar_lea.vmem [#allocation12], %s317
          %s320 = ssub.s32 128, 128
          %321 = vsyncadd %s315, %s320
          %s322 = smul.addr %s22, 8
          %s323 = smul.addr %s322, 16
          %s324 = scalar_lea.hbm %s4, %s323
          %s326 = sshll.u32 %s318, 4
          %s327 = int_to_ptr.vmem [resolvable:$true] %s326
          %329 = dma.hbm_to_vmem [thread:$0]  %s324, 128, %s327, %s315
        $region44: #{tpu_custom_call.1} parent=27 // pred_fallthru
          _
      $region28: #{tpu_custom_call.1} parent=5 // pred_fallthru
        _
      %p330 = scmp.le.s32.totalorder 1, %s22
      %p331 = scmp.lt.s32.totalorder %s22, 4
      %p332 = pnand %p330, %p331
      %p333 = pneg %p332
      // Predicated region
      $region45: #{tpu_custom_call.1} parent=5 // pred_check
        _
      $region46: #{tpu_custom_call.1} parent=5 // pred_check_branch
        %335 = sbr.rel (%p332) target = $region48
      $region47: #{tpu_custom_call.1} parent=5 // pred_region
        %s336 = ssub.s32 %s22, 1
        // Predicated region
        $region49: #{tpu_custom_call.1} parent=47 // pred_check
          %p337 = pneg %p43
        $region50: #{tpu_custom_call.1} parent=47 // pred_check_branch
          %339 = sbr.rel (%p337) target = $region52
        $region51: #{tpu_custom_call.1} parent=47 // pred_region
          %340 = dma.done [#allocation6], 4096
        $region52: #{tpu_custom_call.1} parent=47 // pred_fallthru
          _
        %s341 = sand.u32 %s27, 1
        %s342 = scalar_lea.sflag [#allocation8], %s341
        %s343 = sand.u32 %s56, 1
        %s344 = smul.addr %s343, 2048
        %s345 = scalar_lea.vmem [#allocation7], %s344
        // Predicated region
        $region53: #{tpu_custom_call.1} parent=47 // pred_check
          %p346 = pneg %p69
        $region54: #{tpu_custom_call.1} parent=47 // pred_check_branch
          %348 = sbr.rel (%p346) target = $region56
        $region55: #{tpu_custom_call.1} parent=47 // pred_region
          %349 = dma.done %s342, 32768
        $region56: #{tpu_custom_call.1} parent=47 // pred_fallthru
          _
        %s350 = sand.u32 %s27, 1
        %s351 = scalar_lea.sflag [#allocation8], %s350
        %s352 = sand.u32 %s82, 1
        %s353 = smul.addr %s352, 512
        %s354 = scalar_lea.vmem [#allocation9], %s353
        // Predicated region
        $region57: #{tpu_custom_call.1} parent=47 // pred_check
          %p355 = pneg %p95
        $region58: #{tpu_custom_call.1} parent=47 // pred_check_branch
          %357 = sbr.rel (%p355) target = $region60
        $region59: #{tpu_custom_call.1} parent=47 // pred_region
          %358 = dma.done %s351, 8192
        $region60: #{tpu_custom_call.1} parent=47 // pred_fallthru
          _
        %s359 = sand.u32 %s27, 1
        %s360 = scalar_lea.sflag [#allocation11], %s359
        %s361 = sand.u32 %s108, 1
        %s362 = smul.addr %s361, 512
        %s363 = scalar_lea.vmem [#allocation10], %s362
        // Predicated region
        $region61: #{tpu_custom_call.1} parent=47 // pred_check
          %p364 = pneg %p121
        $region62: #{tpu_custom_call.1} parent=47 // pred_check_branch
          %366 = sbr.rel (%p364) target = $region64
        $region63: #{tpu_custom_call.1} parent=47 // pred_region
          %367 = dma.done %s360, 8192
        $region64: #{tpu_custom_call.1} parent=47 // pred_fallthru
          _
        %s368 = sand.u32 %s27, 1
        %s369 = scalar_lea.sflag [#allocation11], %s368
        %s370 = sand.u32 %s134, 1
        %s371 = smul.addr %s370, 8
        %s372 = scalar_lea.vmem [#allocation12], %s371
        // Predicated region
        $region65: #{tpu_custom_call.1} parent=47 // pred_check
          %p373 = pneg %p147
        $region66: #{tpu_custom_call.1} parent=47 // pred_check_branch
          %375 = sbr.rel (%p373) target = $region68
        $region67: #{tpu_custom_call.1} parent=47 // pred_region
          %376 = dma.done %s369, 128
        $region68: #{tpu_custom_call.1} parent=47 // pred_fallthru
          _
        %p377 = pneg %p43
        %p378 = pneg %p40
        %s379 = sand.u32 %s27, 1
        %s380 = scalar_lea.sflag [#allocation8], %s379
        %s381 = sand.u32 %s56, 1
        %s382 = smul.addr %s381, 2048
        %s383 = scalar_lea.vmem [#allocation7], %s382
        %p384 = pneg %p69
        %p385 = pneg %p66
        %s386 = sand.u32 %s27, 1
        %s387 = scalar_lea.sflag [#allocation8], %s386
        %s388 = sand.u32 %s82, 1
        %s389 = smul.addr %s388, 512
        %s390 = scalar_lea.vmem [#allocation9], %s389
        %p391 = pneg %p95
        %p392 = pneg %p92
        %s393 = sand.u32 %s27, 1
        %s394 = scalar_lea.sflag [#allocation11], %s393
        %s395 = sand.u32 %s108, 1
        %s396 = smul.addr %s395, 512
        %s397 = scalar_lea.vmem [#allocation10], %s396
        %p398 = pneg %p121
        %p399 = pneg %p118
        %s400 = sand.u32 %s27, 1
        %s401 = scalar_lea.sflag [#allocation11], %s400
        %s402 = sand.u32 %s134, 1
        %s403 = smul.addr %s402, 8
        %s404 = scalar_lea.vmem [#allocation12], %s403
        %p405 = pneg %p147
        %p406 = pneg %p144
        %p407 = pneg %p168
        %p408 = pneg %p165
        %p409 = pneg %p189
        %p410 = pneg %p186
        %p411 = pneg %p210
        %p412 = pneg %p207
        %p413 = scmp.eq.s32.totalorder %s27, 0
        // Predicated region
        $region69: #{tpu_custom_call.1} parent=47 // pred_check
          %p414 = pneg %p413
        $region70: #{tpu_custom_call.1} parent=47 // pred_check_branch
          %416 = sbr.rel (%p414) target = $region72
        $region71: #{tpu_custom_call.1} parent=47 // pred_region
          %v417 = vld [vmem:[#allocation5] sm:$0xff]
          %v418 = vld [vmem:[#allocation5 + $0x8] sm:$0xff]
          %v419 = vld [vmem:[#allocation5 + $0x10] sm:$0xff]
          %v420 = vld [vmem:[#allocation5 + $0x18] sm:$0xff]
          %v421 = vld [vmem:[#allocation5 + $0x20] sm:$0xff]
          %v422 = vld [vmem:[#allocation5 + $0x28] sm:$0xff]
          %v423 = vld [vmem:[#allocation5 + $0x30] sm:$0xff]
          %v424 = vld [vmem:[#allocation5 + $0x38] sm:$0xff]
          %v425 = vld [vmem:[#allocation5 + $0x40] sm:$0xff]
          %v426 = vld [vmem:[#allocation5 + $0x48] sm:$0xff]
          %v427 = vld [vmem:[#allocation5 + $0x50] sm:$0xff]
          %v428 = vld [vmem:[#allocation5 + $0x58] sm:$0xff]
          %v429 = vld [vmem:[#allocation5 + $0x60] sm:$0xff]
          %v430 = vld [vmem:[#allocation5 + $0x68] sm:$0xff]
          %v431 = vld [vmem:[#allocation5 + $0x70] sm:$0xff]
          %v432 = vld [vmem:[#allocation5 + $0x78] sm:$0xff]
          %v433 = vld [vmem:[#allocation5 + $0x80] sm:$0xff]
          %v434 = vld [vmem:[#allocation5 + $0x88] sm:$0xff]
          %v435 = vld [vmem:[#allocation5 + $0x90] sm:$0xff]
          %v436 = vld [vmem:[#allocation5 + $0x98] sm:$0xff]
          %v437 = vld [vmem:[#allocation5 + $0xa0] sm:$0xff]
          %v438 = vld [vmem:[#allocation5 + $0xa8] sm:$0xff]
          %v439 = vld [vmem:[#allocation5 + $0xb0] sm:$0xff]
          %v440 = vld [vmem:[#allocation5 + $0xb8] sm:$0xff]
          %v441 = vld [vmem:[#allocation5 + $0xc0] sm:$0xff]
          %v442 = vld [vmem:[#allocation5 + $0xc8] sm:$0xff]
          %v443 = vld [vmem:[#allocation5 + $0xd0] sm:$0xff]
          %v444 = vld [vmem:[#allocation5 + $0xd8] sm:$0xff]
          %v445 = vld [vmem:[#allocation5 + $0xe0] sm:$0xff]
          %v446 = vld [vmem:[#allocation5 + $0xe8] sm:$0xff]
          %v447 = vld [vmem:[#allocation5 + $0xf0] sm:$0xff]
          %v448 = vld [vmem:[#allocation5 + $0xf8] sm:$0xff]
          %449 = vst [vmem:[#allocation3] sm:$0xff] %v417
          %450 = vst [vmem:[#allocation3 + $0x8] sm:$0xff] %v418
          %451 = vst [vmem:[#allocation3 + $0x10] sm:$0xff] %v419
          %452 = vst [vmem:[#allocation3 + $0x18] sm:$0xff] %v420
          %453 = vst [vmem:[#allocation3 + $0x20] sm:$0xff] %v421
          %454 = vst [vmem:[#allocation3 + $0x28] sm:$0xff] %v422
          %455 = vst [vmem:[#allocation3 + $0x30] sm:$0xff] %v423
          %456 = vst [vmem:[#allocation3 + $0x38] sm:$0xff] %v424
          %457 = vst [vmem:[#allocation3 + $0x40] sm:$0xff] %v425
          %458 = vst [vmem:[#allocation3 + $0x48] sm:$0xff] %v426
          %459 = vst [vmem:[#allocation3 + $0x50] sm:$0xff] %v427
          %460 = vst [vmem:[#allocation3 + $0x58] sm:$0xff] %v428
          %461 = vst [vmem:[#allocation3 + $0x60] sm:$0xff] %v429
          %462 = vst [vmem:[#allocation3 + $0x68] sm:$0xff] %v430
          %463 = vst [vmem:[#allocation3 + $0x70] sm:$0xff] %v431
          %464 = vst [vmem:[#allocation3 + $0x78] sm:$0xff] %v432
          %465 = vst [vmem:[#allocation3 + $0x80] sm:$0xff] %v433
          %466 = vst [vmem:[#allocation3 + $0x88] sm:$0xff] %v434
          %467 = vst [vmem:[#allocation3 + $0x90] sm:$0xff] %v435
          %468 = vst [vmem:[#allocation3 + $0x98] sm:$0xff] %v436
          %469 = vst [vmem:[#allocation3 + $0xa0] sm:$0xff] %v437
          %470 = vst [vmem:[#allocation3 + $0xa8] sm:$0xff] %v438
          %471 = vst [vmem:[#allocation3 + $0xb0] sm:$0xff] %v439
          %472 = vst [vmem:[#allocation3 + $0xb8] sm:$0xff] %v440
          %473 = vst [vmem:[#allocation3 + $0xc0] sm:$0xff] %v441
          %474 = vst [vmem:[#allocation3 + $0xc8] sm:$0xff] %v442
          %475 = vst [vmem:[#allocation3 + $0xd0] sm:$0xff] %v443
          %476 = vst [vmem:[#allocation3 + $0xd8] sm:$0xff] %v444
          %477 = vst [vmem:[#allocation3 + $0xe0] sm:$0xff] %v445
          %478 = vst [vmem:[#allocation3 + $0xe8] sm:$0xff] %v446
          %479 = vst [vmem:[#allocation3 + $0xf0] sm:$0xff] %v447
          %480 = vst [vmem:[#allocation3 + $0xf8] sm:$0xff] %v448
        $region72: #{tpu_custom_call.1} parent=47 // pred_fallthru
          _
        %v481 = vld [vmem:[#allocation3] sm:$0xff]
        %v482 = vld [vmem:[#allocation3 + $0x8] sm:$0xff]
        %v483 = vld [vmem:[#allocation3 + $0x10] sm:$0xff]
        %v484 = vld [vmem:[#allocation3 + $0x18] sm:$0xff]
        %v485 = vld [vmem:[#allocation3 + $0x20] sm:$0xff]
        %v486 = vld [vmem:[#allocation3 + $0x28] sm:$0xff]
        %v487 = vld [vmem:[#allocation3 + $0x30] sm:$0xff]
        %v488 = vld [vmem:[#allocation3 + $0x38] sm:$0xff]
        %v489 = vld [vmem:[#allocation3 + $0x40] sm:$0xff]
        %v490 = vld [vmem:[#allocation3 + $0x48] sm:$0xff]
        %v491 = vld [vmem:[#allocation3 + $0x50] sm:$0xff]
        %v492 = vld [vmem:[#allocation3 + $0x58] sm:$0xff]
        %v493 = vld [vmem:[#allocation3 + $0x60] sm:$0xff]
        %v494 = vld [vmem:[#allocation3 + $0x68] sm:$0xff]
        %v495 = vld [vmem:[#allocation3 + $0x70] sm:$0xff]
        %v496 = vld [vmem:[#allocation3 + $0x78] sm:$0xff]
        %v497 = vld [vmem:[#allocation3 + $0x80] sm:$0xff]
        %v498 = vld [vmem:[#allocation3 + $0x88] sm:$0xff]
        %v499 = vld [vmem:[#allocation3 + $0x90] sm:$0xff]
        %v500 = vld [vmem:[#allocation3 + $0x98] sm:$0xff]
        %v501 = vld [vmem:[#allocation3 + $0xa0] sm:$0xff]
        %v502 = vld [vmem:[#allocation3 + $0xa8] sm:$0xff]
        %v503 = vld [vmem:[#allocation3 + $0xb0] sm:$0xff]
        %v504 = vld [vmem:[#allocation3 + $0xb8] sm:$0xff]
        %v505 = vld [vmem:[#allocation3 + $0xc0] sm:$0xff]
        %v506 = vld [vmem:[#allocation3 + $0xc8] sm:$0xff]
        %v507 = vld [vmem:[#allocation3 + $0xd0] sm:$0xff]
        %v508 = vld [vmem:[#allocation3 + $0xd8] sm:$0xff]
        %v509 = vld [vmem:[#allocation3 + $0xe0] sm:$0xff]
        %v510 = vld [vmem:[#allocation3 + $0xe8] sm:$0xff]
        %v511 = vld [vmem:[#allocation3 + $0xf0] sm:$0xff]
        %v512 = vld [vmem:[#allocation3 + $0xf8] sm:$0xff]
        %v513 = vld [vmem:[%s345] sm:$0xff]
        %v514 = vld [vmem:[%s345 + $0x8] sm:$0xff]
        %v515 = vld [vmem:[%s345 + $0x10] sm:$0xff]
        %v516 = vld [vmem:[%s345 + $0x18] sm:$0xff]
        %v517 = vld [vmem:[%s345 + $0x20] sm:$0xff]
        %v518 = vld [vmem:[%s345 + $0x28] sm:$0xff]
        %v519 = vld [vmem:[%s345 + $0x30] sm:$0xff]
        %v520 = vld [vmem:[%s345 + $0x38] sm:$0xff]
        %v521 = vld [vmem:[%s345 + $0x40] sm:$0xff]
        %v522 = vld [vmem:[%s345 + $0x48] sm:$0xff]
        %v523 = vld [vmem:[%s345 + $0x50] sm:$0xff]
        %v524 = vld [vmem:[%s345 + $0x58] sm:$0xff]
        %v525 = vld [vmem:[%s345 + $0x60] sm:$0xff]
        %v526 = vld [vmem:[%s345 + $0x68] sm:$0xff]
        %v527 = vld [vmem:[%s345 + $0x70] sm:$0xff]
        %v528 = vld [vmem:[%s345 + $0x78] sm:$0xff]
        %v529 = vld [vmem:[%s345 + $0x80] sm:$0xff]
        %v530 = vld [vmem:[%s345 + $0x88] sm:$0xff]
        %v531 = vld [vmem:[%s345 + $0x90] sm:$0xff]
        %v532 = vld [vmem:[%s345 + $0x98] sm:$0xff]
        %v533 = vld [vmem:[%s345 + $0xa0] sm:$0xff]
        %v534 = vld [vmem:[%s345 + $0xa8] sm:$0xff]
        %v535 = vld [vmem:[%s345 + $0xb0] sm:$0xff]
        %v536 = vld [vmem:[%s345 + $0xb8] sm:$0xff]
        %v537 = vld [vmem:[%s345 + $0xc0] sm:$0xff]
        %v538 = vld [vmem:[%s345 + $0xc8] sm:$0xff]
        %v539 = vld [vmem:[%s345 + $0xd0] sm:$0xff]
        %v540 = vld [vmem:[%s345 + $0xd8] sm:$0xff]
        %v541 = vld [vmem:[%s345 + $0xe0] sm:$0xff]
        %v542 = vld [vmem:[%s345 + $0xe8] sm:$0xff]
        %v543 = vld [vmem:[%s345 + $0xf0] sm:$0xff]
        %v544 = vld [vmem:[%s345 + $0xf8] sm:$0xff]
        %v545 = vld [vmem:[%s345 + $0x100] sm:$0xff]
        %v546 = vld [vmem:[%s345 + $0x108] sm:$0xff]
        %v547 = vld [vmem:[%s345 + $0x110] sm:$0xff]
        %v548 = vld [vmem:[%s345 + $0x118] sm:$0xff]
        %v549 = vld [vmem:[%s345 + $0x120] sm:$0xff]
        %v550 = vld [vmem:[%s345 + $0x128] sm:$0xff]
        %v551 = vld [vmem:[%s345 + $0x130] sm:$0xff]
        %v552 = vld [vmem:[%s345 + $0x138] sm:$0xff]
        %v553 = vld [vmem:[%s345 + $0x140] sm:$0xff]
        %v554 = vld [vmem:[%s345 + $0x148] sm:$0xff]
        %v555 = vld [vmem:[%s345 + $0x150] sm:$0xff]
        %v556 = vld [vmem:[%s345 + $0x158] sm:$0xff]
        %v557 = vld [vmem:[%s345 + $0x160] sm:$0xff]
        %v558 = vld [vmem:[%s345 + $0x168] sm:$0xff]
        %v559 = vld [vmem:[%s345 + $0x170] sm:$0xff]
        %v560 = vld [vmem:[%s345 + $0x178] sm:$0xff]
        %v561 = vld [vmem:[%s345 + $0x180] sm:$0xff]
        %v562 = vld [vmem:[%s345 + $0x188] sm:$0xff]
        %v563 = vld [vmem:[%s345 + $0x190] sm:$0xff]
        %v564 = vld [vmem:[%s345 + $0x198] sm:$0xff]
        %v565 = vld [vmem:[%s345 + $0x1a0] sm:$0xff]
        %v566 = vld [vmem:[%s345 + $0x1a8] sm:$0xff]
        %v567 = vld [vmem:[%s345 + $0x1b0] sm:$0xff]
        %v568 = vld [vmem:[%s345 + $0x1b8] sm:$0xff]
        %v569 = vld [vmem:[%s345 + $0x1c0] sm:$0xff]
        %v570 = vld [vmem:[%s345 + $0x1c8] sm:$0xff]
        %v571 = vld [vmem:[%s345 + $0x1d0] sm:$0xff]
        %v572 = vld [vmem:[%s345 + $0x1d8] sm:$0xff]
        %v573 = vld [vmem:[%s345 + $0x1e0] sm:$0xff]
        %v574 = vld [vmem:[%s345 + $0x1e8] sm:$0xff]
        %v575 = vld [vmem:[%s345 + $0x1f0] sm:$0xff]
        %v576 = vld [vmem:[%s345 + $0x1f8] sm:$0xff]
        %v577 = vld [vmem:[%s345 + $0x200] sm:$0xff]
        %v578 = vld [vmem:[%s345 + $0x208] sm:$0xff]
        %v579 = vld [vmem:[%s345 + $0x210] sm:$0xff]
        %v580 = vld [vmem:[%s345 + $0x218] sm:$0xff]
        %v581 = vld [vmem:[%s345 + $0x220] sm:$0xff]
        %v582 = vld [vmem:[%s345 + $0x228] sm:$0xff]
        %v583 = vld [vmem:[%s345 + $0x230] sm:$0xff]
        %v584 = vld [vmem:[%s345 + $0x238] sm:$0xff]
        %v585 = vld [vmem:[%s345 + $0x240] sm:$0xff]
        %v586 = vld [vmem:[%s345 + $0x248] sm:$0xff]
        %v587 = vld [vmem:[%s345 + $0x250] sm:$0xff]
        %v588 = vld [vmem:[%s345 + $0x258] sm:$0xff]
        %v589 = vld [vmem:[%s345 + $0x260] sm:$0xff]
        %v590 = vld [vmem:[%s345 + $0x268] sm:$0xff]
        %v591 = vld [vmem:[%s345 + $0x270] sm:$0xff]
        %v592 = vld [vmem:[%s345 + $0x278] sm:$0xff]
        %v593 = vld [vmem:[%s345 + $0x280] sm:$0xff]
        %v594 = vld [vmem:[%s345 + $0x288] sm:$0xff]
        %v595 = vld [vmem:[%s345 + $0x290] sm:$0xff]
        %v596 = vld [vmem:[%s345 + $0x298] sm:$0xff]
        %v597 = vld [vmem:[%s345 + $0x2a0] sm:$0xff]
        %v598 = vld [vmem:[%s345 + $0x2a8] sm:$0xff]
        %v599 = vld [vmem:[%s345 + $0x2b0] sm:$0xff]
        %v600 = vld [vmem:[%s345 + $0x2b8] sm:$0xff]
        %v601 = vld [vmem:[%s345 + $0x2c0] sm:$0xff]
        %v602 = vld [vmem:[%s345 + $0x2c8] sm:$0xff]
        %v603 = vld [vmem:[%s345 + $0x2d0] sm:$0xff]
        %v604 = vld [vmem:[%s345 + $0x2d8] sm:$0xff]
        %v605 = vld [vmem:[%s345 + $0x2e0] sm:$0xff]
        %v606 = vld [vmem:[%s345 + $0x2e8] sm:$0xff]
        %v607 = vld [vmem:[%s345 + $0x2f0] sm:$0xff]
        %v608 = vld [vmem:[%s345 + $0x2f8] sm:$0xff]
        %v609 = vld [vmem:[%s345 + $0x300] sm:$0xff]
        %v610 = vld [vmem:[%s345 + $0x308] sm:$0xff]
        %v611 = vld [vmem:[%s345 + $0x310] sm:$0xff]
        %v612 = vld [vmem:[%s345 + $0x318] sm:$0xff]
        %v613 = vld [vmem:[%s345 + $0x320] sm:$0xff]
        %v614 = vld [vmem:[%s345 + $0x328] sm:$0xff]
        %v615 = vld [vmem:[%s345 + $0x330] sm:$0xff]
        %v616 = vld [vmem:[%s345 + $0x338] sm:$0xff]
        %v617 = vld [vmem:[%s345 + $0x340] sm:$0xff]
        %v618 = vld [vmem:[%s345 + $0x348] sm:$0xff]
        %v619 = vld [vmem:[%s345 + $0x350] sm:$0xff]
        %v620 = vld [vmem:[%s345 + $0x358] sm:$0xff]
        %v621 = vld [vmem:[%s345 + $0x360] sm:$0xff]
        %v622 = vld [vmem:[%s345 + $0x368] sm:$0xff]
        %v623 = vld [vmem:[%s345 + $0x370] sm:$0xff]
        %v624 = vld [vmem:[%s345 + $0x378] sm:$0xff]
        %v625 = vld [vmem:[%s345 + $0x380] sm:$0xff]
        %v626 = vld [vmem:[%s345 + $0x388] sm:$0xff]
        %v627 = vld [vmem:[%s345 + $0x390] sm:$0xff]
        %v628 = vld [vmem:[%s345 + $0x398] sm:$0xff]
        %v629 = vld [vmem:[%s345 + $0x3a0] sm:$0xff]
        %v630 = vld [vmem:[%s345 + $0x3a8] sm:$0xff]
        %v631 = vld [vmem:[%s345 + $0x3b0] sm:$0xff]
        %v632 = vld [vmem:[%s345 + $0x3b8] sm:$0xff]
        %v633 = vld [vmem:[%s345 + $0x3c0] sm:$0xff]
        %v634 = vld [vmem:[%s345 + $0x3c8] sm:$0xff]
        %v635 = vld [vmem:[%s345 + $0x3d0] sm:$0xff]
        %v636 = vld [vmem:[%s345 + $0x3d8] sm:$0xff]
        %v637 = vld [vmem:[%s345 + $0x3e0] sm:$0xff]
        %v638 = vld [vmem:[%s345 + $0x3e8] sm:$0xff]
        %v639 = vld [vmem:[%s345 + $0x3f0] sm:$0xff]
        %v640 = vld [vmem:[%s345 + $0x3f8] sm:$0xff]
        %v641 = vld [vmem:[%s345 + $0x400] sm:$0xff]
        %v642 = vld [vmem:[%s345 + $0x408] sm:$0xff]
        %v643 = vld [vmem:[%s345 + $0x410] sm:$0xff]
        %v644 = vld [vmem:[%s345 + $0x418] sm:$0xff]
        %v645 = vld [vmem:[%s345 + $0x420] sm:$0xff]
        %v646 = vld [vmem:[%s345 + $0x428] sm:$0xff]
        %v647 = vld [vmem:[%s345 + $0x430] sm:$0xff]
        %v648 = vld [vmem:[%s345 + $0x438] sm:$0xff]
        %v649 = vld [vmem:[%s345 + $0x440] sm:$0xff]
        %v650 = vld [vmem:[%s345 + $0x448] sm:$0xff]
        %v651 = vld [vmem:[%s345 + $0x450] sm:$0xff]
        %v652 = vld [vmem:[%s345 + $0x458] sm:$0xff]
        %v653 = vld [vmem:[%s345 + $0x460] sm:$0xff]
        %v654 = vld [vmem:[%s345 + $0x468] sm:$0xff]
        %v655 = vld [vmem:[%s345 + $0x470] sm:$0xff]
        %v656 = vld [vmem:[%s345 + $0x478] sm:$0xff]
        %v657 = vld [vmem:[%s345 + $0x480] sm:$0xff]
        %v658 = vld [vmem:[%s345 + $0x488] sm:$0xff]
        %v659 = vld [vmem:[%s345 + $0x490] sm:$0xff]
        %v660 = vld [vmem:[%s345 + $0x498] sm:$0xff]
        %v661 = vld [vmem:[%s345 + $0x4a0] sm:$0xff]
        %v662 = vld [vmem:[%s345 + $0x4a8] sm:$0xff]
        %v663 = vld [vmem:[%s345 + $0x4b0] sm:$0xff]
        %v664 = vld [vmem:[%s345 + $0x4b8] sm:$0xff]
        %v665 = vld [vmem:[%s345 + $0x4c0] sm:$0xff]
        %v666 = vld [vmem:[%s345 + $0x4c8] sm:$0xff]
        %v667 = vld [vmem:[%s345 + $0x4d0] sm:$0xff]
        %v668 = vld [vmem:[%s345 + $0x4d8] sm:$0xff]
        %v669 = vld [vmem:[%s345 + $0x4e0] sm:$0xff]
        %v670 = vld [vmem:[%s345 + $0x4e8] sm:$0xff]
        %v671 = vld [vmem:[%s345 + $0x4f0] sm:$0xff]
        %v672 = vld [vmem:[%s345 + $0x4f8] sm:$0xff]
        %v673 = vld [vmem:[%s345 + $0x500] sm:$0xff]
        %v674 = vld [vmem:[%s345 + $0x508] sm:$0xff]
        %v675 = vld [vmem:[%s345 + $0x510] sm:$0xff]
        %v676 = vld [vmem:[%s345 + $0x518] sm:$0xff]
        %v677 = vld [vmem:[%s345 + $0x520] sm:$0xff]
        %v678 = vld [vmem:[%s345 + $0x528] sm:$0xff]
        %v679 = vld [vmem:[%s345 + $0x530] sm:$0xff]
        %v680 = vld [vmem:[%s345 + $0x538] sm:$0xff]
        %v681 = vld [vmem:[%s345 + $0x540] sm:$0xff]
        %v682 = vld [vmem:[%s345 + $0x548] sm:$0xff]
        %v683 = vld [vmem:[%s345 + $0x550] sm:$0xff]
        %v684 = vld [vmem:[%s345 + $0x558] sm:$0xff]
        %v685 = vld [vmem:[%s345 + $0x560] sm:$0xff]
        %v686 = vld [vmem:[%s345 + $0x568] sm:$0xff]
        %v687 = vld [vmem:[%s345 + $0x570] sm:$0xff]
        %v688 = vld [vmem:[%s345 + $0x578] sm:$0xff]
        %v689 = vld [vmem:[%s345 + $0x580] sm:$0xff]
        %v690 = vld [vmem:[%s345 + $0x588] sm:$0xff]
        %v691 = vld [vmem:[%s345 + $0x590] sm:$0xff]
        %v692 = vld [vmem:[%s345 + $0x598] sm:$0xff]
        %v693 = vld [vmem:[%s345 + $0x5a0] sm:$0xff]
        %v694 = vld [vmem:[%s345 + $0x5a8] sm:$0xff]
        %v695 = vld [vmem:[%s345 + $0x5b0] sm:$0xff]
        %v696 = vld [vmem:[%s345 + $0x5b8] sm:$0xff]
        %v697 = vld [vmem:[%s345 + $0x5c0] sm:$0xff]
        %v698 = vld [vmem:[%s345 + $0x5c8] sm:$0xff]
        %v699 = vld [vmem:[%s345 + $0x5d0] sm:$0xff]
        %v700 = vld [vmem:[%s345 + $0x5d8] sm:$0xff]
        %v701 = vld [vmem:[%s345 + $0x5e0] sm:$0xff]
        %v702 = vld [vmem:[%s345 + $0x5e8] sm:$0xff]
        %v703 = vld [vmem:[%s345 + $0x5f0] sm:$0xff]
        %v704 = vld [vmem:[%s345 + $0x5f8] sm:$0xff]
        %v705 = vld [vmem:[%s345 + $0x600] sm:$0xff]
        %v706 = vld [vmem:[%s345 + $0x608] sm:$0xff]
        %v707 = vld [vmem:[%s345 + $0x610] sm:$0xff]
        %v708 = vld [vmem:[%s345 + $0x618] sm:$0xff]
        %v709 = vld [vmem:[%s345 + $0x620] sm:$0xff]
        %v710 = vld [vmem:[%s345 + $0x628] sm:$0xff]
        %v711 = vld [vmem:[%s345 + $0x630] sm:$0xff]
        %v712 = vld [vmem:[%s345 + $0x638] sm:$0xff]
        %v713 = vld [vmem:[%s345 + $0x640] sm:$0xff]
        %v714 = vld [vmem:[%s345 + $0x648] sm:$0xff]
        %v715 = vld [vmem:[%s345 + $0x650] sm:$0xff]
        %v716 = vld [vmem:[%s345 + $0x658] sm:$0xff]
        %v717 = vld [vmem:[%s345 + $0x660] sm:$0xff]
        %v718 = vld [vmem:[%s345 + $0x668] sm:$0xff]
        %v719 = vld [vmem:[%s345 + $0x670] sm:$0xff]
        %v720 = vld [vmem:[%s345 + $0x678] sm:$0xff]
        %v721 = vld [vmem:[%s345 + $0x680] sm:$0xff]
        %v722 = vld [vmem:[%s345 + $0x688] sm:$0xff]
        %v723 = vld [vmem:[%s345 + $0x690] sm:$0xff]
        %v724 = vld [vmem:[%s345 + $0x698] sm:$0xff]
        %v725 = vld [vmem:[%s345 + $0x6a0] sm:$0xff]
        %v726 = vld [vmem:[%s345 + $0x6a8] sm:$0xff]
        %v727 = vld [vmem:[%s345 + $0x6b0] sm:$0xff]
        %v728 = vld [vmem:[%s345 + $0x6b8] sm:$0xff]
        %v729 = vld [vmem:[%s345 + $0x6c0] sm:$0xff]
        %v730 = vld [vmem:[%s345 + $0x6c8] sm:$0xff]
        %v731 = vld [vmem:[%s345 + $0x6d0] sm:$0xff]
        %v732 = vld [vmem:[%s345 + $0x6d8] sm:$0xff]
        %v733 = vld [vmem:[%s345 + $0x6e0] sm:$0xff]
        %v734 = vld [vmem:[%s345 + $0x6e8] sm:$0xff]
        %v735 = vld [vmem:[%s345 + $0x6f0] sm:$0xff]
        %v736 = vld [vmem:[%s345 + $0x6f8] sm:$0xff]
        %v737 = vld [vmem:[%s345 + $0x700] sm:$0xff]
        %v738 = vld [vmem:[%s345 + $0x708] sm:$0xff]
        %v739 = vld [vmem:[%s345 + $0x710] sm:$0xff]
        %v740 = vld [vmem:[%s345 + $0x718] sm:$0xff]
        %v741 = vld [vmem:[%s345 + $0x720] sm:$0xff]
        %v742 = vld [vmem:[%s345 + $0x728] sm:$0xff]
        %v743 = vld [vmem:[%s345 + $0x730] sm:$0xff]
        %v744 = vld [vmem:[%s345 + $0x738] sm:$0xff]
        %v745 = vld [vmem:[%s345 + $0x740] sm:$0xff]
        %v746 = vld [vmem:[%s345 + $0x748] sm:$0xff]
        %v747 = vld [vmem:[%s345 + $0x750] sm:$0xff]
        %v748 = vld [vmem:[%s345 + $0x758] sm:$0xff]
        %v749 = vld [vmem:[%s345 + $0x760] sm:$0xff]
        %v750 = vld [vmem:[%s345 + $0x768] sm:$0xff]
        %v751 = vld [vmem:[%s345 + $0x770] sm:$0xff]
        %v752 = vld [vmem:[%s345 + $0x778] sm:$0xff]
        %v753 = vld [vmem:[%s345 + $0x780] sm:$0xff]
        %v754 = vld [vmem:[%s345 + $0x788] sm:$0xff]
        %v755 = vld [vmem:[%s345 + $0x790] sm:$0xff]
        %v756 = vld [vmem:[%s345 + $0x798] sm:$0xff]
        %v757 = vld [vmem:[%s345 + $0x7a0] sm:$0xff]
        %v758 = vld [vmem:[%s345 + $0x7a8] sm:$0xff]
        %v759 = vld [vmem:[%s345 + $0x7b0] sm:$0xff]
        %v760 = vld [vmem:[%s345 + $0x7b8] sm:$0xff]
        %v761 = vld [vmem:[%s345 + $0x7c0] sm:$0xff]
        %v762 = vld [vmem:[%s345 + $0x7c8] sm:$0xff]
        %v763 = vld [vmem:[%s345 + $0x7d0] sm:$0xff]
        %v764 = vld [vmem:[%s345 + $0x7d8] sm:$0xff]
        %v765 = vld [vmem:[%s345 + $0x7e0] sm:$0xff]
        %v766 = vld [vmem:[%s345 + $0x7e8] sm:$0xff]
        %v767 = vld [vmem:[%s345 + $0x7f0] sm:$0xff]
        %v768 = vld [vmem:[%s345 + $0x7f8] sm:$0xff]
        %v769 = vld [vmem:[%s372] sm:$0xff]
        %v771 = vlaneseq
        %v772 = vshrl.u32 %v771, 7
        %v773 = vsub.s32 0, %v772
        %v774 = vrot.slane %v769, %v773
        %v775 = vlaneseq
        %v776 = vshrl.u32 %v775, 7
        %v777 = vsub.s32 1, %v776
        %v778 = vrot.slane %v769, %v777
        %v779 = vlaneseq
        %v780 = vshrl.u32 %v779, 7
        %v781 = vsub.s32 2, %v780
        %v782 = vrot.slane %v769, %v781
        %v783 = vlaneseq
        %v784 = vshrl.u32 %v783, 7
        %v785 = vsub.s32 3, %v784
        %v786 = vrot.slane %v769, %v785
        %v787 = vlaneseq
        %v788 = vshrl.u32 %v787, 7
        %v789 = vsub.s32 4, %v788
        %v790 = vrot.slane %v769, %v789
        %v791 = vlaneseq
        %v792 = vshrl.u32 %v791, 7
        %v793 = vsub.s32 5, %v792
        %v794 = vrot.slane %v769, %v793
        %v795 = vlaneseq
        %v796 = vshrl.u32 %v795, 7
        %v797 = vsub.s32 6, %v796
        %v798 = vrot.slane %v769, %v797
        %v799 = vlaneseq
        %v800 = vshrl.u32 %v799, 7
        %v801 = vsub.s32 7, %v800
        %v802 = vrot.slane %v769, %v801
        %811 = vmatprep.subr.mxu0 %v514
        %812 = vmatpush1.msra.mxu0 %v513
        %813 = vmatprep.subr.mxu0 %v522
        %814 = vmatpush1.msra.mxu0 %v521
        %815 = vmatprep.subr.mxu0 %v530
        %816 = vmatpush1.msra.mxu0 %v529
        %817 = vmatprep.subr.mxu0 %v538
        %818 = vmatpush1.msra.mxu0 %v537
        %819 = vmatprep.subr.mxu0 %v546
        %820 = vmatpush1.msra.mxu0 %v545
        %821 = vmatprep.subr.mxu0 %v554
        %822 = vmatpush1.msra.mxu0 %v553
        %823 = vmatprep.subr.mxu0 %v562
        %824 = vmatpush1.msra.mxu0 %v561
        %825 = vmatprep.subr.mxu0 %v570
        %826 = vmatpush1.msra.mxu0 %v569
        %827 = vmatprep.subr.mxu0 %v578
        %828 = vmatpush1.msra.mxu0 %v577
        %829 = vmatprep.subr.mxu0 %v586
        %830 = vmatpush1.msra.mxu0 %v585
        %831 = vmatprep.subr.mxu0 %v594
        %832 = vmatpush1.msra.mxu0 %v593
        %833 = vmatprep.subr.mxu0 %v602
        %834 = vmatpush1.msra.mxu0 %v601
        %835 = vmatprep.subr.mxu0 %v610
        %836 = vmatpush1.msra.mxu0 %v609
        %837 = vmatprep.subr.mxu0 %v618
        %838 = vmatpush1.msra.mxu0 %v617
        %839 = vmatprep.subr.mxu0 %v626
        %840 = vmatpush1.msra.mxu0 %v625
        %841 = vmatprep.subr.mxu0 %v634
        %842 = vmatpush1.msra.mxu0 %v633
        %843 = vmatprep.subr.mxu0 %v642
        %844 = vmatpush1.msra.mxu0 %v641
        %845 = vmatprep.subr.mxu0 %v650
        %846 = vmatpush1.msra.mxu0 %v649
        %847 = vmatprep.subr.mxu0 %v658
        %848 = vmatpush1.msra.mxu0 %v657
        %849 = vmatprep.subr.mxu0 %v666
        %850 = vmatpush1.msra.mxu0 %v665
        %851 = vmatprep.subr.mxu0 %v674
        %852 = vmatpush1.msra.mxu0 %v673
        %853 = vmatprep.subr.mxu0 %v682
        %854 = vmatpush1.msra.mxu0 %v681
        %855 = vmatprep.subr.mxu0 %v690
        %856 = vmatpush1.msra.mxu0 %v689
        %857 = vmatprep.subr.mxu0 %v698
        %858 = vmatpush1.msra.mxu0 %v697
        %859 = vmatprep.subr.mxu0 %v706
        %860 = vmatpush1.msra.mxu0 %v705
        %861 = vmatprep.subr.mxu0 %v714
        %862 = vmatpush1.msra.mxu0 %v713
        %863 = vmatprep.subr.mxu0 %v722
        %864 = vmatpush1.msra.mxu0 %v721
        %865 = vmatprep.subr.mxu0 %v730
        %866 = vmatpush1.msra.mxu0 %v729
        %867 = vmatprep.subr.mxu0 %v738
        %868 = vmatpush1.msra.mxu0 %v737
        %869 = vmatprep.subr.mxu0 %v746
        %870 = vmatpush1.msra.mxu0 %v745
        %871 = vmatprep.subr.mxu0 %v754
        %872 = vmatpush1.msra.mxu0 %v753
        %873 = vmatprep.subr.mxu0 %v762
        %874 = vmatpush1.msra.mxu0 %v761
        %875 = vmatprep.mubr.f32.mxu0 %v482
        %876 = vmatmul.mubr.f32.gmra.mrb[0].mxu0 %v481
        %v877 = vpop.f32.mrb[0].mxu0
        %v878 = vadd.f32 %v774, %v877
        %v879 = vpop.f32.mrb[0].mxu0
        %v880 = vadd.f32 %v778, %v879
        %881 = vmatprep.mubr.f32.mxu0 %v484
        %882 = vmatmul.mubr.f32.gmra.mrb[0].mxu0 %v483
        %v883 = vpop.f32.mrb[0].mxu0
        %v884 = vadd.f32 %v774, %v883
        %v885 = vpop.f32.mrb[0].mxu0
        %v886 = vadd.f32 %v778, %v885
        %887 = vmatprep.mubr.f32.mxu0 %v486
        %888 = vmatmul.mubr.f32.gmra.mrb[0].mxu0 %v485
        %v889 = vpop.f32.mrb[0].mxu0
        %v890 = vadd.f32 %v774, %v889
        %v891 = vpop.f32.mrb[0].mxu0
        %v892 = vadd.f32 %v778, %v891
        %893 = vmatprep.mubr.f32.mxu0 %v488
        %894 = vmatmul.mubr.f32.gmra.mrb[0].mxu0 %v487
        %v895 = vpop.f32.mrb[0].mxu0
        %v896 = vadd.f32 %v774, %v895
        %v897 = vpop.f32.mrb[0].mxu0
        %v898 = vadd.f32 %v778, %v897
        %899 = vmatprep.mubr.f32.mxu0 %v490
        %900 = vmatmul.mubr.f32.gmra.mrb[0].mxu0 %v489
        %v901 = vpop.f32.mrb[0].mxu0
        %v902 = vadd.f32 %v774, %v901
        %v903 = vpop.f32.mrb[0].mxu0
        %v904 = vadd.f32 %v778, %v903
        %905 = vmatprep.mubr.f32.mxu0 %v492
        %906 = vmatmul.mubr.f32.gmra.mrb[0].mxu0 %v491
        %v907 = vpop.f32.mrb[0].mxu0
        %v908 = vadd.f32 %v774, %v907
        %v909 = vpop.f32.mrb[0].mxu0
        %v910 = vadd.f32 %v778, %v909
        %911 = vmatprep.mubr.f32.mxu0 %v494
        %912 = vmatmul.mubr.f32.gmra.mrb[0].mxu0 %v493
        %v913 = vpop.f32.mrb[0].mxu0
        %v914 = vadd.f32 %v774, %v913
        %v915 = vpop.f32.mrb[0].mxu0
        %v916 = vadd.f32 %v778, %v915
        %917 = vmatprep.mubr.f32.mxu0 %v496
        %918 = vmatmul.mubr.f32.gmra.mrb[0].mxu0 %v495
        %v919 = vpop.f32.mrb[0].mxu0
        %v920 = vadd.f32 %v774, %v919
        %v921 = vpop.f32.mrb[0].mxu0
        %v922 = vadd.f32 %v778, %v921
        %923 = vmatprep.mubr.f32.mxu0 %v498
        %924 = vmatmul.mubr.f32.gmra.mrb[0].mxu0 %v497
        %v925 = vpop.f32.mrb[0].mxu0
        %v926 = vadd.f32 %v774, %v925
        %v927 = vpop.f32.mrb[0].mxu0
        %v928 = vadd.f32 %v778, %v927
        %929 = vmatprep.mubr.f32.mxu0 %v500
        %930 = vmatmul.mubr.f32.gmra.mrb[0].mxu0 %v499
        %v931 = vpop.f32.mrb[0].mxu0
        %v932 = vadd.f32 %v774, %v931
        %v933 = vpop.f32.mrb[0].mxu0
        %v934 = vadd.f32 %v778, %v933
        %935 = vmatprep.mubr.f32.mxu0 %v502
        %936 = vmatmul.mubr.f32.gmra.mrb[0].mxu0 %v501
        %v937 = vpop.f32.mrb[0].mxu0
        %v938 = vadd.f32 %v774, %v937
        %v939 = vpop.f32.mrb[0].mxu0
        %v940 = vadd.f32 %v778, %v939
        %941 = vmatprep.mubr.f32.mxu0 %v504
        %942 = vmatmul.mubr.f32.gmra.mrb[0].mxu0 %v503
        %v943 = vpop.f32.mrb[0].mxu0
        %v944 = vadd.f32 %v774, %v943
        %v945 = vpop.f32.mrb[0].mxu0
        %v946 = vadd.f32 %v778, %v945
        %947 = vmatprep.mubr.f32.mxu0 %v506
        %948 = vmatmul.mubr.f32.gmra.mrb[0].mxu0 %v505
        %v949 = vpop.f32.mrb[0].mxu0
        %v950 = vadd.f32 %v774, %v949
        %v951 = vpop.f32.mrb[0].mxu0
        %v952 = vadd.f32 %v778, %v951
        %953 = vmatprep.mubr.f32.mxu0 %v508
        %954 = vmatmul.mubr.f32.gmra.mrb[0].mxu0 %v507
        %v955 = vpop.f32.mrb[0].mxu0
        %v956 = vadd.f32 %v774, %v955
        %v957 = vpop.f32.mrb[0].mxu0
        %v958 = vadd.f32 %v778, %v957
        %959 = vmatprep.mubr.f32.mxu0 %v510
        %960 = vmatmul.mubr.f32.gmra.mrb[0].mxu0 %v509
        %v961 = vpop.f32.mrb[0].mxu0
        %v962 = vadd.f32 %v774, %v961
        %v963 = vpop.f32.mrb[0].mxu0
        %v964 = vadd.f32 %v778, %v963
        %965 = vmatprep.mubr.f32.mxu0 %v512
        %966 = vmatmul.mubr.f32.gmra.mrb[0].mxu0 %v511
        %v967 = vpop.f32.mrb[0].mxu0
        %v968 = vadd.f32 %v774, %v967
        %v969 = vpop.f32.mrb[0].mxu0
        %v970 = vadd.f32 %v778, %v969
        %971 = vdwg.mxu0
        %972 = vmatprep.subr.mxu0 %v516
        %973 = vmatpush1.msra.mxu0 %v515
        %974 = vmatprep.subr.mxu0 %v524
        %975 = vmatpush1.msra.mxu0 %v523
        %976 = vmatprep.subr.mxu0 %v532
        %977 = vmatpush1.msra.mxu0 %v531
        %978 = vmatprep.subr.mxu0 %v540
        %979 = vmatpush1.msra.mxu0 %v539
        %980 = vmatprep.subr.mxu0 %v548
        %981 = vmatpush1.msra.mxu0 %v547
        %982 = vmatprep.subr.mxu0 %v556
        %983 = vmatpush1.msra.mxu0 %v555
        %984 = vmatprep.subr.mxu0 %v564
        %985 = vmatpush1.msra.mxu0 %v563
        %986 = vmatprep.subr.mxu0 %v572
        %987 = vmatpush1.msra.mxu0 %v571
        %988 = vmatprep.subr.mxu0 %v580
        %989 = vmatpush1.msra.mxu0 %v579
        %990 = vmatprep.subr.mxu0 %v588
        %991 = vmatpush1.msra.mxu0 %v587
        %992 = vmatprep.subr.mxu0 %v596
        %993 = vmatpush1.msra.mxu0 %v595
        %994 = vmatprep.subr.mxu0 %v604
        %995 = vmatpush1.msra.mxu0 %v603
        %996 = vmatprep.subr.mxu0 %v612
        %997 = vmatpush1.msra.mxu0 %v611
        %998 = vmatprep.subr.mxu0 %v620
        %999 = vmatpush1.msra.mxu0 %v619
        %1000 = vmatprep.subr.mxu0 %v628
        %1001 = vmatpush1.msra.mxu0 %v627
        %1002 = vmatprep.subr.mxu0 %v636
        %1003 = vmatpush1.msra.mxu0 %v635
        %1004 = vmatprep.subr.mxu0 %v644
        %1005 = vmatpush1.msra.mxu0 %v643
        %1006 = vmatprep.subr.mxu0 %v652
        %1007 = vmatpush1.msra.mxu0 %v651
        %1008 = vmatprep.subr.mxu0 %v660
        %1009 = vmatpush1.msra.mxu0 %v659
        %1010 = vmatprep.subr.mxu0 %v668
        %1011 = vmatpush1.msra.mxu0 %v667
        %1012 = vmatprep.subr.mxu0 %v676
        %1013 = vmatpush1.msra.mxu0 %v675
        %1014 = vmatprep.subr.mxu0 %v684
        %1015 = vmatpush1.msra.mxu0 %v683
        %1016 = vmatprep.subr.mxu0 %v692
        %1017 = vmatpush1.msra.mxu0 %v691
        %1018 = vmatprep.subr.mxu0 %v700
        %1019 = vmatpush1.msra.mxu0 %v699
        %1020 = vmatprep.subr.mxu0 %v708
        %1021 = vmatpush1.msra.mxu0 %v707
        %1022 = vmatprep.subr.mxu0 %v716
        %1023 = vmatpush1.msra.mxu0 %v715
        %1024 = vmatprep.subr.mxu0 %v724
        %1025 = vmatpush1.msra.mxu0 %v723
        %1026 = vmatprep.subr.mxu0 %v732
        %1027 = vmatpush1.msra.mxu0 %v731
        %1028 = vmatprep.subr.mxu0 %v740
        %1029 = vmatpush1.msra.mxu0 %v739
        %1030 = vmatprep.subr.mxu0 %v748
        %1031 = vmatpush1.msra.mxu0 %v747
        %1032 = vmatprep.subr.mxu0 %v756
        %1033 = vmatpush1.msra.mxu0 %v755
        %1034 = vmatprep.subr.mxu0 %v764
        %1035 = vmatpush1.msra.mxu0 %v763
        %1036 = vmatprep.mubr.f32.mxu0 %v482
        %1037 = vmatmul.mubr.f32.gmra.mrb[0].mxu0 %v481
        %v1038 = vpop.f32.mrb[0].mxu0
        %v1039 = vadd.f32 %v782, %v1038
        %v1040 = vpop.f32.mrb[0].mxu0
        %v1041 = vadd.f32 %v786, %v1040
        %1042 = vmatprep.mubr.f32.mxu0 %v484
        %1043 = vmatmul.mubr.f32.gmra.mrb[0].mxu0 %v483
        %v1044 = vpop.f32.mrb[0].mxu0
        %v1045 = vadd.f32 %v782, %v1044
        %v1046 = vpop.f32.mrb[0].mxu0
        %v1047 = vadd.f32 %v786, %v1046
        %1048 = vmatprep.mubr.f32.mxu0 %v486
        %1049 = vmatmul.mubr.f32.gmra.mrb[0].mxu0 %v485
        %v1050 = vpop.f32.mrb[0].mxu0
        %v1051 = vadd.f32 %v782, %v1050
        %v1052 = vpop.f32.mrb[0].mxu0
        %v1053 = vadd.f32 %v786, %v1052
        %1054 = vmatprep.mubr.f32.mxu0 %v488
        %1055 = vmatmul.mubr.f32.gmra.mrb[0].mxu0 %v487
        %v1056 = vpop.f32.mrb[0].mxu0
        %v1057 = vadd.f32 %v782, %v1056
        %v1058 = vpop.f32.mrb[0].mxu0
        %v1059 = vadd.f32 %v786, %v1058
        %1060 = vmatprep.mubr.f32.mxu0 %v490
        %1061 = vmatmul.mubr.f32.gmra.mrb[0].mxu0 %v489
        %v1062 = vpop.f32.mrb[0].mxu0
        %v1063 = vadd.f32 %v782, %v1062
        %v1064 = vpop.f32.mrb[0].mxu0
        %v1065 = vadd.f32 %v786, %v1064
        %1066 = vmatprep.mubr.f32.mxu0 %v492
        %1067 = vmatmul.mubr.f32.gmra.mrb[0].mxu0 %v491
        %v1068 = vpop.f32.mrb[0].mxu0
        %v1069 = vadd.f32 %v782, %v1068
        %v1070 = vpop.f32.mrb[0].mxu0
        %v1071 = vadd.f32 %v786, %v1070
        %1072 = vmatprep.mubr.f32.mxu0 %v494
        %1073 = vmatmul.mubr.f32.gmra.mrb[0].mxu0 %v493
        %v1074 = vpop.f32.mrb[0].mxu0
        %v1075 = vadd.f32 %v782, %v1074
        %v1076 = vpop.f32.mrb[0].mxu0
        %v1077 = vadd.f32 %v786, %v1076
        %1078 = vmatprep.mubr.f32.mxu0 %v496
        %1079 = vmatmul.mubr.f32.gmra.mrb[0].mxu0 %v495
        %v1080 = vpop.f32.mrb[0].mxu0
        %v1081 = vadd.f32 %v782, %v1080
        %v1082 = vpop.f32.mrb[0].mxu0
        %v1083 = vadd.f32 %v786, %v1082
        %1084 = vmatprep.mubr.f32.mxu0 %v498
        %1085 = vmatmul.mubr.f32.gmra.mrb[0].mxu0 %v497
        %v1086 = vpop.f32.mrb[0].mxu0
        %v1087 = vadd.f32 %v782, %v1086
        %v1088 = vpop.f32.mrb[0].mxu0
        %v1089 = vadd.f32 %v786, %v1088
        %1090 = vmatprep.mubr.f32.mxu0 %v500
        %1091 = vmatmul.mubr.f32.gmra.mrb[0].mxu0 %v499
        %v1092 = vpop.f32.mrb[0].mxu0
        %v1093 = vadd.f32 %v782, %v1092
        %v1094 = vpop.f32.mrb[0].mxu0
        %v1095 = vadd.f32 %v786, %v1094
        %1096 = vmatprep.mubr.f32.mxu0 %v502
        %1097 = vmatmul.mubr.f32.gmra.mrb[0].mxu0 %v501
        %v1098 = vpop.f32.mrb[0].mxu0
        %v1099 = vadd.f32 %v782, %v1098
        %v1100 = vpop.f32.mrb[0].mxu0
        %v1101 = vadd.f32 %v786, %v1100
        %1102 = vmatprep.mubr.f32.mxu0 %v504
        %1103 = vmatmul.mubr.f32.gmra.mrb[0].mxu0 %v503
        %v1104 = vpop.f32.mrb[0].mxu0
        %v1105 = vadd.f32 %v782, %v1104
        %v1106 = vpop.f32.mrb[0].mxu0
        %v1107 = vadd.f32 %v786, %v1106
        %1108 = vmatprep.mubr.f32.mxu0 %v506
        %1109 = vmatmul.mubr.f32.gmra.mrb[0].mxu0 %v505
        %v1110 = vpop.f32.mrb[0].mxu0
        %v1111 = vadd.f32 %v782, %v1110
        %v1112 = vpop.f32.mrb[0].mxu0
        %v1113 = vadd.f32 %v786, %v1112
        %1114 = vmatprep.mubr.f32.mxu0 %v508
        %1115 = vmatmul.mubr.f32.gmra.mrb[0].mxu0 %v507
        %v1116 = vpop.f32.mrb[0].mxu0
        %v1117 = vadd.f32 %v782, %v1116
        %v1118 = vpop.f32.mrb[0].mxu0
        %v1119 = vadd.f32 %v786, %v1118
        %1120 = vmatprep.mubr.f32.mxu0 %v510
        %1121 = vmatmul.mubr.f32.gmra.mrb[0].mxu0 %v509
        %v1122 = vpop.f32.mrb[0].mxu0
        %v1123 = vadd.f32 %v782, %v1122
        %v1124 = vpop.f32.mrb[0].mxu0
        %v1125 = vadd.f32 %v786, %v1124
        %1126 = vmatprep.mubr.f32.mxu0 %v512
        %1127 = vmatmul.mubr.f32.gmra.mrb[0].mxu0 %v511
        %v1128 = vpop.f32.mrb[0].mxu0
        %v1129 = vadd.f32 %v782, %v1128
        %v1130 = vpop.f32.mrb[0].mxu0
        %v1131 = vadd.f32 %v786, %v1130
        %1132 = vdwg.mxu0
        %1133 = vmatprep.subr.mxu0 %v518
        %1134 = vmatpush1.msra.mxu0 %v517
        %1135 = vmatprep.subr.mxu0 %v526
        %1136 = vmatpush1.msra.mxu0 %v525
        %1137 = vmatprep.subr.mxu0 %v534
        %1138 = vmatpush1.msra.mxu0 %v533
        %1139 = vmatprep.subr.mxu0 %v542
        %1140 = vmatpush1.msra.mxu0 %v541
        %1141 = vmatprep.subr.mxu0 %v550
        %1142 = vmatpush1.msra.mxu0 %v549
        %1143 = vmatprep.subr.mxu0 %v558
        %1144 = vmatpush1.msra.mxu0 %v557
        %1145 = vmatprep.subr.mxu0 %v566
        %1146 = vmatpush1.msra.mxu0 %v565
        %1147 = vmatprep.subr.mxu0 %v574
        %1148 = vmatpush1.msra.mxu0 %v573
        %1149 = vmatprep.subr.mxu0 %v582
        %1150 = vmatpush1.msra.mxu0 %v581
        %1151 = vmatprep.subr.mxu0 %v590
        %1152 = vmatpush1.msra.mxu0 %v589
        %1153 = vmatprep.subr.mxu0 %v598
        %1154 = vmatpush1.msra.mxu0 %v597
        %1155 = vmatprep.subr.mxu0 %v606
        %1156 = vmatpush1.msra.mxu0 %v605
        %1157 = vmatprep.subr.mxu0 %v614
        %1158 = vmatpush1.msra.mxu0 %v613
        %1159 = vmatprep.subr.mxu0 %v622
        %1160 = vmatpush1.msra.mxu0 %v621
        %1161 = vmatprep.subr.mxu0 %v630
        %1162 = vmatpush1.msra.mxu0 %v629
        %1163 = vmatprep.subr.mxu0 %v638
        %1164 = vmatpush1.msra.mxu0 %v637
        %1165 = vmatprep.subr.mxu0 %v646
        %1166 = vmatpush1.msra.mxu0 %v645
        %1167 = vmatprep.subr.mxu0 %v654
        %1168 = vmatpush1.msra.mxu0 %v653
        %1169 = vmatprep.subr.mxu0 %v662
        %1170 = vmatpush1.msra.mxu0 %v661
        %1171 = vmatprep.subr.mxu0 %v670
        %1172 = vmatpush1.msra.mxu0 %v669
        %1173 = vmatprep.subr.mxu0 %v678
        %1174 = vmatpush1.msra.mxu0 %v677
        %1175 = vmatprep.subr.mxu0 %v686
        %1176 = vmatpush1.msra.mxu0 %v685
        %1177 = vmatprep.subr.mxu0 %v694
        %1178 = vmatpush1.msra.mxu0 %v693
        %1179 = vmatprep.subr.mxu0 %v702
        %1180 = vmatpush1.msra.mxu0 %v701
        %1181 = vmatprep.subr.mxu0 %v710
        %1182 = vmatpush1.msra.mxu0 %v709
        %1183 = vmatprep.subr.mxu0 %v718
        %1184 = vmatpush1.msra.mxu0 %v717
        %1185 = vmatprep.subr.mxu0 %v726
        %1186 = vmatpush1.msra.mxu0 %v725
        %1187 = vmatprep.subr.mxu0 %v734
        %1188 = vmatpush1.msra.mxu0 %v733
        %1189 = vmatprep.subr.mxu0 %v742
        %1190 = vmatpush1.msra.mxu0 %v741
        %1191 = vmatprep.subr.mxu0 %v750
        %1192 = vmatpush1.msra.mxu0 %v749
        %1193 = vmatprep.subr.mxu0 %v758
        %1194 = vmatpush1.msra.mxu0 %v757
        %1195 = vmatprep.subr.mxu0 %v766
        %1196 = vmatpush1.msra.mxu0 %v765
        %1197 = vmatprep.mubr.f32.mxu0 %v482
        %1198 = vmatmul.mubr.f32.gmra.mrb[0].mxu0 %v481
        %v1199 = vpop.f32.mrb[0].mxu0
        %v1200 = vadd.f32 %v790, %v1199
        %v1201 = vpop.f32.mrb[0].mxu0
        %v1202 = vadd.f32 %v794, %v1201
        %1203 = vmatprep.mubr.f32.mxu0 %v484
        %1204 = vmatmul.mubr.f32.gmra.mrb[0].mxu0 %v483
        %v1205 = vpop.f32.mrb[0].mxu0
        %v1206 = vadd.f32 %v790, %v1205
        %v1207 = vpop.f32.mrb[0].mxu0
        %v1208 = vadd.f32 %v794, %v1207
        %1209 = vmatprep.mubr.f32.mxu0 %v486
        %1210 = vmatmul.mubr.f32.gmra.mrb[0].mxu0 %v485
        %v1211 = vpop.f32.mrb[0].mxu0
        %v1212 = vadd.f32 %v790, %v1211
        %v1213 = vpop.f32.mrb[0].mxu0
        %v1214 = vadd.f32 %v794, %v1213
        %1215 = vmatprep.mubr.f32.mxu0 %v488
        %1216 = vmatmul.mubr.f32.gmra.mrb[0].mxu0 %v487
        %v1217 = vpop.f32.mrb[0].mxu0
        %v1218 = vadd.f32 %v790, %v1217
        %v1219 = vpop.f32.mrb[0].mxu0
        %v1220 = vadd.f32 %v794, %v1219
        %1221 = vmatprep.mubr.f32.mxu0 %v490
        %1222 = vmatmul.mubr.f32.gmra.mrb[0].mxu0 %v489
        %v1223 = vpop.f32.mrb[0].mxu0
        %v1224 = vadd.f32 %v790, %v1223
        %v1225 = vpop.f32.mrb[0].mxu0
        %v1226 = vadd.f32 %v794, %v1225
        %1227 = vmatprep.mubr.f32.mxu0 %v492
        %1228 = vmatmul.mubr.f32.gmra.mrb[0].mxu0 %v491
        %v1229 = vpop.f32.mrb[0].mxu0
        %v1230 = vadd.f32 %v790, %v1229
        %v1231 = vpop.f32.mrb[0].mxu0
        %v1232 = vadd.f32 %v794, %v1231
        %1233 = vmatprep.mubr.f32.mxu0 %v494
        %1234 = vmatmul.mubr.f32.gmra.mrb[0].mxu0 %v493
        %v1235 = vpop.f32.mrb[0].mxu0
        %v1236 = vadd.f32 %v790, %v1235
        %v1237 = vpop.f32.mrb[0].mxu0
        %v1238 = vadd.f32 %v794, %v1237
        %1239 = vmatprep.mubr.f32.mxu0 %v496
        %1240 = vmatmul.mubr.f32.gmra.mrb[0].mxu0 %v495
        %v1241 = vpop.f32.mrb[0].mxu0
        %v1242 = vadd.f32 %v790, %v1241
        %v1243 = vpop.f32.mrb[0].mxu0
        %v1244 = vadd.f32 %v794, %v1243
        %1245 = vmatprep.mubr.f32.mxu0 %v498
        %1246 = vmatmul.mubr.f32.gmra.mrb[0].mxu0 %v497
        %v1247 = vpop.f32.mrb[0].mxu0
        %v1248 = vadd.f32 %v790, %v1247
        %v1249 = vpop.f32.mrb[0].mxu0
        %v1250 = vadd.f32 %v794, %v1249
        %1251 = vmatprep.mubr.f32.mxu0 %v500
        %1252 = vmatmul.mubr.f32.gmra.mrb[0].mxu0 %v499
        %v1253 = vpop.f32.mrb[0].mxu0
        %v1254 = vadd.f32 %v790, %v1253
        %v1255 = vpop.f32.mrb[0].mxu0
        %v1256 = vadd.f32 %v794, %v1255
        %1257 = vmatprep.mubr.f32.mxu0 %v502
        %1258 = vmatmul.mubr.f32.gmra.mrb[0].mxu0 %v501
        %v1259 = vpop.f32.mrb[0].mxu0
        %v1260 = vadd.f32 %v790, %v1259
        %v1261 = vpop.f32.mrb[0].mxu0
        %v1262 = vadd.f32 %v794, %v1261
        %1263 = vmatprep.mubr.f32.mxu0 %v504
        %1264 = vmatmul.mubr.f32.gmra.mrb[0].mxu0 %v503
        %v1265 = vpop.f32.mrb[0].mxu0
        %v1266 = vadd.f32 %v790, %v1265
        %v1267 = vpop.f32.mrb[0].mxu0
        %v1268 = vadd.f32 %v794, %v1267
        %1269 = vmatprep.mubr.f32.mxu0 %v506
        %1270 = vmatmul.mubr.f32.gmra.mrb[0].mxu0 %v505
        %v1271 = vpop.f32.mrb[0].mxu0
        %v1272 = vadd.f32 %v790, %v1271
        %v1273 = vpop.f32.mrb[0].mxu0
        %v1274 = vadd.f32 %v794, %v1273
        %1275 = vmatprep.mubr.f32.mxu0 %v508
        %1276 = vmatmul.mubr.f32.gmra.mrb[0].mxu0 %v507
        %v1277 = vpop.f32.mrb[0].mxu0
        %v1278 = vadd.f32 %v790, %v1277
        %v1279 = vpop.f32.mrb[0].mxu0
        %v1280 = vadd.f32 %v794, %v1279
        %1281 = vmatprep.mubr.f32.mxu0 %v510
        %1282 = vmatmul.mubr.f32.gmra.mrb[0].mxu0 %v509
        %v1283 = vpop.f32.mrb[0].mxu0
        %v1284 = vadd.f32 %v790, %v1283
        %v1285 = vpop.f32.mrb[0].mxu0
        %v1286 = vadd.f32 %v794, %v1285
        %1287 = vmatprep.mubr.f32.mxu0 %v512
        %1288 = vmatmul.mubr.f32.gmra.mrb[0].mxu0 %v511
        %v1289 = vpop.f32.mrb[0].mxu0
        %v1290 = vadd.f32 %v790, %v1289
        %v1291 = vpop.f32.mrb[0].mxu0
        %v1292 = vadd.f32 %v794, %v1291
        %1293 = vdwg.mxu0
        %1294 = vmatprep.subr.mxu0 %v520
        %1295 = vmatpush1.msra.mxu0 %v519
        %1296 = vmatprep.subr.mxu0 %v528
        %1297 = vmatpush1.msra.mxu0 %v527
        %1298 = vmatprep.subr.mxu0 %v536
        %1299 = vmatpush1.msra.mxu0 %v535
        %1300 = vmatprep.subr.mxu0 %v544
        %1301 = vmatpush1.msra.mxu0 %v543
        %1302 = vmatprep.subr.mxu0 %v552
        %1303 = vmatpush1.msra.mxu0 %v551
        %1304 = vmatprep.subr.mxu0 %v560
        %1305 = vmatpush1.msra.mxu0 %v559
        %1306 = vmatprep.subr.mxu0 %v568
        %1307 = vmatpush1.msra.mxu0 %v567
        %1308 = vmatprep.subr.mxu0 %v576
        %1309 = vmatpush1.msra.mxu0 %v575
        %1310 = vmatprep.subr.mxu0 %v584
        %1311 = vmatpush1.msra.mxu0 %v583
        %1312 = vmatprep.subr.mxu0 %v592
        %1313 = vmatpush1.msra.mxu0 %v591
        %1314 = vmatprep.subr.mxu0 %v600
        %1315 = vmatpush1.msra.mxu0 %v599
        %1316 = vmatprep.subr.mxu0 %v608
        %1317 = vmatpush1.msra.mxu0 %v607
        %1318 = vmatprep.subr.mxu0 %v616
        %1319 = vmatpush1.msra.mxu0 %v615
        %1320 = vmatprep.subr.mxu0 %v624
        %1321 = vmatpush1.msra.mxu0 %v623
        %1322 = vmatprep.subr.mxu0 %v632
        %1323 = vmatpush1.msra.mxu0 %v631
        %1324 = vmatprep.subr.mxu0 %v640
        %1325 = vmatpush1.msra.mxu0 %v639
        %1326 = vmatprep.subr.mxu0 %v648
        %1327 = vmatpush1.msra.mxu0 %v647
        %1328 = vmatprep.subr.mxu0 %v656
        %1329 = vmatpush1.msra.mxu0 %v655
        %1330 = vmatprep.subr.mxu0 %v664
        %1331 = vmatpush1.msra.mxu0 %v663
        %1332 = vmatprep.subr.mxu0 %v672
        %1333 = vmatpush1.msra.mxu0 %v671
        %1334 = vmatprep.subr.mxu0 %v680
        %1335 = vmatpush1.msra.mxu0 %v679
        %1336 = vmatprep.subr.mxu0 %v688
        %1337 = vmatpush1.msra.mxu0 %v687
        %1338 = vmatprep.subr.mxu0 %v696
        %1339 = vmatpush1.msra.mxu0 %v695
        %1340 = vmatprep.subr.mxu0 %v704
        %1341 = vmatpush1.msra.mxu0 %v703
        %1342 = vmatprep.subr.mxu0 %v712
        %1343 = vmatpush1.msra.mxu0 %v711
        %1344 = vmatprep.subr.mxu0 %v720
        %1345 = vmatpush1.msra.mxu0 %v719
        %1346 = vmatprep.subr.mxu0 %v728
        %1347 = vmatpush1.msra.mxu0 %v727
        %1348 = vmatprep.subr.mxu0 %v736
        %1349 = vmatpush1.msra.mxu0 %v735
        %1350 = vmatprep.subr.mxu0 %v744
        %1351 = vmatpush1.msra.mxu0 %v743
        %1352 = vmatprep.subr.mxu0 %v752
        %1353 = vmatpush1.msra.mxu0 %v751
        %1354 = vmatprep.subr.mxu0 %v760
        %1355 = vmatpush1.msra.mxu0 %v759
        %1356 = vmatprep.subr.mxu0 %v768
        %1357 = vmatpush1.msra.mxu0 %v767
        %1358 = vmatprep.mubr.f32.mxu0 %v482
        %1359 = vmatmul.mubr.f32.gmra.mrb[0].mxu0 %v481
        %v1360 = vpop.f32.mrb[0].mxu0
        %v1361 = vadd.f32 %v798, %v1360
        %v1362 = vpop.f32.mrb[0].mxu0
        %v1363 = vadd.f32 %v802, %v1362
        %1364 = vmatprep.mubr.f32.mxu0 %v484
        %1365 = vmatmul.mubr.f32.gmra.mrb[0].mxu0 %v483
        %v1366 = vpop.f32.mrb[0].mxu0
        %v1367 = vadd.f32 %v798, %v1366
        %v1368 = vpop.f32.mrb[0].mxu0
        %v1369 = vadd.f32 %v802, %v1368
        %1370 = vmatprep.mubr.f32.mxu0 %v486
        %1371 = vmatmul.mubr.f32.gmra.mrb[0].mxu0 %v485
        %v1372 = vpop.f32.mrb[0].mxu0
        %v1373 = vadd.f32 %v798, %v1372
        %v1374 = vpop.f32.mrb[0].mxu0
        %v1375 = vadd.f32 %v802, %v1374
        %1376 = vmatprep.mubr.f32.mxu0 %v488
        %1377 = vmatmul.mubr.f32.gmra.mrb[0].mxu0 %v487
        %v1378 = vpop.f32.mrb[0].mxu0
        %v1379 = vadd.f32 %v798, %v1378
        %v1380 = vpop.f32.mrb[0].mxu0
        %v1381 = vadd.f32 %v802, %v1380
        %1382 = vmatprep.mubr.f32.mxu0 %v490
        %1383 = vmatmul.mubr.f32.gmra.mrb[0].mxu0 %v489
        %v1384 = vpop.f32.mrb[0].mxu0
        %v1385 = vadd.f32 %v798, %v1384
        %v1386 = vpop.f32.mrb[0].mxu0
        %v1387 = vadd.f32 %v802, %v1386
        %1388 = vmatprep.mubr.f32.mxu0 %v492
        %1389 = vmatmul.mubr.f32.gmra.mrb[0].mxu0 %v491
        %v1390 = vpop.f32.mrb[0].mxu0
        %v1391 = vadd.f32 %v798, %v1390
        %v1392 = vpop.f32.mrb[0].mxu0
        %v1393 = vadd.f32 %v802, %v1392
        %1394 = vmatprep.mubr.f32.mxu0 %v494
        %1395 = vmatmul.mubr.f32.gmra.mrb[0].mxu0 %v493
        %v1396 = vpop.f32.mrb[0].mxu0
        %v1397 = vadd.f32 %v798, %v1396
        %v1398 = vpop.f32.mrb[0].mxu0
        %v1399 = vadd.f32 %v802, %v1398
        %1400 = vmatprep.mubr.f32.mxu0 %v496
        %1401 = vmatmul.mubr.f32.gmra.mrb[0].mxu0 %v495
        %v1402 = vpop.f32.mrb[0].mxu0
        %v1403 = vadd.f32 %v798, %v1402
        %v1404 = vpop.f32.mrb[0].mxu0
        %v1405 = vadd.f32 %v802, %v1404
        %1406 = vmatprep.mubr.f32.mxu0 %v498
        %1407 = vmatmul.mubr.f32.gmra.mrb[0].mxu0 %v497
        %v1408 = vpop.f32.mrb[0].mxu0
        %v1409 = vadd.f32 %v798, %v1408
        %v1410 = vpop.f32.mrb[0].mxu0
        %v1411 = vadd.f32 %v802, %v1410
        %1412 = vmatprep.mubr.f32.mxu0 %v500
        %1413 = vmatmul.mubr.f32.gmra.mrb[0].mxu0 %v499
        %v1414 = vpop.f32.mrb[0].mxu0
        %v1415 = vadd.f32 %v798, %v1414
        %v1416 = vpop.f32.mrb[0].mxu0
        %v1417 = vadd.f32 %v802, %v1416
        %1418 = vmatprep.mubr.f32.mxu0 %v502
        %1419 = vmatmul.mubr.f32.gmra.mrb[0].mxu0 %v501
        %v1420 = vpop.f32.mrb[0].mxu0
        %v1421 = vadd.f32 %v798, %v1420
        %v1422 = vpop.f32.mrb[0].mxu0
        %v1423 = vadd.f32 %v802, %v1422
        %1424 = vmatprep.mubr.f32.mxu0 %v504
        %1425 = vmatmul.mubr.f32.gmra.mrb[0].mxu0 %v503
        %v1426 = vpop.f32.mrb[0].mxu0
        %v1427 = vadd.f32 %v798, %v1426
        %v1428 = vpop.f32.mrb[0].mxu0
        %v1429 = vadd.f32 %v802, %v1428
        %1430 = vmatprep.mubr.f32.mxu0 %v506
        %1431 = vmatmul.mubr.f32.gmra.mrb[0].mxu0 %v505
        %v1432 = vpop.f32.mrb[0].mxu0
        %v1433 = vadd.f32 %v798, %v1432
        %v1434 = vpop.f32.mrb[0].mxu0
        %v1435 = vadd.f32 %v802, %v1434
        %1436 = vmatprep.mubr.f32.mxu0 %v508
        %1437 = vmatmul.mubr.f32.gmra.mrb[0].mxu0 %v507
        %v1438 = vpop.f32.mrb[0].mxu0
        %v1439 = vadd.f32 %v798, %v1438
        %v1440 = vpop.f32.mrb[0].mxu0
        %v1441 = vadd.f32 %v802, %v1440
        %1442 = vmatprep.mubr.f32.mxu0 %v510
        %1443 = vmatmul.mubr.f32.gmra.mrb[0].mxu0 %v509
        %v1444 = vpop.f32.mrb[0].mxu0
        %v1445 = vadd.f32 %v798, %v1444
        %v1446 = vpop.f32.mrb[0].mxu0
        %v1447 = vadd.f32 %v802, %v1446
        %1448 = vmatprep.mubr.f32.mxu0 %v512
        %1449 = vmatmul.mubr.f32.gmra.mrb[0].mxu0 %v511
        %v1450 = vpop.f32.mrb[0].mxu0
        %v1451 = vadd.f32 %v798, %v1450
        %v1452 = vpop.f32.mrb[0].mxu0
        %v1453 = vadd.f32 %v802, %v1452
        %1454 = vdwg.mxu0
        %1455 = vst [vmem:[#allocation2] sm:$0xff] %v878
        %1456 = vst [vmem:[#allocation2 + $0x8] sm:$0xff] %v880
        %1457 = vst [vmem:[#allocation2 + $0x10] sm:$0xff] %v1039
        %1458 = vst [vmem:[#allocation2 + $0x18] sm:$0xff] %v1041
        %1459 = vst [vmem:[#allocation2 + $0x20] sm:$0xff] %v1200
        %1460 = vst [vmem:[#allocation2 + $0x28] sm:$0xff] %v1202
        %1461 = vst [vmem:[#allocation2 + $0x30] sm:$0xff] %v1361
        %1462 = vst [vmem:[#allocation2 + $0x38] sm:$0xff] %v1363
        %1463 = vst [vmem:[#allocation2 + $0x40] sm:$0xff] %v884
        %1464 = vst [vmem:[#allocation2 + $0x48] sm:$0xff] %v886
        %1465 = vst [vmem:[#allocation2 + $0x50] sm:$0xff] %v1045
        %1466 = vst [vmem:[#allocation2 + $0x58] sm:$0xff] %v1047
        %1467 = vst [vmem:[#allocation2 + $0x60] sm:$0xff] %v1206
        %1468 = vst [vmem:[#allocation2 + $0x68] sm:$0xff] %v1208
        %1469 = vst [vmem:[#allocation2 + $0x70] sm:$0xff] %v1367
        %1470 = vst [vmem:[#allocation2 + $0x78] sm:$0xff] %v1369
        %1471 = vst [vmem:[#allocation2 + $0x80] sm:$0xff] %v890
        %1472 = vst [vmem:[#allocation2 + $0x88] sm:$0xff] %v892
        %1473 = vst [vmem:[#allocation2 + $0x90] sm:$0xff] %v1051
        %1474 = vst [vmem:[#allocation2 + $0x98] sm:$0xff] %v1053
        %1475 = vst [vmem:[#allocation2 + $0xa0] sm:$0xff] %v1212
        %1476 = vst [vmem:[#allocation2 + $0xa8] sm:$0xff] %v1214
        %1477 = vst [vmem:[#allocation2 + $0xb0] sm:$0xff] %v1373
        %1478 = vst [vmem:[#allocation2 + $0xb8] sm:$0xff] %v1375
        %1479 = vst [vmem:[#allocation2 + $0xc0] sm:$0xff] %v896
        %1480 = vst [vmem:[#allocation2 + $0xc8] sm:$0xff] %v898
        %1481 = vst [vmem:[#allocation2 + $0xd0] sm:$0xff] %v1057
        %1482 = vst [vmem:[#allocation2 + $0xd8] sm:$0xff] %v1059
        %1483 = vst [vmem:[#allocation2 + $0xe0] sm:$0xff] %v1218
        %1484 = vst [vmem:[#allocation2 + $0xe8] sm:$0xff] %v1220
        %1485 = vst [vmem:[#allocation2 + $0xf0] sm:$0xff] %v1379
        %1486 = vst [vmem:[#allocation2 + $0xf8] sm:$0xff] %v1381
        %1487 = vst [vmem:[#allocation2 + $0x100] sm:$0xff] %v902
        %1488 = vst [vmem:[#allocation2 + $0x108] sm:$0xff] %v904
        %1489 = vst [vmem:[#allocation2 + $0x110] sm:$0xff] %v1063
        %1490 = vst [vmem:[#allocation2 + $0x118] sm:$0xff] %v1065
        %1491 = vst [vmem:[#allocation2 + $0x120] sm:$0xff] %v1224
        %1492 = vst [vmem:[#allocation2 + $0x128] sm:$0xff] %v1226
        %1493 = vst [vmem:[#allocation2 + $0x130] sm:$0xff] %v1385
        %1494 = vst [vmem:[#allocation2 + $0x138] sm:$0xff] %v1387
        %1495 = vst [vmem:[#allocation2 + $0x140] sm:$0xff] %v908
        %1496 = vst [vmem:[#allocation2 + $0x148] sm:$0xff] %v910
        %1497 = vst [vmem:[#allocation2 + $0x150] sm:$0xff] %v1069
        %1498 = vst [vmem:[#allocation2 + $0x158] sm:$0xff] %v1071
        %1499 = vst [vmem:[#allocation2 + $0x160] sm:$0xff] %v1230
        %1500 = vst [vmem:[#allocation2 + $0x168] sm:$0xff] %v1232
        %1501 = vst [vmem:[#allocation2 + $0x170] sm:$0xff] %v1391
        %1502 = vst [vmem:[#allocation2 + $0x178] sm:$0xff] %v1393
        %1503 = vst [vmem:[#allocation2 + $0x180] sm:$0xff] %v914
        %1504 = vst [vmem:[#allocation2 + $0x188] sm:$0xff] %v916
        %1505 = vst [vmem:[#allocation2 + $0x190] sm:$0xff] %v1075
        %1506 = vst [vmem:[#allocation2 + $0x198] sm:$0xff] %v1077
        %1507 = vst [vmem:[#allocation2 + $0x1a0] sm:$0xff] %v1236
        %1508 = vst [vmem:[#allocation2 + $0x1a8] sm:$0xff] %v1238
        %1509 = vst [vmem:[#allocation2 + $0x1b0] sm:$0xff] %v1397
        %1510 = vst [vmem:[#allocation2 + $0x1b8] sm:$0xff] %v1399
        %1511 = vst [vmem:[#allocation2 + $0x1c0] sm:$0xff] %v920
        %1512 = vst [vmem:[#allocation2 + $0x1c8] sm:$0xff] %v922
        %1513 = vst [vmem:[#allocation2 + $0x1d0] sm:$0xff] %v1081
        %1514 = vst [vmem:[#allocation2 + $0x1d8] sm:$0xff] %v1083
        %1515 = vst [vmem:[#allocation2 + $0x1e0] sm:$0xff] %v1242
        %1516 = vst [vmem:[#allocation2 + $0x1e8] sm:$0xff] %v1244
        %1517 = vst [vmem:[#allocation2 + $0x1f0] sm:$0xff] %v1403
        %1518 = vst [vmem:[#allocation2 + $0x1f8] sm:$0xff] %v1405
        %1519 = vst [vmem:[#allocation2 + $0x200] sm:$0xff] %v926
        %1520 = vst [vmem:[#allocation2 + $0x208] sm:$0xff] %v928
        %1521 = vst [vmem:[#allocation2 + $0x210] sm:$0xff] %v1087
        %1522 = vst [vmem:[#allocation2 + $0x218] sm:$0xff] %v1089
        %1523 = vst [vmem:[#allocation2 + $0x220] sm:$0xff] %v1248
        %1524 = vst [vmem:[#allocation2 + $0x228] sm:$0xff] %v1250
        %1525 = vst [vmem:[#allocation2 + $0x230] sm:$0xff] %v1409
        %1526 = vst [vmem:[#allocation2 + $0x238] sm:$0xff] %v1411
        %1527 = vst [vmem:[#allocation2 + $0x240] sm:$0xff] %v932
        %1528 = vst [vmem:[#allocation2 + $0x248] sm:$0xff] %v934
        %1529 = vst [vmem:[#allocation2 + $0x250] sm:$0xff] %v1093
        %1530 = vst [vmem:[#allocation2 + $0x258] sm:$0xff] %v1095
        %1531 = vst [vmem:[#allocation2 + $0x260] sm:$0xff] %v1254
        %1532 = vst [vmem:[#allocation2 + $0x268] sm:$0xff] %v1256
        %1533 = vst [vmem:[#allocation2 + $0x270] sm:$0xff] %v1415
        %1534 = vst [vmem:[#allocation2 + $0x278] sm:$0xff] %v1417
        %1535 = vst [vmem:[#allocation2 + $0x280] sm:$0xff] %v938
        %1536 = vst [vmem:[#allocation2 + $0x288] sm:$0xff] %v940
        %1537 = vst [vmem:[#allocation2 + $0x290] sm:$0xff] %v1099
        %1538 = vst [vmem:[#allocation2 + $0x298] sm:$0xff] %v1101
        %1539 = vst [vmem:[#allocation2 + $0x2a0] sm:$0xff] %v1260
        %1540 = vst [vmem:[#allocation2 + $0x2a8] sm:$0xff] %v1262
        %1541 = vst [vmem:[#allocation2 + $0x2b0] sm:$0xff] %v1421
        %1542 = vst [vmem:[#allocation2 + $0x2b8] sm:$0xff] %v1423
        %1543 = vst [vmem:[#allocation2 + $0x2c0] sm:$0xff] %v944
        %1544 = vst [vmem:[#allocation2 + $0x2c8] sm:$0xff] %v946
        %1545 = vst [vmem:[#allocation2 + $0x2d0] sm:$0xff] %v1105
        %1546 = vst [vmem:[#allocation2 + $0x2d8] sm:$0xff] %v1107
        %1547 = vst [vmem:[#allocation2 + $0x2e0] sm:$0xff] %v1266
        %1548 = vst [vmem:[#allocation2 + $0x2e8] sm:$0xff] %v1268
        %1549 = vst [vmem:[#allocation2 + $0x2f0] sm:$0xff] %v1427
        %1550 = vst [vmem:[#allocation2 + $0x2f8] sm:$0xff] %v1429
        %1551 = vst [vmem:[#allocation2 + $0x300] sm:$0xff] %v950
        %1552 = vst [vmem:[#allocation2 + $0x308] sm:$0xff] %v952
        %1553 = vst [vmem:[#allocation2 + $0x310] sm:$0xff] %v1111
        %1554 = vst [vmem:[#allocation2 + $0x318] sm:$0xff] %v1113
        %1555 = vst [vmem:[#allocation2 + $0x320] sm:$0xff] %v1272
        %1556 = vst [vmem:[#allocation2 + $0x328] sm:$0xff] %v1274
        %1557 = vst [vmem:[#allocation2 + $0x330] sm:$0xff] %v1433
        %1558 = vst [vmem:[#allocation2 + $0x338] sm:$0xff] %v1435
        %1559 = vst [vmem:[#allocation2 + $0x340] sm:$0xff] %v956
        %1560 = vst [vmem:[#allocation2 + $0x348] sm:$0xff] %v958
        %1561 = vst [vmem:[#allocation2 + $0x350] sm:$0xff] %v1117
        %1562 = vst [vmem:[#allocation2 + $0x358] sm:$0xff] %v1119
        %1563 = vst [vmem:[#allocation2 + $0x360] sm:$0xff] %v1278
        %1564 = vst [vmem:[#allocation2 + $0x368] sm:$0xff] %v1280
        %1565 = vst [vmem:[#allocation2 + $0x370] sm:$0xff] %v1439
        %1566 = vst [vmem:[#allocation2 + $0x378] sm:$0xff] %v1441
        %1567 = vst [vmem:[#allocation2 + $0x380] sm:$0xff] %v962
        %1568 = vst [vmem:[#allocation2 + $0x388] sm:$0xff] %v964
        %1569 = vst [vmem:[#allocation2 + $0x390] sm:$0xff] %v1123
        %1570 = vst [vmem:[#allocation2 + $0x398] sm:$0xff] %v1125
        %1571 = vst [vmem:[#allocation2 + $0x3a0] sm:$0xff] %v1284
        %1572 = vst [vmem:[#allocation2 + $0x3a8] sm:$0xff] %v1286
        %1573 = vst [vmem:[#allocation2 + $0x3b0] sm:$0xff] %v1445
        %1574 = vst [vmem:[#allocation2 + $0x3b8] sm:$0xff] %v1447
        %1575 = vst [vmem:[#allocation2 + $0x3c0] sm:$0xff] %v968
        %1576 = vst [vmem:[#allocation2 + $0x3c8] sm:$0xff] %v970
        %1577 = vst [vmem:[#allocation2 + $0x3d0] sm:$0xff] %v1129
        %1578 = vst [vmem:[#allocation2 + $0x3d8] sm:$0xff] %v1131
        %1579 = vst [vmem:[#allocation2 + $0x3e0] sm:$0xff] %v1290
        %1580 = vst [vmem:[#allocation2 + $0x3e8] sm:$0xff] %v1292
        %1581 = vst [vmem:[#allocation2 + $0x3f0] sm:$0xff] %v1451
        %1582 = vst [vmem:[#allocation2 + $0x3f8] sm:$0xff] %v1453
        %v1583 = vld [vmem:[%s354] sm:$0xff]
        %v1584 = vld [vmem:[%s354 + $0x8] sm:$0xff]
        %v1585 = vld [vmem:[%s354 + $0x10] sm:$0xff]
        %v1586 = vld [vmem:[%s354 + $0x18] sm:$0xff]
        %v1587 = vld [vmem:[%s354 + $0x20] sm:$0xff]
        %v1588 = vld [vmem:[%s354 + $0x28] sm:$0xff]
        %v1589 = vld [vmem:[%s354 + $0x30] sm:$0xff]
        %v1590 = vld [vmem:[%s354 + $0x38] sm:$0xff]
        %v1591 = vld [vmem:[%s354 + $0x40] sm:$0xff]
        %v1592 = vld [vmem:[%s354 + $0x48] sm:$0xff]
        %v1593 = vld [vmem:[%s354 + $0x50] sm:$0xff]
        %v1594 = vld [vmem:[%s354 + $0x58] sm:$0xff]
        %v1595 = vld [vmem:[%s354 + $0x60] sm:$0xff]
        %v1596 = vld [vmem:[%s354 + $0x68] sm:$0xff]
        %v1597 = vld [vmem:[%s354 + $0x70] sm:$0xff]
        %v1598 = vld [vmem:[%s354 + $0x78] sm:$0xff]
        %v1599 = vld [vmem:[%s354 + $0x80] sm:$0xff]
        %v1600 = vld [vmem:[%s354 + $0x88] sm:$0xff]
        %v1601 = vld [vmem:[%s354 + $0x90] sm:$0xff]
        %v1602 = vld [vmem:[%s354 + $0x98] sm:$0xff]
        %v1603 = vld [vmem:[%s354 + $0xa0] sm:$0xff]
        %v1604 = vld [vmem:[%s354 + $0xa8] sm:$0xff]
        %v1605 = vld [vmem:[%s354 + $0xb0] sm:$0xff]
        %v1606 = vld [vmem:[%s354 + $0xb8] sm:$0xff]
        %v1607 = vld [vmem:[%s354 + $0xc0] sm:$0xff]
        %v1608 = vld [vmem:[%s354 + $0xc8] sm:$0xff]
        %v1609 = vld [vmem:[%s354 + $0xd0] sm:$0xff]
        %v1610 = vld [vmem:[%s354 + $0xd8] sm:$0xff]
        %v1611 = vld [vmem:[%s354 + $0xe0] sm:$0xff]
        %v1612 = vld [vmem:[%s354 + $0xe8] sm:$0xff]
        %v1613 = vld [vmem:[%s354 + $0xf0] sm:$0xff]
        %v1614 = vld [vmem:[%s354 + $0xf8] sm:$0xff]
        %v1615 = vld [vmem:[%s354 + $0x100] sm:$0xff]
        %v1616 = vld [vmem:[%s354 + $0x108] sm:$0xff]
        %v1617 = vld [vmem:[%s354 + $0x110] sm:$0xff]
        %v1618 = vld [vmem:[%s354 + $0x118] sm:$0xff]
        %v1619 = vld [vmem:[%s354 + $0x120] sm:$0xff]
        %v1620 = vld [vmem:[%s354 + $0x128] sm:$0xff]
        %v1621 = vld [vmem:[%s354 + $0x130] sm:$0xff]
        %v1622 = vld [vmem:[%s354 + $0x138] sm:$0xff]
        %v1623 = vld [vmem:[%s354 + $0x140] sm:$0xff]
        %v1624 = vld [vmem:[%s354 + $0x148] sm:$0xff]
        %v1625 = vld [vmem:[%s354 + $0x150] sm:$0xff]
        %v1626 = vld [vmem:[%s354 + $0x158] sm:$0xff]
        %v1627 = vld [vmem:[%s354 + $0x160] sm:$0xff]
        %v1628 = vld [vmem:[%s354 + $0x168] sm:$0xff]
        %v1629 = vld [vmem:[%s354 + $0x170] sm:$0xff]
        %v1630 = vld [vmem:[%s354 + $0x178] sm:$0xff]
        %v1631 = vld [vmem:[%s354 + $0x180] sm:$0xff]
        %v1632 = vld [vmem:[%s354 + $0x188] sm:$0xff]
        %v1633 = vld [vmem:[%s354 + $0x190] sm:$0xff]
        %v1634 = vld [vmem:[%s354 + $0x198] sm:$0xff]
        %v1635 = vld [vmem:[%s354 + $0x1a0] sm:$0xff]
        %v1636 = vld [vmem:[%s354 + $0x1a8] sm:$0xff]
        %v1637 = vld [vmem:[%s354 + $0x1b0] sm:$0xff]
        %v1638 = vld [vmem:[%s354 + $0x1b8] sm:$0xff]
        %v1639 = vld [vmem:[%s354 + $0x1c0] sm:$0xff]
        %v1640 = vld [vmem:[%s354 + $0x1c8] sm:$0xff]
        %v1641 = vld [vmem:[%s354 + $0x1d0] sm:$0xff]
        %v1642 = vld [vmem:[%s354 + $0x1d8] sm:$0xff]
        %v1643 = vld [vmem:[%s354 + $0x1e0] sm:$0xff]
        %v1644 = vld [vmem:[%s354 + $0x1e8] sm:$0xff]
        %v1645 = vld [vmem:[%s354 + $0x1f0] sm:$0xff]
        %v1646 = vld [vmem:[%s354 + $0x1f8] sm:$0xff]
        %v1647 = vld [vmem:[%s363] sm:$0xff]
        %v1648 = vld [vmem:[%s363 + $0x8] sm:$0xff]
        %v1649 = vld [vmem:[%s363 + $0x10] sm:$0xff]
        %v1650 = vld [vmem:[%s363 + $0x18] sm:$0xff]
        %v1651 = vld [vmem:[%s363 + $0x20] sm:$0xff]
        %v1652 = vld [vmem:[%s363 + $0x28] sm:$0xff]
        %v1653 = vld [vmem:[%s363 + $0x30] sm:$0xff]
        %v1654 = vld [vmem:[%s363 + $0x38] sm:$0xff]
        %v1655 = vld [vmem:[%s363 + $0x40] sm:$0xff]
        %v1656 = vld [vmem:[%s363 + $0x48] sm:$0xff]
        %v1657 = vld [vmem:[%s363 + $0x50] sm:$0xff]
        %v1658 = vld [vmem:[%s363 + $0x58] sm:$0xff]
        %v1659 = vld [vmem:[%s363 + $0x60] sm:$0xff]
        %v1660 = vld [vmem:[%s363 + $0x68] sm:$0xff]
        %v1661 = vld [vmem:[%s363 + $0x70] sm:$0xff]
        %v1662 = vld [vmem:[%s363 + $0x78] sm:$0xff]
        %v1663 = vld [vmem:[%s363 + $0x80] sm:$0xff]
        %v1664 = vld [vmem:[%s363 + $0x88] sm:$0xff]
        %v1665 = vld [vmem:[%s363 + $0x90] sm:$0xff]
        %v1666 = vld [vmem:[%s363 + $0x98] sm:$0xff]
        %v1667 = vld [vmem:[%s363 + $0xa0] sm:$0xff]
        %v1668 = vld [vmem:[%s363 + $0xa8] sm:$0xff]
        %v1669 = vld [vmem:[%s363 + $0xb0] sm:$0xff]
        %v1670 = vld [vmem:[%s363 + $0xb8] sm:$0xff]
        %v1671 = vld [vmem:[%s363 + $0xc0] sm:$0xff]
        %v1672 = vld [vmem:[%s363 + $0xc8] sm:$0xff]
        %v1673 = vld [vmem:[%s363 + $0xd0] sm:$0xff]
        %v1674 = vld [vmem:[%s363 + $0xd8] sm:$0xff]
        %v1675 = vld [vmem:[%s363 + $0xe0] sm:$0xff]
        %v1676 = vld [vmem:[%s363 + $0xe8] sm:$0xff]
        %v1677 = vld [vmem:[%s363 + $0xf0] sm:$0xff]
        %v1678 = vld [vmem:[%s363 + $0xf8] sm:$0xff]
        %v1679 = vld [vmem:[%s363 + $0x100] sm:$0xff]
        %v1680 = vld [vmem:[%s363 + $0x108] sm:$0xff]
        %v1681 = vld [vmem:[%s363 + $0x110] sm:$0xff]
        %v1682 = vld [vmem:[%s363 + $0x118] sm:$0xff]
        %v1683 = vld [vmem:[%s363 + $0x120] sm:$0xff]
        %v1684 = vld [vmem:[%s363 + $0x128] sm:$0xff]
        %v1685 = vld [vmem:[%s363 + $0x130] sm:$0xff]
        %v1686 = vld [vmem:[%s363 + $0x138] sm:$0xff]
        %v1687 = vld [vmem:[%s363 + $0x140] sm:$0xff]
        %v1688 = vld [vmem:[%s363 + $0x148] sm:$0xff]
        %v1689 = vld [vmem:[%s363 + $0x150] sm:$0xff]
        %v1690 = vld [vmem:[%s363 + $0x158] sm:$0xff]
        %v1691 = vld [vmem:[%s363 + $0x160] sm:$0xff]
        %v1692 = vld [vmem:[%s363 + $0x168] sm:$0xff]
        %v1693 = vld [vmem:[%s363 + $0x170] sm:$0xff]
        %v1694 = vld [vmem:[%s363 + $0x178] sm:$0xff]
        %v1695 = vld [vmem:[%s363 + $0x180] sm:$0xff]
        %v1696 = vld [vmem:[%s363 + $0x188] sm:$0xff]
        %v1697 = vld [vmem:[%s363 + $0x190] sm:$0xff]
        %v1698 = vld [vmem:[%s363 + $0x198] sm:$0xff]
        %v1699 = vld [vmem:[%s363 + $0x1a0] sm:$0xff]
        %v1700 = vld [vmem:[%s363 + $0x1a8] sm:$0xff]
        %v1701 = vld [vmem:[%s363 + $0x1b0] sm:$0xff]
        %v1702 = vld [vmem:[%s363 + $0x1b8] sm:$0xff]
        %v1703 = vld [vmem:[%s363 + $0x1c0] sm:$0xff]
        %v1704 = vld [vmem:[%s363 + $0x1c8] sm:$0xff]
        %v1705 = vld [vmem:[%s363 + $0x1d0] sm:$0xff]
        %v1706 = vld [vmem:[%s363 + $0x1d8] sm:$0xff]
        %v1707 = vld [vmem:[%s363 + $0x1e0] sm:$0xff]
        %v1708 = vld [vmem:[%s363 + $0x1e8] sm:$0xff]
        %v1709 = vld [vmem:[%s363 + $0x1f0] sm:$0xff]
        %v1710 = vld [vmem:[%s363 + $0x1f8] sm:$0xff]
        %v1711 = vld [vmem:[#allocation2] sm:$0xff]
        %v1712 = vld [vmem:[#allocation2 + $0x8] sm:$0xff]
        %v1713 = vld [vmem:[#allocation2 + $0x10] sm:$0xff]
        %v1714 = vld [vmem:[#allocation2 + $0x18] sm:$0xff]
        %1715 = vmatprep.subr.mxu0 %v1584
        %1716 = vmatpush1.msra.mxu0 %v1583
        %1717 = vmatprep.subr.mxu0 %v1588
        %1718 = vmatpush1.msra.mxu0 %v1587
        %1719 = vmatprep.subr.mxu0 %v1592
        %1720 = vmatpush1.msra.mxu0 %v1591
        %1721 = vmatprep.subr.mxu0 %v1596
        %1722 = vmatpush1.msra.mxu0 %v1595
        %1723 = vmatprep.subr.mxu0 %v1600
        %1724 = vmatpush1.msra.mxu0 %v1599
        %1725 = vmatprep.subr.mxu0 %v1604
        %1726 = vmatpush1.msra.mxu0 %v1603
        %1727 = vmatprep.subr.mxu0 %v1608
        %1728 = vmatpush1.msra.mxu0 %v1607
        %1729 = vmatprep.subr.mxu0 %v1612
        %1730 = vmatpush1.msra.mxu0 %v1611
        %1731 = vmatprep.subr.mxu0 %v1616
        %1732 = vmatpush1.msra.mxu0 %v1615
        %1733 = vmatprep.subr.mxu0 %v1620
        %1734 = vmatpush1.msra.mxu0 %v1619
        %1735 = vmatprep.subr.mxu0 %v1624
        %1736 = vmatpush1.msra.mxu0 %v1623
        %1737 = vmatprep.subr.mxu0 %v1628
        %1738 = vmatpush1.msra.mxu0 %v1627
        %1739 = vmatprep.subr.mxu0 %v1632
        %1740 = vmatpush1.msra.mxu0 %v1631
        %1741 = vmatprep.subr.mxu0 %v1636
        %1742 = vmatpush1.msra.mxu0 %v1635
        %1743 = vmatprep.subr.mxu0 %v1640
        %1744 = vmatpush1.msra.mxu0 %v1639
        %1745 = vmatprep.subr.mxu0 %v1644
        %1746 = vmatpush1.msra.mxu0 %v1643
        %1747 = vmatprep.subr.mxu0 0.0
        %1748 = vmatpush1.msra.mxu0 0.0
        %1749 = vmatprep.subr.mxu0 0.0
        %1750 = vmatpush1.msra.mxu0 0.0
        %1751 = vmatprep.subr.mxu0 0.0
        %1752 = vmatpush1.msra.mxu0 0.0
        %1753 = vmatprep.subr.mxu0 0.0
        %1754 = vmatpush1.msra.mxu0 0.0
        %1755 = vmatprep.subr.mxu0 0.0
        %1756 = vmatpush1.msra.mxu0 0.0
        %1757 = vmatprep.subr.mxu0 0.0
        %1758 = vmatpush1.msra.mxu0 0.0
        %1759 = vmatprep.subr.mxu0 0.0
        %1760 = vmatpush1.msra.mxu0 0.0
        %1761 = vmatprep.subr.mxu0 0.0
        %1762 = vmatpush1.msra.mxu0 0.0
        %1763 = vmatprep.subr.mxu0 0.0
        %1764 = vmatpush1.msra.mxu0 0.0
        %1765 = vmatprep.subr.mxu0 0.0
        %1766 = vmatpush1.msra.mxu0 0.0
        %1767 = vmatprep.subr.mxu0 0.0
        %1768 = vmatpush1.msra.mxu0 0.0
        %1769 = vmatprep.subr.mxu0 0.0
        %1770 = vmatpush1.msra.mxu0 0.0
        %1771 = vmatprep.subr.mxu0 0.0
        %1772 = vmatpush1.msra.mxu0 0.0
        %1773 = vmatprep.subr.mxu0 0.0
        %1774 = vmatpush1.msra.mxu0 0.0
        %1775 = vmatprep.subr.mxu0 0.0
        %1776 = vmatpush1.msra.mxu0 0.0
        %1777 = vmatprep.subr.mxu0 0.0
        %1778 = vmatpush1.msra.mxu0 0.0
        %1779 = vmatprep.mubr.f32.mxu0 0.0
        %1780 = vmatmul.mubr.f32.gmra.mrb[0].mxu0 0.0
        %v1781 = vpop.f32.mrb[0].mxu0
        %v1782 = vadd.f32 0.0, %v1781
        %v1783 = vpop.f32.mrb[0].mxu0
        %v1784 = vadd.f32 0.0, %v1783
        %1785 = vdwg.mxu0
        %1786 = vmatprep.subr.mxu0 %v1586
        %1787 = vmatpush1.msra.mxu0 %v1585
        %1788 = vmatprep.subr.mxu0 %v1590
        %1789 = vmatpush1.msra.mxu0 %v1589
        %1790 = vmatprep.subr.mxu0 %v1594
        %1791 = vmatpush1.msra.mxu0 %v1593
        %1792 = vmatprep.subr.mxu0 %v1598
        %1793 = vmatpush1.msra.mxu0 %v1597
        %1794 = vmatprep.subr.mxu0 %v1602
        %1795 = vmatpush1.msra.mxu0 %v1601
        %1796 = vmatprep.subr.mxu0 %v1606
        %1797 = vmatpush1.msra.mxu0 %v1605
        %1798 = vmatprep.subr.mxu0 %v1610
        %1799 = vmatpush1.msra.mxu0 %v1609
        %1800 = vmatprep.subr.mxu0 %v1614
        %1801 = vmatpush1.msra.mxu0 %v1613
        %1802 = vmatprep.subr.mxu0 %v1618
        %1803 = vmatpush1.msra.mxu0 %v1617
        %1804 = vmatprep.subr.mxu0 %v1622
        %1805 = vmatpush1.msra.mxu0 %v1621
        %1806 = vmatprep.subr.mxu0 %v1626
        %1807 = vmatpush1.msra.mxu0 %v1625
        %1808 = vmatprep.subr.mxu0 %v1630
        %1809 = vmatpush1.msra.mxu0 %v1629
        %1810 = vmatprep.subr.mxu0 %v1634
        %1811 = vmatpush1.msra.mxu0 %v1633
        %1812 = vmatprep.subr.mxu0 %v1638
        %1813 = vmatpush1.msra.mxu0 %v1637
        %1814 = vmatprep.subr.mxu0 %v1642
        %1815 = vmatpush1.msra.mxu0 %v1641
        %1816 = vmatprep.subr.mxu0 %v1646
        %1817 = vmatpush1.msra.mxu0 %v1645
        %1818 = vmatprep.subr.mxu0 0.0
        %1819 = vmatpush1.msra.mxu0 0.0
        %1820 = vmatprep.subr.mxu0 0.0
        %1821 = vmatpush1.msra.mxu0 0.0
        %1822 = vmatprep.subr.mxu0 0.0
        %1823 = vmatpush1.msra.mxu0 0.0
        %1824 = vmatprep.subr.mxu0 0.0
        %1825 = vmatpush1.msra.mxu0 0.0
        %1826 = vmatprep.subr.mxu0 0.0
        %1827 = vmatpush1.msra.mxu0 0.0
        %1828 = vmatprep.subr.mxu0 0.0
        %1829 = vmatpush1.msra.mxu0 0.0
        %1830 = vmatprep.subr.mxu0 0.0
        %1831 = vmatpush1.msra.mxu0 0.0
        %1832 = vmatprep.subr.mxu0 0.0
        %1833 = vmatpush1.msra.mxu0 0.0
        %1834 = vmatprep.subr.mxu0 0.0
        %1835 = vmatpush1.msra.mxu0 0.0
        %1836 = vmatprep.subr.mxu0 0.0
        %1837 = vmatpush1.msra.mxu0 0.0
        %1838 = vmatprep.subr.mxu0 0.0
        %1839 = vmatpush1.msra.mxu0 0.0
        %1840 = vmatprep.subr.mxu0 0.0
        %1841 = vmatpush1.msra.mxu0 0.0
        %1842 = vmatprep.subr.mxu0 0.0
        %1843 = vmatpush1.msra.mxu0 0.0
        %1844 = vmatprep.subr.mxu0 0.0
        %1845 = vmatpush1.msra.mxu0 0.0
        %1846 = vmatprep.subr.mxu0 0.0
        %1847 = vmatpush1.msra.mxu0 0.0
        %1848 = vmatprep.subr.mxu0 0.0
        %1849 = vmatpush1.msra.mxu0 0.0
        %1850 = vmatprep.mubr.f32.mxu0 0.0
        %1851 = vmatmul.mubr.f32.gmra.mrb[0].mxu0 0.0
        %v1852 = vpop.f32.mrb[0].mxu0
        %v1853 = vadd.f32 0.0, %v1852
        %v1854 = vpop.f32.mrb[0].mxu0
        %v1855 = vadd.f32 0.0, %v1854
        %1856 = vdwg.mxu0
        %v1857 = vadd.f32 %v1711, %v1782
        %v1858 = vadd.f32 %v1712, %v1784
        %v1859 = vadd.f32 %v1713, %v1853
        %v1860 = vadd.f32 %v1714, %v1855
        %v1861 = vld [vmem:[#allocation2 + $0x3e0] sm:$0xff]
        %v1862 = vld [vmem:[#allocation2 + $0x3e8] sm:$0xff]
        %v1863 = vld [vmem:[#allocation2 + $0x3f0] sm:$0xff]
        %v1864 = vld [vmem:[#allocation2 + $0x3f8] sm:$0xff]
        %1865 = vmatprep.subr.mxu0 %v1648
        %1866 = vmatpush1.msra.mxu0 %v1647
        %1867 = vmatprep.subr.mxu0 %v1652
        %1868 = vmatpush1.msra.mxu0 %v1651
        %1869 = vmatprep.subr.mxu0 %v1656
        %1870 = vmatpush1.msra.mxu0 %v1655
        %1871 = vmatprep.subr.mxu0 %v1660
        %1872 = vmatpush1.msra.mxu0 %v1659
        %1873 = vmatprep.subr.mxu0 %v1664
        %1874 = vmatpush1.msra.mxu0 %v1663
        %1875 = vmatprep.subr.mxu0 %v1668
        %1876 = vmatpush1.msra.mxu0 %v1667
        %1877 = vmatprep.subr.mxu0 %v1672
        %1878 = vmatpush1.msra.mxu0 %v1671
        %1879 = vmatprep.subr.mxu0 %v1676
        %1880 = vmatpush1.msra.mxu0 %v1675
        %1881 = vmatprep.subr.mxu0 %v1680
        %1882 = vmatpush1.msra.mxu0 %v1679
        %1883 = vmatprep.subr.mxu0 %v1684
        %1884 = vmatpush1.msra.mxu0 %v1683
        %1885 = vmatprep.subr.mxu0 %v1688
        %1886 = vmatpush1.msra.mxu0 %v1687
        %1887 = vmatprep.subr.mxu0 %v1692
        %1888 = vmatpush1.msra.mxu0 %v1691
        %1889 = vmatprep.subr.mxu0 %v1696
        %1890 = vmatpush1.msra.mxu0 %v1695
        %1891 = vmatprep.subr.mxu0 %v1700
        %1892 = vmatpush1.msra.mxu0 %v1699
        %1893 = vmatprep.subr.mxu0 %v1704
        %1894 = vmatpush1.msra.mxu0 %v1703
        %1895 = vmatprep.subr.mxu0 %v1708
        %1896 = vmatpush1.msra.mxu0 %v1707
        %1897 = vmatprep.subr.mxu0 0.0
        %1898 = vmatpush1.msra.mxu0 0.0
        %1899 = vmatprep.subr.mxu0 0.0
        %1900 = vmatpush1.msra.mxu0 0.0
        %1901 = vmatprep.subr.mxu0 0.0
        %1902 = vmatpush1.msra.mxu0 0.0
        %1903 = vmatprep.subr.mxu0 0.0
        %1904 = vmatpush1.msra.mxu0 0.0
        %1905 = vmatprep.subr.mxu0 0.0
        %1906 = vmatpush1.msra.mxu0 0.0
        %1907 = vmatprep.subr.mxu0 0.0
        %1908 = vmatpush1.msra.mxu0 0.0
        %1909 = vmatprep.subr.mxu0 0.0
        %1910 = vmatpush1.msra.mxu0 0.0
        %1911 = vmatprep.subr.mxu0 0.0
        %1912 = vmatpush1.msra.mxu0 0.0
        %1913 = vmatprep.subr.mxu0 0.0
        %1914 = vmatpush1.msra.mxu0 0.0
        %1915 = vmatprep.subr.mxu0 0.0
        %1916 = vmatpush1.msra.mxu0 0.0
        %1917 = vmatprep.subr.mxu0 0.0
        %1918 = vmatpush1.msra.mxu0 0.0
        %1919 = vmatprep.subr.mxu0 0.0
        %1920 = vmatpush1.msra.mxu0 0.0
        %1921 = vmatprep.subr.mxu0 0.0
        %1922 = vmatpush1.msra.mxu0 0.0
        %1923 = vmatprep.subr.mxu0 0.0
        %1924 = vmatpush1.msra.mxu0 0.0
        %1925 = vmatprep.subr.mxu0 0.0
        %1926 = vmatpush1.msra.mxu0 0.0
        %1927 = vmatprep.subr.mxu0 0.0
        %1928 = vmatpush1.msra.mxu0 0.0
        %1929 = vmatprep.mubr.f32.mxu0 0.0
        %1930 = vmatmul.mubr.f32.gmra.mrb[0].mxu0 0.0
        %v1931 = vpop.f32.mrb[0].mxu0
        %v1932 = vadd.f32 0.0, %v1931
        %v1933 = vpop.f32.mrb[0].mxu0
        %v1934 = vadd.f32 0.0, %v1933
        %1935 = vdwg.mxu0
        %1936 = vmatprep.subr.mxu0 %v1650
        %1937 = vmatpush1.msra.mxu0 %v1649
        %1938 = vmatprep.subr.mxu0 %v1654
        %1939 = vmatpush1.msra.mxu0 %v1653
        %1940 = vmatprep.subr.mxu0 %v1658
        %1941 = vmatpush1.msra.mxu0 %v1657
        %1942 = vmatprep.subr.mxu0 %v1662
        %1943 = vmatpush1.msra.mxu0 %v1661
        %1944 = vmatprep.subr.mxu0 %v1666
        %1945 = vmatpush1.msra.mxu0 %v1665
        %1946 = vmatprep.subr.mxu0 %v1670
        %1947 = vmatpush1.msra.mxu0 %v1669
        %1948 = vmatprep.subr.mxu0 %v1674
        %1949 = vmatpush1.msra.mxu0 %v1673
        %1950 = vmatprep.subr.mxu0 %v1678
        %1951 = vmatpush1.msra.mxu0 %v1677
        %1952 = vmatprep.subr.mxu0 %v1682
        %1953 = vmatpush1.msra.mxu0 %v1681
        %1954 = vmatprep.subr.mxu0 %v1686
        %1955 = vmatpush1.msra.mxu0 %v1685
        %1956 = vmatprep.subr.mxu0 %v1690
        %1957 = vmatpush1.msra.mxu0 %v1689
        %1958 = vmatprep.subr.mxu0 %v1694
        %1959 = vmatpush1.msra.mxu0 %v1693
        %1960 = vmatprep.subr.mxu0 %v1698
        %1961 = vmatpush1.msra.mxu0 %v1697
        %1962 = vmatprep.subr.mxu0 %v1702
        %1963 = vmatpush1.msra.mxu0 %v1701
        %1964 = vmatprep.subr.mxu0 %v1706
        %1965 = vmatpush1.msra.mxu0 %v1705
        %1966 = vmatprep.subr.mxu0 %v1710
        %1967 = vmatpush1.msra.mxu0 %v1709
        %1968 = vmatprep.subr.mxu0 0.0
        %1969 = vmatpush1.msra.mxu0 0.0
        %1970 = vmatprep.subr.mxu0 0.0
        %1971 = vmatpush1.msra.mxu0 0.0
        %1972 = vmatprep.subr.mxu0 0.0
        %1973 = vmatpush1.msra.mxu0 0.0
        %1974 = vmatprep.subr.mxu0 0.0
        %1975 = vmatpush1.msra.mxu0 0.0
        %1976 = vmatprep.subr.mxu0 0.0
        %1977 = vmatpush1.msra.mxu0 0.0
        %1978 = vmatprep.subr.mxu0 0.0
        %1979 = vmatpush1.msra.mxu0 0.0
        %1980 = vmatprep.subr.mxu0 0.0
        %1981 = vmatpush1.msra.mxu0 0.0
        %1982 = vmatprep.subr.mxu0 0.0
        %1983 = vmatpush1.msra.mxu0 0.0
        %1984 = vmatprep.subr.mxu0 0.0
        %1985 = vmatpush1.msra.mxu0 0.0
        %1986 = vmatprep.subr.mxu0 0.0
        %1987 = vmatpush1.msra.mxu0 0.0
        %1988 = vmatprep.subr.mxu0 0.0
        %1989 = vmatpush1.msra.mxu0 0.0
        %1990 = vmatprep.subr.mxu0 0.0
        %1991 = vmatpush1.msra.mxu0 0.0
        %1992 = vmatprep.subr.mxu0 0.0
        %1993 = vmatpush1.msra.mxu0 0.0
        %1994 = vmatprep.subr.mxu0 0.0
        %1995 = vmatpush1.msra.mxu0 0.0
        %1996 = vmatprep.subr.mxu0 0.0
        %1997 = vmatpush1.msra.mxu0 0.0
        %1998 = vmatprep.subr.mxu0 0.0
        %1999 = vmatpush1.msra.mxu0 0.0
        %2000 = vmatprep.mubr.f32.mxu0 0.0
        %2001 = vmatmul.mubr.f32.gmra.mrb[0].mxu0 0.0
        %v2002 = vpop.f32.mrb[0].mxu0
        %v2003 = vadd.f32 0.0, %v2002
        %v2004 = vpop.f32.mrb[0].mxu0
        %v2005 = vadd.f32 0.0, %v2004
        %2006 = vdwg.mxu0
        %v2007 = vadd.f32 %v1861, %v1932
        %v2008 = vadd.f32 %v1862, %v1934
        %v2009 = vadd.f32 %v1863, %v2003
        %v2010 = vadd.f32 %v1864, %v2005
        %v2011 = vtanh.pop %v1857
        %v2012 = vtanh.pop %v1858
        %v2013 = vtanh.pop %v1859
        %v2014 = vtanh.pop %v1860
        %v2015 = vmul.f32 %v2011, 0.5
        %v2016 = vmul.f32 %v2012, 0.5
        %v2017 = vmul.f32 %v2013, 0.5
        %v2018 = vadd.f32 %v2015, 0.5
        %v2019 = vadd.f32 %v2016, 0.5
        %v2020 = vadd.f32 %v2017, 0.5
        %v2021 = vmul.f32 %v2019, 0.0
        %v2022 = vmul.f32 %v2018, %v2014
        %v2023 = vadd.f32 %v2021, %v2022
        %v2024 = vtanh.pop %v2023
        %v2025 = vmul.f32 %v2020, %v2024
        %v2026 = vtanh.pop %v2007
        %v2027 = vtanh.pop %v2008
        %v2028 = vtanh.pop %v2009
        %v2029 = vtanh.pop %v2010
        %v2030 = vmul.f32 %v2026, 0.5
        %v2031 = vmul.f32 %v2027, 0.5
        %v2032 = vmul.f32 %v2028, 0.5
        %v2033 = vadd.f32 %v2030, 0.5
        %v2034 = vadd.f32 %v2031, 0.5
        %v2035 = vadd.f32 %v2032, 0.5
        %v2036 = vmul.f32 %v2034, 0.0
        %v2037 = vmul.f32 %v2033, %v2029
        %v2038 = vadd.f32 %v2036, %v2037
        %v2039 = vtanh.pop %v2038
        %v2040 = vmul.f32 %v2035, %v2039
        %2041 = vst [vmem:[#allocation3] sm:$0xff] %v2025
        %2042 = vst [vmem:[#allocation3 + $0xf8] sm:$0xff] %v2040
        %v2043 = vld [vmem:[#allocation2 + $0x40] sm:$0xff]
        %v2044 = vld [vmem:[#allocation2 + $0x48] sm:$0xff]
        %v2045 = vld [vmem:[#allocation2 + $0x50] sm:$0xff]
        %v2046 = vld [vmem:[#allocation2 + $0x58] sm:$0xff]
        %2047 = vmatprep.subr.mxu0 %v1584
        %2048 = vmatpush1.msra.mxu0 %v1583
        %2049 = vmatprep.subr.mxu0 %v1588
        %2050 = vmatpush1.msra.mxu0 %v1587
        %2051 = vmatprep.subr.mxu0 %v1592
        %2052 = vmatpush1.msra.mxu0 %v1591
        %2053 = vmatprep.subr.mxu0 %v1596
        %2054 = vmatpush1.msra.mxu0 %v1595
        %2055 = vmatprep.subr.mxu0 %v1600
        %2056 = vmatpush1.msra.mxu0 %v1599
        %2057 = vmatprep.subr.mxu0 %v1604
        %2058 = vmatpush1.msra.mxu0 %v1603
        %2059 = vmatprep.subr.mxu0 %v1608
        %2060 = vmatpush1.msra.mxu0 %v1607
        %2061 = vmatprep.subr.mxu0 %v1612
        %2062 = vmatpush1.msra.mxu0 %v1611
        %2063 = vmatprep.subr.mxu0 %v1616
        %2064 = vmatpush1.msra.mxu0 %v1615
        %2065 = vmatprep.subr.mxu0 %v1620
        %2066 = vmatpush1.msra.mxu0 %v1619
        %2067 = vmatprep.subr.mxu0 %v1624
        %2068 = vmatpush1.msra.mxu0 %v1623
        %2069 = vmatprep.subr.mxu0 %v1628
        %2070 = vmatpush1.msra.mxu0 %v1627
        %2071 = vmatprep.subr.mxu0 %v1632
        %2072 = vmatpush1.msra.mxu0 %v1631
        %2073 = vmatprep.subr.mxu0 %v1636
        %2074 = vmatpush1.msra.mxu0 %v1635
        %2075 = vmatprep.subr.mxu0 %v1640
        %2076 = vmatpush1.msra.mxu0 %v1639
        %2077 = vmatprep.subr.mxu0 %v1644
        %2078 = vmatpush1.msra.mxu0 %v1643
        %2079 = vmatprep.subr.mxu0 0.0
        %2080 = vmatpush1.msra.mxu0 0.0
        %2081 = vmatprep.subr.mxu0 0.0
        %2082 = vmatpush1.msra.mxu0 0.0
        %2083 = vmatprep.subr.mxu0 0.0
        %2084 = vmatpush1.msra.mxu0 0.0
        %2085 = vmatprep.subr.mxu0 0.0
        %2086 = vmatpush1.msra.mxu0 0.0
        %2087 = vmatprep.subr.mxu0 0.0
        %2088 = vmatpush1.msra.mxu0 0.0
        %2089 = vmatprep.subr.mxu0 0.0
        %2090 = vmatpush1.msra.mxu0 0.0
        %2091 = vmatprep.subr.mxu0 0.0
        %2092 = vmatpush1.msra.mxu0 0.0
        %2093 = vmatprep.subr.mxu0 0.0
        %2094 = vmatpush1.msra.mxu0 0.0
        %2095 = vmatprep.subr.mxu0 0.0
        %2096 = vmatpush1.msra.mxu0 0.0
        %2097 = vmatprep.subr.mxu0 0.0
        %2098 = vmatpush1.msra.mxu0 0.0
        %2099 = vmatprep.subr.mxu0 0.0
        %2100 = vmatpush1.msra.mxu0 0.0
        %2101 = vmatprep.subr.mxu0 0.0
        %2102 = vmatpush1.msra.mxu0 0.0
        %2103 = vmatprep.subr.mxu0 0.0
        %2104 = vmatpush1.msra.mxu0 0.0
        %2105 = vmatprep.subr.mxu0 0.0
        %2106 = vmatpush1.msra.mxu0 0.0
        %2107 = vmatprep.subr.mxu0 0.0
        %2108 = vmatpush1.msra.mxu0 0.0
        %2109 = vmatprep.subr.mxu0 0.0
        %2110 = vmatpush1.msra.mxu0 0.0
        %2111 = vmatprep.mubr.f32.mxu0 0.0
        %2112 = vmatmul.mubr.f32.gmra.mrb[0].mxu0 %v2025
        %v2113 = vpop.f32.mrb[0].mxu0
        %v2114 = vadd.f32 0.0, %v2113
        %v2115 = vpop.f32.mrb[0].mxu0
        %v2116 = vadd.f32 0.0, %v2115
        %2117 = vdwg.mxu0
        %2118 = vmatprep.subr.mxu0 %v1586
        %2119 = vmatpush1.msra.mxu0 %v1585
        %2120 = vmatprep.subr.mxu0 %v1590
        %2121 = vmatpush1.msra.mxu0 %v1589
        %2122 = vmatprep.subr.mxu0 %v1594
        %2123 = vmatpush1.msra.mxu0 %v1593
        %2124 = vmatprep.subr.mxu0 %v1598
        %2125 = vmatpush1.msra.mxu0 %v1597
        %2126 = vmatprep.subr.mxu0 %v1602
        %2127 = vmatpush1.msra.mxu0 %v1601
        %2128 = vmatprep.subr.mxu0 %v1606
        %2129 = vmatpush1.msra.mxu0 %v1605
        %2130 = vmatprep.subr.mxu0 %v1610
        %2131 = vmatpush1.msra.mxu0 %v1609
        %2132 = vmatprep.subr.mxu0 %v1614
        %2133 = vmatpush1.msra.mxu0 %v1613
        %2134 = vmatprep.subr.mxu0 %v1618
        %2135 = vmatpush1.msra.mxu0 %v1617
        %2136 = vmatprep.subr.mxu0 %v1622
        %2137 = vmatpush1.msra.mxu0 %v1621
        %2138 = vmatprep.subr.mxu0 %v1626
        %2139 = vmatpush1.msra.mxu0 %v1625
        %2140 = vmatprep.subr.mxu0 %v1630
        %2141 = vmatpush1.msra.mxu0 %v1629
        %2142 = vmatprep.subr.mxu0 %v1634
        %2143 = vmatpush1.msra.mxu0 %v1633
        %2144 = vmatprep.subr.mxu0 %v1638
        %2145 = vmatpush1.msra.mxu0 %v1637
        %2146 = vmatprep.subr.mxu0 %v1642
        %2147 = vmatpush1.msra.mxu0 %v1641
        %2148 = vmatprep.subr.mxu0 %v1646
        %2149 = vmatpush1.msra.mxu0 %v1645
        %2150 = vmatprep.subr.mxu0 0.0
        %2151 = vmatpush1.msra.mxu0 0.0
        %2152 = vmatprep.subr.mxu0 0.0
        %2153 = vmatpush1.msra.mxu0 0.0
        %2154 = vmatprep.subr.mxu0 0.0
        %2155 = vmatpush1.msra.mxu0 0.0
        %2156 = vmatprep.subr.mxu0 0.0
        %2157 = vmatpush1.msra.mxu0 0.0
        %2158 = vmatprep.subr.mxu0 0.0
        %2159 = vmatpush1.msra.mxu0 0.0
        %2160 = vmatprep.subr.mxu0 0.0
        %2161 = vmatpush1.msra.mxu0 0.0
        %2162 = vmatprep.subr.mxu0 0.0
        %2163 = vmatpush1.msra.mxu0 0.0
        %2164 = vmatprep.subr.mxu0 0.0
        %2165 = vmatpush1.msra.mxu0 0.0
        %2166 = vmatprep.subr.mxu0 0.0
        %2167 = vmatpush1.msra.mxu0 0.0
        %2168 = vmatprep.subr.mxu0 0.0
        %2169 = vmatpush1.msra.mxu0 0.0
        %2170 = vmatprep.subr.mxu0 0.0
        %2171 = vmatpush1.msra.mxu0 0.0
        %2172 = vmatprep.subr.mxu0 0.0
        %2173 = vmatpush1.msra.mxu0 0.0
        %2174 = vmatprep.subr.mxu0 0.0
        %2175 = vmatpush1.msra.mxu0 0.0
        %2176 = vmatprep.subr.mxu0 0.0
        %2177 = vmatpush1.msra.mxu0 0.0
        %2178 = vmatprep.subr.mxu0 0.0
        %2179 = vmatpush1.msra.mxu0 0.0
        %2180 = vmatprep.subr.mxu0 0.0
        %2181 = vmatpush1.msra.mxu0 0.0
        %2182 = vmatprep.mubr.f32.mxu0 0.0
        %2183 = vmatmul.mubr.f32.gmra.mrb[0].mxu0 %v2025
        %v2184 = vpop.f32.mrb[0].mxu0
        %v2185 = vadd.f32 0.0, %v2184
        %v2186 = vpop.f32.mrb[0].mxu0
        %v2187 = vadd.f32 0.0, %v2186
        %2188 = vdwg.mxu0
        %v2189 = vadd.f32 %v2043, %v2114
        %v2190 = vadd.f32 %v2044, %v2116
        %v2191 = vadd.f32 %v2045, %v2185
        %v2192 = vadd.f32 %v2046, %v2187
        %v2193 = vld [vmem:[#allocation2 + $0x3a0] sm:$0xff]
        %v2194 = vld [vmem:[#allocation2 + $0x3a8] sm:$0xff]
        %v2195 = vld [vmem:[#allocation2 + $0x3b0] sm:$0xff]
        %v2196 = vld [vmem:[#allocation2 + $0x3b8] sm:$0xff]
        %2197 = vmatprep.subr.mxu0 %v1648
        %2198 = vmatpush1.msra.mxu0 %v1647
        %2199 = vmatprep.subr.mxu0 %v1652
        %2200 = vmatpush1.msra.mxu0 %v1651
        %2201 = vmatprep.subr.mxu0 %v1656
        %2202 = vmatpush1.msra.mxu0 %v1655
        %2203 = vmatprep.subr.mxu0 %v1660
        %2204 = vmatpush1.msra.mxu0 %v1659
        %2205 = vmatprep.subr.mxu0 %v1664
        %2206 = vmatpush1.msra.mxu0 %v1663
        %2207 = vmatprep.subr.mxu0 %v1668
        %2208 = vmatpush1.msra.mxu0 %v1667
        %2209 = vmatprep.subr.mxu0 %v1672
        %2210 = vmatpush1.msra.mxu0 %v1671
        %2211 = vmatprep.subr.mxu0 %v1676
        %2212 = vmatpush1.msra.mxu0 %v1675
        %2213 = vmatprep.subr.mxu0 %v1680
        %2214 = vmatpush1.msra.mxu0 %v1679
        %2215 = vmatprep.subr.mxu0 %v1684
        %2216 = vmatpush1.msra.mxu0 %v1683
        %2217 = vmatprep.subr.mxu0 %v1688
        %2218 = vmatpush1.msra.mxu0 %v1687
        %2219 = vmatprep.subr.mxu0 %v1692
        %2220 = vmatpush1.msra.mxu0 %v1691
        %2221 = vmatprep.subr.mxu0 %v1696
        %2222 = vmatpush1.msra.mxu0 %v1695
        %2223 = vmatprep.subr.mxu0 %v1700
        %2224 = vmatpush1.msra.mxu0 %v1699
        %2225 = vmatprep.subr.mxu0 %v1704
        %2226 = vmatpush1.msra.mxu0 %v1703
        %2227 = vmatprep.subr.mxu0 %v1708
        %2228 = vmatpush1.msra.mxu0 %v1707
        %2229 = vmatprep.subr.mxu0 0.0
        %2230 = vmatpush1.msra.mxu0 0.0
        %2231 = vmatprep.subr.mxu0 0.0
        %2232 = vmatpush1.msra.mxu0 0.0
        %2233 = vmatprep.subr.mxu0 0.0
        %2234 = vmatpush1.msra.mxu0 0.0
        %2235 = vmatprep.subr.mxu0 0.0
        %2236 = vmatpush1.msra.mxu0 0.0
        %2237 = vmatprep.subr.mxu0 0.0
        %2238 = vmatpush1.msra.mxu0 0.0
        %2239 = vmatprep.subr.mxu0 0.0
        %2240 = vmatpush1.msra.mxu0 0.0
        %2241 = vmatprep.subr.mxu0 0.0
        %2242 = vmatpush1.msra.mxu0 0.0
        %2243 = vmatprep.subr.mxu0 0.0
        %2244 = vmatpush1.msra.mxu0 0.0
        %2245 = vmatprep.subr.mxu0 0.0
        %2246 = vmatpush1.msra.mxu0 0.0
        %2247 = vmatprep.subr.mxu0 0.0
        %2248 = vmatpush1.msra.mxu0 0.0
        %2249 = vmatprep.subr.mxu0 0.0
        %2250 = vmatpush1.msra.mxu0 0.0
        %2251 = vmatprep.subr.mxu0 0.0
        %2252 = vmatpush1.msra.mxu0 0.0
        %2253 = vmatprep.subr.mxu0 0.0
        %2254 = vmatpush1.msra.mxu0 0.0
        %2255 = vmatprep.subr.mxu0 0.0
        %2256 = vmatpush1.msra.mxu0 0.0
        %2257 = vmatprep.subr.mxu0 0.0
        %2258 = vmatpush1.msra.mxu0 0.0
        %2259 = vmatprep.subr.mxu0 0.0
        %2260 = vmatpush1.msra.mxu0 0.0
        %2261 = vmatprep.mubr.f32.mxu0 0.0
        %2262 = vmatmul.mubr.f32.gmra.mrb[0].mxu0 %v2040
        %v2263 = vpop.f32.mrb[0].mxu0
        %v2264 = vadd.f32 0.0, %v2263
        %v2265 = vpop.f32.mrb[0].mxu0
        %v2266 = vadd.f32 0.0, %v2265
        %2267 = vdwg.mxu0
        %2268 = vmatprep.subr.mxu0 %v1650
        %2269 = vmatpush1.msra.mxu0 %v1649
        %2270 = vmatprep.subr.mxu0 %v1654
        %2271 = vmatpush1.msra.mxu0 %v1653
        %2272 = vmatprep.subr.mxu0 %v1658
        %2273 = vmatpush1.msra.mxu0 %v1657
        %2274 = vmatprep.subr.mxu0 %v1662
        %2275 = vmatpush1.msra.mxu0 %v1661
        %2276 = vmatprep.subr.mxu0 %v1666
        %2277 = vmatpush1.msra.mxu0 %v1665
        %2278 = vmatprep.subr.mxu0 %v1670
        %2279 = vmatpush1.msra.mxu0 %v1669
        %2280 = vmatprep.subr.mxu0 %v1674
        %2281 = vmatpush1.msra.mxu0 %v1673
        %2282 = vmatprep.subr.mxu0 %v1678
        %2283 = vmatpush1.msra.mxu0 %v1677
        %2284 = vmatprep.subr.mxu0 %v1682
        %2285 = vmatpush1.msra.mxu0 %v1681
        %2286 = vmatprep.subr.mxu0 %v1686
        %2287 = vmatpush1.msra.mxu0 %v1685
        %2288 = vmatprep.subr.mxu0 %v1690
        %2289 = vmatpush1.msra.mxu0 %v1689
        %2290 = vmatprep.subr.mxu0 %v1694
        %2291 = vmatpush1.msra.mxu0 %v1693
        %2292 = vmatprep.subr.mxu0 %v1698
        %2293 = vmatpush1.msra.mxu0 %v1697
        %2294 = vmatprep.subr.mxu0 %v1702
        %2295 = vmatpush1.msra.mxu0 %v1701
        %2296 = vmatprep.subr.mxu0 %v1706
        %2297 = vmatpush1.msra.mxu0 %v1705
        %2298 = vmatprep.subr.mxu0 %v1710
        %2299 = vmatpush1.msra.mxu0 %v1709
        %2300 = vmatprep.subr.mxu0 0.0
        %2301 = vmatpush1.msra.mxu0 0.0
        %2302 = vmatprep.subr.mxu0 0.0
        %2303 = vmatpush1.msra.mxu0 0.0
        %2304 = vmatprep.subr.mxu0 0.0
        %2305 = vmatpush1.msra.mxu0 0.0
        %2306 = vmatprep.subr.mxu0 0.0
        %2307 = vmatpush1.msra.mxu0 0.0
        %2308 = vmatprep.subr.mxu0 0.0
        %2309 = vmatpush1.msra.mxu0 0.0
        %2310 = vmatprep.subr.mxu0 0.0
        %2311 = vmatpush1.msra.mxu0 0.0
        %2312 = vmatprep.subr.mxu0 0.0
        %2313 = vmatpush1.msra.mxu0 0.0
        %2314 = vmatprep.subr.mxu0 0.0
        %2315 = vmatpush1.msra.mxu0 0.0
        %2316 = vmatprep.subr.mxu0 0.0
        %2317 = vmatpush1.msra.mxu0 0.0
        %2318 = vmatprep.subr.mxu0 0.0
        %2319 = vmatpush1.msra.mxu0 0.0
        %2320 = vmatprep.subr.mxu0 0.0
        %2321 = vmatpush1.msra.mxu0 0.0
        %2322 = vmatprep.subr.mxu0 0.0
        %2323 = vmatpush1.msra.mxu0 0.0
        %2324 = vmatprep.subr.mxu0 0.0
        %2325 = vmatpush1.msra.mxu0 0.0
        %2326 = vmatprep.subr.mxu0 0.0
        %2327 = vmatpush1.msra.mxu0 0.0
        %2328 = vmatprep.subr.mxu0 0.0
        %2329 = vmatpush1.msra.mxu0 0.0
        %2330 = vmatprep.subr.mxu0 0.0
        %2331 = vmatpush1.msra.mxu0 0.0
        %2332 = vmatprep.mubr.f32.mxu0 0.0
        %2333 = vmatmul.mubr.f32.gmra.mrb[0].mxu0 %v2040
        %v2334 = vpop.f32.mrb[0].mxu0
        %v2335 = vadd.f32 0.0, %v2334
        %v2336 = vpop.f32.mrb[0].mxu0
        %v2337 = vadd.f32 0.0, %v2336
        %2338 = vdwg.mxu0
        %v2339 = vadd.f32 %v2193, %v2264
        %v2340 = vadd.f32 %v2194, %v2266
        %v2341 = vadd.f32 %v2195, %v2335
        %v2342 = vadd.f32 %v2196, %v2337
        %v2343 = vtanh.pop %v2189
        %v2344 = vtanh.pop %v2190
        %v2345 = vtanh.pop %v2191
        %v2346 = vtanh.pop %v2192
        %v2347 = vmul.f32 %v2343, 0.5
        %v2348 = vmul.f32 %v2344, 0.5
        %v2349 = vmul.f32 %v2345, 0.5
        %v2350 = vadd.f32 %v2347, 0.5
        %v2351 = vadd.f32 %v2348, 0.5
        %v2352 = vadd.f32 %v2349, 0.5
        %v2353 = vmul.f32 %v2351, %v2023
        %v2354 = vmul.f32 %v2350, %v2346
        %v2355 = vadd.f32 %v2353, %v2354
        %v2356 = vtanh.pop %v2355
        %v2357 = vmul.f32 %v2352, %v2356
        %v2358 = vtanh.pop %v2339
        %v2359 = vtanh.pop %v2340
        %v2360 = vtanh.pop %v2341
        %v2361 = vtanh.pop %v2342
        %v2362 = vmul.f32 %v2358, 0.5
        %v2363 = vmul.f32 %v2359, 0.5
        %v2364 = vmul.f32 %v2360, 0.5
        %v2365 = vadd.f32 %v2362, 0.5
        %v2366 = vadd.f32 %v2363, 0.5
        %v2367 = vadd.f32 %v2364, 0.5
        %v2368 = vmul.f32 %v2366, %v2038
        %v2369 = vmul.f32 %v2365, %v2361
        %v2370 = vadd.f32 %v2368, %v2369
        %v2371 = vtanh.pop %v2370
        %v2372 = vmul.f32 %v2367, %v2371
        %2373 = vst [vmem:[#allocation3 + $0x10] sm:$0xff] %v2357
        %2374 = vst [vmem:[#allocation3 + $0xe8] sm:$0xff] %v2372
        %v2375 = vld [vmem:[#allocation2 + $0x80] sm:$0xff]
        %v2376 = vld [vmem:[#allocation2 + $0x88] sm:$0xff]
        %v2377 = vld [vmem:[#allocation2 + $0x90] sm:$0xff]
        %v2378 = vld [vmem:[#allocation2 + $0x98] sm:$0xff]
        %2379 = vmatprep.subr.mxu0 %v1584
        %2380 = vmatpush1.msra.mxu0 %v1583
        %2381 = vmatprep.subr.mxu0 %v1588
        %2382 = vmatpush1.msra.mxu0 %v1587
        %2383 = vmatprep.subr.mxu0 %v1592
        %2384 = vmatpush1.msra.mxu0 %v1591
        %2385 = vmatprep.subr.mxu0 %v1596
        %2386 = vmatpush1.msra.mxu0 %v1595
        %2387 = vmatprep.subr.mxu0 %v1600
        %2388 = vmatpush1.msra.mxu0 %v1599
        %2389 = vmatprep.subr.mxu0 %v1604
        %2390 = vmatpush1.msra.mxu0 %v1603
        %2391 = vmatprep.subr.mxu0 %v1608
        %2392 = vmatpush1.msra.mxu0 %v1607
        %2393 = vmatprep.subr.mxu0 %v1612
        %2394 = vmatpush1.msra.mxu0 %v1611
        %2395 = vmatprep.subr.mxu0 %v1616
        %2396 = vmatpush1.msra.mxu0 %v1615
        %2397 = vmatprep.subr.mxu0 %v1620
        %2398 = vmatpush1.msra.mxu0 %v1619
        %2399 = vmatprep.subr.mxu0 %v1624
        %2400 = vmatpush1.msra.mxu0 %v1623
        %2401 = vmatprep.subr.mxu0 %v1628
        %2402 = vmatpush1.msra.mxu0 %v1627
        %2403 = vmatprep.subr.mxu0 %v1632
        %2404 = vmatpush1.msra.mxu0 %v1631
        %2405 = vmatprep.subr.mxu0 %v1636
        %2406 = vmatpush1.msra.mxu0 %v1635
        %2407 = vmatprep.subr.mxu0 %v1640
        %2408 = vmatpush1.msra.mxu0 %v1639
        %2409 = vmatprep.subr.mxu0 %v1644
        %2410 = vmatpush1.msra.mxu0 %v1643
        %2411 = vmatprep.subr.mxu0 0.0
        %2412 = vmatpush1.msra.mxu0 0.0
        %2413 = vmatprep.subr.mxu0 0.0
        %2414 = vmatpush1.msra.mxu0 0.0
        %2415 = vmatprep.subr.mxu0 0.0
        %2416 = vmatpush1.msra.mxu0 0.0
        %2417 = vmatprep.subr.mxu0 0.0
        %2418 = vmatpush1.msra.mxu0 0.0
        %2419 = vmatprep.subr.mxu0 0.0
        %2420 = vmatpush1.msra.mxu0 0.0
        %2421 = vmatprep.subr.mxu0 0.0
        %2422 = vmatpush1.msra.mxu0 0.0
        %2423 = vmatprep.subr.mxu0 0.0
        %2424 = vmatpush1.msra.mxu0 0.0
        %2425 = vmatprep.subr.mxu0 0.0
        %2426 = vmatpush1.msra.mxu0 0.0
        %2427 = vmatprep.subr.mxu0 0.0
        %2428 = vmatpush1.msra.mxu0 0.0
        %2429 = vmatprep.subr.mxu0 0.0
        %2430 = vmatpush1.msra.mxu0 0.0
        %2431 = vmatprep.subr.mxu0 0.0
        %2432 = vmatpush1.msra.mxu0 0.0
        %2433 = vmatprep.subr.mxu0 0.0
        %2434 = vmatpush1.msra.mxu0 0.0
        %2435 = vmatprep.subr.mxu0 0.0
        %2436 = vmatpush1.msra.mxu0 0.0
        %2437 = vmatprep.subr.mxu0 0.0
        %2438 = vmatpush1.msra.mxu0 0.0
        %2439 = vmatprep.subr.mxu0 0.0
        %2440 = vmatpush1.msra.mxu0 0.0
        %2441 = vmatprep.subr.mxu0 0.0
        %2442 = vmatpush1.msra.mxu0 0.0
        %2443 = vmatprep.mubr.f32.mxu0 0.0
        %2444 = vmatmul.mubr.f32.gmra.mrb[0].mxu0 %v2357
        %v2445 = vpop.f32.mrb[0].mxu0
        %v2446 = vadd.f32 0.0, %v2445
        %v2447 = vpop.f32.mrb[0].mxu0
        %v2448 = vadd.f32 0.0, %v2447
        %2449 = vdwg.mxu0
        %2450 = vmatprep.subr.mxu0 %v1586
        %2451 = vmatpush1.msra.mxu0 %v1585
        %2452 = vmatprep.subr.mxu0 %v1590
        %2453 = vmatpush1.msra.mxu0 %v1589
        %2454 = vmatprep.subr.mxu0 %v1594
        %2455 = vmatpush1.msra.mxu0 %v1593
        %2456 = vmatprep.subr.mxu0 %v1598
        %2457 = vmatpush1.msra.mxu0 %v1597
        %2458 = vmatprep.subr.mxu0 %v1602
        %2459 = vmatpush1.msra.mxu0 %v1601
        %2460 = vmatprep.subr.mxu0 %v1606
        %2461 = vmatpush1.msra.mxu0 %v1605
        %2462 = vmatprep.subr.mxu0 %v1610
        %2463 = vmatpush1.msra.mxu0 %v1609
        %2464 = vmatprep.subr.mxu0 %v1614
        %2465 = vmatpush1.msra.mxu0 %v1613
        %2466 = vmatprep.subr.mxu0 %v1618
        %2467 = vmatpush1.msra.mxu0 %v1617
        %2468 = vmatprep.subr.mxu0 %v1622
        %2469 = vmatpush1.msra.mxu0 %v1621
        %2470 = vmatprep.subr.mxu0 %v1626
        %2471 = vmatpush1.msra.mxu0 %v1625
        %2472 = vmatprep.subr.mxu0 %v1630
        %2473 = vmatpush1.msra.mxu0 %v1629
        %2474 = vmatprep.subr.mxu0 %v1634
        %2475 = vmatpush1.msra.mxu0 %v1633
        %2476 = vmatprep.subr.mxu0 %v1638
        %2477 = vmatpush1.msra.mxu0 %v1637
        %2478 = vmatprep.subr.mxu0 %v1642
        %2479 = vmatpush1.msra.mxu0 %v1641
        %2480 = vmatprep.subr.mxu0 %v1646
        %2481 = vmatpush1.msra.mxu0 %v1645
        %2482 = vmatprep.subr.mxu0 0.0
        %2483 = vmatpush1.msra.mxu0 0.0
        %2484 = vmatprep.subr.mxu0 0.0
        %2485 = vmatpush1.msra.mxu0 0.0
        %2486 = vmatprep.subr.mxu0 0.0
        %2487 = vmatpush1.msra.mxu0 0.0
        %2488 = vmatprep.subr.mxu0 0.0
        %2489 = vmatpush1.msra.mxu0 0.0
        %2490 = vmatprep.subr.mxu0 0.0
        %2491 = vmatpush1.msra.mxu0 0.0
        %2492 = vmatprep.subr.mxu0 0.0
        %2493 = vmatpush1.msra.mxu0 0.0
        %2494 = vmatprep.subr.mxu0 0.0
        %2495 = vmatpush1.msra.mxu0 0.0
        %2496 = vmatprep.subr.mxu0 0.0
        %2497 = vmatpush1.msra.mxu0 0.0
        %2498 = vmatprep.subr.mxu0 0.0
        %2499 = vmatpush1.msra.mxu0 0.0
        %2500 = vmatprep.subr.mxu0 0.0
        %2501 = vmatpush1.msra.mxu0 0.0
        %2502 = vmatprep.subr.mxu0 0.0
        %2503 = vmatpush1.msra.mxu0 0.0
        %2504 = vmatprep.subr.mxu0 0.0
        %2505 = vmatpush1.msra.mxu0 0.0
        %2506 = vmatprep.subr.mxu0 0.0
        %2507 = vmatpush1.msra.mxu0 0.0
        %2508 = vmatprep.subr.mxu0 0.0
        %2509 = vmatpush1.msra.mxu0 0.0
        %2510 = vmatprep.subr.mxu0 0.0
        %2511 = vmatpush1.msra.mxu0 0.0
        %2512 = vmatprep.subr.mxu0 0.0
        %2513 = vmatpush1.msra.mxu0 0.0
        %2514 = vmatprep.mubr.f32.mxu0 0.0
        %2515 = vmatmul.mubr.f32.gmra.mrb[0].mxu0 %v2357
        %v2516 = vpop.f32.mrb[0].mxu0
        %v2517 = vadd.f32 0.0, %v2516
        %v2518 = vpop.f32.mrb[0].mxu0
        %v2519 = vadd.f32 0.0, %v2518
        %2520 = vdwg.mxu0
        %v2521 = vadd.f32 %v2375, %v2446
        %v2522 = vadd.f32 %v2376, %v2448
        %v2523 = vadd.f32 %v2377, %v2517
        %v2524 = vadd.f32 %v2378, %v2519
        %v2525 = vld [vmem:[#allocation2 + $0x360] sm:$0xff]
        %v2526 = vld [vmem:[#allocation2 + $0x368] sm:$0xff]
        %v2527 = vld [vmem:[#allocation2 + $0x370] sm:$0xff]
        %v2528 = vld [vmem:[#allocation2 + $0x378] sm:$0xff]
        %2529 = vmatprep.subr.mxu0 %v1648
        %2530 = vmatpush1.msra.mxu0 %v1647
        %2531 = vmatprep.subr.mxu0 %v1652
        %2532 = vmatpush1.msra.mxu0 %v1651
        %2533 = vmatprep.subr.mxu0 %v1656
        %2534 = vmatpush1.msra.mxu0 %v1655
        %2535 = vmatprep.subr.mxu0 %v1660
        %2536 = vmatpush1.msra.mxu0 %v1659
        %2537 = vmatprep.subr.mxu0 %v1664
        %2538 = vmatpush1.msra.mxu0 %v1663
        %2539 = vmatprep.subr.mxu0 %v1668
        %2540 = vmatpush1.msra.mxu0 %v1667
        %2541 = vmatprep.subr.mxu0 %v1672
        %2542 = vmatpush1.msra.mxu0 %v1671
        %2543 = vmatprep.subr.mxu0 %v1676
        %2544 = vmatpush1.msra.mxu0 %v1675
        %2545 = vmatprep.subr.mxu0 %v1680
        %2546 = vmatpush1.msra.mxu0 %v1679
        %2547 = vmatprep.subr.mxu0 %v1684
        %2548 = vmatpush1.msra.mxu0 %v1683
        %2549 = vmatprep.subr.mxu0 %v1688
        %2550 = vmatpush1.msra.mxu0 %v1687
        %2551 = vmatprep.subr.mxu0 %v1692
        %2552 = vmatpush1.msra.mxu0 %v1691
        %2553 = vmatprep.subr.mxu0 %v1696
        %2554 = vmatpush1.msra.mxu0 %v1695
        %2555 = vmatprep.subr.mxu0 %v1700
        %2556 = vmatpush1.msra.mxu0 %v1699
        %2557 = vmatprep.subr.mxu0 %v1704
        %2558 = vmatpush1.msra.mxu0 %v1703
        %2559 = vmatprep.subr.mxu0 %v1708
        %2560 = vmatpush1.msra.mxu0 %v1707
        %2561 = vmatprep.subr.mxu0 0.0
        %2562 = vmatpush1.msra.mxu0 0.0
        %2563 = vmatprep.subr.mxu0 0.0
        %2564 = vmatpush1.msra.mxu0 0.0
        %2565 = vmatprep.subr.mxu0 0.0
        %2566 = vmatpush1.msra.mxu0 0.0
        %2567 = vmatprep.subr.mxu0 0.0
        %2568 = vmatpush1.msra.mxu0 0.0
        %2569 = vmatprep.subr.mxu0 0.0
        %2570 = vmatpush1.msra.mxu0 0.0
        %2571 = vmatprep.subr.mxu0 0.0
        %2572 = vmatpush1.msra.mxu0 0.0
        %2573 = vmatprep.subr.mxu0 0.0
        %2574 = vmatpush1.msra.mxu0 0.0
        %2575 = vmatprep.subr.mxu0 0.0
        %2576 = vmatpush1.msra.mxu0 0.0
        %2577 = vmatprep.subr.mxu0 0.0
        %2578 = vmatpush1.msra.mxu0 0.0
        %2579 = vmatprep.subr.mxu0 0.0
        %2580 = vmatpush1.msra.mxu0 0.0
        %2581 = vmatprep.subr.mxu0 0.0
        %2582 = vmatpush1.msra.mxu0 0.0
        %2583 = vmatprep.subr.mxu0 0.0
        %2584 = vmatpush1.msra.mxu0 0.0
        %2585 = vmatprep.subr.mxu0 0.0
        %2586 = vmatpush1.msra.mxu0 0.0
        %2587 = vmatprep.subr.mxu0 0.0
        %2588 = vmatpush1.msra.mxu0 0.0
        %2589 = vmatprep.subr.mxu0 0.0
        %2590 = vmatpush1.msra.mxu0 0.0
        %2591 = vmatprep.subr.mxu0 0.0
        %2592 = vmatpush1.msra.mxu0 0.0
        %2593 = vmatprep.mubr.f32.mxu0 0.0
        %2594 = vmatmul.mubr.f32.gmra.mrb[0].mxu0 %v2372
        %v2595 = vpop.f32.mrb[0].mxu0
        %v2596 = vadd.f32 0.0, %v2595
        %v2597 = vpop.f32.mrb[0].mxu0
        %v2598 = vadd.f32 0.0, %v2597
        %2599 = vdwg.mxu0
        %2600 = vmatprep.subr.mxu0 %v1650
        %2601 = vmatpush1.msra.mxu0 %v1649
        %2602 = vmatprep.subr.mxu0 %v1654
        %2603 = vmatpush1.msra.mxu0 %v1653
        %2604 = vmatprep.subr.mxu0 %v1658
        %2605 = vmatpush1.msra.mxu0 %v1657
        %2606 = vmatprep.subr.mxu0 %v1662
        %2607 = vmatpush1.msra.mxu0 %v1661
        %2608 = vmatprep.subr.mxu0 %v1666
        %2609 = vmatpush1.msra.mxu0 %v1665
        %2610 = vmatprep.subr.mxu0 %v1670
        %2611 = vmatpush1.msra.mxu0 %v1669
        %2612 = vmatprep.subr.mxu0 %v1674
        %2613 = vmatpush1.msra.mxu0 %v1673
        %2614 = vmatprep.subr.mxu0 %v1678
        %2615 = vmatpush1.msra.mxu0 %v1677
        %2616 = vmatprep.subr.mxu0 %v1682
        %2617 = vmatpush1.msra.mxu0 %v1681
        %2618 = vmatprep.subr.mxu0 %v1686
        %2619 = vmatpush1.msra.mxu0 %v1685
        %2620 = vmatprep.subr.mxu0 %v1690
        %2621 = vmatpush1.msra.mxu0 %v1689
        %2622 = vmatprep.subr.mxu0 %v1694
        %2623 = vmatpush1.msra.mxu0 %v1693
        %2624 = vmatprep.subr.mxu0 %v1698
        %2625 = vmatpush1.msra.mxu0 %v1697
        %2626 = vmatprep.subr.mxu0 %v1702
        %2627 = vmatpush1.msra.mxu0 %v1701
        %2628 = vmatprep.subr.mxu0 %v1706
        %2629 = vmatpush1.msra.mxu0 %v1705
        %2630 = vmatprep.subr.mxu0 %v1710
        %2631 = vmatpush1.msra.mxu0 %v1709
        %2632 = vmatprep.subr.mxu0 0.0
        %2633 = vmatpush1.msra.mxu0 0.0
        %2634 = vmatprep.subr.mxu0 0.0
        %2635 = vmatpush1.msra.mxu0 0.0
        %2636 = vmatprep.subr.mxu0 0.0
        %2637 = vmatpush1.msra.mxu0 0.0
        %2638 = vmatprep.subr.mxu0 0.0
        %2639 = vmatpush1.msra.mxu0 0.0
        %2640 = vmatprep.subr.mxu0 0.0
        %2641 = vmatpush1.msra.mxu0 0.0
        %2642 = vmatprep.subr.mxu0 0.0
        %2643 = vmatpush1.msra.mxu0 0.0
        %2644 = vmatprep.subr.mxu0 0.0
        %2645 = vmatpush1.msra.mxu0 0.0
        %2646 = vmatprep.subr.mxu0 0.0
        %2647 = vmatpush1.msra.mxu0 0.0
        %2648 = vmatprep.subr.mxu0 0.0
        %2649 = vmatpush1.msra.mxu0 0.0
        %2650 = vmatprep.subr.mxu0 0.0
        %2651 = vmatpush1.msra.mxu0 0.0
        %2652 = vmatprep.subr.mxu0 0.0
        %2653 = vmatpush1.msra.mxu0 0.0
        %2654 = vmatprep.subr.mxu0 0.0
        %2655 = vmatpush1.msra.mxu0 0.0
        %2656 = vmatprep.subr.mxu0 0.0
        %2657 = vmatpush1.msra.mxu0 0.0
        %2658 = vmatprep.subr.mxu0 0.0
        %2659 = vmatpush1.msra.mxu0 0.0
        %2660 = vmatprep.subr.mxu0 0.0
        %2661 = vmatpush1.msra.mxu0 0.0
        %2662 = vmatprep.subr.mxu0 0.0
        %2663 = vmatpush1.msra.mxu0 0.0
        %2664 = vmatprep.mubr.f32.mxu0 0.0
        %2665 = vmatmul.mubr.f32.gmra.mrb[0].mxu0 %v2372
        %v2666 = vpop.f32.mrb[0].mxu0
        %v2667 = vadd.f32 0.0, %v2666
        %v2668 = vpop.f32.mrb[0].mxu0
        %v2669 = vadd.f32 0.0, %v2668
        %2670 = vdwg.mxu0
        %v2671 = vadd.f32 %v2525, %v2596
        %v2672 = vadd.f32 %v2526, %v2598
        %v2673 = vadd.f32 %v2527, %v2667
        %v2674 = vadd.f32 %v2528, %v2669
        %v2675 = vtanh.pop %v2521
        %v2676 = vtanh.pop %v2522
        %v2677 = vtanh.pop %v2523
        %v2678 = vtanh.pop %v2524
        %v2679 = vmul.f32 %v2675, 0.5
        %v2680 = vmul.f32 %v2676, 0.5
        %v2681 = vmul.f32 %v2677, 0.5
        %v2682 = vadd.f32 %v2679, 0.5
        %v2683 = vadd.f32 %v2680, 0.5
        %v2684 = vadd.f32 %v2681, 0.5
        %v2685 = vmul.f32 %v2683, %v2355
        %v2686 = vmul.f32 %v2682, %v2678
        %v2687 = vadd.f32 %v2685, %v2686
        %v2688 = vtanh.pop %v2687
        %v2689 = vmul.f32 %v2684, %v2688
        %v2690 = vtanh.pop %v2671
        %v2691 = vtanh.pop %v2672
        %v2692 = vtanh.pop %v2673
        %v2693 = vtanh.pop %v2674
        %v2694 = vmul.f32 %v2690, 0.5
        %v2695 = vmul.f32 %v2691, 0.5
        %v2696 = vmul.f32 %v2692, 0.5
        %v2697 = vadd.f32 %v2694, 0.5
        %v2698 = vadd.f32 %v2695, 0.5
        %v2699 = vadd.f32 %v2696, 0.5
        %v2700 = vmul.f32 %v2698, %v2370
        %v2701 = vmul.f32 %v2697, %v2693
        %v2702 = vadd.f32 %v2700, %v2701
        %v2703 = vtanh.pop %v2702
        %v2704 = vmul.f32 %v2699, %v2703
        %2705 = vst [vmem:[#allocation3 + $0x20] sm:$0xff] %v2689
        %2706 = vst [vmem:[#allocation3 + $0xd8] sm:$0xff] %v2704
        %v2707 = vld [vmem:[#allocation2 + $0xc0] sm:$0xff]
        %v2708 = vld [vmem:[#allocation2 + $0xc8] sm:$0xff]
        %v2709 = vld [vmem:[#allocation2 + $0xd0] sm:$0xff]
        %v2710 = vld [vmem:[#allocation2 + $0xd8] sm:$0xff]
        %2711 = vmatprep.subr.mxu0 %v1584
        %2712 = vmatpush1.msra.mxu0 %v1583
        %2713 = vmatprep.subr.mxu0 %v1588
        %2714 = vmatpush1.msra.mxu0 %v1587
        %2715 = vmatprep.subr.mxu0 %v1592
        %2716 = vmatpush1.msra.mxu0 %v1591
        %2717 = vmatprep.subr.mxu0 %v1596
        %2718 = vmatpush1.msra.mxu0 %v1595
        %2719 = vmatprep.subr.mxu0 %v1600
        %2720 = vmatpush1.msra.mxu0 %v1599
        %2721 = vmatprep.subr.mxu0 %v1604
        %2722 = vmatpush1.msra.mxu0 %v1603
        %2723 = vmatprep.subr.mxu0 %v1608
        %2724 = vmatpush1.msra.mxu0 %v1607
        %2725 = vmatprep.subr.mxu0 %v1612
        %2726 = vmatpush1.msra.mxu0 %v1611
        %2727 = vmatprep.subr.mxu0 %v1616
        %2728 = vmatpush1.msra.mxu0 %v1615
        %2729 = vmatprep.subr.mxu0 %v1620
        %2730 = vmatpush1.msra.mxu0 %v1619
        %2731 = vmatprep.subr.mxu0 %v1624
        %2732 = vmatpush1.msra.mxu0 %v1623
        %2733 = vmatprep.subr.mxu0 %v1628
        %2734 = vmatpush1.msra.mxu0 %v1627
        %2735 = vmatprep.subr.mxu0 %v1632
        %2736 = vmatpush1.msra.mxu0 %v1631
        %2737 = vmatprep.subr.mxu0 %v1636
        %2738 = vmatpush1.msra.mxu0 %v1635
        %2739 = vmatprep.subr.mxu0 %v1640
        %2740 = vmatpush1.msra.mxu0 %v1639
        %2741 = vmatprep.subr.mxu0 %v1644
        %2742 = vmatpush1.msra.mxu0 %v1643
        %2743 = vmatprep.subr.mxu0 0.0
        %2744 = vmatpush1.msra.mxu0 0.0
        %2745 = vmatprep.subr.mxu0 0.0
        %2746 = vmatpush1.msra.mxu0 0.0
        %2747 = vmatprep.subr.mxu0 0.0
        %2748 = vmatpush1.msra.mxu0 0.0
        %2749 = vmatprep.subr.mxu0 0.0
        %2750 = vmatpush1.msra.mxu0 0.0
        %2751 = vmatprep.subr.mxu0 0.0
        %2752 = vmatpush1.msra.mxu0 0.0
        %2753 = vmatprep.subr.mxu0 0.0
        %2754 = vmatpush1.msra.mxu0 0.0
        %2755 = vmatprep.subr.mxu0 0.0
        %2756 = vmatpush1.msra.mxu0 0.0
        %2757 = vmatprep.subr.mxu0 0.0
        %2758 = vmatpush1.msra.mxu0 0.0
        %2759 = vmatprep.subr.mxu0 0.0
        %2760 = vmatpush1.msra.mxu0 0.0
        %2761 = vmatprep.subr.mxu0 0.0
        %2762 = vmatpush1.msra.mxu0 0.0
        %2763 = vmatprep.subr.mxu0 0.0
        %2764 = vmatpush1.msra.mxu0 0.0
        %2765 = vmatprep.subr.mxu0 0.0
        %2766 = vmatpush1.msra.mxu0 0.0
        %2767 = vmatprep.subr.mxu0 0.0
        %2768 = vmatpush1.msra.mxu0 0.0
        %2769 = vmatprep.subr.mxu0 0.0
        %2770 = vmatpush1.msra.mxu0 0.0
        %2771 = vmatprep.subr.mxu0 0.0
        %2772 = vmatpush1.msra.mxu0 0.0
        %2773 = vmatprep.subr.mxu0 0.0
        %2774 = vmatpush1.msra.mxu0 0.0
        %2775 = vmatprep.mubr.f32.mxu0 0.0
        %2776 = vmatmul.mubr.f32.gmra.mrb[0].mxu0 %v2689
        %v2777 = vpop.f32.mrb[0].mxu0
        %v2778 = vadd.f32 0.0, %v2777
        %v2779 = vpop.f32.mrb[0].mxu0
        %v2780 = vadd.f32 0.0, %v2779
        %2781 = vdwg.mxu0
        %2782 = vmatprep.subr.mxu0 %v1586
        %2783 = vmatpush1.msra.mxu0 %v1585
        %2784 = vmatprep.subr.mxu0 %v1590
        %2785 = vmatpush1.msra.mxu0 %v1589
        %2786 = vmatprep.subr.mxu0 %v1594
        %2787 = vmatpush1.msra.mxu0 %v1593
        %2788 = vmatprep.subr.mxu0 %v1598
        %2789 = vmatpush1.msra.mxu0 %v1597
        %2790 = vmatprep.subr.mxu0 %v1602
        %2791 = vmatpush1.msra.mxu0 %v1601
        %2792 = vmatprep.subr.mxu0 %v1606
        %2793 = vmatpush1.msra.mxu0 %v1605
        %2794 = vmatprep.subr.mxu0 %v1610
        %2795 = vmatpush1.msra.mxu0 %v1609
        %2796 = vmatprep.subr.mxu0 %v1614
        %2797 = vmatpush1.msra.mxu0 %v1613
        %2798 = vmatprep.subr.mxu0 %v1618
        %2799 = vmatpush1.msra.mxu0 %v1617
        %2800 = vmatprep.subr.mxu0 %v1622
        %2801 = vmatpush1.msra.mxu0 %v1621
        %2802 = vmatprep.subr.mxu0 %v1626
        %2803 = vmatpush1.msra.mxu0 %v1625
        %2804 = vmatprep.subr.mxu0 %v1630
        %2805 = vmatpush1.msra.mxu0 %v1629
        %2806 = vmatprep.subr.mxu0 %v1634
        %2807 = vmatpush1.msra.mxu0 %v1633
        %2808 = vmatprep.subr.mxu0 %v1638
        %2809 = vmatpush1.msra.mxu0 %v1637
        %2810 = vmatprep.subr.mxu0 %v1642
        %2811 = vmatpush1.msra.mxu0 %v1641
        %2812 = vmatprep.subr.mxu0 %v1646
        %2813 = vmatpush1.msra.mxu0 %v1645
        %2814 = vmatprep.subr.mxu0 0.0
        %2815 = vmatpush1.msra.mxu0 0.0
        %2816 = vmatprep.subr.mxu0 0.0
        %2817 = vmatpush1.msra.mxu0 0.0
        %2818 = vmatprep.subr.mxu0 0.0
        %2819 = vmatpush1.msra.mxu0 0.0
        %2820 = vmatprep.subr.mxu0 0.0
        %2821 = vmatpush1.msra.mxu0 0.0
        %2822 = vmatprep.subr.mxu0 0.0
        %2823 = vmatpush1.msra.mxu0 0.0
        %2824 = vmatprep.subr.mxu0 0.0
        %2825 = vmatpush1.msra.mxu0 0.0
        %2826 = vmatprep.subr.mxu0 0.0
        %2827 = vmatpush1.msra.mxu0 0.0
        %2828 = vmatprep.subr.mxu0 0.0
        %2829 = vmatpush1.msra.mxu0 0.0
        %2830 = vmatprep.subr.mxu0 0.0
        %2831 = vmatpush1.msra.mxu0 0.0
        %2832 = vmatprep.subr.mxu0 0.0
        %2833 = vmatpush1.msra.mxu0 0.0
        %2834 = vmatprep.subr.mxu0 0.0
        %2835 = vmatpush1.msra.mxu0 0.0
        %2836 = vmatprep.subr.mxu0 0.0
        %2837 = vmatpush1.msra.mxu0 0.0
        %2838 = vmatprep.subr.mxu0 0.0
        %2839 = vmatpush1.msra.mxu0 0.0
        %2840 = vmatprep.subr.mxu0 0.0
        %2841 = vmatpush1.msra.mxu0 0.0
        %2842 = vmatprep.subr.mxu0 0.0
        %2843 = vmatpush1.msra.mxu0 0.0
        %2844 = vmatprep.subr.mxu0 0.0
        %2845 = vmatpush1.msra.mxu0 0.0
        %2846 = vmatprep.mubr.f32.mxu0 0.0
        %2847 = vmatmul.mubr.f32.gmra.mrb[0].mxu0 %v2689
        %v2848 = vpop.f32.mrb[0].mxu0
        %v2849 = vadd.f32 0.0, %v2848
        %v2850 = vpop.f32.mrb[0].mxu0
        %v2851 = vadd.f32 0.0, %v2850
        %2852 = vdwg.mxu0
        %v2853 = vadd.f32 %v2707, %v2778
        %v2854 = vadd.f32 %v2708, %v2780
        %v2855 = vadd.f32 %v2709, %v2849
        %v2856 = vadd.f32 %v2710, %v2851
        %v2857 = vld [vmem:[#allocation2 + $0x320] sm:$0xff]
        %v2858 = vld [vmem:[#allocation2 + $0x328] sm:$0xff]
        %v2859 = vld [vmem:[#allocation2 + $0x330] sm:$0xff]
        %v2860 = vld [vmem:[#allocation2 + $0x338] sm:$0xff]
        %2861 = vmatprep.subr.mxu0 %v1648
        %2862 = vmatpush1.msra.mxu0 %v1647
        %2863 = vmatprep.subr.mxu0 %v1652
        %2864 = vmatpush1.msra.mxu0 %v1651
        %2865 = vmatprep.subr.mxu0 %v1656
        %2866 = vmatpush1.msra.mxu0 %v1655
        %2867 = vmatprep.subr.mxu0 %v1660
        %2868 = vmatpush1.msra.mxu0 %v1659
        %2869 = vmatprep.subr.mxu0 %v1664
        %2870 = vmatpush1.msra.mxu0 %v1663
        %2871 = vmatprep.subr.mxu0 %v1668
        %2872 = vmatpush1.msra.mxu0 %v1667
        %2873 = vmatprep.subr.mxu0 %v1672
        %2874 = vmatpush1.msra.mxu0 %v1671
        %2875 = vmatprep.subr.mxu0 %v1676
        %2876 = vmatpush1.msra.mxu0 %v1675
        %2877 = vmatprep.subr.mxu0 %v1680
        %2878 = vmatpush1.msra.mxu0 %v1679
        %2879 = vmatprep.subr.mxu0 %v1684
        %2880 = vmatpush1.msra.mxu0 %v1683
        %2881 = vmatprep.subr.mxu0 %v1688
        %2882 = vmatpush1.msra.mxu0 %v1687
        %2883 = vmatprep.subr.mxu0 %v1692
        %2884 = vmatpush1.msra.mxu0 %v1691
        %2885 = vmatprep.subr.mxu0 %v1696
        %2886 = vmatpush1.msra.mxu0 %v1695
        %2887 = vmatprep.subr.mxu0 %v1700
        %2888 = vmatpush1.msra.mxu0 %v1699
        %2889 = vmatprep.subr.mxu0 %v1704
        %2890 = vmatpush1.msra.mxu0 %v1703
        %2891 = vmatprep.subr.mxu0 %v1708
        %2892 = vmatpush1.msra.mxu0 %v1707
        %2893 = vmatprep.subr.mxu0 0.0
        %2894 = vmatpush1.msra.mxu0 0.0
        %2895 = vmatprep.subr.mxu0 0.0
        %2896 = vmatpush1.msra.mxu0 0.0
        %2897 = vmatprep.subr.mxu0 0.0
        %2898 = vmatpush1.msra.mxu0 0.0
        %2899 = vmatprep.subr.mxu0 0.0
        %2900 = vmatpush1.msra.mxu0 0.0
        %2901 = vmatprep.subr.mxu0 0.0
        %2902 = vmatpush1.msra.mxu0 0.0
        %2903 = vmatprep.subr.mxu0 0.0
        %2904 = vmatpush1.msra.mxu0 0.0
        %2905 = vmatprep.subr.mxu0 0.0
        %2906 = vmatpush1.msra.mxu0 0.0
        %2907 = vmatprep.subr.mxu0 0.0
        %2908 = vmatpush1.msra.mxu0 0.0
        %2909 = vmatprep.subr.mxu0 0.0
        %2910 = vmatpush1.msra.mxu0 0.0
        %2911 = vmatprep.subr.mxu0 0.0
        %2912 = vmatpush1.msra.mxu0 0.0
        %2913 = vmatprep.subr.mxu0 0.0
        %2914 = vmatpush1.msra.mxu0 0.0
        %2915 = vmatprep.subr.mxu0 0.0
        %2916 = vmatpush1.msra.mxu0 0.0
        %2917 = vmatprep.subr.mxu0 0.0
        %2918 = vmatpush1.msra.mxu0 0.0
        %2919 = vmatprep.subr.mxu0 0.0
        %2920 = vmatpush1.msra.mxu0 0.0
        %2921 = vmatprep.subr.mxu0 0.0
        %2922 = vmatpush1.msra.mxu0 0.0
        %2923 = vmatprep.subr.mxu0 0.0
        %2924 = vmatpush1.msra.mxu0 0.0
        %2925 = vmatprep.mubr.f32.mxu0 0.0
        %2926 = vmatmul.mubr.f32.gmra.mrb[0].mxu0 %v2704
        %v2927 = vpop.f32.mrb[0].mxu0
        %v2928 = vadd.f32 0.0, %v2927
        %v2929 = vpop.f32.mrb[0].mxu0
        %v2930 = vadd.f32 0.0, %v2929
        %2931 = vdwg.mxu0
        %2932 = vmatprep.subr.mxu0 %v1650
        %2933 = vmatpush1.msra.mxu0 %v1649
        %2934 = vmatprep.subr.mxu0 %v1654
        %2935 = vmatpush1.msra.mxu0 %v1653
        %2936 = vmatprep.subr.mxu0 %v1658
        %2937 = vmatpush1.msra.mxu0 %v1657
        %2938 = vmatprep.subr.mxu0 %v1662
        %2939 = vmatpush1.msra.mxu0 %v1661
        %2940 = vmatprep.subr.mxu0 %v1666
        %2941 = vmatpush1.msra.mxu0 %v1665
        %2942 = vmatprep.subr.mxu0 %v1670
        %2943 = vmatpush1.msra.mxu0 %v1669
        %2944 = vmatprep.subr.mxu0 %v1674
        %2945 = vmatpush1.msra.mxu0 %v1673
        %2946 = vmatprep.subr.mxu0 %v1678
        %2947 = vmatpush1.msra.mxu0 %v1677
        %2948 = vmatprep.subr.mxu0 %v1682
        %2949 = vmatpush1.msra.mxu0 %v1681
        %2950 = vmatprep.subr.mxu0 %v1686
        %2951 = vmatpush1.msra.mxu0 %v1685
        %2952 = vmatprep.subr.mxu0 %v1690
        %2953 = vmatpush1.msra.mxu0 %v1689
        %2954 = vmatprep.subr.mxu0 %v1694
        %2955 = vmatpush1.msra.mxu0 %v1693
        %2956 = vmatprep.subr.mxu0 %v1698
        %2957 = vmatpush1.msra.mxu0 %v1697
        %2958 = vmatprep.subr.mxu0 %v1702
        %2959 = vmatpush1.msra.mxu0 %v1701
        %2960 = vmatprep.subr.mxu0 %v1706
        %2961 = vmatpush1.msra.mxu0 %v1705
        %2962 = vmatprep.subr.mxu0 %v1710
        %2963 = vmatpush1.msra.mxu0 %v1709
        %2964 = vmatprep.subr.mxu0 0.0
        %2965 = vmatpush1.msra.mxu0 0.0
        %2966 = vmatprep.subr.mxu0 0.0
        %2967 = vmatpush1.msra.mxu0 0.0
        %2968 = vmatprep.subr.mxu0 0.0
        %2969 = vmatpush1.msra.mxu0 0.0
        %2970 = vmatprep.subr.mxu0 0.0
        %2971 = vmatpush1.msra.mxu0 0.0
        %2972 = vmatprep.subr.mxu0 0.0
        %2973 = vmatpush1.msra.mxu0 0.0
        %2974 = vmatprep.subr.mxu0 0.0
        %2975 = vmatpush1.msra.mxu0 0.0
        %2976 = vmatprep.subr.mxu0 0.0
        %2977 = vmatpush1.msra.mxu0 0.0
        %2978 = vmatprep.subr.mxu0 0.0
        %2979 = vmatpush1.msra.mxu0 0.0
        %2980 = vmatprep.subr.mxu0 0.0
        %2981 = vmatpush1.msra.mxu0 0.0
        %2982 = vmatprep.subr.mxu0 0.0
        %2983 = vmatpush1.msra.mxu0 0.0
        %2984 = vmatprep.subr.mxu0 0.0
        %2985 = vmatpush1.msra.mxu0 0.0
        %2986 = vmatprep.subr.mxu0 0.0
        %2987 = vmatpush1.msra.mxu0 0.0
        %2988 = vmatprep.subr.mxu0 0.0
        %2989 = vmatpush1.msra.mxu0 0.0
        %2990 = vmatprep.subr.mxu0 0.0
        %2991 = vmatpush1.msra.mxu0 0.0
        %2992 = vmatprep.subr.mxu0 0.0
        %2993 = vmatpush1.msra.mxu0 0.0
        %2994 = vmatprep.subr.mxu0 0.0
        %2995 = vmatpush1.msra.mxu0 0.0
        %2996 = vmatprep.mubr.f32.mxu0 0.0
        %2997 = vmatmul.mubr.f32.gmra.mrb[0].mxu0 %v2704
        %v2998 = vpop.f32.mrb[0].mxu0
        %v2999 = vadd.f32 0.0, %v2998
        %v3000 = vpop.f32.mrb[0].mxu0
        %v3001 = vadd.f32 0.0, %v3000
        %3002 = vdwg.mxu0
        %v3003 = vadd.f32 %v2857, %v2928
        %v3004 = vadd.f32 %v2858, %v2930
        %v3005 = vadd.f32 %v2859, %v2999
        %v3006 = vadd.f32 %v2860, %v3001
        %v3007 = vtanh.pop %v2853
        %v3008 = vtanh.pop %v2854
        %v3009 = vtanh.pop %v2855
        %v3010 = vtanh.pop %v2856
        %v3011 = vmul.f32 %v3007, 0.5
        %v3012 = vmul.f32 %v3008, 0.5
        %v3013 = vmul.f32 %v3009, 0.5
        %v3014 = vadd.f32 %v3011, 0.5
        %v3015 = vadd.f32 %v3012, 0.5
        %v3016 = vadd.f32 %v3013, 0.5
        %v3017 = vmul.f32 %v3015, %v2687
        %v3018 = vmul.f32 %v3014, %v3010
        %v3019 = vadd.f32 %v3017, %v3018
        %v3020 = vtanh.pop %v3019
        %v3021 = vmul.f32 %v3016, %v3020
        %v3022 = vtanh.pop %v3003
        %v3023 = vtanh.pop %v3004
        %v3024 = vtanh.pop %v3005
        %v3025 = vtanh.pop %v3006
        %v3026 = vmul.f32 %v3022, 0.5
        %v3027 = vmul.f32 %v3023, 0.5
        %v3028 = vmul.f32 %v3024, 0.5
        %v3029 = vadd.f32 %v3026, 0.5
        %v3030 = vadd.f32 %v3027, 0.5
        %v3031 = vadd.f32 %v3028, 0.5
        %v3032 = vmul.f32 %v3030, %v2702
        %v3033 = vmul.f32 %v3029, %v3025
        %v3034 = vadd.f32 %v3032, %v3033
        %v3035 = vtanh.pop %v3034
        %v3036 = vmul.f32 %v3031, %v3035
        %3037 = vst [vmem:[#allocation3 + $0x30] sm:$0xff] %v3021
        %3038 = vst [vmem:[#allocation3 + $0xc8] sm:$0xff] %v3036
        %v3039 = vld [vmem:[#allocation2 + $0x100] sm:$0xff]
        %v3040 = vld [vmem:[#allocation2 + $0x108] sm:$0xff]
        %v3041 = vld [vmem:[#allocation2 + $0x110] sm:$0xff]
        %v3042 = vld [vmem:[#allocation2 + $0x118] sm:$0xff]
        %3043 = vmatprep.subr.mxu0 %v1584
        %3044 = vmatpush1.msra.mxu0 %v1583
        %3045 = vmatprep.subr.mxu0 %v1588
        %3046 = vmatpush1.msra.mxu0 %v1587
        %3047 = vmatprep.subr.mxu0 %v1592
        %3048 = vmatpush1.msra.mxu0 %v1591
        %3049 = vmatprep.subr.mxu0 %v1596
        %3050 = vmatpush1.msra.mxu0 %v1595
        %3051 = vmatprep.subr.mxu0 %v1600
        %3052 = vmatpush1.msra.mxu0 %v1599
        %3053 = vmatprep.subr.mxu0 %v1604
        %3054 = vmatpush1.msra.mxu0 %v1603
        %3055 = vmatprep.subr.mxu0 %v1608
        %3056 = vmatpush1.msra.mxu0 %v1607
        %3057 = vmatprep.subr.mxu0 %v1612
        %3058 = vmatpush1.msra.mxu0 %v1611
        %3059 = vmatprep.subr.mxu0 %v1616
        %3060 = vmatpush1.msra.mxu0 %v1615
        %3061 = vmatprep.subr.mxu0 %v1620
        %3062 = vmatpush1.msra.mxu0 %v1619
        %3063 = vmatprep.subr.mxu0 %v1624
        %3064 = vmatpush1.msra.mxu0 %v1623
        %3065 = vmatprep.subr.mxu0 %v1628
        %3066 = vmatpush1.msra.mxu0 %v1627
        %3067 = vmatprep.subr.mxu0 %v1632
        %3068 = vmatpush1.msra.mxu0 %v1631
        %3069 = vmatprep.subr.mxu0 %v1636
        %3070 = vmatpush1.msra.mxu0 %v1635
        %3071 = vmatprep.subr.mxu0 %v1640
        %3072 = vmatpush1.msra.mxu0 %v1639
        %3073 = vmatprep.subr.mxu0 %v1644
        %3074 = vmatpush1.msra.mxu0 %v1643
        %3075 = vmatprep.subr.mxu0 0.0
        %3076 = vmatpush1.msra.mxu0 0.0
        %3077 = vmatprep.subr.mxu0 0.0
        %3078 = vmatpush1.msra.mxu0 0.0
        %3079 = vmatprep.subr.mxu0 0.0
        %3080 = vmatpush1.msra.mxu0 0.0
        %3081 = vmatprep.subr.mxu0 0.0
        %3082 = vmatpush1.msra.mxu0 0.0
        %3083 = vmatprep.subr.mxu0 0.0
        %3084 = vmatpush1.msra.mxu0 0.0
        %3085 = vmatprep.subr.mxu0 0.0
        %3086 = vmatpush1.msra.mxu0 0.0
        %3087 = vmatprep.subr.mxu0 0.0
        %3088 = vmatpush1.msra.mxu0 0.0
        %3089 = vmatprep.subr.mxu0 0.0
        %3090 = vmatpush1.msra.mxu0 0.0
        %3091 = vmatprep.subr.mxu0 0.0
        %3092 = vmatpush1.msra.mxu0 0.0
        %3093 = vmatprep.subr.mxu0 0.0
        %3094 = vmatpush1.msra.mxu0 0.0
        %3095 = vmatprep.subr.mxu0 0.0
        %3096 = vmatpush1.msra.mxu0 0.0
        %3097 = vmatprep.subr.mxu0 0.0
        %3098 = vmatpush1.msra.mxu0 0.0
        %3099 = vmatprep.subr.mxu0 0.0
        %3100 = vmatpush1.msra.mxu0 0.0
        %3101 = vmatprep.subr.mxu0 0.0
        %3102 = vmatpush1.msra.mxu0 0.0
        %3103 = vmatprep.subr.mxu0 0.0
        %3104 = vmatpush1.msra.mxu0 0.0
        %3105 = vmatprep.subr.mxu0 0.0
        %3106 = vmatpush1.msra.mxu0 0.0
        %3107 = vmatprep.mubr.f32.mxu0 0.0
        %3108 = vmatmul.mubr.f32.gmra.mrb[0].mxu0 %v3021
        %v3109 = vpop.f32.mrb[0].mxu0
        %v3110 = vadd.f32 0.0, %v3109
        %v3111 = vpop.f32.mrb[0].mxu0
        %v3112 = vadd.f32 0.0, %v3111
        %3113 = vdwg.mxu0
        %3114 = vmatprep.subr.mxu0 %v1586
        %3115 = vmatpush1.msra.mxu0 %v1585
        %3116 = vmatprep.subr.mxu0 %v1590
        %3117 = vmatpush1.msra.mxu0 %v1589
        %3118 = vmatprep.subr.mxu0 %v1594
        %3119 = vmatpush1.msra.mxu0 %v1593
        %3120 = vmatprep.subr.mxu0 %v1598
        %3121 = vmatpush1.msra.mxu0 %v1597
        %3122 = vmatprep.subr.mxu0 %v1602
        %3123 = vmatpush1.msra.mxu0 %v1601
        %3124 = vmatprep.subr.mxu0 %v1606
        %3125 = vmatpush1.msra.mxu0 %v1605
        %3126 = vmatprep.subr.mxu0 %v1610
        %3127 = vmatpush1.msra.mxu0 %v1609
        %3128 = vmatprep.subr.mxu0 %v1614
        %3129 = vmatpush1.msra.mxu0 %v1613
        %3130 = vmatprep.subr.mxu0 %v1618
        %3131 = vmatpush1.msra.mxu0 %v1617
        %3132 = vmatprep.subr.mxu0 %v1622
        %3133 = vmatpush1.msra.mxu0 %v1621
        %3134 = vmatprep.subr.mxu0 %v1626
        %3135 = vmatpush1.msra.mxu0 %v1625
        %3136 = vmatprep.subr.mxu0 %v1630
        %3137 = vmatpush1.msra.mxu0 %v1629
        %3138 = vmatprep.subr.mxu0 %v1634
        %3139 = vmatpush1.msra.mxu0 %v1633
        %3140 = vmatprep.subr.mxu0 %v1638
        %3141 = vmatpush1.msra.mxu0 %v1637
        %3142 = vmatprep.subr.mxu0 %v1642
        %3143 = vmatpush1.msra.mxu0 %v1641
        %3144 = vmatprep.subr.mxu0 %v1646
        %3145 = vmatpush1.msra.mxu0 %v1645
        %3146 = vmatprep.subr.mxu0 0.0
        %3147 = vmatpush1.msra.mxu0 0.0
        %3148 = vmatprep.subr.mxu0 0.0
        %3149 = vmatpush1.msra.mxu0 0.0
        %3150 = vmatprep.subr.mxu0 0.0
        %3151 = vmatpush1.msra.mxu0 0.0
        %3152 = vmatprep.subr.mxu0 0.0
        %3153 = vmatpush1.msra.mxu0 0.0
        %3154 = vmatprep.subr.mxu0 0.0
        %3155 = vmatpush1.msra.mxu0 0.0
        %3156 = vmatprep.subr.mxu0 0.0
        %3157 = vmatpush1.msra.mxu0 0.0
        %3158 = vmatprep.subr.mxu0 0.0
        %3159 = vmatpush1.msra.mxu0 0.0
        %3160 = vmatprep.subr.mxu0 0.0
        %3161 = vmatpush1.msra.mxu0 0.0
        %3162 = vmatprep.subr.mxu0 0.0
        %3163 = vmatpush1.msra.mxu0 0.0
        %3164 = vmatprep.subr.mxu0 0.0
        %3165 = vmatpush1.msra.mxu0 0.0
        %3166 = vmatprep.subr.mxu0 0.0
        %3167 = vmatpush1.msra.mxu0 0.0
        %3168 = vmatprep.subr.mxu0 0.0
        %3169 = vmatpush1.msra.mxu0 0.0
        %3170 = vmatprep.subr.mxu0 0.0
        %3171 = vmatpush1.msra.mxu0 0.0
        %3172 = vmatprep.subr.mxu0 0.0
        %3173 = vmatpush1.msra.mxu0 0.0
        %3174 = vmatprep.subr.mxu0 0.0
        %3175 = vmatpush1.msra.mxu0 0.0
        %3176 = vmatprep.subr.mxu0 0.0
        %3177 = vmatpush1.msra.mxu0 0.0
        %3178 = vmatprep.mubr.f32.mxu0 0.0
        %3179 = vmatmul.mubr.f32.gmra.mrb[0].mxu0 %v3021
        %v3180 = vpop.f32.mrb[0].mxu0
        %v3181 = vadd.f32 0.0, %v3180
        %v3182 = vpop.f32.mrb[0].mxu0
        %v3183 = vadd.f32 0.0, %v3182
        %3184 = vdwg.mxu0
        %v3185 = vadd.f32 %v3039, %v3110
        %v3186 = vadd.f32 %v3040, %v3112
        %v3187 = vadd.f32 %v3041, %v3181
        %v3188 = vadd.f32 %v3042, %v3183
        %v3189 = vld [vmem:[#allocation2 + $0x2e0] sm:$0xff]
        %v3190 = vld [vmem:[#allocation2 + $0x2e8] sm:$0xff]
        %v3191 = vld [vmem:[#allocation2 + $0x2f0] sm:$0xff]
        %v3192 = vld [vmem:[#allocation2 + $0x2f8] sm:$0xff]
        %3193 = vmatprep.subr.mxu0 %v1648
        %3194 = vmatpush1.msra.mxu0 %v1647
        %3195 = vmatprep.subr.mxu0 %v1652
        %3196 = vmatpush1.msra.mxu0 %v1651
        %3197 = vmatprep.subr.mxu0 %v1656
        %3198 = vmatpush1.msra.mxu0 %v1655
        %3199 = vmatprep.subr.mxu0 %v1660
        %3200 = vmatpush1.msra.mxu0 %v1659
        %3201 = vmatprep.subr.mxu0 %v1664
        %3202 = vmatpush1.msra.mxu0 %v1663
        %3203 = vmatprep.subr.mxu0 %v1668
        %3204 = vmatpush1.msra.mxu0 %v1667
        %3205 = vmatprep.subr.mxu0 %v1672
        %3206 = vmatpush1.msra.mxu0 %v1671
        %3207 = vmatprep.subr.mxu0 %v1676
        %3208 = vmatpush1.msra.mxu0 %v1675
        %3209 = vmatprep.subr.mxu0 %v1680
        %3210 = vmatpush1.msra.mxu0 %v1679
        %3211 = vmatprep.subr.mxu0 %v1684
        %3212 = vmatpush1.msra.mxu0 %v1683
        %3213 = vmatprep.subr.mxu0 %v1688
        %3214 = vmatpush1.msra.mxu0 %v1687
        %3215 = vmatprep.subr.mxu0 %v1692
        %3216 = vmatpush1.msra.mxu0 %v1691
        %3217 = vmatprep.subr.mxu0 %v1696
        %3218 = vmatpush1.msra.mxu0 %v1695
        %3219 = vmatprep.subr.mxu0 %v1700
        %3220 = vmatpush1.msra.mxu0 %v1699
        %3221 = vmatprep.subr.mxu0 %v1704
        %3222 = vmatpush1.msra.mxu0 %v1703
        %3223 = vmatprep.subr.mxu0 %v1708
        %3224 = vmatpush1.msra.mxu0 %v1707
        %3225 = vmatprep.subr.mxu0 0.0
        %3226 = vmatpush1.msra.mxu0 0.0
        %3227 = vmatprep.subr.mxu0 0.0
        %3228 = vmatpush1.msra.mxu0 0.0
        %3229 = vmatprep.subr.mxu0 0.0
        %3230 = vmatpush1.msra.mxu0 0.0
        %3231 = vmatprep.subr.mxu0 0.0
        %3232 = vmatpush1.msra.mxu0 0.0
        %3233 = vmatprep.subr.mxu0 0.0
        %3234 = vmatpush1.msra.mxu0 0.0
        %3235 = vmatprep.subr.mxu0 0.0
        %3236 = vmatpush1.msra.mxu0 0.0
        %3237 = vmatprep.subr.mxu0 0.0
        %3238 = vmatpush1.msra.mxu0 0.0
        %3239 = vmatprep.subr.mxu0 0.0
        %3240 = vmatpush1.msra.mxu0 0.0
        %3241 = vmatprep.subr.mxu0 0.0
        %3242 = vmatpush1.msra.mxu0 0.0
        %3243 = vmatprep.subr.mxu0 0.0
        %3244 = vmatpush1.msra.mxu0 0.0
        %3245 = vmatprep.subr.mxu0 0.0
        %3246 = vmatpush1.msra.mxu0 0.0
        %3247 = vmatprep.subr.mxu0 0.0
        %3248 = vmatpush1.msra.mxu0 0.0
        %3249 = vmatprep.subr.mxu0 0.0
        %3250 = vmatpush1.msra.mxu0 0.0
        %3251 = vmatprep.subr.mxu0 0.0
        %3252 = vmatpush1.msra.mxu0 0.0
        %3253 = vmatprep.subr.mxu0 0.0
        %3254 = vmatpush1.msra.mxu0 0.0
        %3255 = vmatprep.subr.mxu0 0.0
        %3256 = vmatpush1.msra.mxu0 0.0
        %3257 = vmatprep.mubr.f32.mxu0 0.0
        %3258 = vmatmul.mubr.f32.gmra.mrb[0].mxu0 %v3036
        %v3259 = vpop.f32.mrb[0].mxu0
        %v3260 = vadd.f32 0.0, %v3259
        %v3261 = vpop.f32.mrb[0].mxu0
        %v3262 = vadd.f32 0.0, %v3261
        %3263 = vdwg.mxu0
        %3264 = vmatprep.subr.mxu0 %v1650
        %3265 = vmatpush1.msra.mxu0 %v1649
        %3266 = vmatprep.subr.mxu0 %v1654
        %3267 = vmatpush1.msra.mxu0 %v1653
        %3268 = vmatprep.subr.mxu0 %v1658
        %3269 = vmatpush1.msra.mxu0 %v1657
        %3270 = vmatprep.subr.mxu0 %v1662
        %3271 = vmatpush1.msra.mxu0 %v1661
        %3272 = vmatprep.subr.mxu0 %v1666
        %3273 = vmatpush1.msra.mxu0 %v1665
        %3274 = vmatprep.subr.mxu0 %v1670
        %3275 = vmatpush1.msra.mxu0 %v1669
        %3276 = vmatprep.subr.mxu0 %v1674
        %3277 = vmatpush1.msra.mxu0 %v1673
        %3278 = vmatprep.subr.mxu0 %v1678
        %3279 = vmatpush1.msra.mxu0 %v1677
        %3280 = vmatprep.subr.mxu0 %v1682
        %3281 = vmatpush1.msra.mxu0 %v1681
        %3282 = vmatprep.subr.mxu0 %v1686
        %3283 = vmatpush1.msra.mxu0 %v1685
        %3284 = vmatprep.subr.mxu0 %v1690
        %3285 = vmatpush1.msra.mxu0 %v1689
        %3286 = vmatprep.subr.mxu0 %v1694
        %3287 = vmatpush1.msra.mxu0 %v1693
        %3288 = vmatprep.subr.mxu0 %v1698
        %3289 = vmatpush1.msra.mxu0 %v1697
        %3290 = vmatprep.subr.mxu0 %v1702
        %3291 = vmatpush1.msra.mxu0 %v1701
        %3292 = vmatprep.subr.mxu0 %v1706
        %3293 = vmatpush1.msra.mxu0 %v1705
        %3294 = vmatprep.subr.mxu0 %v1710
        %3295 = vmatpush1.msra.mxu0 %v1709
        %3296 = vmatprep.subr.mxu0 0.0
        %3297 = vmatpush1.msra.mxu0 0.0
        %3298 = vmatprep.subr.mxu0 0.0
        %3299 = vmatpush1.msra.mxu0 0.0
        %3300 = vmatprep.subr.mxu0 0.0
        %3301 = vmatpush1.msra.mxu0 0.0
        %3302 = vmatprep.subr.mxu0 0.0
        %3303 = vmatpush1.msra.mxu0 0.0
        %3304 = vmatprep.subr.mxu0 0.0
        %3305 = vmatpush1.msra.mxu0 0.0
        %3306 = vmatprep.subr.mxu0 0.0
        %3307 = vmatpush1.msra.mxu0 0.0
        %3308 = vmatprep.subr.mxu0 0.0
        %3309 = vmatpush1.msra.mxu0 0.0
        %3310 = vmatprep.subr.mxu0 0.0
        %3311 = vmatpush1.msra.mxu0 0.0
        %3312 = vmatprep.subr.mxu0 0.0
        %3313 = vmatpush1.msra.mxu0 0.0
        %3314 = vmatprep.subr.mxu0 0.0
        %3315 = vmatpush1.msra.mxu0 0.0
        %3316 = vmatprep.subr.mxu0 0.0
        %3317 = vmatpush1.msra.mxu0 0.0
        %3318 = vmatprep.subr.mxu0 0.0
        %3319 = vmatpush1.msra.mxu0 0.0
        %3320 = vmatprep.subr.mxu0 0.0
        %3321 = vmatpush1.msra.mxu0 0.0
        %3322 = vmatprep.subr.mxu0 0.0
        %3323 = vmatpush1.msra.mxu0 0.0
        %3324 = vmatprep.subr.mxu0 0.0
        %3325 = vmatpush1.msra.mxu0 0.0
        %3326 = vmatprep.subr.mxu0 0.0
        %3327 = vmatpush1.msra.mxu0 0.0
        %3328 = vmatprep.mubr.f32.mxu0 0.0
        %3329 = vmatmul.mubr.f32.gmra.mrb[0].mxu0 %v3036
        %v3330 = vpop.f32.mrb[0].mxu0
        %v3331 = vadd.f32 0.0, %v3330
        %v3332 = vpop.f32.mrb[0].mxu0
        %v3333 = vadd.f32 0.0, %v3332
        %3334 = vdwg.mxu0
        %v3335 = vadd.f32 %v3189, %v3260
        %v3336 = vadd.f32 %v3190, %v3262
        %v3337 = vadd.f32 %v3191, %v3331
        %v3338 = vadd.f32 %v3192, %v3333
        %v3339 = vtanh.pop %v3185
        %v3340 = vtanh.pop %v3186
        %v3341 = vtanh.pop %v3187
        %v3342 = vtanh.pop %v3188
        %v3343 = vmul.f32 %v3339, 0.5
        %v3344 = vmul.f32 %v3340, 0.5
        %v3345 = vmul.f32 %v3341, 0.5
        %v3346 = vadd.f32 %v3343, 0.5
        %v3347 = vadd.f32 %v3344, 0.5
        %v3348 = vadd.f32 %v3345, 0.5
        %v3349 = vmul.f32 %v3347, %v3019
        %v3350 = vmul.f32 %v3346, %v3342
        %v3351 = vadd.f32 %v3349, %v3350
        %v3352 = vtanh.pop %v3351
        %v3353 = vmul.f32 %v3348, %v3352
        %v3354 = vtanh.pop %v3335
        %v3355 = vtanh.pop %v3336
        %v3356 = vtanh.pop %v3337
        %v3357 = vtanh.pop %v3338
        %v3358 = vmul.f32 %v3354, 0.5
        %v3359 = vmul.f32 %v3355, 0.5
        %v3360 = vmul.f32 %v3356, 0.5
        %v3361 = vadd.f32 %v3358, 0.5
        %v3362 = vadd.f32 %v3359, 0.5
        %v3363 = vadd.f32 %v3360, 0.5
        %v3364 = vmul.f32 %v3362, %v3034
        %v3365 = vmul.f32 %v3361, %v3357
        %v3366 = vadd.f32 %v3364, %v3365
        %v3367 = vtanh.pop %v3366
        %v3368 = vmul.f32 %v3363, %v3367
        %3369 = vst [vmem:[#allocation3 + $0x40] sm:$0xff] %v3353
        %3370 = vst [vmem:[#allocation3 + $0xb8] sm:$0xff] %v3368
        %v3371 = vld [vmem:[#allocation2 + $0x140] sm:$0xff]
        %v3372 = vld [vmem:[#allocation2 + $0x148] sm:$0xff]
        %v3373 = vld [vmem:[#allocation2 + $0x150] sm:$0xff]
        %v3374 = vld [vmem:[#allocation2 + $0x158] sm:$0xff]
        %3375 = vmatprep.subr.mxu0 %v1584
        %3376 = vmatpush1.msra.mxu0 %v1583
        %3377 = vmatprep.subr.mxu0 %v1588
        %3378 = vmatpush1.msra.mxu0 %v1587
        %3379 = vmatprep.subr.mxu0 %v1592
        %3380 = vmatpush1.msra.mxu0 %v1591
        %3381 = vmatprep.subr.mxu0 %v1596
        %3382 = vmatpush1.msra.mxu0 %v1595
        %3383 = vmatprep.subr.mxu0 %v1600
        %3384 = vmatpush1.msra.mxu0 %v1599
        %3385 = vmatprep.subr.mxu0 %v1604
        %3386 = vmatpush1.msra.mxu0 %v1603
        %3387 = vmatprep.subr.mxu0 %v1608
        %3388 = vmatpush1.msra.mxu0 %v1607
        %3389 = vmatprep.subr.mxu0 %v1612
        %3390 = vmatpush1.msra.mxu0 %v1611
        %3391 = vmatprep.subr.mxu0 %v1616
        %3392 = vmatpush1.msra.mxu0 %v1615
        %3393 = vmatprep.subr.mxu0 %v1620
        %3394 = vmatpush1.msra.mxu0 %v1619
        %3395 = vmatprep.subr.mxu0 %v1624
        %3396 = vmatpush1.msra.mxu0 %v1623
        %3397 = vmatprep.subr.mxu0 %v1628
        %3398 = vmatpush1.msra.mxu0 %v1627
        %3399 = vmatprep.subr.mxu0 %v1632
        %3400 = vmatpush1.msra.mxu0 %v1631
        %3401 = vmatprep.subr.mxu0 %v1636
        %3402 = vmatpush1.msra.mxu0 %v1635
        %3403 = vmatprep.subr.mxu0 %v1640
        %3404 = vmatpush1.msra.mxu0 %v1639
        %3405 = vmatprep.subr.mxu0 %v1644
        %3406 = vmatpush1.msra.mxu0 %v1643
        %3407 = vmatprep.subr.mxu0 0.0
        %3408 = vmatpush1.msra.mxu0 0.0
        %3409 = vmatprep.subr.mxu0 0.0
        %3410 = vmatpush1.msra.mxu0 0.0
        %3411 = vmatprep.subr.mxu0 0.0
        %3412 = vmatpush1.msra.mxu0 0.0
        %3413 = vmatprep.subr.mxu0 0.0
        %3414 = vmatpush1.msra.mxu0 0.0
        %3415 = vmatprep.subr.mxu0 0.0
        %3416 = vmatpush1.msra.mxu0 0.0
        %3417 = vmatprep.subr.mxu0 0.0
        %3418 = vmatpush1.msra.mxu0 0.0
        %3419 = vmatprep.subr.mxu0 0.0
        %3420 = vmatpush1.msra.mxu0 0.0
        %3421 = vmatprep.subr.mxu0 0.0
        %3422 = vmatpush1.msra.mxu0 0.0
        %3423 = vmatprep.subr.mxu0 0.0
        %3424 = vmatpush1.msra.mxu0 0.0
        %3425 = vmatprep.subr.mxu0 0.0
        %3426 = vmatpush1.msra.mxu0 0.0
        %3427 = vmatprep.subr.mxu0 0.0
        %3428 = vmatpush1.msra.mxu0 0.0
        %3429 = vmatprep.subr.mxu0 0.0
        %3430 = vmatpush1.msra.mxu0 0.0
        %3431 = vmatprep.subr.mxu0 0.0
        %3432 = vmatpush1.msra.mxu0 0.0
        %3433 = vmatprep.subr.mxu0 0.0
        %3434 = vmatpush1.msra.mxu0 0.0
        %3435 = vmatprep.subr.mxu0 0.0
        %3436 = vmatpush1.msra.mxu0 0.0
        %3437 = vmatprep.subr.mxu0 0.0
        %3438 = vmatpush1.msra.mxu0 0.0
        %3439 = vmatprep.mubr.f32.mxu0 0.0
        %3440 = vmatmul.mubr.f32.gmra.mrb[0].mxu0 %v3353
        %v3441 = vpop.f32.mrb[0].mxu0
        %v3442 = vadd.f32 0.0, %v3441
        %v3443 = vpop.f32.mrb[0].mxu0
        %v3444 = vadd.f32 0.0, %v3443
        %3445 = vdwg.mxu0
        %3446 = vmatprep.subr.mxu0 %v1586
        %3447 = vmatpush1.msra.mxu0 %v1585
        %3448 = vmatprep.subr.mxu0 %v1590
        %3449 = vmatpush1.msra.mxu0 %v1589
        %3450 = vmatprep.subr.mxu0 %v1594
        %3451 = vmatpush1.msra.mxu0 %v1593
        %3452 = vmatprep.subr.mxu0 %v1598
        %3453 = vmatpush1.msra.mxu0 %v1597
        %3454 = vmatprep.subr.mxu0 %v1602
        %3455 = vmatpush1.msra.mxu0 %v1601
        %3456 = vmatprep.subr.mxu0 %v1606
        %3457 = vmatpush1.msra.mxu0 %v1605
        %3458 = vmatprep.subr.mxu0 %v1610
        %3459 = vmatpush1.msra.mxu0 %v1609
        %3460 = vmatprep.subr.mxu0 %v1614
        %3461 = vmatpush1.msra.mxu0 %v1613
        %3462 = vmatprep.subr.mxu0 %v1618
        %3463 = vmatpush1.msra.mxu0 %v1617
        %3464 = vmatprep.subr.mxu0 %v1622
        %3465 = vmatpush1.msra.mxu0 %v1621
        %3466 = vmatprep.subr.mxu0 %v1626
        %3467 = vmatpush1.msra.mxu0 %v1625
        %3468 = vmatprep.subr.mxu0 %v1630
        %3469 = vmatpush1.msra.mxu0 %v1629
        %3470 = vmatprep.subr.mxu0 %v1634
        %3471 = vmatpush1.msra.mxu0 %v1633
        %3472 = vmatprep.subr.mxu0 %v1638
        %3473 = vmatpush1.msra.mxu0 %v1637
        %3474 = vmatprep.subr.mxu0 %v1642
        %3475 = vmatpush1.msra.mxu0 %v1641
        %3476 = vmatprep.subr.mxu0 %v1646
        %3477 = vmatpush1.msra.mxu0 %v1645
        %3478 = vmatprep.subr.mxu0 0.0
        %3479 = vmatpush1.msra.mxu0 0.0
        %3480 = vmatprep.subr.mxu0 0.0
        %3481 = vmatpush1.msra.mxu0 0.0
        %3482 = vmatprep.subr.mxu0 0.0
        %3483 = vmatpush1.msra.mxu0 0.0
        %3484 = vmatprep.subr.mxu0 0.0
        %3485 = vmatpush1.msra.mxu0 0.0
        %3486 = vmatprep.subr.mxu0 0.0
        %3487 = vmatpush1.msra.mxu0 0.0
        %3488 = vmatprep.subr.mxu0 0.0
        %3489 = vmatpush1.msra.mxu0 0.0
        %3490 = vmatprep.subr.mxu0 0.0
        %3491 = vmatpush1.msra.mxu0 0.0
        %3492 = vmatprep.subr.mxu0 0.0
        %3493 = vmatpush1.msra.mxu0 0.0
        %3494 = vmatprep.subr.mxu0 0.0
        %3495 = vmatpush1.msra.mxu0 0.0
        %3496 = vmatprep.subr.mxu0 0.0
        %3497 = vmatpush1.msra.mxu0 0.0
        %3498 = vmatprep.subr.mxu0 0.0
        %3499 = vmatpush1.msra.mxu0 0.0
        %3500 = vmatprep.subr.mxu0 0.0
        %3501 = vmatpush1.msra.mxu0 0.0
        %3502 = vmatprep.subr.mxu0 0.0
        %3503 = vmatpush1.msra.mxu0 0.0
        %3504 = vmatprep.subr.mxu0 0.0
        %3505 = vmatpush1.msra.mxu0 0.0
        %3506 = vmatprep.subr.mxu0 0.0
        %3507 = vmatpush1.msra.mxu0 0.0
        %3508 = vmatprep.subr.mxu0 0.0
        %3509 = vmatpush1.msra.mxu0 0.0
        %3510 = vmatprep.mubr.f32.mxu0 0.0
        %3511 = vmatmul.mubr.f32.gmra.mrb[0].mxu0 %v3353
        %v3512 = vpop.f32.mrb[0].mxu0
        %v3513 = vadd.f32 0.0, %v3512
        %v3514 = vpop.f32.mrb[0].mxu0
        %v3515 = vadd.f32 0.0, %v3514
        %3516 = vdwg.mxu0
        %v3517 = vadd.f32 %v3371, %v3442
        %v3518 = vadd.f32 %v3372, %v3444
        %v3519 = vadd.f32 %v3373, %v3513
        %v3520 = vadd.f32 %v3374, %v3515
        %v3521 = vld [vmem:[#allocation2 + $0x2a0] sm:$0xff]
        %v3522 = vld [vmem:[#allocation2 + $0x2a8] sm:$0xff]
        %v3523 = vld [vmem:[#allocation2 + $0x2b0] sm:$0xff]
        %v3524 = vld [vmem:[#allocation2 + $0x2b8] sm:$0xff]
        %3525 = vmatprep.subr.mxu0 %v1648
        %3526 = vmatpush1.msra.mxu0 %v1647
        %3527 = vmatprep.subr.mxu0 %v1652
        %3528 = vmatpush1.msra.mxu0 %v1651
        %3529 = vmatprep.subr.mxu0 %v1656
        %3530 = vmatpush1.msra.mxu0 %v1655
        %3531 = vmatprep.subr.mxu0 %v1660
        %3532 = vmatpush1.msra.mxu0 %v1659
        %3533 = vmatprep.subr.mxu0 %v1664
        %3534 = vmatpush1.msra.mxu0 %v1663
        %3535 = vmatprep.subr.mxu0 %v1668
        %3536 = vmatpush1.msra.mxu0 %v1667
        %3537 = vmatprep.subr.mxu0 %v1672
        %3538 = vmatpush1.msra.mxu0 %v1671
        %3539 = vmatprep.subr.mxu0 %v1676
        %3540 = vmatpush1.msra.mxu0 %v1675
        %3541 = vmatprep.subr.mxu0 %v1680
        %3542 = vmatpush1.msra.mxu0 %v1679
        %3543 = vmatprep.subr.mxu0 %v1684
        %3544 = vmatpush1.msra.mxu0 %v1683
        %3545 = vmatprep.subr.mxu0 %v1688
        %3546 = vmatpush1.msra.mxu0 %v1687
        %3547 = vmatprep.subr.mxu0 %v1692
        %3548 = vmatpush1.msra.mxu0 %v1691
        %3549 = vmatprep.subr.mxu0 %v1696
        %3550 = vmatpush1.msra.mxu0 %v1695
        %3551 = vmatprep.subr.mxu0 %v1700
        %3552 = vmatpush1.msra.mxu0 %v1699
        %3553 = vmatprep.subr.mxu0 %v1704
        %3554 = vmatpush1.msra.mxu0 %v1703
        %3555 = vmatprep.subr.mxu0 %v1708
        %3556 = vmatpush1.msra.mxu0 %v1707
        %3557 = vmatprep.subr.mxu0 0.0
        %3558 = vmatpush1.msra.mxu0 0.0
        %3559 = vmatprep.subr.mxu0 0.0
        %3560 = vmatpush1.msra.mxu0 0.0
        %3561 = vmatprep.subr.mxu0 0.0
        %3562 = vmatpush1.msra.mxu0 0.0
        %3563 = vmatprep.subr.mxu0 0.0
        %3564 = vmatpush1.msra.mxu0 0.0
        %3565 = vmatprep.subr.mxu0 0.0
        %3566 = vmatpush1.msra.mxu0 0.0
        %3567 = vmatprep.subr.mxu0 0.0
        %3568 = vmatpush1.msra.mxu0 0.0
        %3569 = vmatprep.subr.mxu0 0.0
        %3570 = vmatpush1.msra.mxu0 0.0
        %3571 = vmatprep.subr.mxu0 0.0
        %3572 = vmatpush1.msra.mxu0 0.0
        %3573 = vmatprep.subr.mxu0 0.0
        %3574 = vmatpush1.msra.mxu0 0.0
        %3575 = vmatprep.subr.mxu0 0.0
        %3576 = vmatpush1.msra.mxu0 0.0
        %3577 = vmatprep.subr.mxu0 0.0
        %3578 = vmatpush1.msra.mxu0 0.0
        %3579 = vmatprep.subr.mxu0 0.0
        %3580 = vmatpush1.msra.mxu0 0.0
        %3581 = vmatprep.subr.mxu0 0.0
        %3582 = vmatpush1.msra.mxu0 0.0
        %3583 = vmatprep.subr.mxu0 0.0
        %3584 = vmatpush1.msra.mxu0 0.0
        %3585 = vmatprep.subr.mxu0 0.0
        %3586 = vmatpush1.msra.mxu0 0.0
        %3587 = vmatprep.subr.mxu0 0.0
        %3588 = vmatpush1.msra.mxu0 0.0
        %3589 = vmatprep.mubr.f32.mxu0 0.0
        %3590 = vmatmul.mubr.f32.gmra.mrb[0].mxu0 %v3368
        %v3591 = vpop.f32.mrb[0].mxu0
        %v3592 = vadd.f32 0.0, %v3591
        %v3593 = vpop.f32.mrb[0].mxu0
        %v3594 = vadd.f32 0.0, %v3593
        %3595 = vdwg.mxu0
        %3596 = vmatprep.subr.mxu0 %v1650
        %3597 = vmatpush1.msra.mxu0 %v1649
        %3598 = vmatprep.subr.mxu0 %v1654
        %3599 = vmatpush1.msra.mxu0 %v1653
        %3600 = vmatprep.subr.mxu0 %v1658
        %3601 = vmatpush1.msra.mxu0 %v1657
        %3602 = vmatprep.subr.mxu0 %v1662
        %3603 = vmatpush1.msra.mxu0 %v1661
        %3604 = vmatprep.subr.mxu0 %v1666
        %3605 = vmatpush1.msra.mxu0 %v1665
        %3606 = vmatprep.subr.mxu0 %v1670
        %3607 = vmatpush1.msra.mxu0 %v1669
        %3608 = vmatprep.subr.mxu0 %v1674
        %3609 = vmatpush1.msra.mxu0 %v1673
        %3610 = vmatprep.subr.mxu0 %v1678
        %3611 = vmatpush1.msra.mxu0 %v1677
        %3612 = vmatprep.subr.mxu0 %v1682
        %3613 = vmatpush1.msra.mxu0 %v1681
        %3614 = vmatprep.subr.mxu0 %v1686
        %3615 = vmatpush1.msra.mxu0 %v1685
        %3616 = vmatprep.subr.mxu0 %v1690
        %3617 = vmatpush1.msra.mxu0 %v1689
        %3618 = vmatprep.subr.mxu0 %v1694
        %3619 = vmatpush1.msra.mxu0 %v1693
        %3620 = vmatprep.subr.mxu0 %v1698
        %3621 = vmatpush1.msra.mxu0 %v1697
        %3622 = vmatprep.subr.mxu0 %v1702
        %3623 = vmatpush1.msra.mxu0 %v1701
        %3624 = vmatprep.subr.mxu0 %v1706
        %3625 = vmatpush1.msra.mxu0 %v1705
        %3626 = vmatprep.subr.mxu0 %v1710
        %3627 = vmatpush1.msra.mxu0 %v1709
        %3628 = vmatprep.subr.mxu0 0.0
        %3629 = vmatpush1.msra.mxu0 0.0
        %3630 = vmatprep.subr.mxu0 0.0
        %3631 = vmatpush1.msra.mxu0 0.0
        %3632 = vmatprep.subr.mxu0 0.0
        %3633 = vmatpush1.msra.mxu0 0.0
        %3634 = vmatprep.subr.mxu0 0.0
        %3635 = vmatpush1.msra.mxu0 0.0
        %3636 = vmatprep.subr.mxu0 0.0
        %3637 = vmatpush1.msra.mxu0 0.0
        %3638 = vmatprep.subr.mxu0 0.0
        %3639 = vmatpush1.msra.mxu0 0.0
        %3640 = vmatprep.subr.mxu0 0.0
        %3641 = vmatpush1.msra.mxu0 0.0
        %3642 = vmatprep.subr.mxu0 0.0
        %3643 = vmatpush1.msra.mxu0 0.0
        %3644 = vmatprep.subr.mxu0 0.0
        %3645 = vmatpush1.msra.mxu0 0.0
        %3646 = vmatprep.subr.mxu0 0.0
        %3647 = vmatpush1.msra.mxu0 0.0
        %3648 = vmatprep.subr.mxu0 0.0
        %3649 = vmatpush1.msra.mxu0 0.0
        %3650 = vmatprep.subr.mxu0 0.0
        %3651 = vmatpush1.msra.mxu0 0.0
        %3652 = vmatprep.subr.mxu0 0.0
        %3653 = vmatpush1.msra.mxu0 0.0
        %3654 = vmatprep.subr.mxu0 0.0
        %3655 = vmatpush1.msra.mxu0 0.0
        %3656 = vmatprep.subr.mxu0 0.0
        %3657 = vmatpush1.msra.mxu0 0.0
        %3658 = vmatprep.subr.mxu0 0.0
        %3659 = vmatpush1.msra.mxu0 0.0
        %3660 = vmatprep.mubr.f32.mxu0 0.0
        %3661 = vmatmul.mubr.f32.gmra.mrb[0].mxu0 %v3368
        %v3662 = vpop.f32.mrb[0].mxu0
        %v3663 = vadd.f32 0.0, %v3662
        %v3664 = vpop.f32.mrb[0].mxu0
        %v3665 = vadd.f32 0.0, %v3664
        %3666 = vdwg.mxu0
        %v3667 = vadd.f32 %v3521, %v3592
        %v3668 = vadd.f32 %v3522, %v3594
        %v3669 = vadd.f32 %v3523, %v3663
        %v3670 = vadd.f32 %v3524, %v3665
        %v3671 = vtanh.pop %v3517
        %v3672 = vtanh.pop %v3518
        %v3673 = vtanh.pop %v3519
        %v3674 = vtanh.pop %v3520
        %v3675 = vmul.f32 %v3671, 0.5
        %v3676 = vmul.f32 %v3672, 0.5
        %v3677 = vmul.f32 %v3673, 0.5
        %v3678 = vadd.f32 %v3675, 0.5
        %v3679 = vadd.f32 %v3676, 0.5
        %v3680 = vadd.f32 %v3677, 0.5
        %v3681 = vmul.f32 %v3679, %v3351
        %v3682 = vmul.f32 %v3678, %v3674
        %v3683 = vadd.f32 %v3681, %v3682
        %v3684 = vtanh.pop %v3683
        %v3685 = vmul.f32 %v3680, %v3684
        %v3686 = vtanh.pop %v3667
        %v3687 = vtanh.pop %v3668
        %v3688 = vtanh.pop %v3669
        %v3689 = vtanh.pop %v3670
        %v3690 = vmul.f32 %v3686, 0.5
        %v3691 = vmul.f32 %v3687, 0.5
        %v3692 = vmul.f32 %v3688, 0.5
        %v3693 = vadd.f32 %v3690, 0.5
        %v3694 = vadd.f32 %v3691, 0.5
        %v3695 = vadd.f32 %v3692, 0.5
        %v3696 = vmul.f32 %v3694, %v3366
        %v3697 = vmul.f32 %v3693, %v3689
        %v3698 = vadd.f32 %v3696, %v3697
        %v3699 = vtanh.pop %v3698
        %v3700 = vmul.f32 %v3695, %v3699
        %3701 = vst [vmem:[#allocation3 + $0x50] sm:$0xff] %v3685
        %3702 = vst [vmem:[#allocation3 + $0xa8] sm:$0xff] %v3700
        %v3703 = vld [vmem:[#allocation2 + $0x180] sm:$0xff]
        %v3704 = vld [vmem:[#allocation2 + $0x188] sm:$0xff]
        %v3705 = vld [vmem:[#allocation2 + $0x190] sm:$0xff]
        %v3706 = vld [vmem:[#allocation2 + $0x198] sm:$0xff]
        %3707 = vmatprep.subr.mxu0 %v1584
        %3708 = vmatpush1.msra.mxu0 %v1583
        %3709 = vmatprep.subr.mxu0 %v1588
        %3710 = vmatpush1.msra.mxu0 %v1587
        %3711 = vmatprep.subr.mxu0 %v1592
        %3712 = vmatpush1.msra.mxu0 %v1591
        %3713 = vmatprep.subr.mxu0 %v1596
        %3714 = vmatpush1.msra.mxu0 %v1595
        %3715 = vmatprep.subr.mxu0 %v1600
        %3716 = vmatpush1.msra.mxu0 %v1599
        %3717 = vmatprep.subr.mxu0 %v1604
        %3718 = vmatpush1.msra.mxu0 %v1603
        %3719 = vmatprep.subr.mxu0 %v1608
        %3720 = vmatpush1.msra.mxu0 %v1607
        %3721 = vmatprep.subr.mxu0 %v1612
        %3722 = vmatpush1.msra.mxu0 %v1611
        %3723 = vmatprep.subr.mxu0 %v1616
        %3724 = vmatpush1.msra.mxu0 %v1615
        %3725 = vmatprep.subr.mxu0 %v1620
        %3726 = vmatpush1.msra.mxu0 %v1619
        %3727 = vmatprep.subr.mxu0 %v1624
        %3728 = vmatpush1.msra.mxu0 %v1623
        %3729 = vmatprep.subr.mxu0 %v1628
        %3730 = vmatpush1.msra.mxu0 %v1627
        %3731 = vmatprep.subr.mxu0 %v1632
        %3732 = vmatpush1.msra.mxu0 %v1631
        %3733 = vmatprep.subr.mxu0 %v1636
        %3734 = vmatpush1.msra.mxu0 %v1635
        %3735 = vmatprep.subr.mxu0 %v1640
        %3736 = vmatpush1.msra.mxu0 %v1639
        %3737 = vmatprep.subr.mxu0 %v1644
        %3738 = vmatpush1.msra.mxu0 %v1643
        %3739 = vmatprep.subr.mxu0 0.0
        %3740 = vmatpush1.msra.mxu0 0.0
        %3741 = vmatprep.subr.mxu0 0.0
        %3742 = vmatpush1.msra.mxu0 0.0
        %3743 = vmatprep.subr.mxu0 0.0
        %3744 = vmatpush1.msra.mxu0 0.0
        %3745 = vmatprep.subr.mxu0 0.0
        %3746 = vmatpush1.msra.mxu0 0.0
        %3747 = vmatprep.subr.mxu0 0.0
        %3748 = vmatpush1.msra.mxu0 0.0
        %3749 = vmatprep.subr.mxu0 0.0
        %3750 = vmatpush1.msra.mxu0 0.0
        %3751 = vmatprep.subr.mxu0 0.0
        %3752 = vmatpush1.msra.mxu0 0.0
        %3753 = vmatprep.subr.mxu0 0.0
        %3754 = vmatpush1.msra.mxu0 0.0
        %3755 = vmatprep.subr.mxu0 0.0
        %3756 = vmatpush1.msra.mxu0 0.0
        %3757 = vmatprep.subr.mxu0 0.0
        %3758 = vmatpush1.msra.mxu0 0.0
        %3759 = vmatprep.subr.mxu0 0.0
        %3760 = vmatpush1.msra.mxu0 0.0
        %3761 = vmatprep.subr.mxu0 0.0
        %3762 = vmatpush1.msra.mxu0 0.0
        %3763 = vmatprep.subr.mxu0 0.0
        %3764 = vmatpush1.msra.mxu0 0.0
        %3765 = vmatprep.subr.mxu0 0.0
        %3766 = vmatpush1.msra.mxu0 0.0
        %3767 = vmatprep.subr.mxu0 0.0
        %3768 = vmatpush1.msra.mxu0 0.0
        %3769 = vmatprep.subr.mxu0 0.0
        %3770 = vmatpush1.msra.mxu0 0.0
        %3771 = vmatprep.mubr.f32.mxu0 0.0
        %3772 = vmatmul.mubr.f32.gmra.mrb[0].mxu0 %v3685
        %v3773 = vpop.f32.mrb[0].mxu0
        %v3774 = vadd.f32 0.0, %v3773
        %v3775 = vpop.f32.mrb[0].mxu0
        %v3776 = vadd.f32 0.0, %v3775
        %3777 = vdwg.mxu0
        %3778 = vmatprep.subr.mxu0 %v1586
        %3779 = vmatpush1.msra.mxu0 %v1585
        %3780 = vmatprep.subr.mxu0 %v1590
        %3781 = vmatpush1.msra.mxu0 %v1589
        %3782 = vmatprep.subr.mxu0 %v1594
        %3783 = vmatpush1.msra.mxu0 %v1593
        %3784 = vmatprep.subr.mxu0 %v1598
        %3785 = vmatpush1.msra.mxu0 %v1597
        %3786 = vmatprep.subr.mxu0 %v1602
        %3787 = vmatpush1.msra.mxu0 %v1601
        %3788 = vmatprep.subr.mxu0 %v1606
        %3789 = vmatpush1.msra.mxu0 %v1605
        %3790 = vmatprep.subr.mxu0 %v1610
        %3791 = vmatpush1.msra.mxu0 %v1609
        %3792 = vmatprep.subr.mxu0 %v1614
        %3793 = vmatpush1.msra.mxu0 %v1613
        %3794 = vmatprep.subr.mxu0 %v1618
        %3795 = vmatpush1.msra.mxu0 %v1617
        %3796 = vmatprep.subr.mxu0 %v1622
        %3797 = vmatpush1.msra.mxu0 %v1621
        %3798 = vmatprep.subr.mxu0 %v1626
        %3799 = vmatpush1.msra.mxu0 %v1625
        %3800 = vmatprep.subr.mxu0 %v1630
        %3801 = vmatpush1.msra.mxu0 %v1629
        %3802 = vmatprep.subr.mxu0 %v1634
        %3803 = vmatpush1.msra.mxu0 %v1633
        %3804 = vmatprep.subr.mxu0 %v1638
        %3805 = vmatpush1.msra.mxu0 %v1637
        %3806 = vmatprep.subr.mxu0 %v1642
        %3807 = vmatpush1.msra.mxu0 %v1641
        %3808 = vmatprep.subr.mxu0 %v1646
        %3809 = vmatpush1.msra.mxu0 %v1645
        %3810 = vmatprep.subr.mxu0 0.0
        %3811 = vmatpush1.msra.mxu0 0.0
        %3812 = vmatprep.subr.mxu0 0.0
        %3813 = vmatpush1.msra.mxu0 0.0
        %3814 = vmatprep.subr.mxu0 0.0
        %3815 = vmatpush1.msra.mxu0 0.0
        %3816 = vmatprep.subr.mxu0 0.0
        %3817 = vmatpush1.msra.mxu0 0.0
        %3818 = vmatprep.subr.mxu0 0.0
        %3819 = vmatpush1.msra.mxu0 0.0
        %3820 = vmatprep.subr.mxu0 0.0
        %3821 = vmatpush1.msra.mxu0 0.0
        %3822 = vmatprep.subr.mxu0 0.0
        %3823 = vmatpush1.msra.mxu0 0.0
        %3824 = vmatprep.subr.mxu0 0.0
        %3825 = vmatpush1.msra.mxu0 0.0
        %3826 = vmatprep.subr.mxu0 0.0
        %3827 = vmatpush1.msra.mxu0 0.0
        %3828 = vmatprep.subr.mxu0 0.0
        %3829 = vmatpush1.msra.mxu0 0.0
        %3830 = vmatprep.subr.mxu0 0.0
        %3831 = vmatpush1.msra.mxu0 0.0
        %3832 = vmatprep.subr.mxu0 0.0
        %3833 = vmatpush1.msra.mxu0 0.0
        %3834 = vmatprep.subr.mxu0 0.0
        %3835 = vmatpush1.msra.mxu0 0.0
        %3836 = vmatprep.subr.mxu0 0.0
        %3837 = vmatpush1.msra.mxu0 0.0
        %3838 = vmatprep.subr.mxu0 0.0
        %3839 = vmatpush1.msra.mxu0 0.0
        %3840 = vmatprep.subr.mxu0 0.0
        %3841 = vmatpush1.msra.mxu0 0.0
        %3842 = vmatprep.mubr.f32.mxu0 0.0
        %3843 = vmatmul.mubr.f32.gmra.mrb[0].mxu0 %v3685
        %v3844 = vpop.f32.mrb[0].mxu0
        %v3845 = vadd.f32 0.0, %v3844
        %v3846 = vpop.f32.mrb[0].mxu0
        %v3847 = vadd.f32 0.0, %v3846
        %3848 = vdwg.mxu0
        %v3849 = vadd.f32 %v3703, %v3774
        %v3850 = vadd.f32 %v3704, %v3776
        %v3851 = vadd.f32 %v3705, %v3845
        %v3852 = vadd.f32 %v3706, %v3847
        %v3853 = vld [vmem:[#allocation2 + $0x260] sm:$0xff]
        %v3854 = vld [vmem:[#allocation2 + $0x268] sm:$0xff]
        %v3855 = vld [vmem:[#allocation2 + $0x270] sm:$0xff]
        %v3856 = vld [vmem:[#allocation2 + $0x278] sm:$0xff]
        %3857 = vmatprep.subr.mxu0 %v1648
        %3858 = vmatpush1.msra.mxu0 %v1647
        %3859 = vmatprep.subr.mxu0 %v1652
        %3860 = vmatpush1.msra.mxu0 %v1651
        %3861 = vmatprep.subr.mxu0 %v1656
        %3862 = vmatpush1.msra.mxu0 %v1655
        %3863 = vmatprep.subr.mxu0 %v1660
        %3864 = vmatpush1.msra.mxu0 %v1659
        %3865 = vmatprep.subr.mxu0 %v1664
        %3866 = vmatpush1.msra.mxu0 %v1663
        %3867 = vmatprep.subr.mxu0 %v1668
        %3868 = vmatpush1.msra.mxu0 %v1667
        %3869 = vmatprep.subr.mxu0 %v1672
        %3870 = vmatpush1.msra.mxu0 %v1671
        %3871 = vmatprep.subr.mxu0 %v1676
        %3872 = vmatpush1.msra.mxu0 %v1675
        %3873 = vmatprep.subr.mxu0 %v1680
        %3874 = vmatpush1.msra.mxu0 %v1679
        %3875 = vmatprep.subr.mxu0 %v1684
        %3876 = vmatpush1.msra.mxu0 %v1683
        %3877 = vmatprep.subr.mxu0 %v1688
        %3878 = vmatpush1.msra.mxu0 %v1687
        %3879 = vmatprep.subr.mxu0 %v1692
        %3880 = vmatpush1.msra.mxu0 %v1691
        %3881 = vmatprep.subr.mxu0 %v1696
        %3882 = vmatpush1.msra.mxu0 %v1695
        %3883 = vmatprep.subr.mxu0 %v1700
        %3884 = vmatpush1.msra.mxu0 %v1699
        %3885 = vmatprep.subr.mxu0 %v1704
        %3886 = vmatpush1.msra.mxu0 %v1703
        %3887 = vmatprep.subr.mxu0 %v1708
        %3888 = vmatpush1.msra.mxu0 %v1707
        %3889 = vmatprep.subr.mxu0 0.0
        %3890 = vmatpush1.msra.mxu0 0.0
        %3891 = vmatprep.subr.mxu0 0.0
        %3892 = vmatpush1.msra.mxu0 0.0
        %3893 = vmatprep.subr.mxu0 0.0
        %3894 = vmatpush1.msra.mxu0 0.0
        %3895 = vmatprep.subr.mxu0 0.0
        %3896 = vmatpush1.msra.mxu0 0.0
        %3897 = vmatprep.subr.mxu0 0.0
        %3898 = vmatpush1.msra.mxu0 0.0
        %3899 = vmatprep.subr.mxu0 0.0
        %3900 = vmatpush1.msra.mxu0 0.0
        %3901 = vmatprep.subr.mxu0 0.0
        %3902 = vmatpush1.msra.mxu0 0.0
        %3903 = vmatprep.subr.mxu0 0.0
        %3904 = vmatpush1.msra.mxu0 0.0
        %3905 = vmatprep.subr.mxu0 0.0
        %3906 = vmatpush1.msra.mxu0 0.0
        %3907 = vmatprep.subr.mxu0 0.0
        %3908 = vmatpush1.msra.mxu0 0.0
        %3909 = vmatprep.subr.mxu0 0.0
        %3910 = vmatpush1.msra.mxu0 0.0
        %3911 = vmatprep.subr.mxu0 0.0
        %3912 = vmatpush1.msra.mxu0 0.0
        %3913 = vmatprep.subr.mxu0 0.0
        %3914 = vmatpush1.msra.mxu0 0.0
        %3915 = vmatprep.subr.mxu0 0.0
        %3916 = vmatpush1.msra.mxu0 0.0
        %3917 = vmatprep.subr.mxu0 0.0
        %3918 = vmatpush1.msra.mxu0 0.0
        %3919 = vmatprep.subr.mxu0 0.0
        %3920 = vmatpush1.msra.mxu0 0.0
        %3921 = vmatprep.mubr.f32.mxu0 0.0
        %3922 = vmatmul.mubr.f32.gmra.mrb[0].mxu0 %v3700
        %v3923 = vpop.f32.mrb[0].mxu0
        %v3924 = vadd.f32 0.0, %v3923
        %v3925 = vpop.f32.mrb[0].mxu0
        %v3926 = vadd.f32 0.0, %v3925
        %3927 = vdwg.mxu0
        %3928 = vmatprep.subr.mxu0 %v1650
        %3929 = vmatpush1.msra.mxu0 %v1649
        %3930 = vmatprep.subr.mxu0 %v1654
        %3931 = vmatpush1.msra.mxu0 %v1653
        %3932 = vmatprep.subr.mxu0 %v1658
        %3933 = vmatpush1.msra.mxu0 %v1657
        %3934 = vmatprep.subr.mxu0 %v1662
        %3935 = vmatpush1.msra.mxu0 %v1661
        %3936 = vmatprep.subr.mxu0 %v1666
        %3937 = vmatpush1.msra.mxu0 %v1665
        %3938 = vmatprep.subr.mxu0 %v1670
        %3939 = vmatpush1.msra.mxu0 %v1669
        %3940 = vmatprep.subr.mxu0 %v1674
        %3941 = vmatpush1.msra.mxu0 %v1673
        %3942 = vmatprep.subr.mxu0 %v1678
        %3943 = vmatpush1.msra.mxu0 %v1677
        %3944 = vmatprep.subr.mxu0 %v1682
        %3945 = vmatpush1.msra.mxu0 %v1681
        %3946 = vmatprep.subr.mxu0 %v1686
        %3947 = vmatpush1.msra.mxu0 %v1685
        %3948 = vmatprep.subr.mxu0 %v1690
        %3949 = vmatpush1.msra.mxu0 %v1689
        %3950 = vmatprep.subr.mxu0 %v1694
        %3951 = vmatpush1.msra.mxu0 %v1693
        %3952 = vmatprep.subr.mxu0 %v1698
        %3953 = vmatpush1.msra.mxu0 %v1697
        %3954 = vmatprep.subr.mxu0 %v1702
        %3955 = vmatpush1.msra.mxu0 %v1701
        %3956 = vmatprep.subr.mxu0 %v1706
        %3957 = vmatpush1.msra.mxu0 %v1705
        %3958 = vmatprep.subr.mxu0 %v1710
        %3959 = vmatpush1.msra.mxu0 %v1709
        %3960 = vmatprep.subr.mxu0 0.0
        %3961 = vmatpush1.msra.mxu0 0.0
        %3962 = vmatprep.subr.mxu0 0.0
        %3963 = vmatpush1.msra.mxu0 0.0
        %3964 = vmatprep.subr.mxu0 0.0
        %3965 = vmatpush1.msra.mxu0 0.0
        %3966 = vmatprep.subr.mxu0 0.0
        %3967 = vmatpush1.msra.mxu0 0.0
        %3968 = vmatprep.subr.mxu0 0.0
        %3969 = vmatpush1.msra.mxu0 0.0
        %3970 = vmatprep.subr.mxu0 0.0
        %3971 = vmatpush1.msra.mxu0 0.0
        %3972 = vmatprep.subr.mxu0 0.0
        %3973 = vmatpush1.msra.mxu0 0.0
        %3974 = vmatprep.subr.mxu0 0.0
        %3975 = vmatpush1.msra.mxu0 0.0
        %3976 = vmatprep.subr.mxu0 0.0
        %3977 = vmatpush1.msra.mxu0 0.0
        %3978 = vmatprep.subr.mxu0 0.0
        %3979 = vmatpush1.msra.mxu0 0.0
        %3980 = vmatprep.subr.mxu0 0.0
        %3981 = vmatpush1.msra.mxu0 0.0
        %3982 = vmatprep.subr.mxu0 0.0
        %3983 = vmatpush1.msra.mxu0 0.0
        %3984 = vmatprep.subr.mxu0 0.0
        %3985 = vmatpush1.msra.mxu0 0.0
        %3986 = vmatprep.subr.mxu0 0.0
        %3987 = vmatpush1.msra.mxu0 0.0
        %3988 = vmatprep.subr.mxu0 0.0
        %3989 = vmatpush1.msra.mxu0 0.0
        %3990 = vmatprep.subr.mxu0 0.0
        %3991 = vmatpush1.msra.mxu0 0.0
        %3992 = vmatprep.mubr.f32.mxu0 0.0
        %3993 = vmatmul.mubr.f32.gmra.mrb[0].mxu0 %v3700
        %v3994 = vpop.f32.mrb[0].mxu0
        %v3995 = vadd.f32 0.0, %v3994
        %v3996 = vpop.f32.mrb[0].mxu0
        %v3997 = vadd.f32 0.0, %v3996
        %3998 = vdwg.mxu0
        %v3999 = vadd.f32 %v3853, %v3924
        %v4000 = vadd.f32 %v3854, %v3926
        %v4001 = vadd.f32 %v3855, %v3995
        %v4002 = vadd.f32 %v3856, %v3997
        %v4003 = vtanh.pop %v3849
        %v4004 = vtanh.pop %v3850
        %v4005 = vtanh.pop %v3851
        %v4006 = vtanh.pop %v3852
        %v4007 = vmul.f32 %v4003, 0.5
        %v4008 = vmul.f32 %v4004, 0.5
        %v4009 = vmul.f32 %v4005, 0.5
        %v4010 = vadd.f32 %v4007, 0.5
        %v4011 = vadd.f32 %v4008, 0.5
        %v4012 = vadd.f32 %v4009, 0.5
        %v4013 = vmul.f32 %v4011, %v3683
        %v4014 = vmul.f32 %v4010, %v4006
        %v4015 = vadd.f32 %v4013, %v4014
        %v4016 = vtanh.pop %v4015
        %v4017 = vmul.f32 %v4012, %v4016
        %v4018 = vtanh.pop %v3999
        %v4019 = vtanh.pop %v4000
        %v4020 = vtanh.pop %v4001
        %v4021 = vtanh.pop %v4002
        %v4022 = vmul.f32 %v4018, 0.5
        %v4023 = vmul.f32 %v4019, 0.5
        %v4024 = vmul.f32 %v4020, 0.5
        %v4025 = vadd.f32 %v4022, 0.5
        %v4026 = vadd.f32 %v4023, 0.5
        %v4027 = vadd.f32 %v4024, 0.5
        %v4028 = vmul.f32 %v4026, %v3698
        %v4029 = vmul.f32 %v4025, %v4021
        %v4030 = vadd.f32 %v4028, %v4029
        %v4031 = vtanh.pop %v4030
        %v4032 = vmul.f32 %v4027, %v4031
        %4033 = vst [vmem:[#allocation3 + $0x60] sm:$0xff] %v4017
        %4034 = vst [vmem:[#allocation3 + $0x98] sm:$0xff] %v4032
        %v4035 = vld [vmem:[#allocation2 + $0x1c0] sm:$0xff]
        %v4036 = vld [vmem:[#allocation2 + $0x1c8] sm:$0xff]
        %v4037 = vld [vmem:[#allocation2 + $0x1d0] sm:$0xff]
        %v4038 = vld [vmem:[#allocation2 + $0x1d8] sm:$0xff]
        %4039 = vmatprep.subr.mxu0 %v1584
        %4040 = vmatpush1.msra.mxu0 %v1583
        %4041 = vmatprep.subr.mxu0 %v1588
        %4042 = vmatpush1.msra.mxu0 %v1587
        %4043 = vmatprep.subr.mxu0 %v1592
        %4044 = vmatpush1.msra.mxu0 %v1591
        %4045 = vmatprep.subr.mxu0 %v1596
        %4046 = vmatpush1.msra.mxu0 %v1595
        %4047 = vmatprep.subr.mxu0 %v1600
        %4048 = vmatpush1.msra.mxu0 %v1599
        %4049 = vmatprep.subr.mxu0 %v1604
        %4050 = vmatpush1.msra.mxu0 %v1603
        %4051 = vmatprep.subr.mxu0 %v1608
        %4052 = vmatpush1.msra.mxu0 %v1607
        %4053 = vmatprep.subr.mxu0 %v1612
        %4054 = vmatpush1.msra.mxu0 %v1611
        %4055 = vmatprep.subr.mxu0 %v1616
        %4056 = vmatpush1.msra.mxu0 %v1615
        %4057 = vmatprep.subr.mxu0 %v1620
        %4058 = vmatpush1.msra.mxu0 %v1619
        %4059 = vmatprep.subr.mxu0 %v1624
        %4060 = vmatpush1.msra.mxu0 %v1623
        %4061 = vmatprep.subr.mxu0 %v1628
        %4062 = vmatpush1.msra.mxu0 %v1627
        %4063 = vmatprep.subr.mxu0 %v1632
        %4064 = vmatpush1.msra.mxu0 %v1631
        %4065 = vmatprep.subr.mxu0 %v1636
        %4066 = vmatpush1.msra.mxu0 %v1635
        %4067 = vmatprep.subr.mxu0 %v1640
        %4068 = vmatpush1.msra.mxu0 %v1639
        %4069 = vmatprep.subr.mxu0 %v1644
        %4070 = vmatpush1.msra.mxu0 %v1643
        %4071 = vmatprep.subr.mxu0 0.0
        %4072 = vmatpush1.msra.mxu0 0.0
        %4073 = vmatprep.subr.mxu0 0.0
        %4074 = vmatpush1.msra.mxu0 0.0
        %4075 = vmatprep.subr.mxu0 0.0
        %4076 = vmatpush1.msra.mxu0 0.0
        %4077 = vmatprep.subr.mxu0 0.0
        %4078 = vmatpush1.msra.mxu0 0.0
        %4079 = vmatprep.subr.mxu0 0.0
        %4080 = vmatpush1.msra.mxu0 0.0
        %4081 = vmatprep.subr.mxu0 0.0
        %4082 = vmatpush1.msra.mxu0 0.0
        %4083 = vmatprep.subr.mxu0 0.0
        %4084 = vmatpush1.msra.mxu0 0.0
        %4085 = vmatprep.subr.mxu0 0.0
        %4086 = vmatpush1.msra.mxu0 0.0
        %4087 = vmatprep.subr.mxu0 0.0
        %4088 = vmatpush1.msra.mxu0 0.0
        %4089 = vmatprep.subr.mxu0 0.0
        %4090 = vmatpush1.msra.mxu0 0.0
        %4091 = vmatprep.subr.mxu0 0.0
        %4092 = vmatpush1.msra.mxu0 0.0
        %4093 = vmatprep.subr.mxu0 0.0
        %4094 = vmatpush1.msra.mxu0 0.0
        %4095 = vmatprep.subr.mxu0 0.0
        %4096 = vmatpush1.msra.mxu0 0.0
        %4097 = vmatprep.subr.mxu0 0.0
        %4098 = vmatpush1.msra.mxu0 0.0
        %4099 = vmatprep.subr.mxu0 0.0
        %4100 = vmatpush1.msra.mxu0 0.0
        %4101 = vmatprep.subr.mxu0 0.0
        %4102 = vmatpush1.msra.mxu0 0.0
        %4103 = vmatprep.mubr.f32.mxu0 0.0
        %4104 = vmatmul.mubr.f32.gmra.mrb[0].mxu0 %v4017
        %v4105 = vpop.f32.mrb[0].mxu0
        %v4106 = vadd.f32 0.0, %v4105
        %v4107 = vpop.f32.mrb[0].mxu0
        %v4108 = vadd.f32 0.0, %v4107
        %4109 = vdwg.mxu0
        %4110 = vmatprep.subr.mxu0 %v1586
        %4111 = vmatpush1.msra.mxu0 %v1585
        %4112 = vmatprep.subr.mxu0 %v1590
        %4113 = vmatpush1.msra.mxu0 %v1589
        %4114 = vmatprep.subr.mxu0 %v1594
        %4115 = vmatpush1.msra.mxu0 %v1593
        %4116 = vmatprep.subr.mxu0 %v1598
        %4117 = vmatpush1.msra.mxu0 %v1597
        %4118 = vmatprep.subr.mxu0 %v1602
        %4119 = vmatpush1.msra.mxu0 %v1601
        %4120 = vmatprep.subr.mxu0 %v1606
        %4121 = vmatpush1.msra.mxu0 %v1605
        %4122 = vmatprep.subr.mxu0 %v1610
        %4123 = vmatpush1.msra.mxu0 %v1609
        %4124 = vmatprep.subr.mxu0 %v1614
        %4125 = vmatpush1.msra.mxu0 %v1613
        %4126 = vmatprep.subr.mxu0 %v1618
        %4127 = vmatpush1.msra.mxu0 %v1617
        %4128 = vmatprep.subr.mxu0 %v1622
        %4129 = vmatpush1.msra.mxu0 %v1621
        %4130 = vmatprep.subr.mxu0 %v1626
        %4131 = vmatpush1.msra.mxu0 %v1625
        %4132 = vmatprep.subr.mxu0 %v1630
        %4133 = vmatpush1.msra.mxu0 %v1629
        %4134 = vmatprep.subr.mxu0 %v1634
        %4135 = vmatpush1.msra.mxu0 %v1633
        %4136 = vmatprep.subr.mxu0 %v1638
        %4137 = vmatpush1.msra.mxu0 %v1637
        %4138 = vmatprep.subr.mxu0 %v1642
        %4139 = vmatpush1.msra.mxu0 %v1641
        %4140 = vmatprep.subr.mxu0 %v1646
        %4141 = vmatpush1.msra.mxu0 %v1645
        %4142 = vmatprep.subr.mxu0 0.0
        %4143 = vmatpush1.msra.mxu0 0.0
        %4144 = vmatprep.subr.mxu0 0.0
        %4145 = vmatpush1.msra.mxu0 0.0
        %4146 = vmatprep.subr.mxu0 0.0
        %4147 = vmatpush1.msra.mxu0 0.0
        %4148 = vmatprep.subr.mxu0 0.0
        %4149 = vmatpush1.msra.mxu0 0.0
        %4150 = vmatprep.subr.mxu0 0.0
        %4151 = vmatpush1.msra.mxu0 0.0
        %4152 = vmatprep.subr.mxu0 0.0
        %4153 = vmatpush1.msra.mxu0 0.0
        %4154 = vmatprep.subr.mxu0 0.0
        %4155 = vmatpush1.msra.mxu0 0.0
        %4156 = vmatprep.subr.mxu0 0.0
        %4157 = vmatpush1.msra.mxu0 0.0
        %4158 = vmatprep.subr.mxu0 0.0
        %4159 = vmatpush1.msra.mxu0 0.0
        %4160 = vmatprep.subr.mxu0 0.0
        %4161 = vmatpush1.msra.mxu0 0.0
        %4162 = vmatprep.subr.mxu0 0.0
        %4163 = vmatpush1.msra.mxu0 0.0
        %4164 = vmatprep.subr.mxu0 0.0
        %4165 = vmatpush1.msra.mxu0 0.0
        %4166 = vmatprep.subr.mxu0 0.0
        %4167 = vmatpush1.msra.mxu0 0.0
        %4168 = vmatprep.subr.mxu0 0.0
        %4169 = vmatpush1.msra.mxu0 0.0
        %4170 = vmatprep.subr.mxu0 0.0
        %4171 = vmatpush1.msra.mxu0 0.0
        %4172 = vmatprep.subr.mxu0 0.0
        %4173 = vmatpush1.msra.mxu0 0.0
        %4174 = vmatprep.mubr.f32.mxu0 0.0
        %4175 = vmatmul.mubr.f32.gmra.mrb[0].mxu0 %v4017
        %v4176 = vpop.f32.mrb[0].mxu0
        %v4177 = vadd.f32 0.0, %v4176
        %v4178 = vpop.f32.mrb[0].mxu0
        %v4179 = vadd.f32 0.0, %v4178
        %4180 = vdwg.mxu0
        %v4181 = vadd.f32 %v4035, %v4106
        %v4182 = vadd.f32 %v4036, %v4108
        %v4183 = vadd.f32 %v4037, %v4177
        %v4184 = vadd.f32 %v4038, %v4179
        %v4185 = vld [vmem:[#allocation2 + $0x220] sm:$0xff]
        %v4186 = vld [vmem:[#allocation2 + $0x228] sm:$0xff]
        %v4187 = vld [vmem:[#allocation2 + $0x230] sm:$0xff]
        %v4188 = vld [vmem:[#allocation2 + $0x238] sm:$0xff]
        %4189 = vmatprep.subr.mxu0 %v1648
        %4190 = vmatpush1.msra.mxu0 %v1647
        %4191 = vmatprep.subr.mxu0 %v1652
        %4192 = vmatpush1.msra.mxu0 %v1651
        %4193 = vmatprep.subr.mxu0 %v1656
        %4194 = vmatpush1.msra.mxu0 %v1655
        %4195 = vmatprep.subr.mxu0 %v1660
        %4196 = vmatpush1.msra.mxu0 %v1659
        %4197 = vmatprep.subr.mxu0 %v1664
        %4198 = vmatpush1.msra.mxu0 %v1663
        %4199 = vmatprep.subr.mxu0 %v1668
        %4200 = vmatpush1.msra.mxu0 %v1667
        %4201 = vmatprep.subr.mxu0 %v1672
        %4202 = vmatpush1.msra.mxu0 %v1671
        %4203 = vmatprep.subr.mxu0 %v1676
        %4204 = vmatpush1.msra.mxu0 %v1675
        %4205 = vmatprep.subr.mxu0 %v1680
        %4206 = vmatpush1.msra.mxu0 %v1679
        %4207 = vmatprep.subr.mxu0 %v1684
        %4208 = vmatpush1.msra.mxu0 %v1683
        %4209 = vmatprep.subr.mxu0 %v1688
        %4210 = vmatpush1.msra.mxu0 %v1687
        %4211 = vmatprep.subr.mxu0 %v1692
        %4212 = vmatpush1.msra.mxu0 %v1691
        %4213 = vmatprep.subr.mxu0 %v1696
        %4214 = vmatpush1.msra.mxu0 %v1695
        %4215 = vmatprep.subr.mxu0 %v1700
        %4216 = vmatpush1.msra.mxu0 %v1699
        %4217 = vmatprep.subr.mxu0 %v1704
        %4218 = vmatpush1.msra.mxu0 %v1703
        %4219 = vmatprep.subr.mxu0 %v1708
        %4220 = vmatpush1.msra.mxu0 %v1707
        %4221 = vmatprep.subr.mxu0 0.0
        %4222 = vmatpush1.msra.mxu0 0.0
        %4223 = vmatprep.subr.mxu0 0.0
        %4224 = vmatpush1.msra.mxu0 0.0
        %4225 = vmatprep.subr.mxu0 0.0
        %4226 = vmatpush1.msra.mxu0 0.0
        %4227 = vmatprep.subr.mxu0 0.0
        %4228 = vmatpush1.msra.mxu0 0.0
        %4229 = vmatprep.subr.mxu0 0.0
        %4230 = vmatpush1.msra.mxu0 0.0
        %4231 = vmatprep.subr.mxu0 0.0
        %4232 = vmatpush1.msra.mxu0 0.0
        %4233 = vmatprep.subr.mxu0 0.0
        %4234 = vmatpush1.msra.mxu0 0.0
        %4235 = vmatprep.subr.mxu0 0.0
        %4236 = vmatpush1.msra.mxu0 0.0
        %4237 = vmatprep.subr.mxu0 0.0
        %4238 = vmatpush1.msra.mxu0 0.0
        %4239 = vmatprep.subr.mxu0 0.0
        %4240 = vmatpush1.msra.mxu0 0.0
        %4241 = vmatprep.subr.mxu0 0.0
        %4242 = vmatpush1.msra.mxu0 0.0
        %4243 = vmatprep.subr.mxu0 0.0
        %4244 = vmatpush1.msra.mxu0 0.0
        %4245 = vmatprep.subr.mxu0 0.0
        %4246 = vmatpush1.msra.mxu0 0.0
        %4247 = vmatprep.subr.mxu0 0.0
        %4248 = vmatpush1.msra.mxu0 0.0
        %4249 = vmatprep.subr.mxu0 0.0
        %4250 = vmatpush1.msra.mxu0 0.0
        %4251 = vmatprep.subr.mxu0 0.0
        %4252 = vmatpush1.msra.mxu0 0.0
        %4253 = vmatprep.mubr.f32.mxu0 0.0
        %4254 = vmatmul.mubr.f32.gmra.mrb[0].mxu0 %v4032
        %v4255 = vpop.f32.mrb[0].mxu0
        %v4256 = vadd.f32 0.0, %v4255
        %v4257 = vpop.f32.mrb[0].mxu0
        %v4258 = vadd.f32 0.0, %v4257
        %4259 = vdwg.mxu0
        %4260 = vmatprep.subr.mxu0 %v1650
        %4261 = vmatpush1.msra.mxu0 %v1649
        %4262 = vmatprep.subr.mxu0 %v1654
        %4263 = vmatpush1.msra.mxu0 %v1653
        %4264 = vmatprep.subr.mxu0 %v1658
        %4265 = vmatpush1.msra.mxu0 %v1657
        %4266 = vmatprep.subr.mxu0 %v1662
        %4267 = vmatpush1.msra.mxu0 %v1661
        %4268 = vmatprep.subr.mxu0 %v1666
        %4269 = vmatpush1.msra.mxu0 %v1665
        %4270 = vmatprep.subr.mxu0 %v1670
        %4271 = vmatpush1.msra.mxu0 %v1669
        %4272 = vmatprep.subr.mxu0 %v1674
        %4273 = vmatpush1.msra.mxu0 %v1673
        %4274 = vmatprep.subr.mxu0 %v1678
        %4275 = vmatpush1.msra.mxu0 %v1677
        %4276 = vmatprep.subr.mxu0 %v1682
        %4277 = vmatpush1.msra.mxu0 %v1681
        %4278 = vmatprep.subr.mxu0 %v1686
        %4279 = vmatpush1.msra.mxu0 %v1685
        %4280 = vmatprep.subr.mxu0 %v1690
        %4281 = vmatpush1.msra.mxu0 %v1689
        %4282 = vmatprep.subr.mxu0 %v1694
        %4283 = vmatpush1.msra.mxu0 %v1693
        %4284 = vmatprep.subr.mxu0 %v1698
        %4285 = vmatpush1.msra.mxu0 %v1697
        %4286 = vmatprep.subr.mxu0 %v1702
        %4287 = vmatpush1.msra.mxu0 %v1701
        %4288 = vmatprep.subr.mxu0 %v1706
        %4289 = vmatpush1.msra.mxu0 %v1705
        %4290 = vmatprep.subr.mxu0 %v1710
        %4291 = vmatpush1.msra.mxu0 %v1709
        %4292 = vmatprep.subr.mxu0 0.0
        %4293 = vmatpush1.msra.mxu0 0.0
        %4294 = vmatprep.subr.mxu0 0.0
        %4295 = vmatpush1.msra.mxu0 0.0
        %4296 = vmatprep.subr.mxu0 0.0
        %4297 = vmatpush1.msra.mxu0 0.0
        %4298 = vmatprep.subr.mxu0 0.0
        %4299 = vmatpush1.msra.mxu0 0.0
        %4300 = vmatprep.subr.mxu0 0.0
        %4301 = vmatpush1.msra.mxu0 0.0
        %4302 = vmatprep.subr.mxu0 0.0
        %4303 = vmatpush1.msra.mxu0 0.0
        %4304 = vmatprep.subr.mxu0 0.0
        %4305 = vmatpush1.msra.mxu0 0.0
        %4306 = vmatprep.subr.mxu0 0.0
        %4307 = vmatpush1.msra.mxu0 0.0
        %4308 = vmatprep.subr.mxu0 0.0
        %4309 = vmatpush1.msra.mxu0 0.0
        %4310 = vmatprep.subr.mxu0 0.0
        %4311 = vmatpush1.msra.mxu0 0.0
        %4312 = vmatprep.subr.mxu0 0.0
        %4313 = vmatpush1.msra.mxu0 0.0
        %4314 = vmatprep.subr.mxu0 0.0
        %4315 = vmatpush1.msra.mxu0 0.0
        %4316 = vmatprep.subr.mxu0 0.0
        %4317 = vmatpush1.msra.mxu0 0.0
        %4318 = vmatprep.subr.mxu0 0.0
        %4319 = vmatpush1.msra.mxu0 0.0
        %4320 = vmatprep.subr.mxu0 0.0
        %4321 = vmatpush1.msra.mxu0 0.0
        %4322 = vmatprep.subr.mxu0 0.0
        %4323 = vmatpush1.msra.mxu0 0.0
        %4324 = vmatprep.mubr.f32.mxu0 0.0
        %4325 = vmatmul.mubr.f32.gmra.mrb[0].mxu0 %v4032
        %v4326 = vpop.f32.mrb[0].mxu0
        %v4327 = vadd.f32 0.0, %v4326
        %v4328 = vpop.f32.mrb[0].mxu0
        %v4329 = vadd.f32 0.0, %v4328
        %4330 = vdwg.mxu0
        %v4331 = vadd.f32 %v4185, %v4256
        %v4332 = vadd.f32 %v4186, %v4258
        %v4333 = vadd.f32 %v4187, %v4327
        %v4334 = vadd.f32 %v4188, %v4329
        %v4335 = vtanh.pop %v4181
        %v4336 = vtanh.pop %v4182
        %v4337 = vtanh.pop %v4183
        %v4338 = vtanh.pop %v4184
        %v4339 = vmul.f32 %v4335, 0.5
        %v4340 = vmul.f32 %v4336, 0.5
        %v4341 = vmul.f32 %v4337, 0.5
        %v4342 = vadd.f32 %v4339, 0.5
        %v4343 = vadd.f32 %v4340, 0.5
        %v4344 = vadd.f32 %v4341, 0.5
        %v4345 = vmul.f32 %v4343, %v4015
        %v4346 = vmul.f32 %v4342, %v4338
        %v4347 = vadd.f32 %v4345, %v4346
        %v4348 = vtanh.pop %v4347
        %v4349 = vmul.f32 %v4344, %v4348
        %v4350 = vtanh.pop %v4331
        %v4351 = vtanh.pop %v4332
        %v4352 = vtanh.pop %v4333
        %v4353 = vtanh.pop %v4334
        %v4354 = vmul.f32 %v4350, 0.5
        %v4355 = vmul.f32 %v4351, 0.5
        %v4356 = vmul.f32 %v4352, 0.5
        %v4357 = vadd.f32 %v4354, 0.5
        %v4358 = vadd.f32 %v4355, 0.5
        %v4359 = vadd.f32 %v4356, 0.5
        %v4360 = vmul.f32 %v4358, %v4030
        %v4361 = vmul.f32 %v4357, %v4353
        %v4362 = vadd.f32 %v4360, %v4361
        %v4363 = vtanh.pop %v4362
        %v4364 = vmul.f32 %v4359, %v4363
        %4365 = vst [vmem:[#allocation3 + $0x70] sm:$0xff] %v4349
        %4366 = vst [vmem:[#allocation3 + $0x88] sm:$0xff] %v4364
        %v4367 = vld [vmem:[#allocation2 + $0x200] sm:$0xff]
        %v4368 = vld [vmem:[#allocation2 + $0x208] sm:$0xff]
        %v4369 = vld [vmem:[#allocation2 + $0x210] sm:$0xff]
        %v4370 = vld [vmem:[#allocation2 + $0x218] sm:$0xff]
        %4371 = vmatprep.subr.mxu0 %v1584
        %4372 = vmatpush1.msra.mxu0 %v1583
        %4373 = vmatprep.subr.mxu0 %v1588
        %4374 = vmatpush1.msra.mxu0 %v1587
        %4375 = vmatprep.subr.mxu0 %v1592
        %4376 = vmatpush1.msra.mxu0 %v1591
        %4377 = vmatprep.subr.mxu0 %v1596
        %4378 = vmatpush1.msra.mxu0 %v1595
        %4379 = vmatprep.subr.mxu0 %v1600
        %4380 = vmatpush1.msra.mxu0 %v1599
        %4381 = vmatprep.subr.mxu0 %v1604
        %4382 = vmatpush1.msra.mxu0 %v1603
        %4383 = vmatprep.subr.mxu0 %v1608
        %4384 = vmatpush1.msra.mxu0 %v1607
        %4385 = vmatprep.subr.mxu0 %v1612
        %4386 = vmatpush1.msra.mxu0 %v1611
        %4387 = vmatprep.subr.mxu0 %v1616
        %4388 = vmatpush1.msra.mxu0 %v1615
        %4389 = vmatprep.subr.mxu0 %v1620
        %4390 = vmatpush1.msra.mxu0 %v1619
        %4391 = vmatprep.subr.mxu0 %v1624
        %4392 = vmatpush1.msra.mxu0 %v1623
        %4393 = vmatprep.subr.mxu0 %v1628
        %4394 = vmatpush1.msra.mxu0 %v1627
        %4395 = vmatprep.subr.mxu0 %v1632
        %4396 = vmatpush1.msra.mxu0 %v1631
        %4397 = vmatprep.subr.mxu0 %v1636
        %4398 = vmatpush1.msra.mxu0 %v1635
        %4399 = vmatprep.subr.mxu0 %v1640
        %4400 = vmatpush1.msra.mxu0 %v1639
        %4401 = vmatprep.subr.mxu0 %v1644
        %4402 = vmatpush1.msra.mxu0 %v1643
        %4403 = vmatprep.subr.mxu0 0.0
        %4404 = vmatpush1.msra.mxu0 0.0
        %4405 = vmatprep.subr.mxu0 0.0
        %4406 = vmatpush1.msra.mxu0 0.0
        %4407 = vmatprep.subr.mxu0 0.0
        %4408 = vmatpush1.msra.mxu0 0.0
        %4409 = vmatprep.subr.mxu0 0.0
        %4410 = vmatpush1.msra.mxu0 0.0
        %4411 = vmatprep.subr.mxu0 0.0
        %4412 = vmatpush1.msra.mxu0 0.0
        %4413 = vmatprep.subr.mxu0 0.0
        %4414 = vmatpush1.msra.mxu0 0.0
        %4415 = vmatprep.subr.mxu0 0.0
        %4416 = vmatpush1.msra.mxu0 0.0
        %4417 = vmatprep.subr.mxu0 0.0
        %4418 = vmatpush1.msra.mxu0 0.0
        %4419 = vmatprep.subr.mxu0 0.0
        %4420 = vmatpush1.msra.mxu0 0.0
        %4421 = vmatprep.subr.mxu0 0.0
        %4422 = vmatpush1.msra.mxu0 0.0
        %4423 = vmatprep.subr.mxu0 0.0
        %4424 = vmatpush1.msra.mxu0 0.0
        %4425 = vmatprep.subr.mxu0 0.0
        %4426 = vmatpush1.msra.mxu0 0.0
        %4427 = vmatprep.subr.mxu0 0.0
        %4428 = vmatpush1.msra.mxu0 0.0
        %4429 = vmatprep.subr.mxu0 0.0
        %4430 = vmatpush1.msra.mxu0 0.0
        %4431 = vmatprep.subr.mxu0 0.0
        %4432 = vmatpush1.msra.mxu0 0.0
        %4433 = vmatprep.subr.mxu0 0.0
        %4434 = vmatpush1.msra.mxu0 0.0
        %4435 = vmatprep.mubr.f32.mxu0 0.0
        %4436 = vmatmul.mubr.f32.gmra.mrb[0].mxu0 %v4349
        %v4437 = vpop.f32.mrb[0].mxu0
        %v4438 = vadd.f32 0.0, %v4437
        %v4439 = vpop.f32.mrb[0].mxu0
        %v4440 = vadd.f32 0.0, %v4439
        %4441 = vdwg.mxu0
        %4442 = vmatprep.subr.mxu0 %v1586
        %4443 = vmatpush1.msra.mxu0 %v1585
        %4444 = vmatprep.subr.mxu0 %v1590
        %4445 = vmatpush1.msra.mxu0 %v1589
        %4446 = vmatprep.subr.mxu0 %v1594
        %4447 = vmatpush1.msra.mxu0 %v1593
        %4448 = vmatprep.subr.mxu0 %v1598
        %4449 = vmatpush1.msra.mxu0 %v1597
        %4450 = vmatprep.subr.mxu0 %v1602
        %4451 = vmatpush1.msra.mxu0 %v1601
        %4452 = vmatprep.subr.mxu0 %v1606
        %4453 = vmatpush1.msra.mxu0 %v1605
        %4454 = vmatprep.subr.mxu0 %v1610
        %4455 = vmatpush1.msra.mxu0 %v1609
        %4456 = vmatprep.subr.mxu0 %v1614
        %4457 = vmatpush1.msra.mxu0 %v1613
        %4458 = vmatprep.subr.mxu0 %v1618
        %4459 = vmatpush1.msra.mxu0 %v1617
        %4460 = vmatprep.subr.mxu0 %v1622
        %4461 = vmatpush1.msra.mxu0 %v1621
        %4462 = vmatprep.subr.mxu0 %v1626
        %4463 = vmatpush1.msra.mxu0 %v1625
        %4464 = vmatprep.subr.mxu0 %v1630
        %4465 = vmatpush1.msra.mxu0 %v1629
        %4466 = vmatprep.subr.mxu0 %v1634
        %4467 = vmatpush1.msra.mxu0 %v1633
        %4468 = vmatprep.subr.mxu0 %v1638
        %4469 = vmatpush1.msra.mxu0 %v1637
        %4470 = vmatprep.subr.mxu0 %v1642
        %4471 = vmatpush1.msra.mxu0 %v1641
        %4472 = vmatprep.subr.mxu0 %v1646
        %4473 = vmatpush1.msra.mxu0 %v1645
        %4474 = vmatprep.subr.mxu0 0.0
        %4475 = vmatpush1.msra.mxu0 0.0
        %4476 = vmatprep.subr.mxu0 0.0
        %4477 = vmatpush1.msra.mxu0 0.0
        %4478 = vmatprep.subr.mxu0 0.0
        %4479 = vmatpush1.msra.mxu0 0.0
        %4480 = vmatprep.subr.mxu0 0.0
        %4481 = vmatpush1.msra.mxu0 0.0
        %4482 = vmatprep.subr.mxu0 0.0
        %4483 = vmatpush1.msra.mxu0 0.0
        %4484 = vmatprep.subr.mxu0 0.0
        %4485 = vmatpush1.msra.mxu0 0.0
        %4486 = vmatprep.subr.mxu0 0.0
        %4487 = vmatpush1.msra.mxu0 0.0
        %4488 = vmatprep.subr.mxu0 0.0
        %4489 = vmatpush1.msra.mxu0 0.0
        %4490 = vmatprep.subr.mxu0 0.0
        %4491 = vmatpush1.msra.mxu0 0.0
        %4492 = vmatprep.subr.mxu0 0.0
        %4493 = vmatpush1.msra.mxu0 0.0
        %4494 = vmatprep.subr.mxu0 0.0
        %4495 = vmatpush1.msra.mxu0 0.0
        %4496 = vmatprep.subr.mxu0 0.0
        %4497 = vmatpush1.msra.mxu0 0.0
        %4498 = vmatprep.subr.mxu0 0.0
        %4499 = vmatpush1.msra.mxu0 0.0
        %4500 = vmatprep.subr.mxu0 0.0
        %4501 = vmatpush1.msra.mxu0 0.0
        %4502 = vmatprep.subr.mxu0 0.0
        %4503 = vmatpush1.msra.mxu0 0.0
        %4504 = vmatprep.subr.mxu0 0.0
        %4505 = vmatpush1.msra.mxu0 0.0
        %4506 = vmatprep.mubr.f32.mxu0 0.0
        %4507 = vmatmul.mubr.f32.gmra.mrb[0].mxu0 %v4349
        %v4508 = vpop.f32.mrb[0].mxu0
        %v4509 = vadd.f32 0.0, %v4508
        %v4510 = vpop.f32.mrb[0].mxu0
        %v4511 = vadd.f32 0.0, %v4510
        %4512 = vdwg.mxu0
        %v4513 = vadd.f32 %v4367, %v4438
        %v4514 = vadd.f32 %v4368, %v4440
        %v4515 = vadd.f32 %v4369, %v4509
        %v4516 = vadd.f32 %v4370, %v4511
        %v4517 = vld [vmem:[#allocation2 + $0x1e0] sm:$0xff]
        %v4518 = vld [vmem:[#allocation2 + $0x1e8] sm:$0xff]
        %v4519 = vld [vmem:[#allocation2 + $0x1f0] sm:$0xff]
        %v4520 = vld [vmem:[#allocation2 + $0x1f8] sm:$0xff]
        %4521 = vmatprep.subr.mxu0 %v1648
        %4522 = vmatpush1.msra.mxu0 %v1647
        %4523 = vmatprep.subr.mxu0 %v1652
        %4524 = vmatpush1.msra.mxu0 %v1651
        %4525 = vmatprep.subr.mxu0 %v1656
        %4526 = vmatpush1.msra.mxu0 %v1655
        %4527 = vmatprep.subr.mxu0 %v1660
        %4528 = vmatpush1.msra.mxu0 %v1659
        %4529 = vmatprep.subr.mxu0 %v1664
        %4530 = vmatpush1.msra.mxu0 %v1663
        %4531 = vmatprep.subr.mxu0 %v1668
        %4532 = vmatpush1.msra.mxu0 %v1667
        %4533 = vmatprep.subr.mxu0 %v1672
        %4534 = vmatpush1.msra.mxu0 %v1671
        %4535 = vmatprep.subr.mxu0 %v1676
        %4536 = vmatpush1.msra.mxu0 %v1675
        %4537 = vmatprep.subr.mxu0 %v1680
        %4538 = vmatpush1.msra.mxu0 %v1679
        %4539 = vmatprep.subr.mxu0 %v1684
        %4540 = vmatpush1.msra.mxu0 %v1683
        %4541 = vmatprep.subr.mxu0 %v1688
        %4542 = vmatpush1.msra.mxu0 %v1687
        %4543 = vmatprep.subr.mxu0 %v1692
        %4544 = vmatpush1.msra.mxu0 %v1691
        %4545 = vmatprep.subr.mxu0 %v1696
        %4546 = vmatpush1.msra.mxu0 %v1695
        %4547 = vmatprep.subr.mxu0 %v1700
        %4548 = vmatpush1.msra.mxu0 %v1699
        %4549 = vmatprep.subr.mxu0 %v1704
        %4550 = vmatpush1.msra.mxu0 %v1703
        %4551 = vmatprep.subr.mxu0 %v1708
        %4552 = vmatpush1.msra.mxu0 %v1707
        %4553 = vmatprep.subr.mxu0 0.0
        %4554 = vmatpush1.msra.mxu0 0.0
        %4555 = vmatprep.subr.mxu0 0.0
        %4556 = vmatpush1.msra.mxu0 0.0
        %4557 = vmatprep.subr.mxu0 0.0
        %4558 = vmatpush1.msra.mxu0 0.0
        %4559 = vmatprep.subr.mxu0 0.0
        %4560 = vmatpush1.msra.mxu0 0.0
        %4561 = vmatprep.subr.mxu0 0.0
        %4562 = vmatpush1.msra.mxu0 0.0
        %4563 = vmatprep.subr.mxu0 0.0
        %4564 = vmatpush1.msra.mxu0 0.0
        %4565 = vmatprep.subr.mxu0 0.0
        %4566 = vmatpush1.msra.mxu0 0.0
        %4567 = vmatprep.subr.mxu0 0.0
        %4568 = vmatpush1.msra.mxu0 0.0
        %4569 = vmatprep.subr.mxu0 0.0
        %4570 = vmatpush1.msra.mxu0 0.0
        %4571 = vmatprep.subr.mxu0 0.0
        %4572 = vmatpush1.msra.mxu0 0.0
        %4573 = vmatprep.subr.mxu0 0.0
        %4574 = vmatpush1.msra.mxu0 0.0
        %4575 = vmatprep.subr.mxu0 0.0
        %4576 = vmatpush1.msra.mxu0 0.0
        %4577 = vmatprep.subr.mxu0 0.0
        %4578 = vmatpush1.msra.mxu0 0.0
        %4579 = vmatprep.subr.mxu0 0.0
        %4580 = vmatpush1.msra.mxu0 0.0
        %4581 = vmatprep.subr.mxu0 0.0
        %4582 = vmatpush1.msra.mxu0 0.0
        %4583 = vmatprep.subr.mxu0 0.0
        %4584 = vmatpush1.msra.mxu0 0.0
        %4585 = vmatprep.mubr.f32.mxu0 0.0
        %4586 = vmatmul.mubr.f32.gmra.mrb[0].mxu0 %v4364
        %v4587 = vpop.f32.mrb[0].mxu0
        %v4588 = vadd.f32 0.0, %v4587
        %v4589 = vpop.f32.mrb[0].mxu0
        %v4590 = vadd.f32 0.0, %v4589
        %4591 = vdwg.mxu0
        %4592 = vmatprep.subr.mxu0 %v1650
        %4593 = vmatpush1.msra.mxu0 %v1649
        %4594 = vmatprep.subr.mxu0 %v1654
        %4595 = vmatpush1.msra.mxu0 %v1653
        %4596 = vmatprep.subr.mxu0 %v1658
        %4597 = vmatpush1.msra.mxu0 %v1657
        %4598 = vmatprep.subr.mxu0 %v1662
        %4599 = vmatpush1.msra.mxu0 %v1661
        %4600 = vmatprep.subr.mxu0 %v1666
        %4601 = vmatpush1.msra.mxu0 %v1665
        %4602 = vmatprep.subr.mxu0 %v1670
        %4603 = vmatpush1.msra.mxu0 %v1669
        %4604 = vmatprep.subr.mxu0 %v1674
        %4605 = vmatpush1.msra.mxu0 %v1673
        %4606 = vmatprep.subr.mxu0 %v1678
        %4607 = vmatpush1.msra.mxu0 %v1677
        %4608 = vmatprep.subr.mxu0 %v1682
        %4609 = vmatpush1.msra.mxu0 %v1681
        %4610 = vmatprep.subr.mxu0 %v1686
        %4611 = vmatpush1.msra.mxu0 %v1685
        %4612 = vmatprep.subr.mxu0 %v1690
        %4613 = vmatpush1.msra.mxu0 %v1689
        %4614 = vmatprep.subr.mxu0 %v1694
        %4615 = vmatpush1.msra.mxu0 %v1693
        %4616 = vmatprep.subr.mxu0 %v1698
        %4617 = vmatpush1.msra.mxu0 %v1697
        %4618 = vmatprep.subr.mxu0 %v1702
        %4619 = vmatpush1.msra.mxu0 %v1701
        %4620 = vmatprep.subr.mxu0 %v1706
        %4621 = vmatpush1.msra.mxu0 %v1705
        %4622 = vmatprep.subr.mxu0 %v1710
        %4623 = vmatpush1.msra.mxu0 %v1709
        %4624 = vmatprep.subr.mxu0 0.0
        %4625 = vmatpush1.msra.mxu0 0.0
        %4626 = vmatprep.subr.mxu0 0.0
        %4627 = vmatpush1.msra.mxu0 0.0
        %4628 = vmatprep.subr.mxu0 0.0
        %4629 = vmatpush1.msra.mxu0 0.0
        %4630 = vmatprep.subr.mxu0 0.0
        %4631 = vmatpush1.msra.mxu0 0.0
        %4632 = vmatprep.subr.mxu0 0.0
        %4633 = vmatpush1.msra.mxu0 0.0
        %4634 = vmatprep.subr.mxu0 0.0
        %4635 = vmatpush1.msra.mxu0 0.0
        %4636 = vmatprep.subr.mxu0 0.0
        %4637 = vmatpush1.msra.mxu0 0.0
        %4638 = vmatprep.subr.mxu0 0.0
        %4639 = vmatpush1.msra.mxu0 0.0
        %4640 = vmatprep.subr.mxu0 0.0
        %4641 = vmatpush1.msra.mxu0 0.0
        %4642 = vmatprep.subr.mxu0 0.0
        %4643 = vmatpush1.msra.mxu0 0.0
        %4644 = vmatprep.subr.mxu0 0.0
        %4645 = vmatpush1.msra.mxu0 0.0
        %4646 = vmatprep.subr.mxu0 0.0
        %4647 = vmatpush1.msra.mxu0 0.0
        %4648 = vmatprep.subr.mxu0 0.0
        %4649 = vmatpush1.msra.mxu0 0.0
        %4650 = vmatprep.subr.mxu0 0.0
        %4651 = vmatpush1.msra.mxu0 0.0
        %4652 = vmatprep.subr.mxu0 0.0
        %4653 = vmatpush1.msra.mxu0 0.0
        %4654 = vmatprep.subr.mxu0 0.0
        %4655 = vmatpush1.msra.mxu0 0.0
        %4656 = vmatprep.mubr.f32.mxu0 0.0
        %4657 = vmatmul.mubr.f32.gmra.mrb[0].mxu0 %v4364
        %v4658 = vpop.f32.mrb[0].mxu0
        %v4659 = vadd.f32 0.0, %v4658
        %v4660 = vpop.f32.mrb[0].mxu0
        %v4661 = vadd.f32 0.0, %v4660
        %4662 = vdwg.mxu0
        %v4663 = vadd.f32 %v4517, %v4588
        %v4664 = vadd.f32 %v4518, %v4590
        %v4665 = vadd.f32 %v4519, %v4659
        %v4666 = vadd.f32 %v4520, %v4661
        %v4667 = vtanh.pop %v4513
        %v4668 = vtanh.pop %v4514
        %v4669 = vtanh.pop %v4515
        %v4670 = vtanh.pop %v4516
        %v4671 = vmul.f32 %v4667, 0.5
        %v4672 = vmul.f32 %v4668, 0.5
        %v4673 = vmul.f32 %v4669, 0.5
        %v4674 = vadd.f32 %v4671, 0.5
        %v4675 = vadd.f32 %v4672, 0.5
        %v4676 = vadd.f32 %v4673, 0.5
        %v4677 = vmul.f32 %v4675, %v4347
        %v4678 = vmul.f32 %v4674, %v4670
        %v4679 = vadd.f32 %v4677, %v4678
        %v4680 = vtanh.pop %v4679
        %v4681 = vmul.f32 %v4676, %v4680
        %v4682 = vtanh.pop %v4663
        %v4683 = vtanh.pop %v4664
        %v4684 = vtanh.pop %v4665
        %v4685 = vtanh.pop %v4666
        %v4686 = vmul.f32 %v4682, 0.5
        %v4687 = vmul.f32 %v4683, 0.5
        %v4688 = vmul.f32 %v4684, 0.5
        %v4689 = vadd.f32 %v4686, 0.5
        %v4690 = vadd.f32 %v4687, 0.5
        %v4691 = vadd.f32 %v4688, 0.5
        %v4692 = vmul.f32 %v4690, %v4362
        %v4693 = vmul.f32 %v4689, %v4685
        %v4694 = vadd.f32 %v4692, %v4693
        %v4695 = vtanh.pop %v4694
        %v4696 = vmul.f32 %v4691, %v4695
        %4697 = vst [vmem:[#allocation3 + $0x80] sm:$0xff] %v4681
        %4698 = vst [vmem:[#allocation3 + $0x78] sm:$0xff] %v4696
        %v4699 = vld [vmem:[#allocation2 + $0x240] sm:$0xff]
        %v4700 = vld [vmem:[#allocation2 + $0x248] sm:$0xff]
        %v4701 = vld [vmem:[#allocation2 + $0x250] sm:$0xff]
        %v4702 = vld [vmem:[#allocation2 + $0x258] sm:$0xff]
        %4703 = vmatprep.subr.mxu0 %v1584
        %4704 = vmatpush1.msra.mxu0 %v1583
        %4705 = vmatprep.subr.mxu0 %v1588
        %4706 = vmatpush1.msra.mxu0 %v1587
        %4707 = vmatprep.subr.mxu0 %v1592
        %4708 = vmatpush1.msra.mxu0 %v1591
        %4709 = vmatprep.subr.mxu0 %v1596
        %4710 = vmatpush1.msra.mxu0 %v1595
        %4711 = vmatprep.subr.mxu0 %v1600
        %4712 = vmatpush1.msra.mxu0 %v1599
        %4713 = vmatprep.subr.mxu0 %v1604
        %4714 = vmatpush1.msra.mxu0 %v1603
        %4715 = vmatprep.subr.mxu0 %v1608
        %4716 = vmatpush1.msra.mxu0 %v1607
        %4717 = vmatprep.subr.mxu0 %v1612
        %4718 = vmatpush1.msra.mxu0 %v1611
        %4719 = vmatprep.subr.mxu0 %v1616
        %4720 = vmatpush1.msra.mxu0 %v1615
        %4721 = vmatprep.subr.mxu0 %v1620
        %4722 = vmatpush1.msra.mxu0 %v1619
        %4723 = vmatprep.subr.mxu0 %v1624
        %4724 = vmatpush1.msra.mxu0 %v1623
        %4725 = vmatprep.subr.mxu0 %v1628
        %4726 = vmatpush1.msra.mxu0 %v1627
        %4727 = vmatprep.subr.mxu0 %v1632
        %4728 = vmatpush1.msra.mxu0 %v1631
        %4729 = vmatprep.subr.mxu0 %v1636
        %4730 = vmatpush1.msra.mxu0 %v1635
        %4731 = vmatprep.subr.mxu0 %v1640
        %4732 = vmatpush1.msra.mxu0 %v1639
        %4733 = vmatprep.subr.mxu0 %v1644
        %4734 = vmatpush1.msra.mxu0 %v1643
        %4735 = vmatprep.subr.mxu0 0.0
        %4736 = vmatpush1.msra.mxu0 0.0
        %4737 = vmatprep.subr.mxu0 0.0
        %4738 = vmatpush1.msra.mxu0 0.0
        %4739 = vmatprep.subr.mxu0 0.0
        %4740 = vmatpush1.msra.mxu0 0.0
        %4741 = vmatprep.subr.mxu0 0.0
        %4742 = vmatpush1.msra.mxu0 0.0
        %4743 = vmatprep.subr.mxu0 0.0
        %4744 = vmatpush1.msra.mxu0 0.0
        %4745 = vmatprep.subr.mxu0 0.0
        %4746 = vmatpush1.msra.mxu0 0.0
        %4747 = vmatprep.subr.mxu0 0.0
        %4748 = vmatpush1.msra.mxu0 0.0
        %4749 = vmatprep.subr.mxu0 0.0
        %4750 = vmatpush1.msra.mxu0 0.0
        %4751 = vmatprep.subr.mxu0 0.0
        %4752 = vmatpush1.msra.mxu0 0.0
        %4753 = vmatprep.subr.mxu0 0.0
        %4754 = vmatpush1.msra.mxu0 0.0
        %4755 = vmatprep.subr.mxu0 0.0
        %4756 = vmatpush1.msra.mxu0 0.0
        %4757 = vmatprep.subr.mxu0 0.0
        %4758 = vmatpush1.msra.mxu0 0.0
        %4759 = vmatprep.subr.mxu0 0.0
        %4760 = vmatpush1.msra.mxu0 0.0
        %4761 = vmatprep.subr.mxu0 0.0
        %4762 = vmatpush1.msra.mxu0 0.0
        %4763 = vmatprep.subr.mxu0 0.0
        %4764 = vmatpush1.msra.mxu0 0.0
        %4765 = vmatprep.subr.mxu0 0.0
        %4766 = vmatpush1.msra.mxu0 0.0
        %4767 = vmatprep.mubr.f32.mxu0 0.0
        %4768 = vmatmul.mubr.f32.gmra.mrb[0].mxu0 %v4681
        %v4769 = vpop.f32.mrb[0].mxu0
        %v4770 = vadd.f32 0.0, %v4769
        %v4771 = vpop.f32.mrb[0].mxu0
        %v4772 = vadd.f32 0.0, %v4771
        %4773 = vdwg.mxu0
        %4774 = vmatprep.subr.mxu0 %v1586
        %4775 = vmatpush1.msra.mxu0 %v1585
        %4776 = vmatprep.subr.mxu0 %v1590
        %4777 = vmatpush1.msra.mxu0 %v1589
        %4778 = vmatprep.subr.mxu0 %v1594
        %4779 = vmatpush1.msra.mxu0 %v1593
        %4780 = vmatprep.subr.mxu0 %v1598
        %4781 = vmatpush1.msra.mxu0 %v1597
        %4782 = vmatprep.subr.mxu0 %v1602
        %4783 = vmatpush1.msra.mxu0 %v1601
        %4784 = vmatprep.subr.mxu0 %v1606
        %4785 = vmatpush1.msra.mxu0 %v1605
        %4786 = vmatprep.subr.mxu0 %v1610
        %4787 = vmatpush1.msra.mxu0 %v1609
        %4788 = vmatprep.subr.mxu0 %v1614
        %4789 = vmatpush1.msra.mxu0 %v1613
        %4790 = vmatprep.subr.mxu0 %v1618
        %4791 = vmatpush1.msra.mxu0 %v1617
        %4792 = vmatprep.subr.mxu0 %v1622
        %4793 = vmatpush1.msra.mxu0 %v1621
        %4794 = vmatprep.subr.mxu0 %v1626
        %4795 = vmatpush1.msra.mxu0 %v1625
        %4796 = vmatprep.subr.mxu0 %v1630
        %4797 = vmatpush1.msra.mxu0 %v1629
        %4798 = vmatprep.subr.mxu0 %v1634
        %4799 = vmatpush1.msra.mxu0 %v1633
        %4800 = vmatprep.subr.mxu0 %v1638
        %4801 = vmatpush1.msra.mxu0 %v1637
        %4802 = vmatprep.subr.mxu0 %v1642
        %4803 = vmatpush1.msra.mxu0 %v1641
        %4804 = vmatprep.subr.mxu0 %v1646
        %4805 = vmatpush1.msra.mxu0 %v1645
        %4806 = vmatprep.subr.mxu0 0.0
        %4807 = vmatpush1.msra.mxu0 0.0
        %4808 = vmatprep.subr.mxu0 0.0
        %4809 = vmatpush1.msra.mxu0 0.0
        %4810 = vmatprep.subr.mxu0 0.0
        %4811 = vmatpush1.msra.mxu0 0.0
        %4812 = vmatprep.subr.mxu0 0.0
        %4813 = vmatpush1.msra.mxu0 0.0
        %4814 = vmatprep.subr.mxu0 0.0
        %4815 = vmatpush1.msra.mxu0 0.0
        %4816 = vmatprep.subr.mxu0 0.0
        %4817 = vmatpush1.msra.mxu0 0.0
        %4818 = vmatprep.subr.mxu0 0.0
        %4819 = vmatpush1.msra.mxu0 0.0
        %4820 = vmatprep.subr.mxu0 0.0
        %4821 = vmatpush1.msra.mxu0 0.0
        %4822 = vmatprep.subr.mxu0 0.0
        %4823 = vmatpush1.msra.mxu0 0.0
        %4824 = vmatprep.subr.mxu0 0.0
        %4825 = vmatpush1.msra.mxu0 0.0
        %4826 = vmatprep.subr.mxu0 0.0
        %4827 = vmatpush1.msra.mxu0 0.0
        %4828 = vmatprep.subr.mxu0 0.0
        %4829 = vmatpush1.msra.mxu0 0.0
        %4830 = vmatprep.subr.mxu0 0.0
        %4831 = vmatpush1.msra.mxu0 0.0
        %4832 = vmatprep.subr.mxu0 0.0
        %4833 = vmatpush1.msra.mxu0 0.0
        %4834 = vmatprep.subr.mxu0 0.0
        %4835 = vmatpush1.msra.mxu0 0.0
        %4836 = vmatprep.subr.mxu0 0.0
        %4837 = vmatpush1.msra.mxu0 0.0
        %4838 = vmatprep.mubr.f32.mxu0 0.0
        %4839 = vmatmul.mubr.f32.gmra.mrb[0].mxu0 %v4681
        %v4840 = vpop.f32.mrb[0].mxu0
        %v4841 = vadd.f32 0.0, %v4840
        %v4842 = vpop.f32.mrb[0].mxu0
        %v4843 = vadd.f32 0.0, %v4842
        %4844 = vdwg.mxu0
        %v4845 = vadd.f32 %v4699, %v4770
        %v4846 = vadd.f32 %v4700, %v4772
        %v4847 = vadd.f32 %v4701, %v4841
        %v4848 = vadd.f32 %v4702, %v4843
        %v4849 = vld [vmem:[#allocation2 + $0x1a0] sm:$0xff]
        %v4850 = vld [vmem:[#allocation2 + $0x1a8] sm:$0xff]
        %v4851 = vld [vmem:[#allocation2 + $0x1b0] sm:$0xff]
        %v4852 = vld [vmem:[#allocation2 + $0x1b8] sm:$0xff]
        %4853 = vmatprep.subr.mxu0 %v1648
        %4854 = vmatpush1.msra.mxu0 %v1647
        %4855 = vmatprep.subr.mxu0 %v1652
        %4856 = vmatpush1.msra.mxu0 %v1651
        %4857 = vmatprep.subr.mxu0 %v1656
        %4858 = vmatpush1.msra.mxu0 %v1655
        %4859 = vmatprep.subr.mxu0 %v1660
        %4860 = vmatpush1.msra.mxu0 %v1659
        %4861 = vmatprep.subr.mxu0 %v1664
        %4862 = vmatpush1.msra.mxu0 %v1663
        %4863 = vmatprep.subr.mxu0 %v1668
        %4864 = vmatpush1.msra.mxu0 %v1667
        %4865 = vmatprep.subr.mxu0 %v1672
        %4866 = vmatpush1.msra.mxu0 %v1671
        %4867 = vmatprep.subr.mxu0 %v1676
        %4868 = vmatpush1.msra.mxu0 %v1675
        %4869 = vmatprep.subr.mxu0 %v1680
        %4870 = vmatpush1.msra.mxu0 %v1679
        %4871 = vmatprep.subr.mxu0 %v1684
        %4872 = vmatpush1.msra.mxu0 %v1683
        %4873 = vmatprep.subr.mxu0 %v1688
        %4874 = vmatpush1.msra.mxu0 %v1687
        %4875 = vmatprep.subr.mxu0 %v1692
        %4876 = vmatpush1.msra.mxu0 %v1691
        %4877 = vmatprep.subr.mxu0 %v1696
        %4878 = vmatpush1.msra.mxu0 %v1695
        %4879 = vmatprep.subr.mxu0 %v1700
        %4880 = vmatpush1.msra.mxu0 %v1699
        %4881 = vmatprep.subr.mxu0 %v1704
        %4882 = vmatpush1.msra.mxu0 %v1703
        %4883 = vmatprep.subr.mxu0 %v1708
        %4884 = vmatpush1.msra.mxu0 %v1707
        %4885 = vmatprep.subr.mxu0 0.0
        %4886 = vmatpush1.msra.mxu0 0.0
        %4887 = vmatprep.subr.mxu0 0.0
        %4888 = vmatpush1.msra.mxu0 0.0
        %4889 = vmatprep.subr.mxu0 0.0
        %4890 = vmatpush1.msra.mxu0 0.0
        %4891 = vmatprep.subr.mxu0 0.0
        %4892 = vmatpush1.msra.mxu0 0.0
        %4893 = vmatprep.subr.mxu0 0.0
        %4894 = vmatpush1.msra.mxu0 0.0
        %4895 = vmatprep.subr.mxu0 0.0
        %4896 = vmatpush1.msra.mxu0 0.0
        %4897 = vmatprep.subr.mxu0 0.0
        %4898 = vmatpush1.msra.mxu0 0.0
        %4899 = vmatprep.subr.mxu0 0.0
        %4900 = vmatpush1.msra.mxu0 0.0
        %4901 = vmatprep.subr.mxu0 0.0
        %4902 = vmatpush1.msra.mxu0 0.0
        %4903 = vmatprep.subr.mxu0 0.0
        %4904 = vmatpush1.msra.mxu0 0.0
        %4905 = vmatprep.subr.mxu0 0.0
        %4906 = vmatpush1.msra.mxu0 0.0
        %4907 = vmatprep.subr.mxu0 0.0
        %4908 = vmatpush1.msra.mxu0 0.0
        %4909 = vmatprep.subr.mxu0 0.0
        %4910 = vmatpush1.msra.mxu0 0.0
        %4911 = vmatprep.subr.mxu0 0.0
        %4912 = vmatpush1.msra.mxu0 0.0
        %4913 = vmatprep.subr.mxu0 0.0
        %4914 = vmatpush1.msra.mxu0 0.0
        %4915 = vmatprep.subr.mxu0 0.0
        %4916 = vmatpush1.msra.mxu0 0.0
        %4917 = vmatprep.mubr.f32.mxu0 0.0
        %4918 = vmatmul.mubr.f32.gmra.mrb[0].mxu0 %v4696
        %v4919 = vpop.f32.mrb[0].mxu0
        %v4920 = vadd.f32 0.0, %v4919
        %v4921 = vpop.f32.mrb[0].mxu0
        %v4922 = vadd.f32 0.0, %v4921
        %4923 = vdwg.mxu0
        %4924 = vmatprep.subr.mxu0 %v1650
        %4925 = vmatpush1.msra.mxu0 %v1649
        %4926 = vmatprep.subr.mxu0 %v1654
        %4927 = vmatpush1.msra.mxu0 %v1653
        %4928 = vmatprep.subr.mxu0 %v1658
        %4929 = vmatpush1.msra.mxu0 %v1657
        %4930 = vmatprep.subr.mxu0 %v1662
        %4931 = vmatpush1.msra.mxu0 %v1661
        %4932 = vmatprep.subr.mxu0 %v1666
        %4933 = vmatpush1.msra.mxu0 %v1665
        %4934 = vmatprep.subr.mxu0 %v1670
        %4935 = vmatpush1.msra.mxu0 %v1669
        %4936 = vmatprep.subr.mxu0 %v1674
        %4937 = vmatpush1.msra.mxu0 %v1673
        %4938 = vmatprep.subr.mxu0 %v1678
        %4939 = vmatpush1.msra.mxu0 %v1677
        %4940 = vmatprep.subr.mxu0 %v1682
        %4941 = vmatpush1.msra.mxu0 %v1681
        %4942 = vmatprep.subr.mxu0 %v1686
        %4943 = vmatpush1.msra.mxu0 %v1685
        %4944 = vmatprep.subr.mxu0 %v1690
        %4945 = vmatpush1.msra.mxu0 %v1689
        %4946 = vmatprep.subr.mxu0 %v1694
        %4947 = vmatpush1.msra.mxu0 %v1693
        %4948 = vmatprep.subr.mxu0 %v1698
        %4949 = vmatpush1.msra.mxu0 %v1697
        %4950 = vmatprep.subr.mxu0 %v1702
        %4951 = vmatpush1.msra.mxu0 %v1701
        %4952 = vmatprep.subr.mxu0 %v1706
        %4953 = vmatpush1.msra.mxu0 %v1705
        %4954 = vmatprep.subr.mxu0 %v1710
        %4955 = vmatpush1.msra.mxu0 %v1709
        %4956 = vmatprep.subr.mxu0 0.0
        %4957 = vmatpush1.msra.mxu0 0.0
        %4958 = vmatprep.subr.mxu0 0.0
        %4959 = vmatpush1.msra.mxu0 0.0
        %4960 = vmatprep.subr.mxu0 0.0
        %4961 = vmatpush1.msra.mxu0 0.0
        %4962 = vmatprep.subr.mxu0 0.0
        %4963 = vmatpush1.msra.mxu0 0.0
        %4964 = vmatprep.subr.mxu0 0.0
        %4965 = vmatpush1.msra.mxu0 0.0
        %4966 = vmatprep.subr.mxu0 0.0
        %4967 = vmatpush1.msra.mxu0 0.0
        %4968 = vmatprep.subr.mxu0 0.0
        %4969 = vmatpush1.msra.mxu0 0.0
        %4970 = vmatprep.subr.mxu0 0.0
        %4971 = vmatpush1.msra.mxu0 0.0
        %4972 = vmatprep.subr.mxu0 0.0
        %4973 = vmatpush1.msra.mxu0 0.0
        %4974 = vmatprep.subr.mxu0 0.0
        %4975 = vmatpush1.msra.mxu0 0.0
        %4976 = vmatprep.subr.mxu0 0.0
        %4977 = vmatpush1.msra.mxu0 0.0
        %4978 = vmatprep.subr.mxu0 0.0
        %4979 = vmatpush1.msra.mxu0 0.0
        %4980 = vmatprep.subr.mxu0 0.0
        %4981 = vmatpush1.msra.mxu0 0.0
        %4982 = vmatprep.subr.mxu0 0.0
        %4983 = vmatpush1.msra.mxu0 0.0
        %4984 = vmatprep.subr.mxu0 0.0
        %4985 = vmatpush1.msra.mxu0 0.0
        %4986 = vmatprep.subr.mxu0 0.0
        %4987 = vmatpush1.msra.mxu0 0.0
        %4988 = vmatprep.mubr.f32.mxu0 0.0
        %4989 = vmatmul.mubr.f32.gmra.mrb[0].mxu0 %v4696
        %v4990 = vpop.f32.mrb[0].mxu0
        %v4991 = vadd.f32 0.0, %v4990
        %v4992 = vpop.f32.mrb[0].mxu0
        %v4993 = vadd.f32 0.0, %v4992
        %4994 = vdwg.mxu0
        %v4995 = vadd.f32 %v4849, %v4920
        %v4996 = vadd.f32 %v4850, %v4922
        %v4997 = vadd.f32 %v4851, %v4991
        %v4998 = vadd.f32 %v4852, %v4993
        %v4999 = vtanh.pop %v4845
        %v5000 = vtanh.pop %v4846
        %v5001 = vtanh.pop %v4847
        %v5002 = vtanh.pop %v4848
        %v5003 = vmul.f32 %v4999, 0.5
        %v5004 = vmul.f32 %v5000, 0.5
        %v5005 = vmul.f32 %v5001, 0.5
        %v5006 = vadd.f32 %v5003, 0.5
        %v5007 = vadd.f32 %v5004, 0.5
        %v5008 = vadd.f32 %v5005, 0.5
        %v5009 = vmul.f32 %v5007, %v4679
        %v5010 = vmul.f32 %v5006, %v5002
        %v5011 = vadd.f32 %v5009, %v5010
        %v5012 = vtanh.pop %v5011
        %v5013 = vmul.f32 %v5008, %v5012
        %v5014 = vtanh.pop %v4995
        %v5015 = vtanh.pop %v4996
        %v5016 = vtanh.pop %v4997
        %v5017 = vtanh.pop %v4998
        %v5018 = vmul.f32 %v5014, 0.5
        %v5019 = vmul.f32 %v5015, 0.5
        %v5020 = vmul.f32 %v5016, 0.5
        %v5021 = vadd.f32 %v5018, 0.5
        %v5022 = vadd.f32 %v5019, 0.5
        %v5023 = vadd.f32 %v5020, 0.5
        %v5024 = vmul.f32 %v5022, %v4694
        %v5025 = vmul.f32 %v5021, %v5017
        %v5026 = vadd.f32 %v5024, %v5025
        %v5027 = vtanh.pop %v5026
        %v5028 = vmul.f32 %v5023, %v5027
        %5029 = vst [vmem:[#allocation3 + $0x90] sm:$0xff] %v5013
        %5030 = vst [vmem:[#allocation3 + $0x68] sm:$0xff] %v5028
        %v5031 = vld [vmem:[#allocation2 + $0x280] sm:$0xff]
        %v5032 = vld [vmem:[#allocation2 + $0x288] sm:$0xff]
        %v5033 = vld [vmem:[#allocation2 + $0x290] sm:$0xff]
        %v5034 = vld [vmem:[#allocation2 + $0x298] sm:$0xff]
        %5035 = vmatprep.subr.mxu0 %v1584
        %5036 = vmatpush1.msra.mxu0 %v1583
        %5037 = vmatprep.subr.mxu0 %v1588
        %5038 = vmatpush1.msra.mxu0 %v1587
        %5039 = vmatprep.subr.mxu0 %v1592
        %5040 = vmatpush1.msra.mxu0 %v1591
        %5041 = vmatprep.subr.mxu0 %v1596
        %5042 = vmatpush1.msra.mxu0 %v1595
        %5043 = vmatprep.subr.mxu0 %v1600
        %5044 = vmatpush1.msra.mxu0 %v1599
        %5045 = vmatprep.subr.mxu0 %v1604
        %5046 = vmatpush1.msra.mxu0 %v1603
        %5047 = vmatprep.subr.mxu0 %v1608
        %5048 = vmatpush1.msra.mxu0 %v1607
        %5049 = vmatprep.subr.mxu0 %v1612
        %5050 = vmatpush1.msra.mxu0 %v1611
        %5051 = vmatprep.subr.mxu0 %v1616
        %5052 = vmatpush1.msra.mxu0 %v1615
        %5053 = vmatprep.subr.mxu0 %v1620
        %5054 = vmatpush1.msra.mxu0 %v1619
        %5055 = vmatprep.subr.mxu0 %v1624
        %5056 = vmatpush1.msra.mxu0 %v1623
        %5057 = vmatprep.subr.mxu0 %v1628
        %5058 = vmatpush1.msra.mxu0 %v1627
        %5059 = vmatprep.subr.mxu0 %v1632
        %5060 = vmatpush1.msra.mxu0 %v1631
        %5061 = vmatprep.subr.mxu0 %v1636
        %5062 = vmatpush1.msra.mxu0 %v1635
        %5063 = vmatprep.subr.mxu0 %v1640
        %5064 = vmatpush1.msra.mxu0 %v1639
        %5065 = vmatprep.subr.mxu0 %v1644
        %5066 = vmatpush1.msra.mxu0 %v1643
        %5067 = vmatprep.subr.mxu0 0.0
        %5068 = vmatpush1.msra.mxu0 0.0
        %5069 = vmatprep.subr.mxu0 0.0
        %5070 = vmatpush1.msra.mxu0 0.0
        %5071 = vmatprep.subr.mxu0 0.0
        %5072 = vmatpush1.msra.mxu0 0.0
        %5073 = vmatprep.subr.mxu0 0.0
        %5074 = vmatpush1.msra.mxu0 0.0
        %5075 = vmatprep.subr.mxu0 0.0
        %5076 = vmatpush1.msra.mxu0 0.0
        %5077 = vmatprep.subr.mxu0 0.0
        %5078 = vmatpush1.msra.mxu0 0.0
        %5079 = vmatprep.subr.mxu0 0.0
        %5080 = vmatpush1.msra.mxu0 0.0
        %5081 = vmatprep.subr.mxu0 0.0
        %5082 = vmatpush1.msra.mxu0 0.0
        %5083 = vmatprep.subr.mxu0 0.0
        %5084 = vmatpush1.msra.mxu0 0.0
        %5085 = vmatprep.subr.mxu0 0.0
        %5086 = vmatpush1.msra.mxu0 0.0
        %5087 = vmatprep.subr.mxu0 0.0
        %5088 = vmatpush1.msra.mxu0 0.0
        %5089 = vmatprep.subr.mxu0 0.0
        %5090 = vmatpush1.msra.mxu0 0.0
        %5091 = vmatprep.subr.mxu0 0.0
        %5092 = vmatpush1.msra.mxu0 0.0
        %5093 = vmatprep.subr.mxu0 0.0
        %5094 = vmatpush1.msra.mxu0 0.0
        %5095 = vmatprep.subr.mxu0 0.0
        %5096 = vmatpush1.msra.mxu0 0.0
        %5097 = vmatprep.subr.mxu0 0.0
        %5098 = vmatpush1.msra.mxu0 0.0
        %5099 = vmatprep.mubr.f32.mxu0 0.0
        %5100 = vmatmul.mubr.f32.gmra.mrb[0].mxu0 %v5013
        %v5101 = vpop.f32.mrb[0].mxu0
        %v5102 = vadd.f32 0.0, %v5101
        %v5103 = vpop.f32.mrb[0].mxu0
        %v5104 = vadd.f32 0.0, %v5103
        %5105 = vdwg.mxu0
        %5106 = vmatprep.subr.mxu0 %v1586
        %5107 = vmatpush1.msra.mxu0 %v1585
        %5108 = vmatprep.subr.mxu0 %v1590
        %5109 = vmatpush1.msra.mxu0 %v1589
        %5110 = vmatprep.subr.mxu0 %v1594
        %5111 = vmatpush1.msra.mxu0 %v1593
        %5112 = vmatprep.subr.mxu0 %v1598
        %5113 = vmatpush1.msra.mxu0 %v1597
        %5114 = vmatprep.subr.mxu0 %v1602
        %5115 = vmatpush1.msra.mxu0 %v1601
        %5116 = vmatprep.subr.mxu0 %v1606
        %5117 = vmatpush1.msra.mxu0 %v1605
        %5118 = vmatprep.subr.mxu0 %v1610
        %5119 = vmatpush1.msra.mxu0 %v1609
        %5120 = vmatprep.subr.mxu0 %v1614
        %5121 = vmatpush1.msra.mxu0 %v1613
        %5122 = vmatprep.subr.mxu0 %v1618
        %5123 = vmatpush1.msra.mxu0 %v1617
        %5124 = vmatprep.subr.mxu0 %v1622
        %5125 = vmatpush1.msra.mxu0 %v1621
        %5126 = vmatprep.subr.mxu0 %v1626
        %5127 = vmatpush1.msra.mxu0 %v1625
        %5128 = vmatprep.subr.mxu0 %v1630
        %5129 = vmatpush1.msra.mxu0 %v1629
        %5130 = vmatprep.subr.mxu0 %v1634
        %5131 = vmatpush1.msra.mxu0 %v1633
        %5132 = vmatprep.subr.mxu0 %v1638
        %5133 = vmatpush1.msra.mxu0 %v1637
        %5134 = vmatprep.subr.mxu0 %v1642
        %5135 = vmatpush1.msra.mxu0 %v1641
        %5136 = vmatprep.subr.mxu0 %v1646
        %5137 = vmatpush1.msra.mxu0 %v1645
        %5138 = vmatprep.subr.mxu0 0.0
        %5139 = vmatpush1.msra.mxu0 0.0
        %5140 = vmatprep.subr.mxu0 0.0
        %5141 = vmatpush1.msra.mxu0 0.0
        %5142 = vmatprep.subr.mxu0 0.0
        %5143 = vmatpush1.msra.mxu0 0.0
        %5144 = vmatprep.subr.mxu0 0.0
        %5145 = vmatpush1.msra.mxu0 0.0
        %5146 = vmatprep.subr.mxu0 0.0
        %5147 = vmatpush1.msra.mxu0 0.0
        %5148 = vmatprep.subr.mxu0 0.0
        %5149 = vmatpush1.msra.mxu0 0.0
        %5150 = vmatprep.subr.mxu0 0.0
        %5151 = vmatpush1.msra.mxu0 0.0
        %5152 = vmatprep.subr.mxu0 0.0
        %5153 = vmatpush1.msra.mxu0 0.0
        %5154 = vmatprep.subr.mxu0 0.0
        %5155 = vmatpush1.msra.mxu0 0.0
        %5156 = vmatprep.subr.mxu0 0.0
        %5157 = vmatpush1.msra.mxu0 0.0
        %5158 = vmatprep.subr.mxu0 0.0
        %5159 = vmatpush1.msra.mxu0 0.0
        %5160 = vmatprep.subr.mxu0 0.0
        %5161 = vmatpush1.msra.mxu0 0.0
        %5162 = vmatprep.subr.mxu0 0.0
        %5163 = vmatpush1.msra.mxu0 0.0
        %5164 = vmatprep.subr.mxu0 0.0
        %5165 = vmatpush1.msra.mxu0 0.0
        %5166 = vmatprep.subr.mxu0 0.0
        %5167 = vmatpush1.msra.mxu0 0.0
        %5168 = vmatprep.subr.mxu0 0.0
        %5169 = vmatpush1.msra.mxu0 0.0
        %5170 = vmatprep.mubr.f32.mxu0 0.0
        %5171 = vmatmul.mubr.f32.gmra.mrb[0].mxu0 %v5013
        %v5172 = vpop.f32.mrb[0].mxu0
        %v5173 = vadd.f32 0.0, %v5172
        %v5174 = vpop.f32.mrb[0].mxu0
        %v5175 = vadd.f32 0.0, %v5174
        %5176 = vdwg.mxu0
        %v5177 = vadd.f32 %v5031, %v5102
        %v5178 = vadd.f32 %v5032, %v5104
        %v5179 = vadd.f32 %v5033, %v5173
        %v5180 = vadd.f32 %v5034, %v5175
        %v5181 = vld [vmem:[#allocation2 + $0x160] sm:$0xff]
        %v5182 = vld [vmem:[#allocation2 + $0x168] sm:$0xff]
        %v5183 = vld [vmem:[#allocation2 + $0x170] sm:$0xff]
        %v5184 = vld [vmem:[#allocation2 + $0x178] sm:$0xff]
        %5185 = vmatprep.subr.mxu0 %v1648
        %5186 = vmatpush1.msra.mxu0 %v1647
        %5187 = vmatprep.subr.mxu0 %v1652
        %5188 = vmatpush1.msra.mxu0 %v1651
        %5189 = vmatprep.subr.mxu0 %v1656
        %5190 = vmatpush1.msra.mxu0 %v1655
        %5191 = vmatprep.subr.mxu0 %v1660
        %5192 = vmatpush1.msra.mxu0 %v1659
        %5193 = vmatprep.subr.mxu0 %v1664
        %5194 = vmatpush1.msra.mxu0 %v1663
        %5195 = vmatprep.subr.mxu0 %v1668
        %5196 = vmatpush1.msra.mxu0 %v1667
        %5197 = vmatprep.subr.mxu0 %v1672
        %5198 = vmatpush1.msra.mxu0 %v1671
        %5199 = vmatprep.subr.mxu0 %v1676
        %5200 = vmatpush1.msra.mxu0 %v1675
        %5201 = vmatprep.subr.mxu0 %v1680
        %5202 = vmatpush1.msra.mxu0 %v1679
        %5203 = vmatprep.subr.mxu0 %v1684
        %5204 = vmatpush1.msra.mxu0 %v1683
        %5205 = vmatprep.subr.mxu0 %v1688
        %5206 = vmatpush1.msra.mxu0 %v1687
        %5207 = vmatprep.subr.mxu0 %v1692
        %5208 = vmatpush1.msra.mxu0 %v1691
        %5209 = vmatprep.subr.mxu0 %v1696
        %5210 = vmatpush1.msra.mxu0 %v1695
        %5211 = vmatprep.subr.mxu0 %v1700
        %5212 = vmatpush1.msra.mxu0 %v1699
        %5213 = vmatprep.subr.mxu0 %v1704
        %5214 = vmatpush1.msra.mxu0 %v1703
        %5215 = vmatprep.subr.mxu0 %v1708
        %5216 = vmatpush1.msra.mxu0 %v1707
        %5217 = vmatprep.subr.mxu0 0.0
        %5218 = vmatpush1.msra.mxu0 0.0
        %5219 = vmatprep.subr.mxu0 0.0
        %5220 = vmatpush1.msra.mxu0 0.0
        %5221 = vmatprep.subr.mxu0 0.0
        %5222 = vmatpush1.msra.mxu0 0.0
        %5223 = vmatprep.subr.mxu0 0.0
        %5224 = vmatpush1.msra.mxu0 0.0
        %5225 = vmatprep.subr.mxu0 0.0
        %5226 = vmatpush1.msra.mxu0 0.0
        %5227 = vmatprep.subr.mxu0 0.0
        %5228 = vmatpush1.msra.mxu0 0.0
        %5229 = vmatprep.subr.mxu0 0.0
        %5230 = vmatpush1.msra.mxu0 0.0
        %5231 = vmatprep.subr.mxu0 0.0
        %5232 = vmatpush1.msra.mxu0 0.0
        %5233 = vmatprep.subr.mxu0 0.0
        %5234 = vmatpush1.msra.mxu0 0.0
        %5235 = vmatprep.subr.mxu0 0.0
        %5236 = vmatpush1.msra.mxu0 0.0
        %5237 = vmatprep.subr.mxu0 0.0
        %5238 = vmatpush1.msra.mxu0 0.0
        %5239 = vmatprep.subr.mxu0 0.0
        %5240 = vmatpush1.msra.mxu0 0.0
        %5241 = vmatprep.subr.mxu0 0.0
        %5242 = vmatpush1.msra.mxu0 0.0
        %5243 = vmatprep.subr.mxu0 0.0
        %5244 = vmatpush1.msra.mxu0 0.0
        %5245 = vmatprep.subr.mxu0 0.0
        %5246 = vmatpush1.msra.mxu0 0.0
        %5247 = vmatprep.subr.mxu0 0.0
        %5248 = vmatpush1.msra.mxu0 0.0
        %5249 = vmatprep.mubr.f32.mxu0 0.0
        %5250 = vmatmul.mubr.f32.gmra.mrb[0].mxu0 %v5028
        %v5251 = vpop.f32.mrb[0].mxu0
        %v5252 = vadd.f32 0.0, %v5251
        %v5253 = vpop.f32.mrb[0].mxu0
        %v5254 = vadd.f32 0.0, %v5253
        %5255 = vdwg.mxu0
        %5256 = vmatprep.subr.mxu0 %v1650
        %5257 = vmatpush1.msra.mxu0 %v1649
        %5258 = vmatprep.subr.mxu0 %v1654
        %5259 = vmatpush1.msra.mxu0 %v1653
        %5260 = vmatprep.subr.mxu0 %v1658
        %5261 = vmatpush1.msra.mxu0 %v1657
        %5262 = vmatprep.subr.mxu0 %v1662
        %5263 = vmatpush1.msra.mxu0 %v1661
        %5264 = vmatprep.subr.mxu0 %v1666
        %5265 = vmatpush1.msra.mxu0 %v1665
        %5266 = vmatprep.subr.mxu0 %v1670
        %5267 = vmatpush1.msra.mxu0 %v1669
        %5268 = vmatprep.subr.mxu0 %v1674
        %5269 = vmatpush1.msra.mxu0 %v1673
        %5270 = vmatprep.subr.mxu0 %v1678
        %5271 = vmatpush1.msra.mxu0 %v1677
        %5272 = vmatprep.subr.mxu0 %v1682
        %5273 = vmatpush1.msra.mxu0 %v1681
        %5274 = vmatprep.subr.mxu0 %v1686
        %5275 = vmatpush1.msra.mxu0 %v1685
        %5276 = vmatprep.subr.mxu0 %v1690
        %5277 = vmatpush1.msra.mxu0 %v1689
        %5278 = vmatprep.subr.mxu0 %v1694
        %5279 = vmatpush1.msra.mxu0 %v1693
        %5280 = vmatprep.subr.mxu0 %v1698
        %5281 = vmatpush1.msra.mxu0 %v1697
        %5282 = vmatprep.subr.mxu0 %v1702
        %5283 = vmatpush1.msra.mxu0 %v1701
        %5284 = vmatprep.subr.mxu0 %v1706
        %5285 = vmatpush1.msra.mxu0 %v1705
        %5286 = vmatprep.subr.mxu0 %v1710
        %5287 = vmatpush1.msra.mxu0 %v1709
        %5288 = vmatprep.subr.mxu0 0.0
        %5289 = vmatpush1.msra.mxu0 0.0
        %5290 = vmatprep.subr.mxu0 0.0
        %5291 = vmatpush1.msra.mxu0 0.0
        %5292 = vmatprep.subr.mxu0 0.0
        %5293 = vmatpush1.msra.mxu0 0.0
        %5294 = vmatprep.subr.mxu0 0.0
        %5295 = vmatpush1.msra.mxu0 0.0
        %5296 = vmatprep.subr.mxu0 0.0
        %5297 = vmatpush1.msra.mxu0 0.0
        %5298 = vmatprep.subr.mxu0 0.0
        %5299 = vmatpush1.msra.mxu0 0.0
        %5300 = vmatprep.subr.mxu0 0.0
        %5301 = vmatpush1.msra.mxu0 0.0
        %5302 = vmatprep.subr.mxu0 0.0
        %5303 = vmatpush1.msra.mxu0 0.0
        %5304 = vmatprep.subr.mxu0 0.0
        %5305 = vmatpush1.msra.mxu0 0.0
        %5306 = vmatprep.subr.mxu0 0.0
        %5307 = vmatpush1.msra.mxu0 0.0
        %5308 = vmatprep.subr.mxu0 0.0
        %5309 = vmatpush1.msra.mxu0 0.0
        %5310 = vmatprep.subr.mxu0 0.0
        %5311 = vmatpush1.msra.mxu0 0.0
        %5312 = vmatprep.subr.mxu0 0.0
        %5313 = vmatpush1.msra.mxu0 0.0
        %5314 = vmatprep.subr.mxu0 0.0
        %5315 = vmatpush1.msra.mxu0 0.0
        %5316 = vmatprep.subr.mxu0 0.0
        %5317 = vmatpush1.msra.mxu0 0.0
        %5318 = vmatprep.subr.mxu0 0.0
        %5319 = vmatpush1.msra.mxu0 0.0
        %5320 = vmatprep.mubr.f32.mxu0 0.0
        %5321 = vmatmul.mubr.f32.gmra.mrb[0].mxu0 %v5028
        %v5322 = vpop.f32.mrb[0].mxu0
        %v5323 = vadd.f32 0.0, %v5322
        %v5324 = vpop.f32.mrb[0].mxu0
        %v5325 = vadd.f32 0.0, %v5324
        %5326 = vdwg.mxu0
        %v5327 = vadd.f32 %v5181, %v5252
        %v5328 = vadd.f32 %v5182, %v5254
        %v5329 = vadd.f32 %v5183, %v5323
        %v5330 = vadd.f32 %v5184, %v5325
        %v5331 = vtanh.pop %v5177
        %v5332 = vtanh.pop %v5178
        %v5333 = vtanh.pop %v5179
        %v5334 = vtanh.pop %v5180
        %v5335 = vmul.f32 %v5331, 0.5
        %v5336 = vmul.f32 %v5332, 0.5
        %v5337 = vmul.f32 %v5333, 0.5
        %v5338 = vadd.f32 %v5335, 0.5
        %v5339 = vadd.f32 %v5336, 0.5
        %v5340 = vadd.f32 %v5337, 0.5
        %v5341 = vmul.f32 %v5339, %v5011
        %v5342 = vmul.f32 %v5338, %v5334
        %v5343 = vadd.f32 %v5341, %v5342
        %v5344 = vtanh.pop %v5343
        %v5345 = vmul.f32 %v5340, %v5344
        %v5346 = vtanh.pop %v5327
        %v5347 = vtanh.pop %v5328
        %v5348 = vtanh.pop %v5329
        %v5349 = vtanh.pop %v5330
        %v5350 = vmul.f32 %v5346, 0.5
        %v5351 = vmul.f32 %v5347, 0.5
        %v5352 = vmul.f32 %v5348, 0.5
        %v5353 = vadd.f32 %v5350, 0.5
        %v5354 = vadd.f32 %v5351, 0.5
        %v5355 = vadd.f32 %v5352, 0.5
        %v5356 = vmul.f32 %v5354, %v5026
        %v5357 = vmul.f32 %v5353, %v5349
        %v5358 = vadd.f32 %v5356, %v5357
        %v5359 = vtanh.pop %v5358
        %v5360 = vmul.f32 %v5355, %v5359
        %5361 = vst [vmem:[#allocation3 + $0xa0] sm:$0xff] %v5345
        %5362 = vst [vmem:[#allocation3 + $0x58] sm:$0xff] %v5360
        %v5363 = vld [vmem:[#allocation2 + $0x2c0] sm:$0xff]
        %v5364 = vld [vmem:[#allocation2 + $0x2c8] sm:$0xff]
        %v5365 = vld [vmem:[#allocation2 + $0x2d0] sm:$0xff]
        %v5366 = vld [vmem:[#allocation2 + $0x2d8] sm:$0xff]
        %5367 = vmatprep.subr.mxu0 %v1584
        %5368 = vmatpush1.msra.mxu0 %v1583
        %5369 = vmatprep.subr.mxu0 %v1588
        %5370 = vmatpush1.msra.mxu0 %v1587
        %5371 = vmatprep.subr.mxu0 %v1592
        %5372 = vmatpush1.msra.mxu0 %v1591
        %5373 = vmatprep.subr.mxu0 %v1596
        %5374 = vmatpush1.msra.mxu0 %v1595
        %5375 = vmatprep.subr.mxu0 %v1600
        %5376 = vmatpush1.msra.mxu0 %v1599
        %5377 = vmatprep.subr.mxu0 %v1604
        %5378 = vmatpush1.msra.mxu0 %v1603
        %5379 = vmatprep.subr.mxu0 %v1608
        %5380 = vmatpush1.msra.mxu0 %v1607
        %5381 = vmatprep.subr.mxu0 %v1612
        %5382 = vmatpush1.msra.mxu0 %v1611
        %5383 = vmatprep.subr.mxu0 %v1616
        %5384 = vmatpush1.msra.mxu0 %v1615
        %5385 = vmatprep.subr.mxu0 %v1620
        %5386 = vmatpush1.msra.mxu0 %v1619
        %5387 = vmatprep.subr.mxu0 %v1624
        %5388 = vmatpush1.msra.mxu0 %v1623
        %5389 = vmatprep.subr.mxu0 %v1628
        %5390 = vmatpush1.msra.mxu0 %v1627
        %5391 = vmatprep.subr.mxu0 %v1632
        %5392 = vmatpush1.msra.mxu0 %v1631
        %5393 = vmatprep.subr.mxu0 %v1636
        %5394 = vmatpush1.msra.mxu0 %v1635
        %5395 = vmatprep.subr.mxu0 %v1640
        %5396 = vmatpush1.msra.mxu0 %v1639
        %5397 = vmatprep.subr.mxu0 %v1644
        %5398 = vmatpush1.msra.mxu0 %v1643
        %5399 = vmatprep.subr.mxu0 0.0
        %5400 = vmatpush1.msra.mxu0 0.0
        %5401 = vmatprep.subr.mxu0 0.0
        %5402 = vmatpush1.msra.mxu0 0.0
        %5403 = vmatprep.subr.mxu0 0.0
        %5404 = vmatpush1.msra.mxu0 0.0
        %5405 = vmatprep.subr.mxu0 0.0
        %5406 = vmatpush1.msra.mxu0 0.0
        %5407 = vmatprep.subr.mxu0 0.0
        %5408 = vmatpush1.msra.mxu0 0.0
        %5409 = vmatprep.subr.mxu0 0.0
        %5410 = vmatpush1.msra.mxu0 0.0
        %5411 = vmatprep.subr.mxu0 0.0
        %5412 = vmatpush1.msra.mxu0 0.0
        %5413 = vmatprep.subr.mxu0 0.0
        %5414 = vmatpush1.msra.mxu0 0.0
        %5415 = vmatprep.subr.mxu0 0.0
        %5416 = vmatpush1.msra.mxu0 0.0
        %5417 = vmatprep.subr.mxu0 0.0
        %5418 = vmatpush1.msra.mxu0 0.0
        %5419 = vmatprep.subr.mxu0 0.0
        %5420 = vmatpush1.msra.mxu0 0.0
        %5421 = vmatprep.subr.mxu0 0.0
        %5422 = vmatpush1.msra.mxu0 0.0
        %5423 = vmatprep.subr.mxu0 0.0
        %5424 = vmatpush1.msra.mxu0 0.0
        %5425 = vmatprep.subr.mxu0 0.0
        %5426 = vmatpush1.msra.mxu0 0.0
        %5427 = vmatprep.subr.mxu0 0.0
        %5428 = vmatpush1.msra.mxu0 0.0
        %5429 = vmatprep.subr.mxu0 0.0
        %5430 = vmatpush1.msra.mxu0 0.0
        %5431 = vmatprep.mubr.f32.mxu0 0.0
        %5432 = vmatmul.mubr.f32.gmra.mrb[0].mxu0 %v5345
        %v5433 = vpop.f32.mrb[0].mxu0
        %v5434 = vadd.f32 0.0, %v5433
        %v5435 = vpop.f32.mrb[0].mxu0
        %v5436 = vadd.f32 0.0, %v5435
        %5437 = vdwg.mxu0
        %5438 = vmatprep.subr.mxu0 %v1586
        %5439 = vmatpush1.msra.mxu0 %v1585
        %5440 = vmatprep.subr.mxu0 %v1590
        %5441 = vmatpush1.msra.mxu0 %v1589
        %5442 = vmatprep.subr.mxu0 %v1594
        %5443 = vmatpush1.msra.mxu0 %v1593
        %5444 = vmatprep.subr.mxu0 %v1598
        %5445 = vmatpush1.msra.mxu0 %v1597
        %5446 = vmatprep.subr.mxu0 %v1602
        %5447 = vmatpush1.msra.mxu0 %v1601
        %5448 = vmatprep.subr.mxu0 %v1606
        %5449 = vmatpush1.msra.mxu0 %v1605
        %5450 = vmatprep.subr.mxu0 %v1610
        %5451 = vmatpush1.msra.mxu0 %v1609
        %5452 = vmatprep.subr.mxu0 %v1614
        %5453 = vmatpush1.msra.mxu0 %v1613
        %5454 = vmatprep.subr.mxu0 %v1618
        %5455 = vmatpush1.msra.mxu0 %v1617
        %5456 = vmatprep.subr.mxu0 %v1622
        %5457 = vmatpush1.msra.mxu0 %v1621
        %5458 = vmatprep.subr.mxu0 %v1626
        %5459 = vmatpush1.msra.mxu0 %v1625
        %5460 = vmatprep.subr.mxu0 %v1630
        %5461 = vmatpush1.msra.mxu0 %v1629
        %5462 = vmatprep.subr.mxu0 %v1634
        %5463 = vmatpush1.msra.mxu0 %v1633
        %5464 = vmatprep.subr.mxu0 %v1638
        %5465 = vmatpush1.msra.mxu0 %v1637
        %5466 = vmatprep.subr.mxu0 %v1642
        %5467 = vmatpush1.msra.mxu0 %v1641
        %5468 = vmatprep.subr.mxu0 %v1646
        %5469 = vmatpush1.msra.mxu0 %v1645
        %5470 = vmatprep.subr.mxu0 0.0
        %5471 = vmatpush1.msra.mxu0 0.0
        %5472 = vmatprep.subr.mxu0 0.0
        %5473 = vmatpush1.msra.mxu0 0.0
        %5474 = vmatprep.subr.mxu0 0.0
        %5475 = vmatpush1.msra.mxu0 0.0
        %5476 = vmatprep.subr.mxu0 0.0
        %5477 = vmatpush1.msra.mxu0 0.0
        %5478 = vmatprep.subr.mxu0 0.0
        %5479 = vmatpush1.msra.mxu0 0.0
        %5480 = vmatprep.subr.mxu0 0.0
        %5481 = vmatpush1.msra.mxu0 0.0
        %5482 = vmatprep.subr.mxu0 0.0
        %5483 = vmatpush1.msra.mxu0 0.0
        %5484 = vmatprep.subr.mxu0 0.0
        %5485 = vmatpush1.msra.mxu0 0.0
        %5486 = vmatprep.subr.mxu0 0.0
        %5487 = vmatpush1.msra.mxu0 0.0
        %5488 = vmatprep.subr.mxu0 0.0
        %5489 = vmatpush1.msra.mxu0 0.0
        %5490 = vmatprep.subr.mxu0 0.0
        %5491 = vmatpush1.msra.mxu0 0.0
        %5492 = vmatprep.subr.mxu0 0.0
        %5493 = vmatpush1.msra.mxu0 0.0
        %5494 = vmatprep.subr.mxu0 0.0
        %5495 = vmatpush1.msra.mxu0 0.0
        %5496 = vmatprep.subr.mxu0 0.0
        %5497 = vmatpush1.msra.mxu0 0.0
        %5498 = vmatprep.subr.mxu0 0.0
        %5499 = vmatpush1.msra.mxu0 0.0
        %5500 = vmatprep.subr.mxu0 0.0
        %5501 = vmatpush1.msra.mxu0 0.0
        %5502 = vmatprep.mubr.f32.mxu0 0.0
        %5503 = vmatmul.mubr.f32.gmra.mrb[0].mxu0 %v5345
        %v5504 = vpop.f32.mrb[0].mxu0
        %v5505 = vadd.f32 0.0, %v5504
        %v5506 = vpop.f32.mrb[0].mxu0
        %v5507 = vadd.f32 0.0, %v5506
        %5508 = vdwg.mxu0
        %v5509 = vadd.f32 %v5363, %v5434
        %v5510 = vadd.f32 %v5364, %v5436
        %v5511 = vadd.f32 %v5365, %v5505
        %v5512 = vadd.f32 %v5366, %v5507
        %v5513 = vld [vmem:[#allocation2 + $0x120] sm:$0xff]
        %v5514 = vld [vmem:[#allocation2 + $0x128] sm:$0xff]
        %v5515 = vld [vmem:[#allocation2 + $0x130] sm:$0xff]
        %v5516 = vld [vmem:[#allocation2 + $0x138] sm:$0xff]
        %5517 = vmatprep.subr.mxu0 %v1648
        %5518 = vmatpush1.msra.mxu0 %v1647
        %5519 = vmatprep.subr.mxu0 %v1652
        %5520 = vmatpush1.msra.mxu0 %v1651
        %5521 = vmatprep.subr.mxu0 %v1656
        %5522 = vmatpush1.msra.mxu0 %v1655
        %5523 = vmatprep.subr.mxu0 %v1660
        %5524 = vmatpush1.msra.mxu0 %v1659
        %5525 = vmatprep.subr.mxu0 %v1664
        %5526 = vmatpush1.msra.mxu0 %v1663
        %5527 = vmatprep.subr.mxu0 %v1668
        %5528 = vmatpush1.msra.mxu0 %v1667
        %5529 = vmatprep.subr.mxu0 %v1672
        %5530 = vmatpush1.msra.mxu0 %v1671
        %5531 = vmatprep.subr.mxu0 %v1676
        %5532 = vmatpush1.msra.mxu0 %v1675
        %5533 = vmatprep.subr.mxu0 %v1680
        %5534 = vmatpush1.msra.mxu0 %v1679
        %5535 = vmatprep.subr.mxu0 %v1684
        %5536 = vmatpush1.msra.mxu0 %v1683
        %5537 = vmatprep.subr.mxu0 %v1688
        %5538 = vmatpush1.msra.mxu0 %v1687
        %5539 = vmatprep.subr.mxu0 %v1692
        %5540 = vmatpush1.msra.mxu0 %v1691
        %5541 = vmatprep.subr.mxu0 %v1696
        %5542 = vmatpush1.msra.mxu0 %v1695
        %5543 = vmatprep.subr.mxu0 %v1700
        %5544 = vmatpush1.msra.mxu0 %v1699
        %5545 = vmatprep.subr.mxu0 %v1704
        %5546 = vmatpush1.msra.mxu0 %v1703
        %5547 = vmatprep.subr.mxu0 %v1708
        %5548 = vmatpush1.msra.mxu0 %v1707
        %5549 = vmatprep.subr.mxu0 0.0
        %5550 = vmatpush1.msra.mxu0 0.0
        %5551 = vmatprep.subr.mxu0 0.0
        %5552 = vmatpush1.msra.mxu0 0.0
        %5553 = vmatprep.subr.mxu0 0.0
        %5554 = vmatpush1.msra.mxu0 0.0
        %5555 = vmatprep.subr.mxu0 0.0
        %5556 = vmatpush1.msra.mxu0 0.0
        %5557 = vmatprep.subr.mxu0 0.0
        %5558 = vmatpush1.msra.mxu0 0.0
        %5559 = vmatprep.subr.mxu0 0.0
        %5560 = vmatpush1.msra.mxu0 0.0
        %5561 = vmatprep.subr.mxu0 0.0
        %5562 = vmatpush1.msra.mxu0 0.0
        %5563 = vmatprep.subr.mxu0 0.0
        %5564 = vmatpush1.msra.mxu0 0.0
        %5565 = vmatprep.subr.mxu0 0.0
        %5566 = vmatpush1.msra.mxu0 0.0
        %5567 = vmatprep.subr.mxu0 0.0
        %5568 = vmatpush1.msra.mxu0 0.0
        %5569 = vmatprep.subr.mxu0 0.0
        %5570 = vmatpush1.msra.mxu0 0.0
        %5571 = vmatprep.subr.mxu0 0.0
        %5572 = vmatpush1.msra.mxu0 0.0
        %5573 = vmatprep.subr.mxu0 0.0
        %5574 = vmatpush1.msra.mxu0 0.0
        %5575 = vmatprep.subr.mxu0 0.0
        %5576 = vmatpush1.msra.mxu0 0.0
        %5577 = vmatprep.subr.mxu0 0.0
        %5578 = vmatpush1.msra.mxu0 0.0
        %5579 = vmatprep.subr.mxu0 0.0
        %5580 = vmatpush1.msra.mxu0 0.0
        %5581 = vmatprep.mubr.f32.mxu0 0.0
        %5582 = vmatmul.mubr.f32.gmra.mrb[0].mxu0 %v5360
        %v5583 = vpop.f32.mrb[0].mxu0
        %v5584 = vadd.f32 0.0, %v5583
        %v5585 = vpop.f32.mrb[0].mxu0
        %v5586 = vadd.f32 0.0, %v5585
        %5587 = vdwg.mxu0
        %5588 = vmatprep.subr.mxu0 %v1650
        %5589 = vmatpush1.msra.mxu0 %v1649
        %5590 = vmatprep.subr.mxu0 %v1654
        %5591 = vmatpush1.msra.mxu0 %v1653
        %5592 = vmatprep.subr.mxu0 %v1658
        %5593 = vmatpush1.msra.mxu0 %v1657
        %5594 = vmatprep.subr.mxu0 %v1662
        %5595 = vmatpush1.msra.mxu0 %v1661
        %5596 = vmatprep.subr.mxu0 %v1666
        %5597 = vmatpush1.msra.mxu0 %v1665
        %5598 = vmatprep.subr.mxu0 %v1670
        %5599 = vmatpush1.msra.mxu0 %v1669
        %5600 = vmatprep.subr.mxu0 %v1674
        %5601 = vmatpush1.msra.mxu0 %v1673
        %5602 = vmatprep.subr.mxu0 %v1678
        %5603 = vmatpush1.msra.mxu0 %v1677
        %5604 = vmatprep.subr.mxu0 %v1682
        %5605 = vmatpush1.msra.mxu0 %v1681
        %5606 = vmatprep.subr.mxu0 %v1686
        %5607 = vmatpush1.msra.mxu0 %v1685
        %5608 = vmatprep.subr.mxu0 %v1690
        %5609 = vmatpush1.msra.mxu0 %v1689
        %5610 = vmatprep.subr.mxu0 %v1694
        %5611 = vmatpush1.msra.mxu0 %v1693
        %5612 = vmatprep.subr.mxu0 %v1698
        %5613 = vmatpush1.msra.mxu0 %v1697
        %5614 = vmatprep.subr.mxu0 %v1702
        %5615 = vmatpush1.msra.mxu0 %v1701
        %5616 = vmatprep.subr.mxu0 %v1706
        %5617 = vmatpush1.msra.mxu0 %v1705
        %5618 = vmatprep.subr.mxu0 %v1710
        %5619 = vmatpush1.msra.mxu0 %v1709
        %5620 = vmatprep.subr.mxu0 0.0
        %5621 = vmatpush1.msra.mxu0 0.0
        %5622 = vmatprep.subr.mxu0 0.0
        %5623 = vmatpush1.msra.mxu0 0.0
        %5624 = vmatprep.subr.mxu0 0.0
        %5625 = vmatpush1.msra.mxu0 0.0
        %5626 = vmatprep.subr.mxu0 0.0
        %5627 = vmatpush1.msra.mxu0 0.0
        %5628 = vmatprep.subr.mxu0 0.0
        %5629 = vmatpush1.msra.mxu0 0.0
        %5630 = vmatprep.subr.mxu0 0.0
        %5631 = vmatpush1.msra.mxu0 0.0
        %5632 = vmatprep.subr.mxu0 0.0
        %5633 = vmatpush1.msra.mxu0 0.0
        %5634 = vmatprep.subr.mxu0 0.0
        %5635 = vmatpush1.msra.mxu0 0.0
        %5636 = vmatprep.subr.mxu0 0.0
        %5637 = vmatpush1.msra.mxu0 0.0
        %5638 = vmatprep.subr.mxu0 0.0
        %5639 = vmatpush1.msra.mxu0 0.0
        %5640 = vmatprep.subr.mxu0 0.0
        %5641 = vmatpush1.msra.mxu0 0.0
        %5642 = vmatprep.subr.mxu0 0.0
        %5643 = vmatpush1.msra.mxu0 0.0
        %5644 = vmatprep.subr.mxu0 0.0
        %5645 = vmatpush1.msra.mxu0 0.0
        %5646 = vmatprep.subr.mxu0 0.0
        %5647 = vmatpush1.msra.mxu0 0.0
        %5648 = vmatprep.subr.mxu0 0.0
        %5649 = vmatpush1.msra.mxu0 0.0
        %5650 = vmatprep.subr.mxu0 0.0
        %5651 = vmatpush1.msra.mxu0 0.0
        %5652 = vmatprep.mubr.f32.mxu0 0.0
        %5653 = vmatmul.mubr.f32.gmra.mrb[0].mxu0 %v5360
        %v5654 = vpop.f32.mrb[0].mxu0
        %v5655 = vadd.f32 0.0, %v5654
        %v5656 = vpop.f32.mrb[0].mxu0
        %v5657 = vadd.f32 0.0, %v5656
        %5658 = vdwg.mxu0
        %v5659 = vadd.f32 %v5513, %v5584
        %v5660 = vadd.f32 %v5514, %v5586
        %v5661 = vadd.f32 %v5515, %v5655
        %v5662 = vadd.f32 %v5516, %v5657
        %v5663 = vtanh.pop %v5509
        %v5664 = vtanh.pop %v5510
        %v5665 = vtanh.pop %v5511
        %v5666 = vtanh.pop %v5512
        %v5667 = vmul.f32 %v5663, 0.5
        %v5668 = vmul.f32 %v5664, 0.5
        %v5669 = vmul.f32 %v5665, 0.5
        %v5670 = vadd.f32 %v5667, 0.5
        %v5671 = vadd.f32 %v5668, 0.5
        %v5672 = vadd.f32 %v5669, 0.5
        %v5673 = vmul.f32 %v5671, %v5343
        %v5674 = vmul.f32 %v5670, %v5666
        %v5675 = vadd.f32 %v5673, %v5674
        %v5676 = vtanh.pop %v5675
        %v5677 = vmul.f32 %v5672, %v5676
        %v5678 = vtanh.pop %v5659
        %v5679 = vtanh.pop %v5660
        %v5680 = vtanh.pop %v5661
        %v5681 = vtanh.pop %v5662
        %v5682 = vmul.f32 %v5678, 0.5
        %v5683 = vmul.f32 %v5679, 0.5
        %v5684 = vmul.f32 %v5680, 0.5
        %v5685 = vadd.f32 %v5682, 0.5
        %v5686 = vadd.f32 %v5683, 0.5
        %v5687 = vadd.f32 %v5684, 0.5
        %v5688 = vmul.f32 %v5686, %v5358
        %v5689 = vmul.f32 %v5685, %v5681
        %v5690 = vadd.f32 %v5688, %v5689
        %v5691 = vtanh.pop %v5690
        %v5692 = vmul.f32 %v5687, %v5691
        %5693 = vst [vmem:[#allocation3 + $0xb0] sm:$0xff] %v5677
        %5694 = vst [vmem:[#allocation3 + $0x48] sm:$0xff] %v5692
        %v5695 = vld [vmem:[#allocation2 + $0x300] sm:$0xff]
        %v5696 = vld [vmem:[#allocation2 + $0x308] sm:$0xff]
        %v5697 = vld [vmem:[#allocation2 + $0x310] sm:$0xff]
        %v5698 = vld [vmem:[#allocation2 + $0x318] sm:$0xff]
        %5699 = vmatprep.subr.mxu0 %v1584
        %5700 = vmatpush1.msra.mxu0 %v1583
        %5701 = vmatprep.subr.mxu0 %v1588
        %5702 = vmatpush1.msra.mxu0 %v1587
        %5703 = vmatprep.subr.mxu0 %v1592
        %5704 = vmatpush1.msra.mxu0 %v1591
        %5705 = vmatprep.subr.mxu0 %v1596
        %5706 = vmatpush1.msra.mxu0 %v1595
        %5707 = vmatprep.subr.mxu0 %v1600
        %5708 = vmatpush1.msra.mxu0 %v1599
        %5709 = vmatprep.subr.mxu0 %v1604
        %5710 = vmatpush1.msra.mxu0 %v1603
        %5711 = vmatprep.subr.mxu0 %v1608
        %5712 = vmatpush1.msra.mxu0 %v1607
        %5713 = vmatprep.subr.mxu0 %v1612
        %5714 = vmatpush1.msra.mxu0 %v1611
        %5715 = vmatprep.subr.mxu0 %v1616
        %5716 = vmatpush1.msra.mxu0 %v1615
        %5717 = vmatprep.subr.mxu0 %v1620
        %5718 = vmatpush1.msra.mxu0 %v1619
        %5719 = vmatprep.subr.mxu0 %v1624
        %5720 = vmatpush1.msra.mxu0 %v1623
        %5721 = vmatprep.subr.mxu0 %v1628
        %5722 = vmatpush1.msra.mxu0 %v1627
        %5723 = vmatprep.subr.mxu0 %v1632
        %5724 = vmatpush1.msra.mxu0 %v1631
        %5725 = vmatprep.subr.mxu0 %v1636
        %5726 = vmatpush1.msra.mxu0 %v1635
        %5727 = vmatprep.subr.mxu0 %v1640
        %5728 = vmatpush1.msra.mxu0 %v1639
        %5729 = vmatprep.subr.mxu0 %v1644
        %5730 = vmatpush1.msra.mxu0 %v1643
        %5731 = vmatprep.subr.mxu0 0.0
        %5732 = vmatpush1.msra.mxu0 0.0
        %5733 = vmatprep.subr.mxu0 0.0
        %5734 = vmatpush1.msra.mxu0 0.0
        %5735 = vmatprep.subr.mxu0 0.0
        %5736 = vmatpush1.msra.mxu0 0.0
        %5737 = vmatprep.subr.mxu0 0.0
        %5738 = vmatpush1.msra.mxu0 0.0
        %5739 = vmatprep.subr.mxu0 0.0
        %5740 = vmatpush1.msra.mxu0 0.0
        %5741 = vmatprep.subr.mxu0 0.0
        %5742 = vmatpush1.msra.mxu0 0.0
        %5743 = vmatprep.subr.mxu0 0.0
        %5744 = vmatpush1.msra.mxu0 0.0
        %5745 = vmatprep.subr.mxu0 0.0
        %5746 = vmatpush1.msra.mxu0 0.0
        %5747 = vmatprep.subr.mxu0 0.0
        %5748 = vmatpush1.msra.mxu0 0.0
        %5749 = vmatprep.subr.mxu0 0.0
        %5750 = vmatpush1.msra.mxu0 0.0
        %5751 = vmatprep.subr.mxu0 0.0
        %5752 = vmatpush1.msra.mxu0 0.0
        %5753 = vmatprep.subr.mxu0 0.0
        %5754 = vmatpush1.msra.mxu0 0.0
        %5755 = vmatprep.subr.mxu0 0.0
        %5756 = vmatpush1.msra.mxu0 0.0
        %5757 = vmatprep.subr.mxu0 0.0
        %5758 = vmatpush1.msra.mxu0 0.0
        %5759 = vmatprep.subr.mxu0 0.0
        %5760 = vmatpush1.msra.mxu0 0.0
        %5761 = vmatprep.subr.mxu0 0.0
        %5762 = vmatpush1.msra.mxu0 0.0
        %5763 = vmatprep.mubr.f32.mxu0 0.0
        %5764 = vmatmul.mubr.f32.gmra.mrb[0].mxu0 %v5677
        %v5765 = vpop.f32.mrb[0].mxu0
        %v5766 = vadd.f32 0.0, %v5765
        %v5767 = vpop.f32.mrb[0].mxu0
        %v5768 = vadd.f32 0.0, %v5767
        %5769 = vdwg.mxu0
        %5770 = vmatprep.subr.mxu0 %v1586
        %5771 = vmatpush1.msra.mxu0 %v1585
        %5772 = vmatprep.subr.mxu0 %v1590
        %5773 = vmatpush1.msra.mxu0 %v1589
        %5774 = vmatprep.subr.mxu0 %v1594
        %5775 = vmatpush1.msra.mxu0 %v1593
        %5776 = vmatprep.subr.mxu0 %v1598
        %5777 = vmatpush1.msra.mxu0 %v1597
        %5778 = vmatprep.subr.mxu0 %v1602
        %5779 = vmatpush1.msra.mxu0 %v1601
        %5780 = vmatprep.subr.mxu0 %v1606
        %5781 = vmatpush1.msra.mxu0 %v1605
        %5782 = vmatprep.subr.mxu0 %v1610
        %5783 = vmatpush1.msra.mxu0 %v1609
        %5784 = vmatprep.subr.mxu0 %v1614
        %5785 = vmatpush1.msra.mxu0 %v1613
        %5786 = vmatprep.subr.mxu0 %v1618
        %5787 = vmatpush1.msra.mxu0 %v1617
        %5788 = vmatprep.subr.mxu0 %v1622
        %5789 = vmatpush1.msra.mxu0 %v1621
        %5790 = vmatprep.subr.mxu0 %v1626
        %5791 = vmatpush1.msra.mxu0 %v1625
        %5792 = vmatprep.subr.mxu0 %v1630
        %5793 = vmatpush1.msra.mxu0 %v1629
        %5794 = vmatprep.subr.mxu0 %v1634
        %5795 = vmatpush1.msra.mxu0 %v1633
        %5796 = vmatprep.subr.mxu0 %v1638
        %5797 = vmatpush1.msra.mxu0 %v1637
        %5798 = vmatprep.subr.mxu0 %v1642
        %5799 = vmatpush1.msra.mxu0 %v1641
        %5800 = vmatprep.subr.mxu0 %v1646
        %5801 = vmatpush1.msra.mxu0 %v1645
        %5802 = vmatprep.subr.mxu0 0.0
        %5803 = vmatpush1.msra.mxu0 0.0
        %5804 = vmatprep.subr.mxu0 0.0
        %5805 = vmatpush1.msra.mxu0 0.0
        %5806 = vmatprep.subr.mxu0 0.0
        %5807 = vmatpush1.msra.mxu0 0.0
        %5808 = vmatprep.subr.mxu0 0.0
        %5809 = vmatpush1.msra.mxu0 0.0
        %5810 = vmatprep.subr.mxu0 0.0
        %5811 = vmatpush1.msra.mxu0 0.0
        %5812 = vmatprep.subr.mxu0 0.0
        %5813 = vmatpush1.msra.mxu0 0.0
        %5814 = vmatprep.subr.mxu0 0.0
        %5815 = vmatpush1.msra.mxu0 0.0
        %5816 = vmatprep.subr.mxu0 0.0
        %5817 = vmatpush1.msra.mxu0 0.0
        %5818 = vmatprep.subr.mxu0 0.0
        %5819 = vmatpush1.msra.mxu0 0.0
        %5820 = vmatprep.subr.mxu0 0.0
        %5821 = vmatpush1.msra.mxu0 0.0
        %5822 = vmatprep.subr.mxu0 0.0
        %5823 = vmatpush1.msra.mxu0 0.0
        %5824 = vmatprep.subr.mxu0 0.0
        %5825 = vmatpush1.msra.mxu0 0.0
        %5826 = vmatprep.subr.mxu0 0.0
        %5827 = vmatpush1.msra.mxu0 0.0
        %5828 = vmatprep.subr.mxu0 0.0
        %5829 = vmatpush1.msra.mxu0 0.0
        %5830 = vmatprep.subr.mxu0 0.0
        %5831 = vmatpush1.msra.mxu0 0.0
        %5832 = vmatprep.subr.mxu0 0.0
        %5833 = vmatpush1.msra.mxu0 0.0
        %5834 = vmatprep.mubr.f32.mxu0 0.0
        %5835 = vmatmul.mubr.f32.gmra.mrb[0].mxu0 %v5677
        %v5836 = vpop.f32.mrb[0].mxu0
        %v5837 = vadd.f32 0.0, %v5836
        %v5838 = vpop.f32.mrb[0].mxu0
        %v5839 = vadd.f32 0.0, %v5838
        %5840 = vdwg.mxu0
        %v5841 = vadd.f32 %v5695, %v5766
        %v5842 = vadd.f32 %v5696, %v5768
        %v5843 = vadd.f32 %v5697, %v5837
        %v5844 = vadd.f32 %v5698, %v5839
        %v5845 = vld [vmem:[#allocation2 + $0xe0] sm:$0xff]
        %v5846 = vld [vmem:[#allocation2 + $0xe8] sm:$0xff]
        %v5847 = vld [vmem:[#allocation2 + $0xf0] sm:$0xff]
        %v5848 = vld [vmem:[#allocation2 + $0xf8] sm:$0xff]
        %5849 = vmatprep.subr.mxu0 %v1648
        %5850 = vmatpush1.msra.mxu0 %v1647
        %5851 = vmatprep.subr.mxu0 %v1652
        %5852 = vmatpush1.msra.mxu0 %v1651
        %5853 = vmatprep.subr.mxu0 %v1656
        %5854 = vmatpush1.msra.mxu0 %v1655
        %5855 = vmatprep.subr.mxu0 %v1660
        %5856 = vmatpush1.msra.mxu0 %v1659
        %5857 = vmatprep.subr.mxu0 %v1664
        %5858 = vmatpush1.msra.mxu0 %v1663
        %5859 = vmatprep.subr.mxu0 %v1668
        %5860 = vmatpush1.msra.mxu0 %v1667
        %5861 = vmatprep.subr.mxu0 %v1672
        %5862 = vmatpush1.msra.mxu0 %v1671
        %5863 = vmatprep.subr.mxu0 %v1676
        %5864 = vmatpush1.msra.mxu0 %v1675
        %5865 = vmatprep.subr.mxu0 %v1680
        %5866 = vmatpush1.msra.mxu0 %v1679
        %5867 = vmatprep.subr.mxu0 %v1684
        %5868 = vmatpush1.msra.mxu0 %v1683
        %5869 = vmatprep.subr.mxu0 %v1688
        %5870 = vmatpush1.msra.mxu0 %v1687
        %5871 = vmatprep.subr.mxu0 %v1692
        %5872 = vmatpush1.msra.mxu0 %v1691
        %5873 = vmatprep.subr.mxu0 %v1696
        %5874 = vmatpush1.msra.mxu0 %v1695
        %5875 = vmatprep.subr.mxu0 %v1700
        %5876 = vmatpush1.msra.mxu0 %v1699
        %5877 = vmatprep.subr.mxu0 %v1704
        %5878 = vmatpush1.msra.mxu0 %v1703
        %5879 = vmatprep.subr.mxu0 %v1708
        %5880 = vmatpush1.msra.mxu0 %v1707
        %5881 = vmatprep.subr.mxu0 0.0
        %5882 = vmatpush1.msra.mxu0 0.0
        %5883 = vmatprep.subr.mxu0 0.0
        %5884 = vmatpush1.msra.mxu0 0.0
        %5885 = vmatprep.subr.mxu0 0.0
        %5886 = vmatpush1.msra.mxu0 0.0
        %5887 = vmatprep.subr.mxu0 0.0
        %5888 = vmatpush1.msra.mxu0 0.0
        %5889 = vmatprep.subr.mxu0 0.0
        %5890 = vmatpush1.msra.mxu0 0.0
        %5891 = vmatprep.subr.mxu0 0.0
        %5892 = vmatpush1.msra.mxu0 0.0
        %5893 = vmatprep.subr.mxu0 0.0
        %5894 = vmatpush1.msra.mxu0 0.0
        %5895 = vmatprep.subr.mxu0 0.0
        %5896 = vmatpush1.msra.mxu0 0.0
        %5897 = vmatprep.subr.mxu0 0.0
        %5898 = vmatpush1.msra.mxu0 0.0
        %5899 = vmatprep.subr.mxu0 0.0
        %5900 = vmatpush1.msra.mxu0 0.0
        %5901 = vmatprep.subr.mxu0 0.0
        %5902 = vmatpush1.msra.mxu0 0.0
        %5903 = vmatprep.subr.mxu0 0.0
        %5904 = vmatpush1.msra.mxu0 0.0
        %5905 = vmatprep.subr.mxu0 0.0
        %5906 = vmatpush1.msra.mxu0 0.0
        %5907 = vmatprep.subr.mxu0 0.0
        %5908 = vmatpush1.msra.mxu0 0.0
        %5909 = vmatprep.subr.mxu0 0.0
        %5910 = vmatpush1.msra.mxu0 0.0
        %5911 = vmatprep.subr.mxu0 0.0
        %5912 = vmatpush1.msra.mxu0 0.0
        %5913 = vmatprep.mubr.f32.mxu0 0.0
        %5914 = vmatmul.mubr.f32.gmra.mrb[0].mxu0 %v5692
        %v5915 = vpop.f32.mrb[0].mxu0
        %v5916 = vadd.f32 0.0, %v5915
        %v5917 = vpop.f32.mrb[0].mxu0
        %v5918 = vadd.f32 0.0, %v5917
        %5919 = vdwg.mxu0
        %5920 = vmatprep.subr.mxu0 %v1650
        %5921 = vmatpush1.msra.mxu0 %v1649
        %5922 = vmatprep.subr.mxu0 %v1654
        %5923 = vmatpush1.msra.mxu0 %v1653
        %5924 = vmatprep.subr.mxu0 %v1658
        %5925 = vmatpush1.msra.mxu0 %v1657
        %5926 = vmatprep.subr.mxu0 %v1662
        %5927 = vmatpush1.msra.mxu0 %v1661
        %5928 = vmatprep.subr.mxu0 %v1666
        %5929 = vmatpush1.msra.mxu0 %v1665
        %5930 = vmatprep.subr.mxu0 %v1670
        %5931 = vmatpush1.msra.mxu0 %v1669
        %5932 = vmatprep.subr.mxu0 %v1674
        %5933 = vmatpush1.msra.mxu0 %v1673
        %5934 = vmatprep.subr.mxu0 %v1678
        %5935 = vmatpush1.msra.mxu0 %v1677
        %5936 = vmatprep.subr.mxu0 %v1682
        %5937 = vmatpush1.msra.mxu0 %v1681
        %5938 = vmatprep.subr.mxu0 %v1686
        %5939 = vmatpush1.msra.mxu0 %v1685
        %5940 = vmatprep.subr.mxu0 %v1690
        %5941 = vmatpush1.msra.mxu0 %v1689
        %5942 = vmatprep.subr.mxu0 %v1694
        %5943 = vmatpush1.msra.mxu0 %v1693
        %5944 = vmatprep.subr.mxu0 %v1698
        %5945 = vmatpush1.msra.mxu0 %v1697
        %5946 = vmatprep.subr.mxu0 %v1702
        %5947 = vmatpush1.msra.mxu0 %v1701
        %5948 = vmatprep.subr.mxu0 %v1706
        %5949 = vmatpush1.msra.mxu0 %v1705
        %5950 = vmatprep.subr.mxu0 %v1710
        %5951 = vmatpush1.msra.mxu0 %v1709
        %5952 = vmatprep.subr.mxu0 0.0
        %5953 = vmatpush1.msra.mxu0 0.0
        %5954 = vmatprep.subr.mxu0 0.0
        %5955 = vmatpush1.msra.mxu0 0.0
        %5956 = vmatprep.subr.mxu0 0.0
        %5957 = vmatpush1.msra.mxu0 0.0
        %5958 = vmatprep.subr.mxu0 0.0
        %5959 = vmatpush1.msra.mxu0 0.0
        %5960 = vmatprep.subr.mxu0 0.0
        %5961 = vmatpush1.msra.mxu0 0.0
        %5962 = vmatprep.subr.mxu0 0.0
        %5963 = vmatpush1.msra.mxu0 0.0
        %5964 = vmatprep.subr.mxu0 0.0
        %5965 = vmatpush1.msra.mxu0 0.0
        %5966 = vmatprep.subr.mxu0 0.0
        %5967 = vmatpush1.msra.mxu0 0.0
        %5968 = vmatprep.subr.mxu0 0.0
        %5969 = vmatpush1.msra.mxu0 0.0
        %5970 = vmatprep.subr.mxu0 0.0
        %5971 = vmatpush1.msra.mxu0 0.0
        %5972 = vmatprep.subr.mxu0 0.0
        %5973 = vmatpush1.msra.mxu0 0.0
        %5974 = vmatprep.subr.mxu0 0.0
        %5975 = vmatpush1.msra.mxu0 0.0
        %5976 = vmatprep.subr.mxu0 0.0
        %5977 = vmatpush1.msra.mxu0 0.0
        %5978 = vmatprep.subr.mxu0 0.0
        %5979 = vmatpush1.msra.mxu0 0.0
        %5980 = vmatprep.subr.mxu0 0.0
        %5981 = vmatpush1.msra.mxu0 0.0
        %5982 = vmatprep.subr.mxu0 0.0
        %5983 = vmatpush1.msra.mxu0 0.0
        %5984 = vmatprep.mubr.f32.mxu0 0.0
        %5985 = vmatmul.mubr.f32.gmra.mrb[0].mxu0 %v5692
        %v5986 = vpop.f32.mrb[0].mxu0
        %v5987 = vadd.f32 0.0, %v5986
        %v5988 = vpop.f32.mrb[0].mxu0
        %v5989 = vadd.f32 0.0, %v5988
        %5990 = vdwg.mxu0
        %v5991 = vadd.f32 %v5845, %v5916
        %v5992 = vadd.f32 %v5846, %v5918
        %v5993 = vadd.f32 %v5847, %v5987
        %v5994 = vadd.f32 %v5848, %v5989
        %v5995 = vtanh.pop %v5841
        %v5996 = vtanh.pop %v5842
        %v5997 = vtanh.pop %v5843
        %v5998 = vtanh.pop %v5844
        %v5999 = vmul.f32 %v5995, 0.5
        %v6000 = vmul.f32 %v5996, 0.5
        %v6001 = vmul.f32 %v5997, 0.5
        %v6002 = vadd.f32 %v5999, 0.5
        %v6003 = vadd.f32 %v6000, 0.5
        %v6004 = vadd.f32 %v6001, 0.5
        %v6005 = vmul.f32 %v6003, %v5675
        %v6006 = vmul.f32 %v6002, %v5998
        %v6007 = vadd.f32 %v6005, %v6006
        %v6008 = vtanh.pop %v6007
        %v6009 = vmul.f32 %v6004, %v6008
        %v6010 = vtanh.pop %v5991
        %v6011 = vtanh.pop %v5992
        %v6012 = vtanh.pop %v5993
        %v6013 = vtanh.pop %v5994
        %v6014 = vmul.f32 %v6010, 0.5
        %v6015 = vmul.f32 %v6011, 0.5
        %v6016 = vmul.f32 %v6012, 0.5
        %v6017 = vadd.f32 %v6014, 0.5
        %v6018 = vadd.f32 %v6015, 0.5
        %v6019 = vadd.f32 %v6016, 0.5
        %v6020 = vmul.f32 %v6018, %v5690
        %v6021 = vmul.f32 %v6017, %v6013
        %v6022 = vadd.f32 %v6020, %v6021
        %v6023 = vtanh.pop %v6022
        %v6024 = vmul.f32 %v6019, %v6023
        %6025 = vst [vmem:[#allocation3 + $0xc0] sm:$0xff] %v6009
        %6026 = vst [vmem:[#allocation3 + $0x38] sm:$0xff] %v6024
        %v6027 = vld [vmem:[#allocation2 + $0x340] sm:$0xff]
        %v6028 = vld [vmem:[#allocation2 + $0x348] sm:$0xff]
        %v6029 = vld [vmem:[#allocation2 + $0x350] sm:$0xff]
        %v6030 = vld [vmem:[#allocation2 + $0x358] sm:$0xff]
        %6031 = vmatprep.subr.mxu0 %v1584
        %6032 = vmatpush1.msra.mxu0 %v1583
        %6033 = vmatprep.subr.mxu0 %v1588
        %6034 = vmatpush1.msra.mxu0 %v1587
        %6035 = vmatprep.subr.mxu0 %v1592
        %6036 = vmatpush1.msra.mxu0 %v1591
        %6037 = vmatprep.subr.mxu0 %v1596
        %6038 = vmatpush1.msra.mxu0 %v1595
        %6039 = vmatprep.subr.mxu0 %v1600
        %6040 = vmatpush1.msra.mxu0 %v1599
        %6041 = vmatprep.subr.mxu0 %v1604
        %6042 = vmatpush1.msra.mxu0 %v1603
        %6043 = vmatprep.subr.mxu0 %v1608
        %6044 = vmatpush1.msra.mxu0 %v1607
        %6045 = vmatprep.subr.mxu0 %v1612
        %6046 = vmatpush1.msra.mxu0 %v1611
        %6047 = vmatprep.subr.mxu0 %v1616
        %6048 = vmatpush1.msra.mxu0 %v1615
        %6049 = vmatprep.subr.mxu0 %v1620
        %6050 = vmatpush1.msra.mxu0 %v1619
        %6051 = vmatprep.subr.mxu0 %v1624
        %6052 = vmatpush1.msra.mxu0 %v1623
        %6053 = vmatprep.subr.mxu0 %v1628
        %6054 = vmatpush1.msra.mxu0 %v1627
        %6055 = vmatprep.subr.mxu0 %v1632
        %6056 = vmatpush1.msra.mxu0 %v1631
        %6057 = vmatprep.subr.mxu0 %v1636
        %6058 = vmatpush1.msra.mxu0 %v1635
        %6059 = vmatprep.subr.mxu0 %v1640
        %6060 = vmatpush1.msra.mxu0 %v1639
        %6061 = vmatprep.subr.mxu0 %v1644
        %6062 = vmatpush1.msra.mxu0 %v1643
        %6063 = vmatprep.subr.mxu0 0.0
        %6064 = vmatpush1.msra.mxu0 0.0
        %6065 = vmatprep.subr.mxu0 0.0
        %6066 = vmatpush1.msra.mxu0 0.0
        %6067 = vmatprep.subr.mxu0 0.0
        %6068 = vmatpush1.msra.mxu0 0.0
        %6069 = vmatprep.subr.mxu0 0.0
        %6070 = vmatpush1.msra.mxu0 0.0
        %6071 = vmatprep.subr.mxu0 0.0
        %6072 = vmatpush1.msra.mxu0 0.0
        %6073 = vmatprep.subr.mxu0 0.0
        %6074 = vmatpush1.msra.mxu0 0.0
        %6075 = vmatprep.subr.mxu0 0.0
        %6076 = vmatpush1.msra.mxu0 0.0
        %6077 = vmatprep.subr.mxu0 0.0
        %6078 = vmatpush1.msra.mxu0 0.0
        %6079 = vmatprep.subr.mxu0 0.0
        %6080 = vmatpush1.msra.mxu0 0.0
        %6081 = vmatprep.subr.mxu0 0.0
        %6082 = vmatpush1.msra.mxu0 0.0
        %6083 = vmatprep.subr.mxu0 0.0
        %6084 = vmatpush1.msra.mxu0 0.0
        %6085 = vmatprep.subr.mxu0 0.0
        %6086 = vmatpush1.msra.mxu0 0.0
        %6087 = vmatprep.subr.mxu0 0.0
        %6088 = vmatpush1.msra.mxu0 0.0
        %6089 = vmatprep.subr.mxu0 0.0
        %6090 = vmatpush1.msra.mxu0 0.0
        %6091 = vmatprep.subr.mxu0 0.0
        %6092 = vmatpush1.msra.mxu0 0.0
        %6093 = vmatprep.subr.mxu0 0.0
        %6094 = vmatpush1.msra.mxu0 0.0
        %6095 = vmatprep.mubr.f32.mxu0 0.0
        %6096 = vmatmul.mubr.f32.gmra.mrb[0].mxu0 %v6009
        %v6097 = vpop.f32.mrb[0].mxu0
        %v6098 = vadd.f32 0.0, %v6097
        %v6099 = vpop.f32.mrb[0].mxu0
        %v6100 = vadd.f32 0.0, %v6099
        %6101 = vdwg.mxu0
        %6102 = vmatprep.subr.mxu0 %v1586
        %6103 = vmatpush1.msra.mxu0 %v1585
        %6104 = vmatprep.subr.mxu0 %v1590
        %6105 = vmatpush1.msra.mxu0 %v1589
        %6106 = vmatprep.subr.mxu0 %v1594
        %6107 = vmatpush1.msra.mxu0 %v1593
        %6108 = vmatprep.subr.mxu0 %v1598
        %6109 = vmatpush1.msra.mxu0 %v1597
        %6110 = vmatprep.subr.mxu0 %v1602
        %6111 = vmatpush1.msra.mxu0 %v1601
        %6112 = vmatprep.subr.mxu0 %v1606
        %6113 = vmatpush1.msra.mxu0 %v1605
        %6114 = vmatprep.subr.mxu0 %v1610
        %6115 = vmatpush1.msra.mxu0 %v1609
        %6116 = vmatprep.subr.mxu0 %v1614
        %6117 = vmatpush1.msra.mxu0 %v1613
        %6118 = vmatprep.subr.mxu0 %v1618
        %6119 = vmatpush1.msra.mxu0 %v1617
        %6120 = vmatprep.subr.mxu0 %v1622
        %6121 = vmatpush1.msra.mxu0 %v1621
        %6122 = vmatprep.subr.mxu0 %v1626
        %6123 = vmatpush1.msra.mxu0 %v1625
        %6124 = vmatprep.subr.mxu0 %v1630
        %6125 = vmatpush1.msra.mxu0 %v1629
        %6126 = vmatprep.subr.mxu0 %v1634
        %6127 = vmatpush1.msra.mxu0 %v1633
        %6128 = vmatprep.subr.mxu0 %v1638
        %6129 = vmatpush1.msra.mxu0 %v1637
        %6130 = vmatprep.subr.mxu0 %v1642
        %6131 = vmatpush1.msra.mxu0 %v1641
        %6132 = vmatprep.subr.mxu0 %v1646
        %6133 = vmatpush1.msra.mxu0 %v1645
        %6134 = vmatprep.subr.mxu0 0.0
        %6135 = vmatpush1.msra.mxu0 0.0
        %6136 = vmatprep.subr.mxu0 0.0
        %6137 = vmatpush1.msra.mxu0 0.0
        %6138 = vmatprep.subr.mxu0 0.0
        %6139 = vmatpush1.msra.mxu0 0.0
        %6140 = vmatprep.subr.mxu0 0.0
        %6141 = vmatpush1.msra.mxu0 0.0
        %6142 = vmatprep.subr.mxu0 0.0
        %6143 = vmatpush1.msra.mxu0 0.0
        %6144 = vmatprep.subr.mxu0 0.0
        %6145 = vmatpush1.msra.mxu0 0.0
        %6146 = vmatprep.subr.mxu0 0.0
        %6147 = vmatpush1.msra.mxu0 0.0
        %6148 = vmatprep.subr.mxu0 0.0
        %6149 = vmatpush1.msra.mxu0 0.0
        %6150 = vmatprep.subr.mxu0 0.0
        %6151 = vmatpush1.msra.mxu0 0.0
        %6152 = vmatprep.subr.mxu0 0.0
        %6153 = vmatpush1.msra.mxu0 0.0
        %6154 = vmatprep.subr.mxu0 0.0
        %6155 = vmatpush1.msra.mxu0 0.0
        %6156 = vmatprep.subr.mxu0 0.0
        %6157 = vmatpush1.msra.mxu0 0.0
        %6158 = vmatprep.subr.mxu0 0.0
        %6159 = vmatpush1.msra.mxu0 0.0
        %6160 = vmatprep.subr.mxu0 0.0
        %6161 = vmatpush1.msra.mxu0 0.0
        %6162 = vmatprep.subr.mxu0 0.0
        %6163 = vmatpush1.msra.mxu0 0.0
        %6164 = vmatprep.subr.mxu0 0.0
        %6165 = vmatpush1.msra.mxu0 0.0
        %6166 = vmatprep.mubr.f32.mxu0 0.0
        %6167 = vmatmul.mubr.f32.gmra.mrb[0].mxu0 %v6009
        %v6168 = vpop.f32.mrb[0].mxu0
        %v6169 = vadd.f32 0.0, %v6168
        %v6170 = vpop.f32.mrb[0].mxu0
        %v6171 = vadd.f32 0.0, %v6170
        %6172 = vdwg.mxu0
        %v6173 = vadd.f32 %v6027, %v6098
        %v6174 = vadd.f32 %v6028, %v6100
        %v6175 = vadd.f32 %v6029, %v6169
        %v6176 = vadd.f32 %v6030, %v6171
        %v6177 = vld [vmem:[#allocation2 + $0xa0] sm:$0xff]
        %v6178 = vld [vmem:[#allocation2 + $0xa8] sm:$0xff]
        %v6179 = vld [vmem:[#allocation2 + $0xb0] sm:$0xff]
        %v6180 = vld [vmem:[#allocation2 + $0xb8] sm:$0xff]
        %6181 = vmatprep.subr.mxu0 %v1648
        %6182 = vmatpush1.msra.mxu0 %v1647
        %6183 = vmatprep.subr.mxu0 %v1652
        %6184 = vmatpush1.msra.mxu0 %v1651
        %6185 = vmatprep.subr.mxu0 %v1656
        %6186 = vmatpush1.msra.mxu0 %v1655
        %6187 = vmatprep.subr.mxu0 %v1660
        %6188 = vmatpush1.msra.mxu0 %v1659
        %6189 = vmatprep.subr.mxu0 %v1664
        %6190 = vmatpush1.msra.mxu0 %v1663
        %6191 = vmatprep.subr.mxu0 %v1668
        %6192 = vmatpush1.msra.mxu0 %v1667
        %6193 = vmatprep.subr.mxu0 %v1672
        %6194 = vmatpush1.msra.mxu0 %v1671
        %6195 = vmatprep.subr.mxu0 %v1676
        %6196 = vmatpush1.msra.mxu0 %v1675
        %6197 = vmatprep.subr.mxu0 %v1680
        %6198 = vmatpush1.msra.mxu0 %v1679
        %6199 = vmatprep.subr.mxu0 %v1684
        %6200 = vmatpush1.msra.mxu0 %v1683
        %6201 = vmatprep.subr.mxu0 %v1688
        %6202 = vmatpush1.msra.mxu0 %v1687
        %6203 = vmatprep.subr.mxu0 %v1692
        %6204 = vmatpush1.msra.mxu0 %v1691
        %6205 = vmatprep.subr.mxu0 %v1696
        %6206 = vmatpush1.msra.mxu0 %v1695
        %6207 = vmatprep.subr.mxu0 %v1700
        %6208 = vmatpush1.msra.mxu0 %v1699
        %6209 = vmatprep.subr.mxu0 %v1704
        %6210 = vmatpush1.msra.mxu0 %v1703
        %6211 = vmatprep.subr.mxu0 %v1708
        %6212 = vmatpush1.msra.mxu0 %v1707
        %6213 = vmatprep.subr.mxu0 0.0
        %6214 = vmatpush1.msra.mxu0 0.0
        %6215 = vmatprep.subr.mxu0 0.0
        %6216 = vmatpush1.msra.mxu0 0.0
        %6217 = vmatprep.subr.mxu0 0.0
        %6218 = vmatpush1.msra.mxu0 0.0
        %6219 = vmatprep.subr.mxu0 0.0
        %6220 = vmatpush1.msra.mxu0 0.0
        %6221 = vmatprep.subr.mxu0 0.0
        %6222 = vmatpush1.msra.mxu0 0.0
        %6223 = vmatprep.subr.mxu0 0.0
        %6224 = vmatpush1.msra.mxu0 0.0
        %6225 = vmatprep.subr.mxu0 0.0
        %6226 = vmatpush1.msra.mxu0 0.0
        %6227 = vmatprep.subr.mxu0 0.0
        %6228 = vmatpush1.msra.mxu0 0.0
        %6229 = vmatprep.subr.mxu0 0.0
        %6230 = vmatpush1.msra.mxu0 0.0
        %6231 = vmatprep.subr.mxu0 0.0
        %6232 = vmatpush1.msra.mxu0 0.0
        %6233 = vmatprep.subr.mxu0 0.0
        %6234 = vmatpush1.msra.mxu0 0.0
        %6235 = vmatprep.subr.mxu0 0.0
        %6236 = vmatpush1.msra.mxu0 0.0
        %6237 = vmatprep.subr.mxu0 0.0
        %6238 = vmatpush1.msra.mxu0 0.0
        %6239 = vmatprep.subr.mxu0 0.0
        %6240 = vmatpush1.msra.mxu0 0.0
        %6241 = vmatprep.subr.mxu0 0.0
        %6242 = vmatpush1.msra.mxu0 0.0
        %6243 = vmatprep.subr.mxu0 0.0
        %6244 = vmatpush1.msra.mxu0 0.0
        %6245 = vmatprep.mubr.f32.mxu0 0.0
        %6246 = vmatmul.mubr.f32.gmra.mrb[0].mxu0 %v6024
        %v6247 = vpop.f32.mrb[0].mxu0
        %v6248 = vadd.f32 0.0, %v6247
        %v6249 = vpop.f32.mrb[0].mxu0
        %v6250 = vadd.f32 0.0, %v6249
        %6251 = vdwg.mxu0
        %6252 = vmatprep.subr.mxu0 %v1650
        %6253 = vmatpush1.msra.mxu0 %v1649
        %6254 = vmatprep.subr.mxu0 %v1654
        %6255 = vmatpush1.msra.mxu0 %v1653
        %6256 = vmatprep.subr.mxu0 %v1658
        %6257 = vmatpush1.msra.mxu0 %v1657
        %6258 = vmatprep.subr.mxu0 %v1662
        %6259 = vmatpush1.msra.mxu0 %v1661
        %6260 = vmatprep.subr.mxu0 %v1666
        %6261 = vmatpush1.msra.mxu0 %v1665
        %6262 = vmatprep.subr.mxu0 %v1670
        %6263 = vmatpush1.msra.mxu0 %v1669
        %6264 = vmatprep.subr.mxu0 %v1674
        %6265 = vmatpush1.msra.mxu0 %v1673
        %6266 = vmatprep.subr.mxu0 %v1678
        %6267 = vmatpush1.msra.mxu0 %v1677
        %6268 = vmatprep.subr.mxu0 %v1682
        %6269 = vmatpush1.msra.mxu0 %v1681
        %6270 = vmatprep.subr.mxu0 %v1686
        %6271 = vmatpush1.msra.mxu0 %v1685
        %6272 = vmatprep.subr.mxu0 %v1690
        %6273 = vmatpush1.msra.mxu0 %v1689
        %6274 = vmatprep.subr.mxu0 %v1694
        %6275 = vmatpush1.msra.mxu0 %v1693
        %6276 = vmatprep.subr.mxu0 %v1698
        %6277 = vmatpush1.msra.mxu0 %v1697
        %6278 = vmatprep.subr.mxu0 %v1702
        %6279 = vmatpush1.msra.mxu0 %v1701
        %6280 = vmatprep.subr.mxu0 %v1706
        %6281 = vmatpush1.msra.mxu0 %v1705
        %6282 = vmatprep.subr.mxu0 %v1710
        %6283 = vmatpush1.msra.mxu0 %v1709
        %6284 = vmatprep.subr.mxu0 0.0
        %6285 = vmatpush1.msra.mxu0 0.0
        %6286 = vmatprep.subr.mxu0 0.0
        %6287 = vmatpush1.msra.mxu0 0.0
        %6288 = vmatprep.subr.mxu0 0.0
        %6289 = vmatpush1.msra.mxu0 0.0
        %6290 = vmatprep.subr.mxu0 0.0
        %6291 = vmatpush1.msra.mxu0 0.0
        %6292 = vmatprep.subr.mxu0 0.0
        %6293 = vmatpush1.msra.mxu0 0.0
        %6294 = vmatprep.subr.mxu0 0.0
        %6295 = vmatpush1.msra.mxu0 0.0
        %6296 = vmatprep.subr.mxu0 0.0
        %6297 = vmatpush1.msra.mxu0 0.0
        %6298 = vmatprep.subr.mxu0 0.0
        %6299 = vmatpush1.msra.mxu0 0.0
        %6300 = vmatprep.subr.mxu0 0.0
        %6301 = vmatpush1.msra.mxu0 0.0
        %6302 = vmatprep.subr.mxu0 0.0
        %6303 = vmatpush1.msra.mxu0 0.0
        %6304 = vmatprep.subr.mxu0 0.0
        %6305 = vmatpush1.msra.mxu0 0.0
        %6306 = vmatprep.subr.mxu0 0.0
        %6307 = vmatpush1.msra.mxu0 0.0
        %6308 = vmatprep.subr.mxu0 0.0
        %6309 = vmatpush1.msra.mxu0 0.0
        %6310 = vmatprep.subr.mxu0 0.0
        %6311 = vmatpush1.msra.mxu0 0.0
        %6312 = vmatprep.subr.mxu0 0.0
        %6313 = vmatpush1.msra.mxu0 0.0
        %6314 = vmatprep.subr.mxu0 0.0
        %6315 = vmatpush1.msra.mxu0 0.0
        %6316 = vmatprep.mubr.f32.mxu0 0.0
        %6317 = vmatmul.mubr.f32.gmra.mrb[0].mxu0 %v6024
        %v6318 = vpop.f32.mrb[0].mxu0
        %v6319 = vadd.f32 0.0, %v6318
        %v6320 = vpop.f32.mrb[0].mxu0
        %v6321 = vadd.f32 0.0, %v6320
        %6322 = vdwg.mxu0
        %v6323 = vadd.f32 %v6177, %v6248
        %v6324 = vadd.f32 %v6178, %v6250
        %v6325 = vadd.f32 %v6179, %v6319
        %v6326 = vadd.f32 %v6180, %v6321
        %v6327 = vtanh.pop %v6173
        %v6328 = vtanh.pop %v6174
        %v6329 = vtanh.pop %v6175
        %v6330 = vtanh.pop %v6176
        %v6331 = vmul.f32 %v6327, 0.5
        %v6332 = vmul.f32 %v6328, 0.5
        %v6333 = vmul.f32 %v6329, 0.5
        %v6334 = vadd.f32 %v6331, 0.5
        %v6335 = vadd.f32 %v6332, 0.5
        %v6336 = vadd.f32 %v6333, 0.5
        %v6337 = vmul.f32 %v6335, %v6007
        %v6338 = vmul.f32 %v6334, %v6330
        %v6339 = vadd.f32 %v6337, %v6338
        %v6340 = vtanh.pop %v6339
        %v6341 = vmul.f32 %v6336, %v6340
        %v6342 = vtanh.pop %v6323
        %v6343 = vtanh.pop %v6324
        %v6344 = vtanh.pop %v6325
        %v6345 = vtanh.pop %v6326
        %v6346 = vmul.f32 %v6342, 0.5
        %v6347 = vmul.f32 %v6343, 0.5
        %v6348 = vmul.f32 %v6344, 0.5
        %v6349 = vadd.f32 %v6346, 0.5
        %v6350 = vadd.f32 %v6347, 0.5
        %v6351 = vadd.f32 %v6348, 0.5
        %v6352 = vmul.f32 %v6350, %v6022
        %v6353 = vmul.f32 %v6349, %v6345
        %v6354 = vadd.f32 %v6352, %v6353
        %v6355 = vtanh.pop %v6354
        %v6356 = vmul.f32 %v6351, %v6355
        %6357 = vst [vmem:[#allocation3 + $0xd0] sm:$0xff] %v6341
        %6358 = vst [vmem:[#allocation3 + $0x28] sm:$0xff] %v6356
        %v6359 = vld [vmem:[#allocation2 + $0x380] sm:$0xff]
        %v6360 = vld [vmem:[#allocation2 + $0x388] sm:$0xff]
        %v6361 = vld [vmem:[#allocation2 + $0x390] sm:$0xff]
        %v6362 = vld [vmem:[#allocation2 + $0x398] sm:$0xff]
        %6363 = vmatprep.subr.mxu0 %v1584
        %6364 = vmatpush1.msra.mxu0 %v1583
        %6365 = vmatprep.subr.mxu0 %v1588
        %6366 = vmatpush1.msra.mxu0 %v1587
        %6367 = vmatprep.subr.mxu0 %v1592
        %6368 = vmatpush1.msra.mxu0 %v1591
        %6369 = vmatprep.subr.mxu0 %v1596
        %6370 = vmatpush1.msra.mxu0 %v1595
        %6371 = vmatprep.subr.mxu0 %v1600
        %6372 = vmatpush1.msra.mxu0 %v1599
        %6373 = vmatprep.subr.mxu0 %v1604
        %6374 = vmatpush1.msra.mxu0 %v1603
        %6375 = vmatprep.subr.mxu0 %v1608
        %6376 = vmatpush1.msra.mxu0 %v1607
        %6377 = vmatprep.subr.mxu0 %v1612
        %6378 = vmatpush1.msra.mxu0 %v1611
        %6379 = vmatprep.subr.mxu0 %v1616
        %6380 = vmatpush1.msra.mxu0 %v1615
        %6381 = vmatprep.subr.mxu0 %v1620
        %6382 = vmatpush1.msra.mxu0 %v1619
        %6383 = vmatprep.subr.mxu0 %v1624
        %6384 = vmatpush1.msra.mxu0 %v1623
        %6385 = vmatprep.subr.mxu0 %v1628
        %6386 = vmatpush1.msra.mxu0 %v1627
        %6387 = vmatprep.subr.mxu0 %v1632
        %6388 = vmatpush1.msra.mxu0 %v1631
        %6389 = vmatprep.subr.mxu0 %v1636
        %6390 = vmatpush1.msra.mxu0 %v1635
        %6391 = vmatprep.subr.mxu0 %v1640
        %6392 = vmatpush1.msra.mxu0 %v1639
        %6393 = vmatprep.subr.mxu0 %v1644
        %6394 = vmatpush1.msra.mxu0 %v1643
        %6395 = vmatprep.subr.mxu0 0.0
        %6396 = vmatpush1.msra.mxu0 0.0
        %6397 = vmatprep.subr.mxu0 0.0
        %6398 = vmatpush1.msra.mxu0 0.0
        %6399 = vmatprep.subr.mxu0 0.0
        %6400 = vmatpush1.msra.mxu0 0.0
        %6401 = vmatprep.subr.mxu0 0.0
        %6402 = vmatpush1.msra.mxu0 0.0
        %6403 = vmatprep.subr.mxu0 0.0
        %6404 = vmatpush1.msra.mxu0 0.0
        %6405 = vmatprep.subr.mxu0 0.0
        %6406 = vmatpush1.msra.mxu0 0.0
        %6407 = vmatprep.subr.mxu0 0.0
        %6408 = vmatpush1.msra.mxu0 0.0
        %6409 = vmatprep.subr.mxu0 0.0
        %6410 = vmatpush1.msra.mxu0 0.0
        %6411 = vmatprep.subr.mxu0 0.0
        %6412 = vmatpush1.msra.mxu0 0.0
        %6413 = vmatprep.subr.mxu0 0.0
        %6414 = vmatpush1.msra.mxu0 0.0
        %6415 = vmatprep.subr.mxu0 0.0
        %6416 = vmatpush1.msra.mxu0 0.0
        %6417 = vmatprep.subr.mxu0 0.0
        %6418 = vmatpush1.msra.mxu0 0.0
        %6419 = vmatprep.subr.mxu0 0.0
        %6420 = vmatpush1.msra.mxu0 0.0
        %6421 = vmatprep.subr.mxu0 0.0
        %6422 = vmatpush1.msra.mxu0 0.0
        %6423 = vmatprep.subr.mxu0 0.0
        %6424 = vmatpush1.msra.mxu0 0.0
        %6425 = vmatprep.subr.mxu0 0.0
        %6426 = vmatpush1.msra.mxu0 0.0
        %6427 = vmatprep.mubr.f32.mxu0 0.0
        %6428 = vmatmul.mubr.f32.gmra.mrb[0].mxu0 %v6341
        %v6429 = vpop.f32.mrb[0].mxu0
        %v6430 = vadd.f32 0.0, %v6429
        %v6431 = vpop.f32.mrb[0].mxu0
        %v6432 = vadd.f32 0.0, %v6431
        %6433 = vdwg.mxu0
        %6434 = vmatprep.subr.mxu0 %v1586
        %6435 = vmatpush1.msra.mxu0 %v1585
        %6436 = vmatprep.subr.mxu0 %v1590
        %6437 = vmatpush1.msra.mxu0 %v1589
        %6438 = vmatprep.subr.mxu0 %v1594
        %6439 = vmatpush1.msra.mxu0 %v1593
        %6440 = vmatprep.subr.mxu0 %v1598
        %6441 = vmatpush1.msra.mxu0 %v1597
        %6442 = vmatprep.subr.mxu0 %v1602
        %6443 = vmatpush1.msra.mxu0 %v1601
        %6444 = vmatprep.subr.mxu0 %v1606
        %6445 = vmatpush1.msra.mxu0 %v1605
        %6446 = vmatprep.subr.mxu0 %v1610
        %6447 = vmatpush1.msra.mxu0 %v1609
        %6448 = vmatprep.subr.mxu0 %v1614
        %6449 = vmatpush1.msra.mxu0 %v1613
        %6450 = vmatprep.subr.mxu0 %v1618
        %6451 = vmatpush1.msra.mxu0 %v1617
        %6452 = vmatprep.subr.mxu0 %v1622
        %6453 = vmatpush1.msra.mxu0 %v1621
        %6454 = vmatprep.subr.mxu0 %v1626
        %6455 = vmatpush1.msra.mxu0 %v1625
        %6456 = vmatprep.subr.mxu0 %v1630
        %6457 = vmatpush1.msra.mxu0 %v1629
        %6458 = vmatprep.subr.mxu0 %v1634
        %6459 = vmatpush1.msra.mxu0 %v1633
        %6460 = vmatprep.subr.mxu0 %v1638
        %6461 = vmatpush1.msra.mxu0 %v1637
        %6462 = vmatprep.subr.mxu0 %v1642
        %6463 = vmatpush1.msra.mxu0 %v1641
        %6464 = vmatprep.subr.mxu0 %v1646
        %6465 = vmatpush1.msra.mxu0 %v1645
        %6466 = vmatprep.subr.mxu0 0.0
        %6467 = vmatpush1.msra.mxu0 0.0
        %6468 = vmatprep.subr.mxu0 0.0
        %6469 = vmatpush1.msra.mxu0 0.0
        %6470 = vmatprep.subr.mxu0 0.0
        %6471 = vmatpush1.msra.mxu0 0.0
        %6472 = vmatprep.subr.mxu0 0.0
        %6473 = vmatpush1.msra.mxu0 0.0
        %6474 = vmatprep.subr.mxu0 0.0
        %6475 = vmatpush1.msra.mxu0 0.0
        %6476 = vmatprep.subr.mxu0 0.0
        %6477 = vmatpush1.msra.mxu0 0.0
        %6478 = vmatprep.subr.mxu0 0.0
        %6479 = vmatpush1.msra.mxu0 0.0
        %6480 = vmatprep.subr.mxu0 0.0
        %6481 = vmatpush1.msra.mxu0 0.0
        %6482 = vmatprep.subr.mxu0 0.0
        %6483 = vmatpush1.msra.mxu0 0.0
        %6484 = vmatprep.subr.mxu0 0.0
        %6485 = vmatpush1.msra.mxu0 0.0
        %6486 = vmatprep.subr.mxu0 0.0
        %6487 = vmatpush1.msra.mxu0 0.0
        %6488 = vmatprep.subr.mxu0 0.0
        %6489 = vmatpush1.msra.mxu0 0.0
        %6490 = vmatprep.subr.mxu0 0.0
        %6491 = vmatpush1.msra.mxu0 0.0
        %6492 = vmatprep.subr.mxu0 0.0
        %6493 = vmatpush1.msra.mxu0 0.0
        %6494 = vmatprep.subr.mxu0 0.0
        %6495 = vmatpush1.msra.mxu0 0.0
        %6496 = vmatprep.subr.mxu0 0.0
        %6497 = vmatpush1.msra.mxu0 0.0
        %6498 = vmatprep.mubr.f32.mxu0 0.0
        %6499 = vmatmul.mubr.f32.gmra.mrb[0].mxu0 %v6341
        %v6500 = vpop.f32.mrb[0].mxu0
        %v6501 = vadd.f32 0.0, %v6500
        %v6502 = vpop.f32.mrb[0].mxu0
        %v6503 = vadd.f32 0.0, %v6502
        %6504 = vdwg.mxu0
        %v6505 = vadd.f32 %v6359, %v6430
        %v6506 = vadd.f32 %v6360, %v6432
        %v6507 = vadd.f32 %v6361, %v6501
        %v6508 = vadd.f32 %v6362, %v6503
        %v6509 = vld [vmem:[#allocation2 + $0x60] sm:$0xff]
        %v6510 = vld [vmem:[#allocation2 + $0x68] sm:$0xff]
        %v6511 = vld [vmem:[#allocation2 + $0x70] sm:$0xff]
        %v6512 = vld [vmem:[#allocation2 + $0x78] sm:$0xff]
        %6513 = vmatprep.subr.mxu0 %v1648
        %6514 = vmatpush1.msra.mxu0 %v1647
        %6515 = vmatprep.subr.mxu0 %v1652
        %6516 = vmatpush1.msra.mxu0 %v1651
        %6517 = vmatprep.subr.mxu0 %v1656
        %6518 = vmatpush1.msra.mxu0 %v1655
        %6519 = vmatprep.subr.mxu0 %v1660
        %6520 = vmatpush1.msra.mxu0 %v1659
        %6521 = vmatprep.subr.mxu0 %v1664
        %6522 = vmatpush1.msra.mxu0 %v1663
        %6523 = vmatprep.subr.mxu0 %v1668
        %6524 = vmatpush1.msra.mxu0 %v1667
        %6525 = vmatprep.subr.mxu0 %v1672
        %6526 = vmatpush1.msra.mxu0 %v1671
        %6527 = vmatprep.subr.mxu0 %v1676
        %6528 = vmatpush1.msra.mxu0 %v1675
        %6529 = vmatprep.subr.mxu0 %v1680
        %6530 = vmatpush1.msra.mxu0 %v1679
        %6531 = vmatprep.subr.mxu0 %v1684
        %6532 = vmatpush1.msra.mxu0 %v1683
        %6533 = vmatprep.subr.mxu0 %v1688
        %6534 = vmatpush1.msra.mxu0 %v1687
        %6535 = vmatprep.subr.mxu0 %v1692
        %6536 = vmatpush1.msra.mxu0 %v1691
        %6537 = vmatprep.subr.mxu0 %v1696
        %6538 = vmatpush1.msra.mxu0 %v1695
        %6539 = vmatprep.subr.mxu0 %v1700
        %6540 = vmatpush1.msra.mxu0 %v1699
        %6541 = vmatprep.subr.mxu0 %v1704
        %6542 = vmatpush1.msra.mxu0 %v1703
        %6543 = vmatprep.subr.mxu0 %v1708
        %6544 = vmatpush1.msra.mxu0 %v1707
        %6545 = vmatprep.subr.mxu0 0.0
        %6546 = vmatpush1.msra.mxu0 0.0
        %6547 = vmatprep.subr.mxu0 0.0
        %6548 = vmatpush1.msra.mxu0 0.0
        %6549 = vmatprep.subr.mxu0 0.0
        %6550 = vmatpush1.msra.mxu0 0.0
        %6551 = vmatprep.subr.mxu0 0.0
        %6552 = vmatpush1.msra.mxu0 0.0
        %6553 = vmatprep.subr.mxu0 0.0
        %6554 = vmatpush1.msra.mxu0 0.0
        %6555 = vmatprep.subr.mxu0 0.0
        %6556 = vmatpush1.msra.mxu0 0.0
        %6557 = vmatprep.subr.mxu0 0.0
        %6558 = vmatpush1.msra.mxu0 0.0
        %6559 = vmatprep.subr.mxu0 0.0
        %6560 = vmatpush1.msra.mxu0 0.0
        %6561 = vmatprep.subr.mxu0 0.0
        %6562 = vmatpush1.msra.mxu0 0.0
        %6563 = vmatprep.subr.mxu0 0.0
        %6564 = vmatpush1.msra.mxu0 0.0
        %6565 = vmatprep.subr.mxu0 0.0
        %6566 = vmatpush1.msra.mxu0 0.0
        %6567 = vmatprep.subr.mxu0 0.0
        %6568 = vmatpush1.msra.mxu0 0.0
        %6569 = vmatprep.subr.mxu0 0.0
        %6570 = vmatpush1.msra.mxu0 0.0
        %6571 = vmatprep.subr.mxu0 0.0
        %6572 = vmatpush1.msra.mxu0 0.0
        %6573 = vmatprep.subr.mxu0 0.0
        %6574 = vmatpush1.msra.mxu0 0.0
        %6575 = vmatprep.subr.mxu0 0.0
        %6576 = vmatpush1.msra.mxu0 0.0
        %6577 = vmatprep.mubr.f32.mxu0 0.0
        %6578 = vmatmul.mubr.f32.gmra.mrb[0].mxu0 %v6356
        %v6579 = vpop.f32.mrb[0].mxu0
        %v6580 = vadd.f32 0.0, %v6579
        %v6581 = vpop.f32.mrb[0].mxu0
        %v6582 = vadd.f32 0.0, %v6581
        %6583 = vdwg.mxu0
        %6584 = vmatprep.subr.mxu0 %v1650
        %6585 = vmatpush1.msra.mxu0 %v1649
        %6586 = vmatprep.subr.mxu0 %v1654
        %6587 = vmatpush1.msra.mxu0 %v1653
        %6588 = vmatprep.subr.mxu0 %v1658
        %6589 = vmatpush1.msra.mxu0 %v1657
        %6590 = vmatprep.subr.mxu0 %v1662
        %6591 = vmatpush1.msra.mxu0 %v1661
        %6592 = vmatprep.subr.mxu0 %v1666
        %6593 = vmatpush1.msra.mxu0 %v1665
        %6594 = vmatprep.subr.mxu0 %v1670
        %6595 = vmatpush1.msra.mxu0 %v1669
        %6596 = vmatprep.subr.mxu0 %v1674
        %6597 = vmatpush1.msra.mxu0 %v1673
        %6598 = vmatprep.subr.mxu0 %v1678
        %6599 = vmatpush1.msra.mxu0 %v1677
        %6600 = vmatprep.subr.mxu0 %v1682
        %6601 = vmatpush1.msra.mxu0 %v1681
        %6602 = vmatprep.subr.mxu0 %v1686
        %6603 = vmatpush1.msra.mxu0 %v1685
        %6604 = vmatprep.subr.mxu0 %v1690
        %6605 = vmatpush1.msra.mxu0 %v1689
        %6606 = vmatprep.subr.mxu0 %v1694
        %6607 = vmatpush1.msra.mxu0 %v1693
        %6608 = vmatprep.subr.mxu0 %v1698
        %6609 = vmatpush1.msra.mxu0 %v1697
        %6610 = vmatprep.subr.mxu0 %v1702
        %6611 = vmatpush1.msra.mxu0 %v1701
        %6612 = vmatprep.subr.mxu0 %v1706
        %6613 = vmatpush1.msra.mxu0 %v1705
        %6614 = vmatprep.subr.mxu0 %v1710
        %6615 = vmatpush1.msra.mxu0 %v1709
        %6616 = vmatprep.subr.mxu0 0.0
        %6617 = vmatpush1.msra.mxu0 0.0
        %6618 = vmatprep.subr.mxu0 0.0
        %6619 = vmatpush1.msra.mxu0 0.0
        %6620 = vmatprep.subr.mxu0 0.0
        %6621 = vmatpush1.msra.mxu0 0.0
        %6622 = vmatprep.subr.mxu0 0.0
        %6623 = vmatpush1.msra.mxu0 0.0
        %6624 = vmatprep.subr.mxu0 0.0
        %6625 = vmatpush1.msra.mxu0 0.0
        %6626 = vmatprep.subr.mxu0 0.0
        %6627 = vmatpush1.msra.mxu0 0.0
        %6628 = vmatprep.subr.mxu0 0.0
        %6629 = vmatpush1.msra.mxu0 0.0
        %6630 = vmatprep.subr.mxu0 0.0
        %6631 = vmatpush1.msra.mxu0 0.0
        %6632 = vmatprep.subr.mxu0 0.0
        %6633 = vmatpush1.msra.mxu0 0.0
        %6634 = vmatprep.subr.mxu0 0.0
        %6635 = vmatpush1.msra.mxu0 0.0
        %6636 = vmatprep.subr.mxu0 0.0
        %6637 = vmatpush1.msra.mxu0 0.0
        %6638 = vmatprep.subr.mxu0 0.0
        %6639 = vmatpush1.msra.mxu0 0.0
        %6640 = vmatprep.subr.mxu0 0.0
        %6641 = vmatpush1.msra.mxu0 0.0
        %6642 = vmatprep.subr.mxu0 0.0
        %6643 = vmatpush1.msra.mxu0 0.0
        %6644 = vmatprep.subr.mxu0 0.0
        %6645 = vmatpush1.msra.mxu0 0.0
        %6646 = vmatprep.subr.mxu0 0.0
        %6647 = vmatpush1.msra.mxu0 0.0
        %6648 = vmatprep.mubr.f32.mxu0 0.0
        %6649 = vmatmul.mubr.f32.gmra.mrb[0].mxu0 %v6356
        %v6650 = vpop.f32.mrb[0].mxu0
        %v6651 = vadd.f32 0.0, %v6650
        %v6652 = vpop.f32.mrb[0].mxu0
        %v6653 = vadd.f32 0.0, %v6652
        %6654 = vdwg.mxu0
        %v6655 = vadd.f32 %v6509, %v6580
        %v6656 = vadd.f32 %v6510, %v6582
        %v6657 = vadd.f32 %v6511, %v6651
        %v6658 = vadd.f32 %v6512, %v6653
        %v6659 = vtanh.pop %v6505
        %v6660 = vtanh.pop %v6506
        %v6661 = vtanh.pop %v6507
        %v6662 = vtanh.pop %v6508
        %v6663 = vmul.f32 %v6659, 0.5
        %v6664 = vmul.f32 %v6660, 0.5
        %v6665 = vmul.f32 %v6661, 0.5
        %v6666 = vadd.f32 %v6663, 0.5
        %v6667 = vadd.f32 %v6664, 0.5
        %v6668 = vadd.f32 %v6665, 0.5
        %v6669 = vmul.f32 %v6667, %v6339
        %v6670 = vmul.f32 %v6666, %v6662
        %v6671 = vadd.f32 %v6669, %v6670
        %v6672 = vtanh.pop %v6671
        %v6673 = vmul.f32 %v6668, %v6672
        %v6674 = vtanh.pop %v6655
        %v6675 = vtanh.pop %v6656
        %v6676 = vtanh.pop %v6657
        %v6677 = vtanh.pop %v6658
        %v6678 = vmul.f32 %v6674, 0.5
        %v6679 = vmul.f32 %v6675, 0.5
        %v6680 = vmul.f32 %v6676, 0.5
        %v6681 = vadd.f32 %v6678, 0.5
        %v6682 = vadd.f32 %v6679, 0.5
        %v6683 = vadd.f32 %v6680, 0.5
        %v6684 = vmul.f32 %v6682, %v6354
        %v6685 = vmul.f32 %v6681, %v6677
        %v6686 = vadd.f32 %v6684, %v6685
        %v6687 = vtanh.pop %v6686
        %v6688 = vmul.f32 %v6683, %v6687
        %6689 = vst [vmem:[#allocation3 + $0xe0] sm:$0xff] %v6673
        %6690 = vst [vmem:[#allocation3 + $0x18] sm:$0xff] %v6688
        %v6691 = vld [vmem:[#allocation2 + $0x3c0] sm:$0xff]
        %v6692 = vld [vmem:[#allocation2 + $0x3c8] sm:$0xff]
        %v6693 = vld [vmem:[#allocation2 + $0x3d0] sm:$0xff]
        %v6694 = vld [vmem:[#allocation2 + $0x3d8] sm:$0xff]
        %6695 = vmatprep.subr.mxu0 %v1584
        %6696 = vmatpush1.msra.mxu0 %v1583
        %6697 = vmatprep.subr.mxu0 %v1588
        %6698 = vmatpush1.msra.mxu0 %v1587
        %6699 = vmatprep.subr.mxu0 %v1592
        %6700 = vmatpush1.msra.mxu0 %v1591
        %6701 = vmatprep.subr.mxu0 %v1596
        %6702 = vmatpush1.msra.mxu0 %v1595
        %6703 = vmatprep.subr.mxu0 %v1600
        %6704 = vmatpush1.msra.mxu0 %v1599
        %6705 = vmatprep.subr.mxu0 %v1604
        %6706 = vmatpush1.msra.mxu0 %v1603
        %6707 = vmatprep.subr.mxu0 %v1608
        %6708 = vmatpush1.msra.mxu0 %v1607
        %6709 = vmatprep.subr.mxu0 %v1612
        %6710 = vmatpush1.msra.mxu0 %v1611
        %6711 = vmatprep.subr.mxu0 %v1616
        %6712 = vmatpush1.msra.mxu0 %v1615
        %6713 = vmatprep.subr.mxu0 %v1620
        %6714 = vmatpush1.msra.mxu0 %v1619
        %6715 = vmatprep.subr.mxu0 %v1624
        %6716 = vmatpush1.msra.mxu0 %v1623
        %6717 = vmatprep.subr.mxu0 %v1628
        %6718 = vmatpush1.msra.mxu0 %v1627
        %6719 = vmatprep.subr.mxu0 %v1632
        %6720 = vmatpush1.msra.mxu0 %v1631
        %6721 = vmatprep.subr.mxu0 %v1636
        %6722 = vmatpush1.msra.mxu0 %v1635
        %6723 = vmatprep.subr.mxu0 %v1640
        %6724 = vmatpush1.msra.mxu0 %v1639
        %6725 = vmatprep.subr.mxu0 %v1644
        %6726 = vmatpush1.msra.mxu0 %v1643
        %6727 = vmatprep.subr.mxu0 0.0
        %6728 = vmatpush1.msra.mxu0 0.0
        %6729 = vmatprep.subr.mxu0 0.0
        %6730 = vmatpush1.msra.mxu0 0.0
        %6731 = vmatprep.subr.mxu0 0.0
        %6732 = vmatpush1.msra.mxu0 0.0
        %6733 = vmatprep.subr.mxu0 0.0
        %6734 = vmatpush1.msra.mxu0 0.0
        %6735 = vmatprep.subr.mxu0 0.0
        %6736 = vmatpush1.msra.mxu0 0.0
        %6737 = vmatprep.subr.mxu0 0.0
        %6738 = vmatpush1.msra.mxu0 0.0
        %6739 = vmatprep.subr.mxu0 0.0
        %6740 = vmatpush1.msra.mxu0 0.0
        %6741 = vmatprep.subr.mxu0 0.0
        %6742 = vmatpush1.msra.mxu0 0.0
        %6743 = vmatprep.subr.mxu0 0.0
        %6744 = vmatpush1.msra.mxu0 0.0
        %6745 = vmatprep.subr.mxu0 0.0
        %6746 = vmatpush1.msra.mxu0 0.0
        %6747 = vmatprep.subr.mxu0 0.0
        %6748 = vmatpush1.msra.mxu0 0.0
        %6749 = vmatprep.subr.mxu0 0.0
        %6750 = vmatpush1.msra.mxu0 0.0
        %6751 = vmatprep.subr.mxu0 0.0
        %6752 = vmatpush1.msra.mxu0 0.0
        %6753 = vmatprep.subr.mxu0 0.0
        %6754 = vmatpush1.msra.mxu0 0.0
        %6755 = vmatprep.subr.mxu0 0.0
        %6756 = vmatpush1.msra.mxu0 0.0
        %6757 = vmatprep.subr.mxu0 0.0
        %6758 = vmatpush1.msra.mxu0 0.0
        %6759 = vmatprep.mubr.f32.mxu0 0.0
        %6760 = vmatmul.mubr.f32.gmra.mrb[0].mxu0 %v6673
        %v6761 = vpop.f32.mrb[0].mxu0
        %v6762 = vadd.f32 0.0, %v6761
        %v6763 = vpop.f32.mrb[0].mxu0
        %v6764 = vadd.f32 0.0, %v6763
        %6765 = vdwg.mxu0
        %6766 = vmatprep.subr.mxu0 %v1586
        %6767 = vmatpush1.msra.mxu0 %v1585
        %6768 = vmatprep.subr.mxu0 %v1590
        %6769 = vmatpush1.msra.mxu0 %v1589
        %6770 = vmatprep.subr.mxu0 %v1594
        %6771 = vmatpush1.msra.mxu0 %v1593
        %6772 = vmatprep.subr.mxu0 %v1598
        %6773 = vmatpush1.msra.mxu0 %v1597
        %6774 = vmatprep.subr.mxu0 %v1602
        %6775 = vmatpush1.msra.mxu0 %v1601
        %6776 = vmatprep.subr.mxu0 %v1606
        %6777 = vmatpush1.msra.mxu0 %v1605
        %6778 = vmatprep.subr.mxu0 %v1610
        %6779 = vmatpush1.msra.mxu0 %v1609
        %6780 = vmatprep.subr.mxu0 %v1614
        %6781 = vmatpush1.msra.mxu0 %v1613
        %6782 = vmatprep.subr.mxu0 %v1618
        %6783 = vmatpush1.msra.mxu0 %v1617
        %6784 = vmatprep.subr.mxu0 %v1622
        %6785 = vmatpush1.msra.mxu0 %v1621
        %6786 = vmatprep.subr.mxu0 %v1626
        %6787 = vmatpush1.msra.mxu0 %v1625
        %6788 = vmatprep.subr.mxu0 %v1630
        %6789 = vmatpush1.msra.mxu0 %v1629
        %6790 = vmatprep.subr.mxu0 %v1634
        %6791 = vmatpush1.msra.mxu0 %v1633
        %6792 = vmatprep.subr.mxu0 %v1638
        %6793 = vmatpush1.msra.mxu0 %v1637
        %6794 = vmatprep.subr.mxu0 %v1642
        %6795 = vmatpush1.msra.mxu0 %v1641
        %6796 = vmatprep.subr.mxu0 %v1646
        %6797 = vmatpush1.msra.mxu0 %v1645
        %6798 = vmatprep.subr.mxu0 0.0
        %6799 = vmatpush1.msra.mxu0 0.0
        %6800 = vmatprep.subr.mxu0 0.0
        %6801 = vmatpush1.msra.mxu0 0.0
        %6802 = vmatprep.subr.mxu0 0.0
        %6803 = vmatpush1.msra.mxu0 0.0
        %6804 = vmatprep.subr.mxu0 0.0
        %6805 = vmatpush1.msra.mxu0 0.0
        %6806 = vmatprep.subr.mxu0 0.0
        %6807 = vmatpush1.msra.mxu0 0.0
        %6808 = vmatprep.subr.mxu0 0.0
        %6809 = vmatpush1.msra.mxu0 0.0
        %6810 = vmatprep.subr.mxu0 0.0
        %6811 = vmatpush1.msra.mxu0 0.0
        %6812 = vmatprep.subr.mxu0 0.0
        %6813 = vmatpush1.msra.mxu0 0.0
        %6814 = vmatprep.subr.mxu0 0.0
        %6815 = vmatpush1.msra.mxu0 0.0
        %6816 = vmatprep.subr.mxu0 0.0
        %6817 = vmatpush1.msra.mxu0 0.0
        %6818 = vmatprep.subr.mxu0 0.0
        %6819 = vmatpush1.msra.mxu0 0.0
        %6820 = vmatprep.subr.mxu0 0.0
        %6821 = vmatpush1.msra.mxu0 0.0
        %6822 = vmatprep.subr.mxu0 0.0
        %6823 = vmatpush1.msra.mxu0 0.0
        %6824 = vmatprep.subr.mxu0 0.0
        %6825 = vmatpush1.msra.mxu0 0.0
        %6826 = vmatprep.subr.mxu0 0.0
        %6827 = vmatpush1.msra.mxu0 0.0
        %6828 = vmatprep.subr.mxu0 0.0
        %6829 = vmatpush1.msra.mxu0 0.0
        %6830 = vmatprep.mubr.f32.mxu0 0.0
        %6831 = vmatmul.mubr.f32.gmra.mrb[0].mxu0 %v6673
        %v6832 = vpop.f32.mrb[0].mxu0
        %v6833 = vadd.f32 0.0, %v6832
        %v6834 = vpop.f32.mrb[0].mxu0
        %v6835 = vadd.f32 0.0, %v6834
        %6836 = vdwg.mxu0
        %v6837 = vadd.f32 %v6691, %v6762
        %v6838 = vadd.f32 %v6692, %v6764
        %v6839 = vadd.f32 %v6693, %v6833
        %v6840 = vadd.f32 %v6694, %v6835
        %v6841 = vld [vmem:[#allocation2 + $0x20] sm:$0xff]
        %v6842 = vld [vmem:[#allocation2 + $0x28] sm:$0xff]
        %v6843 = vld [vmem:[#allocation2 + $0x30] sm:$0xff]
        %v6844 = vld [vmem:[#allocation2 + $0x38] sm:$0xff]
        %6845 = vmatprep.subr.mxu0 %v1648
        %6846 = vmatpush1.msra.mxu0 %v1647
        %6847 = vmatprep.subr.mxu0 %v1652
        %6848 = vmatpush1.msra.mxu0 %v1651
        %6849 = vmatprep.subr.mxu0 %v1656
        %6850 = vmatpush1.msra.mxu0 %v1655
        %6851 = vmatprep.subr.mxu0 %v1660
        %6852 = vmatpush1.msra.mxu0 %v1659
        %6853 = vmatprep.subr.mxu0 %v1664
        %6854 = vmatpush1.msra.mxu0 %v1663
        %6855 = vmatprep.subr.mxu0 %v1668
        %6856 = vmatpush1.msra.mxu0 %v1667
        %6857 = vmatprep.subr.mxu0 %v1672
        %6858 = vmatpush1.msra.mxu0 %v1671
        %6859 = vmatprep.subr.mxu0 %v1676
        %6860 = vmatpush1.msra.mxu0 %v1675
        %6861 = vmatprep.subr.mxu0 %v1680
        %6862 = vmatpush1.msra.mxu0 %v1679
        %6863 = vmatprep.subr.mxu0 %v1684
        %6864 = vmatpush1.msra.mxu0 %v1683
        %6865 = vmatprep.subr.mxu0 %v1688
        %6866 = vmatpush1.msra.mxu0 %v1687
        %6867 = vmatprep.subr.mxu0 %v1692
        %6868 = vmatpush1.msra.mxu0 %v1691
        %6869 = vmatprep.subr.mxu0 %v1696
        %6870 = vmatpush1.msra.mxu0 %v1695
        %6871 = vmatprep.subr.mxu0 %v1700
        %6872 = vmatpush1.msra.mxu0 %v1699
        %6873 = vmatprep.subr.mxu0 %v1704
        %6874 = vmatpush1.msra.mxu0 %v1703
        %6875 = vmatprep.subr.mxu0 %v1708
        %6876 = vmatpush1.msra.mxu0 %v1707
        %6877 = vmatprep.subr.mxu0 0.0
        %6878 = vmatpush1.msra.mxu0 0.0
        %6879 = vmatprep.subr.mxu0 0.0
        %6880 = vmatpush1.msra.mxu0 0.0
        %6881 = vmatprep.subr.mxu0 0.0
        %6882 = vmatpush1.msra.mxu0 0.0
        %6883 = vmatprep.subr.mxu0 0.0
        %6884 = vmatpush1.msra.mxu0 0.0
        %6885 = vmatprep.subr.mxu0 0.0
        %6886 = vmatpush1.msra.mxu0 0.0
        %6887 = vmatprep.subr.mxu0 0.0
        %6888 = vmatpush1.msra.mxu0 0.0
        %6889 = vmatprep.subr.mxu0 0.0
        %6890 = vmatpush1.msra.mxu0 0.0
        %6891 = vmatprep.subr.mxu0 0.0
        %6892 = vmatpush1.msra.mxu0 0.0
        %6893 = vmatprep.subr.mxu0 0.0
        %6894 = vmatpush1.msra.mxu0 0.0
        %6895 = vmatprep.subr.mxu0 0.0
        %6896 = vmatpush1.msra.mxu0 0.0
        %6897 = vmatprep.subr.mxu0 0.0
        %6898 = vmatpush1.msra.mxu0 0.0
        %6899 = vmatprep.subr.mxu0 0.0
        %6900 = vmatpush1.msra.mxu0 0.0
        %6901 = vmatprep.subr.mxu0 0.0
        %6902 = vmatpush1.msra.mxu0 0.0
        %6903 = vmatprep.subr.mxu0 0.0
        %6904 = vmatpush1.msra.mxu0 0.0
        %6905 = vmatprep.subr.mxu0 0.0
        %6906 = vmatpush1.msra.mxu0 0.0
        %6907 = vmatprep.subr.mxu0 0.0
        %6908 = vmatpush1.msra.mxu0 0.0
        %6909 = vmatprep.mubr.f32.mxu0 0.0
        %6910 = vmatmul.mubr.f32.gmra.mrb[0].mxu0 %v6688
        %v6911 = vpop.f32.mrb[0].mxu0
        %v6912 = vadd.f32 0.0, %v6911
        %v6913 = vpop.f32.mrb[0].mxu0
        %v6914 = vadd.f32 0.0, %v6913
        %6915 = vdwg.mxu0
        %6916 = vmatprep.subr.mxu0 %v1650
        %6917 = vmatpush1.msra.mxu0 %v1649
        %6918 = vmatprep.subr.mxu0 %v1654
        %6919 = vmatpush1.msra.mxu0 %v1653
        %6920 = vmatprep.subr.mxu0 %v1658
        %6921 = vmatpush1.msra.mxu0 %v1657
        %6922 = vmatprep.subr.mxu0 %v1662
        %6923 = vmatpush1.msra.mxu0 %v1661
        %6924 = vmatprep.subr.mxu0 %v1666
        %6925 = vmatpush1.msra.mxu0 %v1665
        %6926 = vmatprep.subr.mxu0 %v1670
        %6927 = vmatpush1.msra.mxu0 %v1669
        %6928 = vmatprep.subr.mxu0 %v1674
        %6929 = vmatpush1.msra.mxu0 %v1673
        %6930 = vmatprep.subr.mxu0 %v1678
        %6931 = vmatpush1.msra.mxu0 %v1677
        %6932 = vmatprep.subr.mxu0 %v1682
        %6933 = vmatpush1.msra.mxu0 %v1681
        %6934 = vmatprep.subr.mxu0 %v1686
        %6935 = vmatpush1.msra.mxu0 %v1685
        %6936 = vmatprep.subr.mxu0 %v1690
        %6937 = vmatpush1.msra.mxu0 %v1689
        %6938 = vmatprep.subr.mxu0 %v1694
        %6939 = vmatpush1.msra.mxu0 %v1693
        %6940 = vmatprep.subr.mxu0 %v1698
        %6941 = vmatpush1.msra.mxu0 %v1697
        %6942 = vmatprep.subr.mxu0 %v1702
        %6943 = vmatpush1.msra.mxu0 %v1701
        %6944 = vmatprep.subr.mxu0 %v1706
        %6945 = vmatpush1.msra.mxu0 %v1705
        %6946 = vmatprep.subr.mxu0 %v1710
        %6947 = vmatpush1.msra.mxu0 %v1709
        %6948 = vmatprep.subr.mxu0 0.0
        %6949 = vmatpush1.msra.mxu0 0.0
        %6950 = vmatprep.subr.mxu0 0.0
        %6951 = vmatpush1.msra.mxu0 0.0
        %6952 = vmatprep.subr.mxu0 0.0
        %6953 = vmatpush1.msra.mxu0 0.0
        %6954 = vmatprep.subr.mxu0 0.0
        %6955 = vmatpush1.msra.mxu0 0.0
        %6956 = vmatprep.subr.mxu0 0.0
        %6957 = vmatpush1.msra.mxu0 0.0
        %6958 = vmatprep.subr.mxu0 0.0
        %6959 = vmatpush1.msra.mxu0 0.0
        %6960 = vmatprep.subr.mxu0 0.0
        %6961 = vmatpush1.msra.mxu0 0.0
        %6962 = vmatprep.subr.mxu0 0.0
        %6963 = vmatpush1.msra.mxu0 0.0
        %6964 = vmatprep.subr.mxu0 0.0
        %6965 = vmatpush1.msra.mxu0 0.0
        %6966 = vmatprep.subr.mxu0 0.0
        %6967 = vmatpush1.msra.mxu0 0.0
        %6968 = vmatprep.subr.mxu0 0.0
        %6969 = vmatpush1.msra.mxu0 0.0
        %6970 = vmatprep.subr.mxu0 0.0
        %6971 = vmatpush1.msra.mxu0 0.0
        %6972 = vmatprep.subr.mxu0 0.0
        %6973 = vmatpush1.msra.mxu0 0.0
        %6974 = vmatprep.subr.mxu0 0.0
        %6975 = vmatpush1.msra.mxu0 0.0
        %6976 = vmatprep.subr.mxu0 0.0
        %6977 = vmatpush1.msra.mxu0 0.0
        %6978 = vmatprep.subr.mxu0 0.0
        %6979 = vmatpush1.msra.mxu0 0.0
        %6980 = vmatprep.mubr.f32.mxu0 0.0
        %6981 = vmatmul.mubr.f32.gmra.mrb[0].mxu0 %v6688
        %v6982 = vpop.f32.mrb[0].mxu0
        %v6983 = vadd.f32 0.0, %v6982
        %v6984 = vpop.f32.mrb[0].mxu0
        %v6985 = vadd.f32 0.0, %v6984
        %6986 = vdwg.mxu0
        %v6987 = vadd.f32 %v6841, %v6912
        %v6988 = vadd.f32 %v6842, %v6914
        %v6989 = vadd.f32 %v6843, %v6983
        %v6990 = vadd.f32 %v6844, %v6985
        %v6991 = vtanh.pop %v6837
        %v6992 = vtanh.pop %v6838
        %v6993 = vtanh.pop %v6839
        %v6994 = vtanh.pop %v6840
        %v6995 = vmul.f32 %v6991, 0.5
        %v6996 = vmul.f32 %v6992, 0.5
        %v6997 = vmul.f32 %v6993, 0.5
        %v6998 = vadd.f32 %v6995, 0.5
        %v6999 = vadd.f32 %v6996, 0.5
        %v7000 = vadd.f32 %v6997, 0.5
        %v7001 = vmul.f32 %v6999, %v6671
        %v7002 = vmul.f32 %v6998, %v6994
        %v7003 = vadd.f32 %v7001, %v7002
        %v7004 = vtanh.pop %v7003
        %v7005 = vmul.f32 %v7000, %v7004
        %v7006 = vtanh.pop %v6987
        %v7007 = vtanh.pop %v6988
        %v7008 = vtanh.pop %v6989
        %v7009 = vtanh.pop %v6990
        %v7010 = vmul.f32 %v7006, 0.5
        %v7011 = vmul.f32 %v7007, 0.5
        %v7012 = vmul.f32 %v7008, 0.5
        %v7013 = vadd.f32 %v7010, 0.5
        %v7014 = vadd.f32 %v7011, 0.5
        %v7015 = vadd.f32 %v7012, 0.5
        %v7016 = vmul.f32 %v7014, %v6686
        %v7017 = vmul.f32 %v7013, %v7009
        %v7018 = vadd.f32 %v7016, %v7017
        %v7019 = vtanh.pop %v7018
        %v7020 = vmul.f32 %v7015, %v7019
        %7021 = vst [vmem:[#allocation3 + $0xf0] sm:$0xff] %v7005
        %7022 = vst [vmem:[#allocation3 + $0x8] sm:$0xff] %v7020
        %p7023 = scmp.eq.s32.totalorder %s27, 2
        // Predicated region
        $region73: #{tpu_custom_call.1} parent=47 // pred_check
          %p7024 = pneg %p7023
        $region74: #{tpu_custom_call.1} parent=47 // pred_check_branch
          %7026 = sbr.rel (%p7024) target = $region76
        $region75: #{tpu_custom_call.1} parent=47 // pred_region
          %v7027 = vld [vmem:[#allocation3 + $0xf0] sm:$0xff]
          %v7028 = vld [vmem:[#allocation3 + $0xf8] sm:$0xff]
          %v7029 = vld [vmem:[%s5] sm:$0xff]
          %v7030 = vld [vmem:[%s5 + $0x8] sm:$0xff]
          %v7031 = vld [vmem:[%s5 + $0x10] sm:$0xff]
          %v7032 = vld [vmem:[%s5 + $0x18] sm:$0xff]
          %v7033 = vld [vmem:[%s5 + $0x20] sm:$0xff]
          %v7034 = vld [vmem:[%s5 + $0x28] sm:$0xff]
          %v7035 = vld [vmem:[%s5 + $0x30] sm:$0xff]
          %v7036 = vld [vmem:[%s5 + $0x38] sm:$0xff]
          %v7037 = vld [vmem:[%s5 + $0x40] sm:$0xff]
          %v7038 = vld [vmem:[%s5 + $0x48] sm:$0xff]
          %v7039 = vld [vmem:[%s5 + $0x50] sm:$0xff]
          %v7040 = vld [vmem:[%s5 + $0x58] sm:$0xff]
          %v7041 = vld [vmem:[%s5 + $0x60] sm:$0xff]
          %v7042 = vld [vmem:[%s5 + $0x68] sm:$0xff]
          %v7043 = vld [vmem:[%s5 + $0x70] sm:$0xff]
          %v7044 = vld [vmem:[%s5 + $0x78] sm:$0xff]
          %v7045 = vld [vmem:[%s5 + $0x80] sm:$0xff]
          %v7046 = vld [vmem:[%s5 + $0x88] sm:$0xff]
          %v7047 = vld [vmem:[%s5 + $0x90] sm:$0xff]
          %v7048 = vld [vmem:[%s5 + $0x98] sm:$0xff]
          %v7049 = vld [vmem:[%s5 + $0xa0] sm:$0xff]
          %v7050 = vld [vmem:[%s5 + $0xa8] sm:$0xff]
          %v7051 = vld [vmem:[%s5 + $0xb0] sm:$0xff]
          %v7052 = vld [vmem:[%s5 + $0xb8] sm:$0xff]
          %v7053 = vld [vmem:[%s5 + $0xc0] sm:$0xff]
          %v7054 = vld [vmem:[%s5 + $0xc8] sm:$0xff]
          %v7055 = vld [vmem:[%s5 + $0xd0] sm:$0xff]
          %v7056 = vld [vmem:[%s5 + $0xd8] sm:$0xff]
          %v7057 = vld [vmem:[%s5 + $0xe0] sm:$0xff]
          %v7058 = vld [vmem:[%s5 + $0xe8] sm:$0xff]
          %v7059 = vld [vmem:[%s5 + $0xf0] sm:$0xff]
          %v7060 = vld [vmem:[%s5 + $0xf8] sm:$0xff]
          %v7061 = vld [vmem:[#allocation4] sm:$0x1]
          %v7063 = vlaneseq
          %v7064 = vshrl.u32 %v7063, 7
          %v7065 = vsub.s32 0, %v7064
          %v7066 = vrot.slane %v7061, %v7065
          %7068 = vmatprep.subr.mxu0 0.0
          %7069 = vmatpush1.msra.mxu0 %v7029
          %7070 = vmatprep.subr.mxu0 0.0
          %7071 = vmatpush1.msra.mxu0 %v7030
          %7072 = vmatprep.subr.mxu0 0.0
          %7073 = vmatpush1.msra.mxu0 %v7031
          %7074 = vmatprep.subr.mxu0 0.0
          %7075 = vmatpush1.msra.mxu0 %v7032
          %7076 = vmatprep.subr.mxu0 0.0
          %7077 = vmatpush1.msra.mxu0 %v7033
          %7078 = vmatprep.subr.mxu0 0.0
          %7079 = vmatpush1.msra.mxu0 %v7034
          %7080 = vmatprep.subr.mxu0 0.0
          %7081 = vmatpush1.msra.mxu0 %v7035
          %7082 = vmatprep.subr.mxu0 0.0
          %7083 = vmatpush1.msra.mxu0 %v7036
          %7084 = vmatprep.subr.mxu0 0.0
          %7085 = vmatpush1.msra.mxu0 %v7037
          %7086 = vmatprep.subr.mxu0 0.0
          %7087 = vmatpush1.msra.mxu0 %v7038
          %7088 = vmatprep.subr.mxu0 0.0
          %7089 = vmatpush1.msra.mxu0 %v7039
          %7090 = vmatprep.subr.mxu0 0.0
          %7091 = vmatpush1.msra.mxu0 %v7040
          %7092 = vmatprep.subr.mxu0 0.0
          %7093 = vmatpush1.msra.mxu0 %v7041
          %7094 = vmatprep.subr.mxu0 0.0
          %7095 = vmatpush1.msra.mxu0 %v7042
          %7096 = vmatprep.subr.mxu0 0.0
          %7097 = vmatpush1.msra.mxu0 %v7043
          %7098 = vmatprep.subr.mxu0 0.0
          %7099 = vmatpush1.msra.mxu0 %v7044
          %7100 = vmatprep.subr.mxu0 0.0
          %7101 = vmatpush1.msra.mxu0 %v7045
          %7102 = vmatprep.subr.mxu0 0.0
          %7103 = vmatpush1.msra.mxu0 %v7046
          %7104 = vmatprep.subr.mxu0 0.0
          %7105 = vmatpush1.msra.mxu0 %v7047
          %7106 = vmatprep.subr.mxu0 0.0
          %7107 = vmatpush1.msra.mxu0 %v7048
          %7108 = vmatprep.subr.mxu0 0.0
          %7109 = vmatpush1.msra.mxu0 %v7049
          %7110 = vmatprep.subr.mxu0 0.0
          %7111 = vmatpush1.msra.mxu0 %v7050
          %7112 = vmatprep.subr.mxu0 0.0
          %7113 = vmatpush1.msra.mxu0 %v7051
          %7114 = vmatprep.subr.mxu0 0.0
          %7115 = vmatpush1.msra.mxu0 %v7052
          %7116 = vmatprep.subr.mxu0 0.0
          %7117 = vmatpush1.msra.mxu0 %v7053
          %7118 = vmatprep.subr.mxu0 0.0
          %7119 = vmatpush1.msra.mxu0 %v7054
          %7120 = vmatprep.subr.mxu0 0.0
          %7121 = vmatpush1.msra.mxu0 %v7055
          %7122 = vmatprep.subr.mxu0 0.0
          %7123 = vmatpush1.msra.mxu0 %v7056
          %7124 = vmatprep.subr.mxu0 0.0
          %7125 = vmatpush1.msra.mxu0 %v7057
          %7126 = vmatprep.subr.mxu0 0.0
          %7127 = vmatpush1.msra.mxu0 %v7058
          %7128 = vmatprep.subr.mxu0 0.0
          %7129 = vmatpush1.msra.mxu0 %v7059
          %7130 = vmatprep.subr.mxu0 0.0
          %7131 = vmatpush1.msra.mxu0 %v7060
          %7132 = vmatprep.mubr.f32.mxu0 %v7028
          %7133 = vmatmul.mubr.f32.gmra.mrb[0].mxu0 %v7027
          %v7134 = vpop.f32.mrb[0].mxu0
          %v7135 = vadd.f32 %v7066, %v7134
          %v7136 = vpop.f32.mrb[0].mxu0
          %7137 = vdwg.mxu0
          %vm7138 = vcmask 7168
          %7139 = vst.msk [vmem:[%s7] sm:$0xff] %vm7138, %v7135
        $region76: #{tpu_custom_call.1} parent=47 // pred_fallthru
          _
        // Predicated region
        $region77: #{tpu_custom_call.1} parent=47 // pred_check
          %p7140 = pneg %p207
        $region78: #{tpu_custom_call.1} parent=47 // pred_check_branch
          %7142 = sbr.rel (%p7140) target = $region80
        $region79: #{tpu_custom_call.1} parent=47 // pred_region
          _
        $region80: #{tpu_custom_call.1} parent=47 // pred_fallthru
          _
        // Predicated region
        $region81: #{tpu_custom_call.1} parent=47 // pred_check
          %p7143 = pneg %p207
        $region82: #{tpu_custom_call.1} parent=47 // pred_check_branch
          %7145 = sbr.rel (%p7143) target = $region84
        $region83: #{tpu_custom_call.1} parent=47 // pred_region
          _
        $region84: #{tpu_custom_call.1} parent=47 // pred_fallthru
          _
      $region48: #{tpu_custom_call.1} parent=5 // pred_fallthru
        _
      %p7146 = scmp.le.s32.totalorder 2, %s22
      // Predicated region
      $region85: #{tpu_custom_call.1} parent=5 // pred_check
        %p7147 = pneg %p7146
      $region86: #{tpu_custom_call.1} parent=5 // pred_check_branch
        %7149 = sbr.rel (%p7147) target = $region88
      $region87: #{tpu_custom_call.1} parent=5 // pred_region
        %s7150 = ssub.s32 %s22, 2
      $region88: #{tpu_custom_call.1} parent=5 // pred_fallthru
        _
    $region6: #{tpu_custom_call.1} parent=1 // loop_footer
      %s26 = sadd.s32 1, %s22
    $region7: #{tpu_custom_call.1} parent=1 // loop_footer_branch
      %21 = sbr.rel target = $region3
    $region8: #{tpu_custom_call.1} parent=1 // loop_exit
      _
    %7151 = vsyncpa [#allocation6], 1
    %s7152 = scalar_lea.sflag [#allocation6], 1
    %7153 = vsyncpa %s7152, 1
    %7154 = vsyncpa [#allocation8], 1
    %s7155 = scalar_lea.sflag [#allocation8], 1
    %7156 = vsyncpa %s7155, 1
    %7157 = vsyncpa [#allocation11], 1
    %s7158 = scalar_lea.sflag [#allocation11], 1
    %7159 = vsyncpa %s7158, 1

</llo_original>
